<compile_context>
chip_gen: v6e
topology: v6e:2x2x1
jax: 0.10.0
libtpu: 0.0.40
codegen_flags: <defaults>
</compile_context>

<pallas_src>
import jax
import jax.numpy as jnp
from jax.experimental import pallas as pl
from jax.experimental.pallas import tpu as pltpu

# ----------------------------------------------------------------------------
# Model hyper-parameters (small, synthetic but structurally faithful)
# ----------------------------------------------------------------------------
PATCH = 8
HIDDEN = 128         # "hidden_size" of the vision tower (<< 3584, same role)
NUM_HEADS = 2
HEAD_DIM = HIDDEN // NUM_HEADS
MLP_DIM = 512        # 4x hidden, multiple of 256 (v6e/v7x MXU tile)
NUM_LAYERS = 2
TARGET_DIM = 4096    # UITarsVisionTower.output_dim
TILE_N = 512         # N-tile of the final projection (lane-dense, 4 x 128)
LN_EPS = 1e-5
ATTN_SCALE = 1.0 / float(HEAD_DIM) ** 0.5


def _ln_f32(x, g, b):
    """LayerNorm over the last axis, f32 math (VPU/EUP path stays f32)."""
    x = x.astype(jnp.float32)
    mu = jnp.mean(x, axis=-1, keepdims=True)
    var = jnp.mean(jnp.square(x - mu), axis=-1, keepdims=True)
    return (x - mu) * jax.lax.rsqrt(var + LN_EPS) * g + b


# ----------------------------------------------------------------------------
# Fused kernel: encoder runs once (grid step 0), projection is N-tiled
# ----------------------------------------------------------------------------
def _tower_kernel(patches_ref, patch_w_ref, patch_b_ref, cls_ref, pos_ref,
                  ln1_g_ref, ln1_b_ref, qkv_w_ref, qkv_b_ref,
                  out_w_ref, out_b_ref, ln2_g_ref, ln2_b_ref,
                  fc1_w_ref, fc1_b_ref, fc2_w_ref, fc2_b_ref,
                  ln_f_g_ref, ln_f_b_ref, proj_w_ref, proj_b_ref,
                  o_ref, pooled_ref):
    B = pooled_ref.shape[0]
    Np = patches_ref.shape[0] // B
    T = Np + 1

    @pl.when(pl.program_id(0) == 0)
    def _encode():
        # ---- patch embedding: conv k=stride=P as one bf16 matmul ------------
        patches = patches_ref[...].astype(jnp.bfloat16)              # (B*Np, Cp)
        emb = jnp.dot(patches, patch_w_ref[...],
                      preferred_element_type=jnp.float32) + patch_b_ref[...]
        emb3 = emb.reshape(B, Np, HIDDEN)

        # ---- prepend CLS token + positional embedding (register-resident) ---
        cls_tok = (cls_ref[...] + pos_ref[0:1, :]).reshape(1, 1, HIDDEN)
        x3 = jnp.concatenate(
            [jnp.broadcast_to(cls_tok, (B, 1, HIDDEN)),
             emb3 + pos_ref[1:, :][None]], axis=1)                    # (B,T,H) f32
        x2 = x3.reshape(B * T, HIDDEN)                                # residual, f32

        # ---- pre-LN transformer blocks, fully fused, statically unrolled ----
        # TODO(synk): at checkpoint scale, stream per-layer weights via a
        # layer grid axis instead of all-layer VMEM residency.
        for l in range(NUM_LAYERS):
            # --- attention branch ---
            h = _ln_f32(x2, ln1_g_ref[l], ln1_b_ref[l]).astype(jnp.bfloat16)
            attn = jnp.zeros((B * T, HIDDEN), jnp.float32)
            for hd in range(NUM_HEADS):                               # static unroll
                base = (l * NUM_HEADS + hd) * 3
                q = jnp.dot(h, qkv_w_ref[base + 0],
                            preferred_element_type=jnp.float32) + qkv_b_ref[base + 0]
                k = jnp.dot(h, qkv_w_ref[base + 1],
                            preferred_element_type=jnp.float32) + qkv_b_ref[base + 1]
                v = jnp.dot(h, qkv_w_ref[base + 2],
                            preferred_element_type=jnp.float32) + qkv_b_ref[base + 2]
                q = q * ATTN_SCALE                                    # scale folded into q
                q3 = q.reshape(B, T, HEAD_DIM).astype(jnp.bfloat16)
                k3 = k.reshape(B, T, HEAD_DIM).astype(jnp.bfloat16)
                v3 = v.reshape(B, T, HEAD_DIM).astype(jnp.bfloat16)
                # TODO(synk): block over KV (online softmax) at real seq length.
                s = jnp.einsum('bqd,bkd->bqk', q3, k3,
                               preferred_element_type=jnp.float32)    # (B,T,T)
                m = jnp.max(s, axis=-1, keepdims=True)
                p = jnp.exp(s - m)
                p = p * pl.reciprocal(jnp.sum(p, axis=-1, keepdims=True),
                                      approx=True)
                oh = jnp.einsum('bqk,bkd->bqd', p.astype(jnp.bfloat16), v3,
                                preferred_element_type=jnp.float32)   # (B,T,Dh)
                # Head-merge fused into output projection:
                #   concat(heads) @ W_out == sum_h head_h @ W_out_h
                oh2 = oh.reshape(B * T, HEAD_DIM).astype(jnp.bfloat16)
                attn = attn + jnp.dot(oh2, out_w_ref[l * NUM_HEADS + hd],
                                      preferred_element_type=jnp.float32)
            x2 = x2 + attn + out_b_ref[l]

            # --- MLP branch ---
            h = _ln_f32(x2, ln2_g_ref[l], ln2_b_ref[l]).astype(jnp.bfloat16)
            h = jnp.dot(h, fc1_w_ref[l],
                        preferred_element_type=jnp.float32) + fc1_b_ref[l]
            # TODO(synk): PyTorch nn.GELU defaults to exact erf; tanh approx here.
            h = jax.nn.gelu(h, approximate=True)
            h = jnp.dot(h.astype(jnp.bfloat16), fc2_w_ref[l],
                        preferred_element_type=jnp.float32) + fc2_b_ref[l]
            x2 = x2 + h

        # ---- final LN on token 0 only (== last_hidden_state[:, 0]) ----------
        x0 = _ln_f32(x2.reshape(B, T, HIDDEN)[:, 0, :],
                     ln_f_g_ref[...], ln_f_b_ref[...])                # (B, HIDDEN)
        pooled_ref[...] = x0.astype(jnp.bfloat16)

    # ---- projection: one (B,HIDDEN)@(HIDDEN,TILE_N) matmul per grid step ----
    y = jnp.dot(pooled_ref[...], proj_w_ref[...],
                preferred_element_type=jnp.float32) + proj_b_ref[...]
    o_ref[...] = y.astype(o_ref.dtype)                                # lane-dense store


# ----------------------------------------------------------------------------
# Parameter init (deterministic, synthetic — no checkpoint loading)
# ----------------------------------------------------------------------------
# TODO(synk): pretrained Qwen2.5-VL checkpoint loading / 8-bit quantization has
# no Pallas equivalent; weights are deterministic synthetic tensors here.
def init_params(key, in_chans, num_patches):
    patch_dim = in_chans * PATCH * PATCH
    T = num_patches + 1  # + CLS token
    L, NH, HD = NUM_LAYERS, NUM_HEADS, HEAD_DIM
    keys = iter(jax.random.split(key, 16))

    def nrm(shape, scale=0.02, dtype=jnp.bfloat16):
        return (scale * jax.random.normal(next(keys), shape)).astype(dtype)

    return {
        # matmul weights stored bf16 (MXU operands), norms/biases f32
        "patch_w": nrm((patch_dim, HIDDEN)),
        "patch_b": jnp.zeros((1, HIDDEN), jnp.float32),
        "cls":     nrm((1, HIDDEN), dtype=jnp.float32),
        "pos":     nrm((T, HIDDEN), dtype=jnp.float32),
        "ln1_g":   jnp.ones((L, 1, HIDDEN), jnp.float32),
        "ln1_b":   jnp.zeros((L, 1, HIDDEN), jnp.float32),
        # per-head QKV layout: row = (l*NUM_HEADS + head)*3 + {0:q, 1:k, 2:v}
        "qkv_w":   nrm((L * NH * 3, HIDDEN, HD)),
        "qkv_b":   jnp.zeros((L * NH * 3, 1, HD), jnp.float32),
        # per-head output projection slices: row = l*NUM_HEADS + head
        "out_w":   nrm((L * NH, HD, HIDDEN)),
        "out_b":   jnp.zeros((L, 1, HIDDEN), jnp.float32),
        "ln2_g":   jnp.ones((L, 1, HIDDEN), jnp.float32),
        "ln2_b":   jnp.zeros((L, 1, HIDDEN), jnp.float32),
        "fc1_w":   nrm((L, HIDDEN, MLP_DIM)),
        "fc1_b":   jnp.zeros((L, 1, MLP_DIM), jnp.float32),
        "fc2_w":   nrm((L, MLP_DIM, HIDDEN)),
        "fc2_b":   jnp.zeros((L, 1, HIDDEN), jnp.float32),
        "ln_f_g":  jnp.ones((1, HIDDEN), jnp.float32),
        "ln_f_b":  jnp.zeros((1, HIDDEN), jnp.float32),
        "proj_w":  nrm((HIDDEN, TARGET_DIM)),
        "proj_b":  jnp.zeros((1, TARGET_DIM), jnp.float32),
    }


_PARAM_ORDER = ("patch_w", "patch_b", "cls", "pos",
                "ln1_g", "ln1_b", "qkv_w", "qkv_b", "out_w", "out_b",
                "ln2_g", "ln2_b", "fc1_w", "fc1_b", "fc2_w", "fc2_b",
                "ln_f_g", "ln_f_b", "proj_w", "proj_b")


# ----------------------------------------------------------------------------
# Forward pass: patch extraction in JAX glue, everything else in one kernel
# ----------------------------------------------------------------------------
def extract_patches_nchw(x):
    """(B, C, H, W) -> (B, num_patches, C*P*P), matching PyTorch Conv2d
    weight flattening order (C-major, then patch rows)."""
    B, C, H, W = x.shape
    gh, gw = H // PATCH, W // PATCH
    x = x.reshape(B, C, gh, PATCH, gw, PATCH)
    x = x.transpose(0, 2, 4, 1, 3, 5)                     # (B, gh, gw, C, P, P)
    return x.reshape(B, gh * gw, C * PATCH * PATCH)


def vision_tower_forward(params, screenshot_batch):
    """screenshot_batch: (B, C, H, W) float32 in [0, 1] -> (B, 4096)."""
    # TODO(synk): HF AutoProcessor resize/normalize + image-token text plumbing
    # has no kernel equivalent; pixels are consumed directly here.
    B = screenshot_batch.shape[0]
    patches = extract_patches_nchw(screenshot_batch)       # (B, Np, Cp)
    Np, Cp = patches.shape[1], patches.shape[2]
    patches2 = patches.reshape(B * Np, Cp)                 # whole batch in one step

    weight_args = [params[name] for name in _PARAM_ORDER]
    vmem_full = pl.BlockSpec(memory_space=pltpu.MemorySpace.VMEM)  # single-buffered
    in_specs = [vmem_full]                                  # patches
    for name in _PARAM_ORDER:
        if name == "proj_w":
            in_specs.append(pl.BlockSpec((HIDDEN, TILE_N), lambda n: (0, n)))
        elif name == "proj_b":
            in_specs.append(pl.BlockSpec((1, TILE_N), lambda n: (0, n)))
        else:
            in_specs.append(vmem_full)

    out = pl.pallas_call(
        _tower_kernel,
        out_shape=jax.ShapeDtypeStruct((B, TARGET_DIM), jnp.float32),
        grid=(TARGET_DIM // TILE_N,),
        in_specs=in_specs,
        out_specs=pl.BlockSpec((B, TILE_N), lambda n: (0, n)),
        scratch_shapes=[pltpu.VMEM((B, HIDDEN), jnp.bfloat16)],  # pooled tokens
        compiler_params=pltpu.CompilerParams(
            # sequential: step 0 computes the pooled tokens used by all N tiles
            dimension_semantics=("arbitrary",)),
    )(patches2, *weight_args)
    return out


# ----------------------------------------------------------------------------
if __name__ == "__main__":
    # T = (24/8)*(40/8) + 1 = 16 tokens -> sublane-aligned activations.
    B, C, H, W = 2, 3, 24, 40
    key = jax.random.PRNGKey(0)
    k_img, k_par = jax.random.split(key)
    # Input in [0, 1], NCHW — same contract as the PyTorch module.
    screenshots = jax.random.uniform(k_img, (B, C, H, W), dtype=jnp.float32)

    params = init_params(k_par, in_chans=C,
                         num_patches=(H // PATCH) * (W // PATCH))

    fwd = jax.jit(vision_tower_forward)
    out = fwd(params, screenshots)
    jax.block_until_ready(out)

    assert out.shape == (B, TARGET_DIM), out.shape
    assert out.dtype == jnp.float32
    assert bool(jnp.all(jnp.isfinite(out)))
    print("KERNEL_OK")
</pallas_src>

<mosaic_0001>
module attributes {stable_mosaic.version = 11 : i64} {
  func.func @_tower_kernel(%arg0: i32, %arg1: memref<30x192xf32, #tpu.memory_space<vmem>>, %arg2: memref<192x128xbf16, #tpu.memory_space<vmem>>, %arg3: memref<1x128xf32, #tpu.memory_space<vmem>>, %arg4: memref<1x128xf32, #tpu.memory_space<vmem>>, %arg5: memref<16x128xf32, #tpu.memory_space<vmem>>, %arg6: memref<2x1x128xf32, #tpu.memory_space<vmem>>, %arg7: memref<2x1x128xf32, #tpu.memory_space<vmem>>, %arg8: memref<12x128x64xbf16, #tpu.memory_space<vmem>>, %arg9: memref<12x1x64xf32, #tpu.memory_space<vmem>>, %arg10: memref<4x64x128xbf16, #tpu.memory_space<vmem>>, %arg11: memref<2x1x128xf32, #tpu.memory_space<vmem>>, %arg12: memref<2x1x128xf32, #tpu.memory_space<vmem>>, %arg13: memref<2x1x128xf32, #tpu.memory_space<vmem>>, %arg14: memref<2x128x512xbf16, #tpu.memory_space<vmem>>, %arg15: memref<2x1x512xf32, #tpu.memory_space<vmem>>, %arg16: memref<2x512x128xbf16, #tpu.memory_space<vmem>>, %arg17: memref<2x1x128xf32, #tpu.memory_space<vmem>>, %arg18: memref<1x128xf32, #tpu.memory_space<vmem>>, %arg19: memref<1x128xf32, #tpu.memory_space<vmem>>, %arg20: memref<128x512xbf16, #tpu.memory_space<vmem>>, %arg21: memref<1x512xf32, #tpu.memory_space<vmem>>, %arg22: memref<2x512xf32, #tpu.memory_space<vmem>>, %arg23: memref<2x128xbf16, #tpu.memory_space<vmem>>) attributes {dimension_semantics = [#tpu.dimension_semantics<arbitrary>], iteration_bounds = array<i64: 8>, scalar_prefetch = 0 : i64, scratch_operands = 1 : i64, tpu.core_type = #tpu.core_type<tc>, window_params = [{pipeline_mode = #tpu.pipeline_mode<synchronous>, transform_indices = @transform_0, window_bounds = array<i64: 30, 192>}, {pipeline_mode = #tpu.pipeline_mode<synchronous>, transform_indices = @transform_1, window_bounds = array<i64: 192, 128>}, {pipeline_mode = #tpu.pipeline_mode<synchronous>, transform_indices = @transform_2, window_bounds = array<i64: 1, 128>}, {pipeline_mode = #tpu.pipeline_mode<synchronous>, transform_indices = @transform_3, window_bounds = array<i64: 1, 128>}, {pipeline_mode = #tpu.pipeline_mode<synchronous>, transform_indices = @transform_4, window_bounds = array<i64: 16, 128>}, {pipeline_mode = #tpu.pipeline_mode<synchronous>, transform_indices = @transform_5, window_bounds = array<i64: 2, 1, 128>}, {pipeline_mode = #tpu.pipeline_mode<synchronous>, transform_indices = @transform_6, window_bounds = array<i64: 2, 1, 128>}, {pipeline_mode = #tpu.pipeline_mode<synchronous>, transform_indices = @transform_7, window_bounds = array<i64: 12, 128, 64>}, {pipeline_mode = #tpu.pipeline_mode<synchronous>, transform_indices = @transform_8, window_bounds = array<i64: 12, 1, 64>}, {pipeline_mode = #tpu.pipeline_mode<synchronous>, transform_indices = @transform_9, window_bounds = array<i64: 4, 64, 128>}, {pipeline_mode = #tpu.pipeline_mode<synchronous>, transform_indices = @transform_10, window_bounds = array<i64: 2, 1, 128>}, {pipeline_mode = #tpu.pipeline_mode<synchronous>, transform_indices = @transform_11, window_bounds = array<i64: 2, 1, 128>}, {pipeline_mode = #tpu.pipeline_mode<synchronous>, transform_indices = @transform_12, window_bounds = array<i64: 2, 1, 128>}, {pipeline_mode = #tpu.pipeline_mode<synchronous>, transform_indices = @transform_13, window_bounds = array<i64: 2, 128, 512>}, {pipeline_mode = #tpu.pipeline_mode<synchronous>, transform_indices = @transform_14, window_bounds = array<i64: 2, 1, 512>}, {pipeline_mode = #tpu.pipeline_mode<synchronous>, transform_indices = @transform_15, window_bounds = array<i64: 2, 512, 128>}, {pipeline_mode = #tpu.pipeline_mode<synchronous>, transform_indices = @transform_16, window_bounds = array<i64: 2, 1, 128>}, {pipeline_mode = #tpu.pipeline_mode<synchronous>, transform_indices = @transform_17, window_bounds = array<i64: 1, 128>}, {pipeline_mode = #tpu.pipeline_mode<synchronous>, transform_indices = @transform_18, window_bounds = array<i64: 1, 128>}, {transform_indices = @transform_19, window_bounds = array<i64: 128, 512>}, {transform_indices = @transform_20, window_bounds = array<i64: 1, 512>}, {transform_indices = @transform_21, window_bounds = array<i64: 2, 512>}]} {
    %c0_i32 = arith.constant 0 : i32
    %0 = arith.cmpi eq, %arg0, %c0_i32 : i32
    %1 = arith.extui %0 : i1 to i32
    %c0_i32_0 = arith.constant 0 : i32
    %2 = arith.cmpi ne, %1, %c0_i32_0 : i32
    scf.if %2 {
      %c0_8 = arith.constant 0 : index
      %c0_9 = arith.constant 0 : index
      %10 = vector.load %arg1[%c0_8, %c0_9] : memref<30x192xf32, #tpu.memory_space<vmem>>, vector<30x192xf32>
      %11 = arith.truncf %10 : vector<30x192xf32> to vector<30x192xbf16>
      %c0_10 = arith.constant 0 : index
      %c0_11 = arith.constant 0 : index
      %12 = vector.load %arg2[%c0_10, %c0_11] : memref<192x128xbf16, #tpu.memory_space<vmem>>, vector<192x128xbf16>
      %cst_12 = arith.constant dense<0.000000e+00> : vector<30x128xf32>
      %13 = tpu.matmul %11, %12, %cst_12 {dimension_numbers = #tpu.dot_dimension_numbers<[1], [0], [0], [1], [0, 0, 1, 1], [], []>} : vector<30x192xbf16>, vector<192x128xbf16>, vector<30x128xf32> -> vector<30x128xf32>
      %c0_13 = arith.constant 0 : index
      %c0_14 = arith.constant 0 : index
      %14 = vector.load %arg3[%c0_13, %c0_14] : memref<1x128xf32, #tpu.memory_space<vmem>>, vector<1x128xf32>
      %15 = vector.broadcast %14 : vector<1x128xf32> to vector<30x128xf32>
      %16 = arith.addf %13, %15 : vector<30x128xf32>
      %17 = vector.shape_cast %16 : vector<30x128xf32> to vector<2x15x128xf32>
      %c0_15 = arith.constant 0 : index
      %c0_16 = arith.constant 0 : index
      %18 = vector.load %arg4[%c0_15, %c0_16] : memref<1x128xf32, #tpu.memory_space<vmem>>, vector<1x128xf32>
      %c0_17 = arith.constant 0 : index
      %c0_18 = arith.constant 0 : index
      %19 = vector.load %arg5[%c0_17, %c0_18] : memref<16x128xf32, #tpu.memory_space<vmem>>, vector<1x128xf32>
      %20 = arith.addf %18, %19 : vector<1x128xf32>
      %21 = vector.shape_cast %20 : vector<1x128xf32> to vector<1x1x128xf32>
      %22 = vector.shape_cast %21 : vector<1x1x128xf32> to vector<1x1x128xf32>
      %23 = vector.broadcast %22 : vector<1x1x128xf32> to vector<2x1x128xf32>
      %c1 = arith.constant 1 : index
      %c0_19 = arith.constant 0 : index
      %24 = vector.load %arg5[%c1, %c0_19] : memref<16x128xf32, #tpu.memory_space<vmem>>, vector<15x128xf32>
      %25 = vector.shape_cast %24 : vector<15x128xf32> to vector<1x15x128xf32>
      %26 = vector.broadcast %25 : vector<1x15x128xf32> to vector<2x15x128xf32>
      %27 = arith.addf %17, %26 : vector<2x15x128xf32>
      %28 = tpu.concatenate %23, %27 in 1 : vector<2x1x128xf32>, vector<2x15x128xf32> -> vector<2x16x128xf32>
      %29 = vector.shape_cast %28 : vector<2x16x128xf32> to vector<32x128xf32>
      %c0_20 = arith.constant 0 : index
      %c0_21 = arith.constant 0 : index
      %c0_22 = arith.constant 0 : index
      %30 = vector.load %arg6[%c0_20, %c0_21, %c0_22] : memref<2x1x128xf32, #tpu.memory_space<vmem>>, vector<1x1x128xf32>
      %31 = vector.shape_cast %30 : vector<1x1x128xf32> to vector<1x128xf32>
      %c0_23 = arith.constant 0 : index
      %c0_24 = arith.constant 0 : index
      %c0_25 = arith.constant 0 : index
      %32 = vector.load %arg7[%c0_23, %c0_24, %c0_25] : memref<2x1x128xf32, #tpu.memory_space<vmem>>, vector<1x1x128xf32>
      %33 = vector.shape_cast %32 : vector<1x1x128xf32> to vector<1x128xf32>
      %cst_26 = arith.constant dense<0.000000e+00> : vector<32xf32>
      %34 = vector.multi_reduction <add>, %29, %cst_26 [1] : vector<32x128xf32> to vector<32xf32>
      %35 = vector.shape_cast %34 : vector<32xf32> to vector<32x1xf32>
      %cst_27 = arith.constant 1.280000e+02 : f32
      %36 = vector.broadcast %cst_27 : f32 to vector<32x1xf32>
      %37 = arith.divf %35, %36 : vector<32x1xf32>
      %38 = vector.broadcast %37 : vector<32x1xf32> to vector<32x128xf32>
      %39 = arith.subf %29, %38 : vector<32x128xf32>
      %40 = arith.mulf %39, %39 : vector<32x128xf32>
      %cst_28 = arith.constant dense<0.000000e+00> : vector<32xf32>
      %41 = vector.multi_reduction <add>, %40, %cst_28 [1] : vector<32x128xf32> to vector<32xf32>
      %42 = vector.shape_cast %41 : vector<32xf32> to vector<32x1xf32>
      %cst_29 = arith.constant 1.280000e+02 : f32
      %43 = vector.broadcast %cst_29 : f32 to vector<32x1xf32>
      %44 = arith.divf %42, %43 : vector<32x1xf32>
      %45 = vector.broadcast %37 : vector<32x1xf32> to vector<32x128xf32>
      %46 = arith.subf %29, %45 : vector<32x128xf32>
      %cst_30 = arith.constant 9.99999974E-6 : f32
      %47 = vector.broadcast %cst_30 : f32 to vector<32x1xf32>
      %48 = arith.addf %44, %47 : vector<32x1xf32>
      %49 = math.rsqrt %48 : vector<32x1xf32>
      %50 = vector.broadcast %49 : vector<32x1xf32> to vector<32x128xf32>
      %51 = arith.mulf %46, %50 : vector<32x128xf32>
      %52 = vector.broadcast %31 : vector<1x128xf32> to vector<32x128xf32>
      %53 = arith.mulf %51, %52 : vector<32x128xf32>
      %54 = vector.broadcast %33 : vector<1x128xf32> to vector<32x128xf32>
      %55 = arith.addf %53, %54 : vector<32x128xf32>
      %56 = arith.truncf %55 : vector<32x128xf32> to vector<32x128xbf16>
      %cst_31 = arith.constant 0.000000e+00 : f32
      %57 = vector.broadcast %cst_31 : f32 to vector<32x128xf32>
      %c0_32 = arith.constant 0 : index
      %c0_33 = arith.constant 0 : index
      %c0_34 = arith.constant 0 : index
      %58 = vector.load %arg8[%c0_32, %c0_33, %c0_34] : memref<12x128x64xbf16, #tpu.memory_space<vmem>>, vector<1x128x64xbf16>
      %59 = vector.shape_cast %58 : vector<1x128x64xbf16> to vector<128x64xbf16>
      %cst_35 = arith.constant dense<0.000000e+00> : vector<32x64xf32>
      %60 = tpu.matmul %56, %59, %cst_35 {dimension_numbers = #tpu.dot_dimension_numbers<[1], [0], [0], [1], [0, 0, 1, 1], [], []>} : vector<32x128xbf16>, vector<128x64xbf16>, vector<32x64xf32> -> vector<32x64xf32>
      %c0_36 = arith.constant 0 : index
      %c0_37 = arith.constant 0 : index
      %c0_38 = arith.constant 0 : index
      %61 = vector.load %arg9[%c0_36, %c0_37, %c0_38] : memref<12x1x64xf32, #tpu.memory_space<vmem>>, vector<1x1x64xf32>
      %62 = vector.shape_cast %61 : vector<1x1x64xf32> to vector<1x64xf32>
      %63 = vector.broadcast %62 : vector<1x64xf32> to vector<32x64xf32>
      %64 = arith.addf %60, %63 : vector<32x64xf32>
      %c1_39 = arith.constant 1 : index
      %c0_40 = arith.constant 0 : index
      %c0_41 = arith.constant 0 : index
      %65 = vector.load %arg8[%c1_39, %c0_40, %c0_41] : memref<12x128x64xbf16, #tpu.memory_space<vmem>>, vector<1x128x64xbf16>
      %66 = vector.shape_cast %65 : vector<1x128x64xbf16> to vector<128x64xbf16>
      %cst_42 = arith.constant dense<0.000000e+00> : vector<32x64xf32>
      %67 = tpu.matmul %56, %66, %cst_42 {dimension_numbers = #tpu.dot_dimension_numbers<[1], [0], [0], [1], [0, 0, 1, 1], [], []>} : vector<32x128xbf16>, vector<128x64xbf16>, vector<32x64xf32> -> vector<32x64xf32>
      %c1_43 = arith.constant 1 : index
      %c0_44 = arith.constant 0 : index
      %c0_45 = arith.constant 0 : index
      %68 = vector.load %arg9[%c1_43, %c0_44, %c0_45] : memref<12x1x64xf32, #tpu.memory_space<vmem>>, vector<1x1x64xf32>
      %69 = vector.shape_cast %68 : vector<1x1x64xf32> to vector<1x64xf32>
      %70 = vector.broadcast %69 : vector<1x64xf32> to vector<32x64xf32>
      %71 = arith.addf %67, %70 : vector<32x64xf32>
      %c2 = arith.constant 2 : index
      %c0_46 = arith.constant 0 : index
      %c0_47 = arith.constant 0 : index
      %72 = vector.load %arg8[%c2, %c0_46, %c0_47] : memref<12x128x64xbf16, #tpu.memory_space<vmem>>, vector<1x128x64xbf16>
      %73 = vector.shape_cast %72 : vector<1x128x64xbf16> to vector<128x64xbf16>
      %cst_48 = arith.constant dense<0.000000e+00> : vector<32x64xf32>
      %74 = tpu.matmul %56, %73, %cst_48 {dimension_numbers = #tpu.dot_dimension_numbers<[1], [0], [0], [1], [0, 0, 1, 1], [], []>} : vector<32x128xbf16>, vector<128x64xbf16>, vector<32x64xf32> -> vector<32x64xf32>
      %c2_49 = arith.constant 2 : index
      %c0_50 = arith.constant 0 : index
      %c0_51 = arith.constant 0 : index
      %75 = vector.load %arg9[%c2_49, %c0_50, %c0_51] : memref<12x1x64xf32, #tpu.memory_space<vmem>>, vector<1x1x64xf32>
      %76 = vector.shape_cast %75 : vector<1x1x64xf32> to vector<1x64xf32>
      %77 = vector.broadcast %76 : vector<1x64xf32> to vector<32x64xf32>
      %78 = arith.addf %74, %77 : vector<32x64xf32>
      %cst_52 = arith.constant 1.250000e-01 : f32
      %79 = vector.broadcast %cst_52 : f32 to vector<32x64xf32>
      %80 = arith.mulf %64, %79 : vector<32x64xf32>
      %81 = vector.shape_cast %80 : vector<32x64xf32> to vector<2x16x64xf32>
      %82 = arith.truncf %81 : vector<2x16x64xf32> to vector<2x16x64xbf16>
      %83 = vector.shape_cast %71 : vector<32x64xf32> to vector<2x16x64xf32>
      %84 = arith.truncf %83 : vector<2x16x64xf32> to vector<2x16x64xbf16>
      %85 = vector.shape_cast %78 : vector<32x64xf32> to vector<2x16x64xf32>
      %86 = arith.truncf %85 : vector<2x16x64xf32> to vector<2x16x64xbf16>
      "tpu.trace_start"() <{level = 10 : i32, message = "bqd,bkd->bqk"}> : () -> ()
      %cst_53 = arith.constant dense<0.000000e+00> : vector<2x16x16xf32>
      %87 = tpu.matmul %82, %84, %cst_53 {dimension_numbers = #tpu.dot_dimension_numbers<[2], [2], [1], [1], [0, 0, 0, 1, 1, 1], [0], [0]>} : vector<2x16x64xbf16>, vector<2x16x64xbf16>, vector<2x16x16xf32> -> vector<2x16x16xf32>
      "tpu.trace_stop"() : () -> ()
      %cst_54 = arith.constant dense<0xFF800000> : vector<2x16xf32>
      %88 = vector.multi_reduction <maximumf>, %87, %cst_54 [2] : vector<2x16x16xf32> to vector<2x16xf32>
      %89 = vector.shape_cast %88 : vector<2x16xf32> to vector<2x16x1xf32>
      %90 = vector.broadcast %89 : vector<2x16x1xf32> to vector<2x16x16xf32>
      %91 = arith.subf %87, %90 : vector<2x16x16xf32>
      %92 = math.exp %91 : vector<2x16x16xf32>
      %cst_55 = arith.constant dense<0.000000e+00> : vector<2x16xf32>
      %93 = vector.multi_reduction <add>, %92, %cst_55 [2] : vector<2x16x16xf32> to vector<2x16xf32>
      %94 = vector.shape_cast %93 : vector<2x16xf32> to vector<2x16x1xf32>
      %95 = tpu.reciprocal %94 {approx = true} : vector<2x16x1xf32> -> vector<2x16x1xf32>
      %96 = vector.broadcast %95 : vector<2x16x1xf32> to vector<2x16x16xf32>
      %97 = arith.mulf %92, %96 : vector<2x16x16xf32>
      %98 = arith.truncf %97 : vector<2x16x16xf32> to vector<2x16x16xbf16>
      "tpu.trace_start"() <{level = 10 : i32, message = "bqk,bkd->bqd"}> : () -> ()
      %cst_56 = arith.constant dense<0.000000e+00> : vector<2x16x64xf32>
      %99 = tpu.matmul %98, %86, %cst_56 {dimension_numbers = #tpu.dot_dimension_numbers<[2], [1], [1], [2], [0, 0, 0, 1, 1, 2], [0], [0]>} : vector<2x16x16xbf16>, vector<2x16x64xbf16>, vector<2x16x64xf32> -> vector<2x16x64xf32>
      "tpu.trace_stop"() : () -> ()
      %100 = vector.shape_cast %99 : vector<2x16x64xf32> to vector<32x64xf32>
      %101 = arith.truncf %100 : vector<32x64xf32> to vector<32x64xbf16>
      %c0_57 = arith.constant 0 : index
      %c0_58 = arith.constant 0 : index
      %c0_59 = arith.constant 0 : index
      %102 = vector.load %arg10[%c0_57, %c0_58, %c0_59] : memref<4x64x128xbf16, #tpu.memory_space<vmem>>, vector<1x64x128xbf16>
      %103 = vector.shape_cast %102 : vector<1x64x128xbf16> to vector<64x128xbf16>
      %cst_60 = arith.constant dense<0.000000e+00> : vector<32x128xf32>
      %104 = tpu.matmul %101, %103, %cst_60 {dimension_numbers = #tpu.dot_dimension_numbers<[1], [0], [0], [1], [0, 0, 1, 1], [], []>} : vector<32x64xbf16>, vector<64x128xbf16>, vector<32x128xf32> -> vector<32x128xf32>
      %105 = arith.addf %57, %104 : vector<32x128xf32>
      %c3 = arith.constant 3 : index
      %c0_61 = arith.constant 0 : index
      %c0_62 = arith.constant 0 : index
      %106 = vector.load %arg8[%c3, %c0_61, %c0_62] : memref<12x128x64xbf16, #tpu.memory_space<vmem>>, vector<1x128x64xbf16>
      %107 = vector.shape_cast %106 : vector<1x128x64xbf16> to vector<128x64xbf16>
      %cst_63 = arith.constant dense<0.000000e+00> : vector<32x64xf32>
      %108 = tpu.matmul %56, %107, %cst_63 {dimension_numbers = #tpu.dot_dimension_numbers<[1], [0], [0], [1], [0, 0, 1, 1], [], []>} : vector<32x128xbf16>, vector<128x64xbf16>, vector<32x64xf32> -> vector<32x64xf32>
      %c3_64 = arith.constant 3 : index
      %c0_65 = arith.constant 0 : index
      %c0_66 = arith.constant 0 : index
      %109 = vector.load %arg9[%c3_64, %c0_65, %c0_66] : memref<12x1x64xf32, #tpu.memory_space<vmem>>, vector<1x1x64xf32>
      %110 = vector.shape_cast %109 : vector<1x1x64xf32> to vector<1x64xf32>
      %111 = vector.broadcast %110 : vector<1x64xf32> to vector<32x64xf32>
      %112 = arith.addf %108, %111 : vector<32x64xf32>
      %c4 = arith.constant 4 : index
      %c0_67 = arith.constant 0 : index
      %c0_68 = arith.constant 0 : index
      %113 = vector.load %arg8[%c4, %c0_67, %c0_68] : memref<12x128x64xbf16, #tpu.memory_space<vmem>>, vector<1x128x64xbf16>
      %114 = vector.shape_cast %113 : vector<1x128x64xbf16> to vector<128x64xbf16>
      %cst_69 = arith.constant dense<0.000000e+00> : vector<32x64xf32>
      %115 = tpu.matmul %56, %114, %cst_69 {dimension_numbers = #tpu.dot_dimension_numbers<[1], [0], [0], [1], [0, 0, 1, 1], [], []>} : vector<32x128xbf16>, vector<128x64xbf16>, vector<32x64xf32> -> vector<32x64xf32>
      %c4_70 = arith.constant 4 : index
      %c0_71 = arith.constant 0 : index
      %c0_72 = arith.constant 0 : index
      %116 = vector.load %arg9[%c4_70, %c0_71, %c0_72] : memref<12x1x64xf32, #tpu.memory_space<vmem>>, vector<1x1x64xf32>
      %117 = vector.shape_cast %116 : vector<1x1x64xf32> to vector<1x64xf32>
      %118 = vector.broadcast %117 : vector<1x64xf32> to vector<32x64xf32>
      %119 = arith.addf %115, %118 : vector<32x64xf32>
      %c5 = arith.constant 5 : index
      %c0_73 = arith.constant 0 : index
      %c0_74 = arith.constant 0 : index
      %120 = vector.load %arg8[%c5, %c0_73, %c0_74] : memref<12x128x64xbf16, #tpu.memory_space<vmem>>, vector<1x128x64xbf16>
      %121 = vector.shape_cast %120 : vector<1x128x64xbf16> to vector<128x64xbf16>
      %cst_75 = arith.constant dense<0.000000e+00> : vector<32x64xf32>
      %122 = tpu.matmul %56, %121, %cst_75 {dimension_numbers = #tpu.dot_dimension_numbers<[1], [0], [0], [1], [0, 0, 1, 1], [], []>} : vector<32x128xbf16>, vector<128x64xbf16>, vector<32x64xf32> -> vector<32x64xf32>
      %c5_76 = arith.constant 5 : index
      %c0_77 = arith.constant 0 : index
      %c0_78 = arith.constant 0 : index
      %123 = vector.load %arg9[%c5_76, %c0_77, %c0_78] : memref<12x1x64xf32, #tpu.memory_space<vmem>>, vector<1x1x64xf32>
      %124 = vector.shape_cast %123 : vector<1x1x64xf32> to vector<1x64xf32>
      %125 = vector.broadcast %124 : vector<1x64xf32> to vector<32x64xf32>
      %126 = arith.addf %122, %125 : vector<32x64xf32>
      %cst_79 = arith.constant 1.250000e-01 : f32
      %127 = vector.broadcast %cst_79 : f32 to vector<32x64xf32>
      %128 = arith.mulf %112, %127 : vector<32x64xf32>
      %129 = vector.shape_cast %128 : vector<32x64xf32> to vector<2x16x64xf32>
      %130 = arith.truncf %129 : vector<2x16x64xf32> to vector<2x16x64xbf16>
      %131 = vector.shape_cast %119 : vector<32x64xf32> to vector<2x16x64xf32>
      %132 = arith.truncf %131 : vector<2x16x64xf32> to vector<2x16x64xbf16>
      %133 = vector.shape_cast %126 : vector<32x64xf32> to vector<2x16x64xf32>
      %134 = arith.truncf %133 : vector<2x16x64xf32> to vector<2x16x64xbf16>
      "tpu.trace_start"() <{level = 10 : i32, message = "bqd,bkd->bqk"}> : () -> ()
      %cst_80 = arith.constant dense<0.000000e+00> : vector<2x16x16xf32>
      %135 = tpu.matmul %130, %132, %cst_80 {dimension_numbers = #tpu.dot_dimension_numbers<[2], [2], [1], [1], [0, 0, 0, 1, 1, 1], [0], [0]>} : vector<2x16x64xbf16>, vector<2x16x64xbf16>, vector<2x16x16xf32> -> vector<2x16x16xf32>
      "tpu.trace_stop"() : () -> ()
      %cst_81 = arith.constant dense<0xFF800000> : vector<2x16xf32>
      %136 = vector.multi_reduction <maximumf>, %135, %cst_81 [2] : vector<2x16x16xf32> to vector<2x16xf32>
      %137 = vector.shape_cast %136 : vector<2x16xf32> to vector<2x16x1xf32>
      %138 = vector.broadcast %137 : vector<2x16x1xf32> to vector<2x16x16xf32>
      %139 = arith.subf %135, %138 : vector<2x16x16xf32>
      %140 = math.exp %139 : vector<2x16x16xf32>
      %cst_82 = arith.constant dense<0.000000e+00> : vector<2x16xf32>
      %141 = vector.multi_reduction <add>, %140, %cst_82 [2] : vector<2x16x16xf32> to vector<2x16xf32>
      %142 = vector.shape_cast %141 : vector<2x16xf32> to vector<2x16x1xf32>
      %143 = tpu.reciprocal %142 {approx = true} : vector<2x16x1xf32> -> vector<2x16x1xf32>
      %144 = vector.broadcast %143 : vector<2x16x1xf32> to vector<2x16x16xf32>
      %145 = arith.mulf %140, %144 : vector<2x16x16xf32>
      %146 = arith.truncf %145 : vector<2x16x16xf32> to vector<2x16x16xbf16>
      "tpu.trace_start"() <{level = 10 : i32, message = "bqk,bkd->bqd"}> : () -> ()
      %cst_83 = arith.constant dense<0.000000e+00> : vector<2x16x64xf32>
      %147 = tpu.matmul %146, %134, %cst_83 {dimension_numbers = #tpu.dot_dimension_numbers<[2], [1], [1], [2], [0, 0, 0, 1, 1, 2], [0], [0]>} : vector<2x16x16xbf16>, vector<2x16x64xbf16>, vector<2x16x64xf32> -> vector<2x16x64xf32>
      "tpu.trace_stop"() : () -> ()
      %148 = vector.shape_cast %147 : vector<2x16x64xf32> to vector<32x64xf32>
      %149 = arith.truncf %148 : vector<32x64xf32> to vector<32x64xbf16>
      %c1_84 = arith.constant 1 : index
      %c0_85 = arith.constant 0 : index
      %c0_86 = arith.constant 0 : index
      %150 = vector.load %arg10[%c1_84, %c0_85, %c0_86] : memref<4x64x128xbf16, #tpu.memory_space<vmem>>, vector<1x64x128xbf16>
      %151 = vector.shape_cast %150 : vector<1x64x128xbf16> to vector<64x128xbf16>
      %cst_87 = arith.constant dense<0.000000e+00> : vector<32x128xf32>
      %152 = tpu.matmul %149, %151, %cst_87 {dimension_numbers = #tpu.dot_dimension_numbers<[1], [0], [0], [1], [0, 0, 1, 1], [], []>} : vector<32x64xbf16>, vector<64x128xbf16>, vector<32x128xf32> -> vector<32x128xf32>
      %153 = arith.addf %105, %152 : vector<32x128xf32>
      %154 = arith.addf %29, %153 : vector<32x128xf32>
      %c0_88 = arith.constant 0 : index
      %c0_89 = arith.constant 0 : index
      %c0_90 = arith.constant 0 : index
      %155 = vector.load %arg11[%c0_88, %c0_89, %c0_90] : memref<2x1x128xf32, #tpu.memory_space<vmem>>, vector<1x1x128xf32>
      %156 = vector.shape_cast %155 : vector<1x1x128xf32> to vector<1x128xf32>
      %157 = vector.broadcast %156 : vector<1x128xf32> to vector<32x128xf32>
      %158 = arith.addf %154, %157 : vector<32x128xf32>
      %c0_91 = arith.constant 0 : index
      %c0_92 = arith.constant 0 : index
      %c0_93 = arith.constant 0 : index
      %159 = vector.load %arg12[%c0_91, %c0_92, %c0_93] : memref<2x1x128xf32, #tpu.memory_space<vmem>>, vector<1x1x128xf32>
      %160 = vector.shape_cast %159 : vector<1x1x128xf32> to vector<1x128xf32>
      %c0_94 = arith.constant 0 : index
      %c0_95 = arith.constant 0 : index
      %c0_96 = arith.constant 0 : index
      %161 = vector.load %arg13[%c0_94, %c0_95, %c0_96] : memref<2x1x128xf32, #tpu.memory_space<vmem>>, vector<1x1x128xf32>
      %162 = vector.shape_cast %161 : vector<1x1x128xf32> to vector<1x128xf32>
      %cst_97 = arith.constant dense<0.000000e+00> : vector<32xf32>
      %163 = vector.multi_reduction <add>, %158, %cst_97 [1] : vector<32x128xf32> to vector<32xf32>
      %164 = vector.shape_cast %163 : vector<32xf32> to vector<32x1xf32>
      %cst_98 = arith.constant 1.280000e+02 : f32
      %165 = vector.broadcast %cst_98 : f32 to vector<32x1xf32>
      %166 = arith.divf %164, %165 : vector<32x1xf32>
      %167 = vector.broadcast %166 : vector<32x1xf32> to vector<32x128xf32>
      %168 = arith.subf %158, %167 : vector<32x128xf32>
      %169 = arith.mulf %168, %168 : vector<32x128xf32>
      %cst_99 = arith.constant dense<0.000000e+00> : vector<32xf32>
      %170 = vector.multi_reduction <add>, %169, %cst_99 [1] : vector<32x128xf32> to vector<32xf32>
      %171 = vector.shape_cast %170 : vector<32xf32> to vector<32x1xf32>
      %cst_100 = arith.constant 1.280000e+02 : f32
      %172 = vector.broadcast %cst_100 : f32 to vector<32x1xf32>
      %173 = arith.divf %171, %172 : vector<32x1xf32>
      %174 = vector.broadcast %166 : vector<32x1xf32> to vector<32x128xf32>
      %175 = arith.subf %158, %174 : vector<32x128xf32>
      %cst_101 = arith.constant 9.99999974E-6 : f32
      %176 = vector.broadcast %cst_101 : f32 to vector<32x1xf32>
      %177 = arith.addf %173, %176 : vector<32x1xf32>
      %178 = math.rsqrt %177 : vector<32x1xf32>
      %179 = vector.broadcast %178 : vector<32x1xf32> to vector<32x128xf32>
      %180 = arith.mulf %175, %179 : vector<32x128xf32>
      %181 = vector.broadcast %160 : vector<1x128xf32> to vector<32x128xf32>
      %182 = arith.mulf %180, %181 : vector<32x128xf32>
      %183 = vector.broadcast %162 : vector<1x128xf32> to vector<32x128xf32>
      %184 = arith.addf %182, %183 : vector<32x128xf32>
      %185 = arith.truncf %184 : vector<32x128xf32> to vector<32x128xbf16>
      %c0_102 = arith.constant 0 : index
      %c0_103 = arith.constant 0 : index
      %c0_104 = arith.constant 0 : index
      %186 = vector.load %arg14[%c0_102, %c0_103, %c0_104] : memref<2x128x512xbf16, #tpu.memory_space<vmem>>, vector<1x128x512xbf16>
      %187 = vector.shape_cast %186 : vector<1x128x512xbf16> to vector<128x512xbf16>
      %cst_105 = arith.constant dense<0.000000e+00> : vector<32x512xf32>
      %188 = tpu.matmul %185, %187, %cst_105 {dimension_numbers = #tpu.dot_dimension_numbers<[1], [0], [0], [1], [0, 0, 1, 1], [], []>} : vector<32x128xbf16>, vector<128x512xbf16>, vector<32x512xf32> -> vector<32x512xf32>
      %c0_106 = arith.constant 0 : index
      %c0_107 = arith.constant 0 : index
      %c0_108 = arith.constant 0 : index
      %189 = vector.load %arg15[%c0_106, %c0_107, %c0_108] : memref<2x1x512xf32, #tpu.memory_space<vmem>>, vector<1x1x512xf32>
      %190 = vector.shape_cast %189 : vector<1x1x512xf32> to vector<1x512xf32>
      %191 = vector.broadcast %190 : vector<1x512xf32> to vector<32x512xf32>
      %192 = arith.addf %188, %191 : vector<32x512xf32>
      %193 = arith.mulf %192, %192 : vector<32x512xf32>
      %194 = arith.mulf %192, %193 : vector<32x512xf32>
      %cst_109 = arith.constant 4.471500e-02 : f32
      %195 = vector.broadcast %cst_109 : f32 to vector<32x512xf32>
      %196 = arith.mulf %195, %194 : vector<32x512xf32>
      %197 = arith.addf %192, %196 : vector<32x512xf32>
      %cst_110 = arith.constant 0.797884583 : f32
      %198 = vector.broadcast %cst_110 : f32 to vector<32x512xf32>
      %199 = arith.mulf %198, %197 : vector<32x512xf32>
      %200 = math.tanh %199 : vector<32x512xf32>
      %cst_111 = arith.constant 1.000000e+00 : f32
      %201 = vector.broadcast %cst_111 : f32 to vector<32x512xf32>
      %202 = arith.addf %201, %200 : vector<32x512xf32>
      %cst_112 = arith.constant 5.000000e-01 : f32
      %203 = vector.broadcast %cst_112 : f32 to vector<32x512xf32>
      %204 = arith.mulf %203, %202 : vector<32x512xf32>
      %205 = arith.mulf %192, %204 : vector<32x512xf32>
      %206 = arith.truncf %205 : vector<32x512xf32> to vector<32x512xbf16>
      %c0_113 = arith.constant 0 : index
      %c0_114 = arith.constant 0 : index
      %c0_115 = arith.constant 0 : index
      %207 = vector.load %arg16[%c0_113, %c0_114, %c0_115] : memref<2x512x128xbf16, #tpu.memory_space<vmem>>, vector<1x512x128xbf16>
      %208 = vector.shape_cast %207 : vector<1x512x128xbf16> to vector<512x128xbf16>
      %cst_116 = arith.constant dense<0.000000e+00> : vector<32x128xf32>
      %209 = tpu.matmul %206, %208, %cst_116 {dimension_numbers = #tpu.dot_dimension_numbers<[1], [0], [0], [1], [0, 0, 1, 1], [], []>} : vector<32x512xbf16>, vector<512x128xbf16>, vector<32x128xf32> -> vector<32x128xf32>
      %c0_117 = arith.constant 0 : index
      %c0_118 = arith.constant 0 : index
      %c0_119 = arith.constant 0 : index
      %210 = vector.load %arg17[%c0_117, %c0_118, %c0_119] : memref<2x1x128xf32, #tpu.memory_space<vmem>>, vector<1x1x128xf32>
      %211 = vector.shape_cast %210 : vector<1x1x128xf32> to vector<1x128xf32>
      %212 = vector.broadcast %211 : vector<1x128xf32> to vector<32x128xf32>
      %213 = arith.addf %209, %212 : vector<32x128xf32>
      %214 = arith.addf %158, %213 : vector<32x128xf32>
      %c1_120 = arith.constant 1 : index
      %c0_121 = arith.constant 0 : index
      %c0_122 = arith.constant 0 : index
      %215 = vector.load %arg6[%c1_120, %c0_121, %c0_122] : memref<2x1x128xf32, #tpu.memory_space<vmem>>, vector<1x1x128xf32>
      %216 = vector.shape_cast %215 : vector<1x1x128xf32> to vector<1x128xf32>
      %c1_123 = arith.constant 1 : index
      %c0_124 = arith.constant 0 : index
      %c0_125 = arith.constant 0 : index
      %217 = vector.load %arg7[%c1_123, %c0_124, %c0_125] : memref<2x1x128xf32, #tpu.memory_space<vmem>>, vector<1x1x128xf32>
      %218 = vector.shape_cast %217 : vector<1x1x128xf32> to vector<1x128xf32>
      %cst_126 = arith.constant dense<0.000000e+00> : vector<32xf32>
      %219 = vector.multi_reduction <add>, %214, %cst_126 [1] : vector<32x128xf32> to vector<32xf32>
      %220 = vector.shape_cast %219 : vector<32xf32> to vector<32x1xf32>
      %cst_127 = arith.constant 1.280000e+02 : f32
      %221 = vector.broadcast %cst_127 : f32 to vector<32x1xf32>
      %222 = arith.divf %220, %221 : vector<32x1xf32>
      %223 = vector.broadcast %222 : vector<32x1xf32> to vector<32x128xf32>
      %224 = arith.subf %214, %223 : vector<32x128xf32>
      %225 = arith.mulf %224, %224 : vector<32x128xf32>
      %cst_128 = arith.constant dense<0.000000e+00> : vector<32xf32>
      %226 = vector.multi_reduction <add>, %225, %cst_128 [1] : vector<32x128xf32> to vector<32xf32>
      %227 = vector.shape_cast %226 : vector<32xf32> to vector<32x1xf32>
      %cst_129 = arith.constant 1.280000e+02 : f32
      %228 = vector.broadcast %cst_129 : f32 to vector<32x1xf32>
      %229 = arith.divf %227, %228 : vector<32x1xf32>
      %230 = vector.broadcast %222 : vector<32x1xf32> to vector<32x128xf32>
      %231 = arith.subf %214, %230 : vector<32x128xf32>
      %cst_130 = arith.constant 9.99999974E-6 : f32
      %232 = vector.broadcast %cst_130 : f32 to vector<32x1xf32>
      %233 = arith.addf %229, %232 : vector<32x1xf32>
      %234 = math.rsqrt %233 : vector<32x1xf32>
      %235 = vector.broadcast %234 : vector<32x1xf32> to vector<32x128xf32>
      %236 = arith.mulf %231, %235 : vector<32x128xf32>
      %237 = vector.broadcast %216 : vector<1x128xf32> to vector<32x128xf32>
      %238 = arith.mulf %236, %237 : vector<32x128xf32>
      %239 = vector.broadcast %218 : vector<1x128xf32> to vector<32x128xf32>
      %240 = arith.addf %238, %239 : vector<32x128xf32>
      %241 = arith.truncf %240 : vector<32x128xf32> to vector<32x128xbf16>
      %cst_131 = arith.constant 0.000000e+00 : f32
      %242 = vector.broadcast %cst_131 : f32 to vector<32x128xf32>
      %c6 = arith.constant 6 : index
      %c0_132 = arith.constant 0 : index
      %c0_133 = arith.constant 0 : index
      %243 = vector.load %arg8[%c6, %c0_132, %c0_133] : memref<12x128x64xbf16, #tpu.memory_space<vmem>>, vector<1x128x64xbf16>
      %244 = vector.shape_cast %243 : vector<1x128x64xbf16> to vector<128x64xbf16>
      %cst_134 = arith.constant dense<0.000000e+00> : vector<32x64xf32>
      %245 = tpu.matmul %241, %244, %cst_134 {dimension_numbers = #tpu.dot_dimension_numbers<[1], [0], [0], [1], [0, 0, 1, 1], [], []>} : vector<32x128xbf16>, vector<128x64xbf16>, vector<32x64xf32> -> vector<32x64xf32>
      %c6_135 = arith.constant 6 : index
      %c0_136 = arith.constant 0 : index
      %c0_137 = arith.constant 0 : index
      %246 = vector.load %arg9[%c6_135, %c0_136, %c0_137] : memref<12x1x64xf32, #tpu.memory_space<vmem>>, vector<1x1x64xf32>
      %247 = vector.shape_cast %246 : vector<1x1x64xf32> to vector<1x64xf32>
      %248 = vector.broadcast %247 : vector<1x64xf32> to vector<32x64xf32>
      %249 = arith.addf %245, %248 : vector<32x64xf32>
      %c7 = arith.constant 7 : index
      %c0_138 = arith.constant 0 : index
      %c0_139 = arith.constant 0 : index
      %250 = vector.load %arg8[%c7, %c0_138, %c0_139] : memref<12x128x64xbf16, #tpu.memory_space<vmem>>, vector<1x128x64xbf16>
      %251 = vector.shape_cast %250 : vector<1x128x64xbf16> to vector<128x64xbf16>
      %cst_140 = arith.constant dense<0.000000e+00> : vector<32x64xf32>
      %252 = tpu.matmul %241, %251, %cst_140 {dimension_numbers = #tpu.dot_dimension_numbers<[1], [0], [0], [1], [0, 0, 1, 1], [], []>} : vector<32x128xbf16>, vector<128x64xbf16>, vector<32x64xf32> -> vector<32x64xf32>
      %c7_141 = arith.constant 7 : index
      %c0_142 = arith.constant 0 : index
      %c0_143 = arith.constant 0 : index
      %253 = vector.load %arg9[%c7_141, %c0_142, %c0_143] : memref<12x1x64xf32, #tpu.memory_space<vmem>>, vector<1x1x64xf32>
      %254 = vector.shape_cast %253 : vector<1x1x64xf32> to vector<1x64xf32>
      %255 = vector.broadcast %254 : vector<1x64xf32> to vector<32x64xf32>
      %256 = arith.addf %252, %255 : vector<32x64xf32>
      %c8 = arith.constant 8 : index
      %c0_144 = arith.constant 0 : index
      %c0_145 = arith.constant 0 : index
      %257 = vector.load %arg8[%c8, %c0_144, %c0_145] : memref<12x128x64xbf16, #tpu.memory_space<vmem>>, vector<1x128x64xbf16>
      %258 = vector.shape_cast %257 : vector<1x128x64xbf16> to vector<128x64xbf16>
      %cst_146 = arith.constant dense<0.000000e+00> : vector<32x64xf32>
      %259 = tpu.matmul %241, %258, %cst_146 {dimension_numbers = #tpu.dot_dimension_numbers<[1], [0], [0], [1], [0, 0, 1, 1], [], []>} : vector<32x128xbf16>, vector<128x64xbf16>, vector<32x64xf32> -> vector<32x64xf32>
      %c8_147 = arith.constant 8 : index
      %c0_148 = arith.constant 0 : index
      %c0_149 = arith.constant 0 : index
      %260 = vector.load %arg9[%c8_147, %c0_148, %c0_149] : memref<12x1x64xf32, #tpu.memory_space<vmem>>, vector<1x1x64xf32>
      %261 = vector.shape_cast %260 : vector<1x1x64xf32> to vector<1x64xf32>
      %262 = vector.broadcast %261 : vector<1x64xf32> to vector<32x64xf32>
      %263 = arith.addf %259, %262 : vector<32x64xf32>
      %cst_150 = arith.constant 1.250000e-01 : f32
      %264 = vector.broadcast %cst_150 : f32 to vector<32x64xf32>
      %265 = arith.mulf %249, %264 : vector<32x64xf32>
      %266 = vector.shape_cast %265 : vector<32x64xf32> to vector<2x16x64xf32>
      %267 = arith.truncf %266 : vector<2x16x64xf32> to vector<2x16x64xbf16>
      %268 = vector.shape_cast %256 : vector<32x64xf32> to vector<2x16x64xf32>
      %269 = arith.truncf %268 : vector<2x16x64xf32> to vector<2x16x64xbf16>
      %270 = vector.shape_cast %263 : vector<32x64xf32> to vector<2x16x64xf32>
      %271 = arith.truncf %270 : vector<2x16x64xf32> to vector<2x16x64xbf16>
      "tpu.trace_start"() <{level = 10 : i32, message = "bqd,bkd->bqk"}> : () -> ()
      %cst_151 = arith.constant dense<0.000000e+00> : vector<2x16x16xf32>
      %272 = tpu.matmul %267, %269, %cst_151 {dimension_numbers = #tpu.dot_dimension_numbers<[2], [2], [1], [1], [0, 0, 0, 1, 1, 1], [0], [0]>} : vector<2x16x64xbf16>, vector<2x16x64xbf16>, vector<2x16x16xf32> -> vector<2x16x16xf32>
      "tpu.trace_stop"() : () -> ()
      %cst_152 = arith.constant dense<0xFF800000> : vector<2x16xf32>
      %273 = vector.multi_reduction <maximumf>, %272, %cst_152 [2] : vector<2x16x16xf32> to vector<2x16xf32>
      %274 = vector.shape_cast %273 : vector<2x16xf32> to vector<2x16x1xf32>
      %275 = vector.broadcast %274 : vector<2x16x1xf32> to vector<2x16x16xf32>
      %276 = arith.subf %272, %275 : vector<2x16x16xf32>
      %277 = math.exp %276 : vector<2x16x16xf32>
      %cst_153 = arith.constant dense<0.000000e+00> : vector<2x16xf32>
      %278 = vector.multi_reduction <add>, %277, %cst_153 [2] : vector<2x16x16xf32> to vector<2x16xf32>
      %279 = vector.shape_cast %278 : vector<2x16xf32> to vector<2x16x1xf32>
      %280 = tpu.reciprocal %279 {approx = true} : vector<2x16x1xf32> -> vector<2x16x1xf32>
      %281 = vector.broadcast %280 : vector<2x16x1xf32> to vector<2x16x16xf32>
      %282 = arith.mulf %277, %281 : vector<2x16x16xf32>
      %283 = arith.truncf %282 : vector<2x16x16xf32> to vector<2x16x16xbf16>
      "tpu.trace_start"() <{level = 10 : i32, message = "bqk,bkd->bqd"}> : () -> ()
      %cst_154 = arith.constant dense<0.000000e+00> : vector<2x16x64xf32>
      %284 = tpu.matmul %283, %271, %cst_154 {dimension_numbers = #tpu.dot_dimension_numbers<[2], [1], [1], [2], [0, 0, 0, 1, 1, 2], [0], [0]>} : vector<2x16x16xbf16>, vector<2x16x64xbf16>, vector<2x16x64xf32> -> vector<2x16x64xf32>
      "tpu.trace_stop"() : () -> ()
      %285 = vector.shape_cast %284 : vector<2x16x64xf32> to vector<32x64xf32>
      %286 = arith.truncf %285 : vector<32x64xf32> to vector<32x64xbf16>
      %c2_155 = arith.constant 2 : index
      %c0_156 = arith.constant 0 : index
      %c0_157 = arith.constant 0 : index
      %287 = vector.load %arg10[%c2_155, %c0_156, %c0_157] : memref<4x64x128xbf16, #tpu.memory_space<vmem>>, vector<1x64x128xbf16>
      %288 = vector.shape_cast %287 : vector<1x64x128xbf16> to vector<64x128xbf16>
      %cst_158 = arith.constant dense<0.000000e+00> : vector<32x128xf32>
      %289 = tpu.matmul %286, %288, %cst_158 {dimension_numbers = #tpu.dot_dimension_numbers<[1], [0], [0], [1], [0, 0, 1, 1], [], []>} : vector<32x64xbf16>, vector<64x128xbf16>, vector<32x128xf32> -> vector<32x128xf32>
      %290 = arith.addf %242, %289 : vector<32x128xf32>
      %c9 = arith.constant 9 : index
      %c0_159 = arith.constant 0 : index
      %c0_160 = arith.constant 0 : index
      %291 = vector.load %arg8[%c9, %c0_159, %c0_160] : memref<12x128x64xbf16, #tpu.memory_space<vmem>>, vector<1x128x64xbf16>
      %292 = vector.shape_cast %291 : vector<1x128x64xbf16> to vector<128x64xbf16>
      %cst_161 = arith.constant dense<0.000000e+00> : vector<32x64xf32>
      %293 = tpu.matmul %241, %292, %cst_161 {dimension_numbers = #tpu.dot_dimension_numbers<[1], [0], [0], [1], [0, 0, 1, 1], [], []>} : vector<32x128xbf16>, vector<128x64xbf16>, vector<32x64xf32> -> vector<32x64xf32>
      %c9_162 = arith.constant 9 : index
      %c0_163 = arith.constant 0 : index
      %c0_164 = arith.constant 0 : index
      %294 = vector.load %arg9[%c9_162, %c0_163, %c0_164] : memref<12x1x64xf32, #tpu.memory_space<vmem>>, vector<1x1x64xf32>
      %295 = vector.shape_cast %294 : vector<1x1x64xf32> to vector<1x64xf32>
      %296 = vector.broadcast %295 : vector<1x64xf32> to vector<32x64xf32>
      %297 = arith.addf %293, %296 : vector<32x64xf32>
      %c10 = arith.constant 10 : index
      %c0_165 = arith.constant 0 : index
      %c0_166 = arith.constant 0 : index
      %298 = vector.load %arg8[%c10, %c0_165, %c0_166] : memref<12x128x64xbf16, #tpu.memory_space<vmem>>, vector<1x128x64xbf16>
      %299 = vector.shape_cast %298 : vector<1x128x64xbf16> to vector<128x64xbf16>
      %cst_167 = arith.constant dense<0.000000e+00> : vector<32x64xf32>
      %300 = tpu.matmul %241, %299, %cst_167 {dimension_numbers = #tpu.dot_dimension_numbers<[1], [0], [0], [1], [0, 0, 1, 1], [], []>} : vector<32x128xbf16>, vector<128x64xbf16>, vector<32x64xf32> -> vector<32x64xf32>
      %c10_168 = arith.constant 10 : index
      %c0_169 = arith.constant 0 : index
      %c0_170 = arith.constant 0 : index
      %301 = vector.load %arg9[%c10_168, %c0_169, %c0_170] : memref<12x1x64xf32, #tpu.memory_space<vmem>>, vector<1x1x64xf32>
      %302 = vector.shape_cast %301 : vector<1x1x64xf32> to vector<1x64xf32>
      %303 = vector.broadcast %302 : vector<1x64xf32> to vector<32x64xf32>
      %304 = arith.addf %300, %303 : vector<32x64xf32>
      %c11 = arith.constant 11 : index
      %c0_171 = arith.constant 0 : index
      %c0_172 = arith.constant 0 : index
      %305 = vector.load %arg8[%c11, %c0_171, %c0_172] : memref<12x128x64xbf16, #tpu.memory_space<vmem>>, vector<1x128x64xbf16>
      %306 = vector.shape_cast %305 : vector<1x128x64xbf16> to vector<128x64xbf16>
      %cst_173 = arith.constant dense<0.000000e+00> : vector<32x64xf32>
      %307 = tpu.matmul %241, %306, %cst_173 {dimension_numbers = #tpu.dot_dimension_numbers<[1], [0], [0], [1], [0, 0, 1, 1], [], []>} : vector<32x128xbf16>, vector<128x64xbf16>, vector<32x64xf32> -> vector<32x64xf32>
      %c11_174 = arith.constant 11 : index
      %c0_175 = arith.constant 0 : index
      %c0_176 = arith.constant 0 : index
      %308 = vector.load %arg9[%c11_174, %c0_175, %c0_176] : memref<12x1x64xf32, #tpu.memory_space<vmem>>, vector<1x1x64xf32>
      %309 = vector.shape_cast %308 : vector<1x1x64xf32> to vector<1x64xf32>
      %310 = vector.broadcast %309 : vector<1x64xf32> to vector<32x64xf32>
      %311 = arith.addf %307, %310 : vector<32x64xf32>
      %cst_177 = arith.constant 1.250000e-01 : f32
      %312 = vector.broadcast %cst_177 : f32 to vector<32x64xf32>
      %313 = arith.mulf %297, %312 : vector<32x64xf32>
      %314 = vector.shape_cast %313 : vector<32x64xf32> to vector<2x16x64xf32>
      %315 = arith.truncf %314 : vector<2x16x64xf32> to vector<2x16x64xbf16>
      %316 = vector.shape_cast %304 : vector<32x64xf32> to vector<2x16x64xf32>
      %317 = arith.truncf %316 : vector<2x16x64xf32> to vector<2x16x64xbf16>
      %318 = vector.shape_cast %311 : vector<32x64xf32> to vector<2x16x64xf32>
      %319 = arith.truncf %318 : vector<2x16x64xf32> to vector<2x16x64xbf16>
      "tpu.trace_start"() <{level = 10 : i32, message = "bqd,bkd->bqk"}> : () -> ()
      %cst_178 = arith.constant dense<0.000000e+00> : vector<2x16x16xf32>
      %320 = tpu.matmul %315, %317, %cst_178 {dimension_numbers = #tpu.dot_dimension_numbers<[2], [2], [1], [1], [0, 0, 0, 1, 1, 1], [0], [0]>} : vector<2x16x64xbf16>, vector<2x16x64xbf16>, vector<2x16x16xf32> -> vector<2x16x16xf32>
      "tpu.trace_stop"() : () -> ()
      %cst_179 = arith.constant dense<0xFF800000> : vector<2x16xf32>
      %321 = vector.multi_reduction <maximumf>, %320, %cst_179 [2] : vector<2x16x16xf32> to vector<2x16xf32>
      %322 = vector.shape_cast %321 : vector<2x16xf32> to vector<2x16x1xf32>
      %323 = vector.broadcast %322 : vector<2x16x1xf32> to vector<2x16x16xf32>
      %324 = arith.subf %320, %323 : vector<2x16x16xf32>
      %325 = math.exp %324 : vector<2x16x16xf32>
      %cst_180 = arith.constant dense<0.000000e+00> : vector<2x16xf32>
      %326 = vector.multi_reduction <add>, %325, %cst_180 [2] : vector<2x16x16xf32> to vector<2x16xf32>
      %327 = vector.shape_cast %326 : vector<2x16xf32> to vector<2x16x1xf32>
      %328 = tpu.reciprocal %327 {approx = true} : vector<2x16x1xf32> -> vector<2x16x1xf32>
      %329 = vector.broadcast %328 : vector<2x16x1xf32> to vector<2x16x16xf32>
      %330 = arith.mulf %325, %329 : vector<2x16x16xf32>
      %331 = arith.truncf %330 : vector<2x16x16xf32> to vector<2x16x16xbf16>
      "tpu.trace_start"() <{level = 10 : i32, message = "bqk,bkd->bqd"}> : () -> ()
      %cst_181 = arith.constant dense<0.000000e+00> : vector<2x16x64xf32>
      %332 = tpu.matmul %331, %319, %cst_181 {dimension_numbers = #tpu.dot_dimension_numbers<[2], [1], [1], [2], [0, 0, 0, 1, 1, 2], [0], [0]>} : vector<2x16x16xbf16>, vector<2x16x64xbf16>, vector<2x16x64xf32> -> vector<2x16x64xf32>
      "tpu.trace_stop"() : () -> ()
      %333 = vector.shape_cast %332 : vector<2x16x64xf32> to vector<32x64xf32>
      %334 = arith.truncf %333 : vector<32x64xf32> to vector<32x64xbf16>
      %c3_182 = arith.constant 3 : index
      %c0_183 = arith.constant 0 : index
      %c0_184 = arith.constant 0 : index
      %335 = vector.load %arg10[%c3_182, %c0_183, %c0_184] : memref<4x64x128xbf16, #tpu.memory_space<vmem>>, vector<1x64x128xbf16>
      %336 = vector.shape_cast %335 : vector<1x64x128xbf16> to vector<64x128xbf16>
      %cst_185 = arith.constant dense<0.000000e+00> : vector<32x128xf32>
      %337 = tpu.matmul %334, %336, %cst_185 {dimension_numbers = #tpu.dot_dimension_numbers<[1], [0], [0], [1], [0, 0, 1, 1], [], []>} : vector<32x64xbf16>, vector<64x128xbf16>, vector<32x128xf32> -> vector<32x128xf32>
      %338 = arith.addf %290, %337 : vector<32x128xf32>
      %339 = arith.addf %214, %338 : vector<32x128xf32>
      %c1_186 = arith.constant 1 : index
      %c0_187 = arith.constant 0 : index
      %c0_188 = arith.constant 0 : index
      %340 = vector.load %arg11[%c1_186, %c0_187, %c0_188] : memref<2x1x128xf32, #tpu.memory_space<vmem>>, vector<1x1x128xf32>
      %341 = vector.shape_cast %340 : vector<1x1x128xf32> to vector<1x128xf32>
      %342 = vector.broadcast %341 : vector<1x128xf32> to vector<32x128xf32>
      %343 = arith.addf %339, %342 : vector<32x128xf32>
      %c1_189 = arith.constant 1 : index
      %c0_190 = arith.constant 0 : index
      %c0_191 = arith.constant 0 : index
      %344 = vector.load %arg12[%c1_189, %c0_190, %c0_191] : memref<2x1x128xf32, #tpu.memory_space<vmem>>, vector<1x1x128xf32>
      %345 = vector.shape_cast %344 : vector<1x1x128xf32> to vector<1x128xf32>
      %c1_192 = arith.constant 1 : index
      %c0_193 = arith.constant 0 : index
      %c0_194 = arith.constant 0 : index
      %346 = vector.load %arg13[%c1_192, %c0_193, %c0_194] : memref<2x1x128xf32, #tpu.memory_space<vmem>>, vector<1x1x128xf32>
      %347 = vector.shape_cast %346 : vector<1x1x128xf32> to vector<1x128xf32>
      %cst_195 = arith.constant dense<0.000000e+00> : vector<32xf32>
      %348 = vector.multi_reduction <add>, %343, %cst_195 [1] : vector<32x128xf32> to vector<32xf32>
      %349 = vector.shape_cast %348 : vector<32xf32> to vector<32x1xf32>
      %cst_196 = arith.constant 1.280000e+02 : f32
      %350 = vector.broadcast %cst_196 : f32 to vector<32x1xf32>
      %351 = arith.divf %349, %350 : vector<32x1xf32>
      %352 = vector.broadcast %351 : vector<32x1xf32> to vector<32x128xf32>
      %353 = arith.subf %343, %352 : vector<32x128xf32>
      %354 = arith.mulf %353, %353 : vector<32x128xf32>
      %cst_197 = arith.constant dense<0.000000e+00> : vector<32xf32>
      %355 = vector.multi_reduction <add>, %354, %cst_197 [1] : vector<32x128xf32> to vector<32xf32>
      %356 = vector.shape_cast %355 : vector<32xf32> to vector<32x1xf32>
      %cst_198 = arith.constant 1.280000e+02 : f32
      %357 = vector.broadcast %cst_198 : f32 to vector<32x1xf32>
      %358 = arith.divf %356, %357 : vector<32x1xf32>
      %359 = vector.broadcast %351 : vector<32x1xf32> to vector<32x128xf32>
      %360 = arith.subf %343, %359 : vector<32x128xf32>
      %cst_199 = arith.constant 9.99999974E-6 : f32
      %361 = vector.broadcast %cst_199 : f32 to vector<32x1xf32>
      %362 = arith.addf %358, %361 : vector<32x1xf32>
      %363 = math.rsqrt %362 : vector<32x1xf32>
      %364 = vector.broadcast %363 : vector<32x1xf32> to vector<32x128xf32>
      %365 = arith.mulf %360, %364 : vector<32x128xf32>
      %366 = vector.broadcast %345 : vector<1x128xf32> to vector<32x128xf32>
      %367 = arith.mulf %365, %366 : vector<32x128xf32>
      %368 = vector.broadcast %347 : vector<1x128xf32> to vector<32x128xf32>
      %369 = arith.addf %367, %368 : vector<32x128xf32>
      %370 = arith.truncf %369 : vector<32x128xf32> to vector<32x128xbf16>
      %c1_200 = arith.constant 1 : index
      %c0_201 = arith.constant 0 : index
      %c0_202 = arith.constant 0 : index
      %371 = vector.load %arg14[%c1_200, %c0_201, %c0_202] : memref<2x128x512xbf16, #tpu.memory_space<vmem>>, vector<1x128x512xbf16>
      %372 = vector.shape_cast %371 : vector<1x128x512xbf16> to vector<128x512xbf16>
      %cst_203 = arith.constant dense<0.000000e+00> : vector<32x512xf32>
      %373 = tpu.matmul %370, %372, %cst_203 {dimension_numbers = #tpu.dot_dimension_numbers<[1], [0], [0], [1], [0, 0, 1, 1], [], []>} : vector<32x128xbf16>, vector<128x512xbf16>, vector<32x512xf32> -> vector<32x512xf32>
      %c1_204 = arith.constant 1 : index
      %c0_205 = arith.constant 0 : index
      %c0_206 = arith.constant 0 : index
      %374 = vector.load %arg15[%c1_204, %c0_205, %c0_206] : memref<2x1x512xf32, #tpu.memory_space<vmem>>, vector<1x1x512xf32>
      %375 = vector.shape_cast %374 : vector<1x1x512xf32> to vector<1x512xf32>
      %376 = vector.broadcast %375 : vector<1x512xf32> to vector<32x512xf32>
      %377 = arith.addf %373, %376 : vector<32x512xf32>
      %378 = arith.mulf %377, %377 : vector<32x512xf32>
      %379 = arith.mulf %377, %378 : vector<32x512xf32>
      %cst_207 = arith.constant 4.471500e-02 : f32
      %380 = vector.broadcast %cst_207 : f32 to vector<32x512xf32>
      %381 = arith.mulf %380, %379 : vector<32x512xf32>
      %382 = arith.addf %377, %381 : vector<32x512xf32>
      %cst_208 = arith.constant 0.797884583 : f32
      %383 = vector.broadcast %cst_208 : f32 to vector<32x512xf32>
      %384 = arith.mulf %383, %382 : vector<32x512xf32>
      %385 = math.tanh %384 : vector<32x512xf32>
      %cst_209 = arith.constant 1.000000e+00 : f32
      %386 = vector.broadcast %cst_209 : f32 to vector<32x512xf32>
      %387 = arith.addf %386, %385 : vector<32x512xf32>
      %cst_210 = arith.constant 5.000000e-01 : f32
      %388 = vector.broadcast %cst_210 : f32 to vector<32x512xf32>
      %389 = arith.mulf %388, %387 : vector<32x512xf32>
      %390 = arith.mulf %377, %389 : vector<32x512xf32>
      %391 = arith.truncf %390 : vector<32x512xf32> to vector<32x512xbf16>
      %c1_211 = arith.constant 1 : index
      %c0_212 = arith.constant 0 : index
      %c0_213 = arith.constant 0 : index
      %392 = vector.load %arg16[%c1_211, %c0_212, %c0_213] : memref<2x512x128xbf16, #tpu.memory_space<vmem>>, vector<1x512x128xbf16>
      %393 = vector.shape_cast %392 : vector<1x512x128xbf16> to vector<512x128xbf16>
      %cst_214 = arith.constant dense<0.000000e+00> : vector<32x128xf32>
      %394 = tpu.matmul %391, %393, %cst_214 {dimension_numbers = #tpu.dot_dimension_numbers<[1], [0], [0], [1], [0, 0, 1, 1], [], []>} : vector<32x512xbf16>, vector<512x128xbf16>, vector<32x128xf32> -> vector<32x128xf32>
      %c1_215 = arith.constant 1 : index
      %c0_216 = arith.constant 0 : index
      %c0_217 = arith.constant 0 : index
      %395 = vector.load %arg17[%c1_215, %c0_216, %c0_217] : memref<2x1x128xf32, #tpu.memory_space<vmem>>, vector<1x1x128xf32>
      %396 = vector.shape_cast %395 : vector<1x1x128xf32> to vector<1x128xf32>
      %397 = vector.broadcast %396 : vector<1x128xf32> to vector<32x128xf32>
      %398 = arith.addf %394, %397 : vector<32x128xf32>
      %399 = arith.addf %343, %398 : vector<32x128xf32>
      %400 = vector.shape_cast %399 : vector<32x128xf32> to vector<2x16x128xf32>
      %401 = vector.extract_strided_slice %400 {offsets = [0, 0, 0], sizes = [2, 1, 128], strides = [1, 1, 1]} : vector<2x16x128xf32> to vector<2x1x128xf32>
      %402 = vector.shape_cast %401 : vector<2x1x128xf32> to vector<2x128xf32>
      %c0_218 = arith.constant 0 : index
      %c0_219 = arith.constant 0 : index
      %403 = vector.load %arg18[%c0_218, %c0_219] : memref<1x128xf32, #tpu.memory_space<vmem>>, vector<1x128xf32>
      %c0_220 = arith.constant 0 : index
      %c0_221 = arith.constant 0 : index
      %404 = vector.load %arg19[%c0_220, %c0_221] : memref<1x128xf32, #tpu.memory_space<vmem>>, vector<1x128xf32>
      %cst_222 = arith.constant dense<0.000000e+00> : vector<2xf32>
      %405 = vector.multi_reduction <add>, %402, %cst_222 [1] : vector<2x128xf32> to vector<2xf32>
      %406 = vector.shape_cast %405 : vector<2xf32> to vector<2x1xf32>
      %cst_223 = arith.constant 1.280000e+02 : f32
      %407 = vector.broadcast %cst_223 : f32 to vector<2x1xf32>
      %408 = arith.divf %406, %407 : vector<2x1xf32>
      %409 = vector.broadcast %408 : vector<2x1xf32> to vector<2x128xf32>
      %410 = arith.subf %402, %409 : vector<2x128xf32>
      %411 = arith.mulf %410, %410 : vector<2x128xf32>
      %cst_224 = arith.constant dense<0.000000e+00> : vector<2xf32>
      %412 = vector.multi_reduction <add>, %411, %cst_224 [1] : vector<2x128xf32> to vector<2xf32>
      %413 = vector.shape_cast %412 : vector<2xf32> to vector<2x1xf32>
      %cst_225 = arith.constant 1.280000e+02 : f32
      %414 = vector.broadcast %cst_225 : f32 to vector<2x1xf32>
      %415 = arith.divf %413, %414 : vector<2x1xf32>
      %416 = vector.broadcast %408 : vector<2x1xf32> to vector<2x128xf32>
      %417 = arith.subf %402, %416 : vector<2x128xf32>
      %cst_226 = arith.constant 9.99999974E-6 : f32
      %418 = vector.broadcast %cst_226 : f32 to vector<2x1xf32>
      %419 = arith.addf %415, %418 : vector<2x1xf32>
      %420 = math.rsqrt %419 : vector<2x1xf32>
      %421 = vector.broadcast %420 : vector<2x1xf32> to vector<2x128xf32>
      %422 = arith.mulf %417, %421 : vector<2x128xf32>
      %423 = vector.broadcast %403 : vector<1x128xf32> to vector<2x128xf32>
      %424 = arith.mulf %422, %423 : vector<2x128xf32>
      %425 = vector.broadcast %404 : vector<1x128xf32> to vector<2x128xf32>
      %426 = arith.addf %424, %425 : vector<2x128xf32>
      %427 = arith.truncf %426 : vector<2x128xf32> to vector<2x128xbf16>
      %c0_227 = arith.constant 0 : index
      %c0_228 = arith.constant 0 : index
      %428 = vector.load %arg23[%c0_227, %c0_228] : memref<2x128xbf16, #tpu.memory_space<vmem>>, vector<2x128xbf16>
      tpu.vector_store %arg23[%c0_227, %c0_228], %427 {strides = array<i32>} : memref<2x128xbf16, #tpu.memory_space<vmem>>, vector<2x128xbf16>,
    } else {
    }
    %c0 = arith.constant 0 : index
    %c0_1 = arith.constant 0 : index
    %3 = vector.load %arg23[%c0, %c0_1] : memref<2x128xbf16, #tpu.memory_space<vmem>>, vector<2x128xbf16>
    %c0_2 = arith.constant 0 : index
    %c0_3 = arith.constant 0 : index
    %4 = vector.load %arg20[%c0_2, %c0_3] : memref<128x512xbf16, #tpu.memory_space<vmem>>, vector<128x512xbf16>
    %cst = arith.constant dense<0.000000e+00> : vector<2x512xf32>
    %5 = tpu.matmul %3, %4, %cst {dimension_numbers = #tpu.dot_dimension_numbers<[1], [0], [0], [1], [0, 0, 1, 1], [], []>} : vector<2x128xbf16>, vector<128x512xbf16>, vector<2x512xf32> -> vector<2x512xf32>
    %c0_4 = arith.constant 0 : index
    %c0_5 = arith.constant 0 : index
    %6 = vector.load %arg21[%c0_4, %c0_5] : memref<1x512xf32, #tpu.memory_space<vmem>>, vector<1x512xf32>
    %7 = vector.broadcast %6 : vector<1x512xf32> to vector<2x512xf32>
    %8 = arith.addf %5, %7 : vector<2x512xf32>
    %c0_6 = arith.constant 0 : index
    %c0_7 = arith.constant 0 : index
    %9 = vector.load %arg22[%c0_6, %c0_7] : memref<2x512xf32, #tpu.memory_space<vmem>>, vector<2x512xf32>
    tpu.vector_store %arg22[%c0_6, %c0_7], %8 {strides = array<i32>} : memref<2x512xf32, #tpu.memory_space<vmem>>, vector<2x512xf32>,
    return
  }
  func.func @transform_0(%arg0: i32) -> (i32, i32) {
    %c0_i32 = arith.constant 0 : i32
    %c0_i32_0 = arith.constant 0 : i32
    %c0_i32_1 = arith.constant 0 : i32
    return %c0_i32, %c0_i32_0 : i32, i32
  }
  func.func @transform_1(%arg0: i32) -> (i32, i32) {
    %c0_i32 = arith.constant 0 : i32
    %c0_i32_0 = arith.constant 0 : i32
    %c0_i32_1 = arith.constant 0 : i32
    return %c0_i32, %c0_i32_0 : i32, i32
  }
  func.func @transform_2(%arg0: i32) -> (i32, i32) {
    %c0_i32 = arith.constant 0 : i32
    %c0_i32_0 = arith.constant 0 : i32
    %c0_i32_1 = arith.constant 0 : i32
    return %c0_i32, %c0_i32_0 : i32, i32
  }
  func.func @transform_3(%arg0: i32) -> (i32, i32) {
    %c0_i32 = arith.constant 0 : i32
    %c0_i32_0 = arith.constant 0 : i32
    %c0_i32_1 = arith.constant 0 : i32
    return %c0_i32, %c0_i32_0 : i32, i32
  }
  func.func @transform_4(%arg0: i32) -> (i32, i32) {
    %c0_i32 = arith.constant 0 : i32
    %c0_i32_0 = arith.constant 0 : i32
    %c0_i32_1 = arith.constant 0 : i32
    return %c0_i32, %c0_i32_0 : i32, i32
  }
  func.func @transform_5(%arg0: i32) -> (i32, i32, i32) {
    %c0_i32 = arith.constant 0 : i32
    %c0_i32_0 = arith.constant 0 : i32
    %c0_i32_1 = arith.constant 0 : i32
    %c0_i32_2 = arith.constant 0 : i32
    return %c0_i32, %c0_i32_0, %c0_i32_1 : i32, i32, i32
  }
  func.func @transform_6(%arg0: i32) -> (i32, i32, i32) {
    %c0_i32 = arith.constant 0 : i32
    %c0_i32_0 = arith.constant 0 : i32
    %c0_i32_1 = arith.constant 0 : i32
    %c0_i32_2 = arith.constant 0 : i32
    return %c0_i32, %c0_i32_0, %c0_i32_1 : i32, i32, i32
  }
  func.func @transform_7(%arg0: i32) -> (i32, i32, i32) {
    %c0_i32 = arith.constant 0 : i32
    %c0_i32_0 = arith.constant 0 : i32
    %c0_i32_1 = arith.constant 0 : i32
    %c0_i32_2 = arith.constant 0 : i32
    return %c0_i32, %c0_i32_0, %c0_i32_1 : i32, i32, i32
  }
  func.func @transform_8(%arg0: i32) -> (i32, i32, i32) {
    %c0_i32 = arith.constant 0 : i32
    %c0_i32_0 = arith.constant 0 : i32
    %c0_i32_1 = arith.constant 0 : i32
    %c0_i32_2 = arith.constant 0 : i32
    return %c0_i32, %c0_i32_0, %c0_i32_1 : i32, i32, i32
  }
  func.func @transform_9(%arg0: i32) -> (i32, i32, i32) {
    %c0_i32 = arith.constant 0 : i32
    %c0_i32_0 = arith.constant 0 : i32
    %c0_i32_1 = arith.constant 0 : i32
    %c0_i32_2 = arith.constant 0 : i32
    return %c0_i32, %c0_i32_0, %c0_i32_1 : i32, i32, i32
  }
  func.func @transform_10(%arg0: i32) -> (i32, i32, i32) {
    %c0_i32 = arith.constant 0 : i32
    %c0_i32_0 = arith.constant 0 : i32
    %c0_i32_1 = arith.constant 0 : i32
    %c0_i32_2 = arith.constant 0 : i32
    return %c0_i32, %c0_i32_0, %c0_i32_1 : i32, i32, i32
  }
  func.func @transform_11(%arg0: i32) -> (i32, i32, i32) {
    %c0_i32 = arith.constant 0 : i32
    %c0_i32_0 = arith.constant 0 : i32
    %c0_i32_1 = arith.constant 0 : i32
    %c0_i32_2 = arith.constant 0 : i32
    return %c0_i32, %c0_i32_0, %c0_i32_1 : i32, i32, i32
  }
  func.func @transform_12(%arg0: i32) -> (i32, i32, i32) {
    %c0_i32 = arith.constant 0 : i32
    %c0_i32_0 = arith.constant 0 : i32
    %c0_i32_1 = arith.constant 0 : i32
    %c0_i32_2 = arith.constant 0 : i32
    return %c0_i32, %c0_i32_0, %c0_i32_1 : i32, i32, i32
  }
  func.func @transform_13(%arg0: i32) -> (i32, i32, i32) {
    %c0_i32 = arith.constant 0 : i32
    %c0_i32_0 = arith.constant 0 : i32
    %c0_i32_1 = arith.constant 0 : i32
    %c0_i32_2 = arith.constant 0 : i32
    return %c0_i32, %c0_i32_0, %c0_i32_1 : i32, i32, i32
  }
  func.func @transform_14(%arg0: i32) -> (i32, i32, i32) {
    %c0_i32 = arith.constant 0 : i32
    %c0_i32_0 = arith.constant 0 : i32
    %c0_i32_1 = arith.constant 0 : i32
    %c0_i32_2 = arith.constant 0 : i32
    return %c0_i32, %c0_i32_0, %c0_i32_1 : i32, i32, i32
  }
  func.func @transform_15(%arg0: i32) -> (i32, i32, i32) {
    %c0_i32 = arith.constant 0 : i32
    %c0_i32_0 = arith.constant 0 : i32
    %c0_i32_1 = arith.constant 0 : i32
    %c0_i32_2 = arith.constant 0 : i32
    return %c0_i32, %c0_i32_0, %c0_i32_1 : i32, i32, i32
  }
  func.func @transform_16(%arg0: i32) -> (i32, i32, i32) {
    %c0_i32 = arith.constant 0 : i32
    %c0_i32_0 = arith.constant 0 : i32
    %c0_i32_1 = arith.constant 0 : i32
    %c0_i32_2 = arith.constant 0 : i32
    return %c0_i32, %c0_i32_0, %c0_i32_1 : i32, i32, i32
  }
  func.func @transform_17(%arg0: i32) -> (i32, i32) {
    %c0_i32 = arith.constant 0 : i32
    %c0_i32_0 = arith.constant 0 : i32
    %c0_i32_1 = arith.constant 0 : i32
    return %c0_i32, %c0_i32_0 : i32, i32
  }
  func.func @transform_18(%arg0: i32) -> (i32, i32) {
    %c0_i32 = arith.constant 0 : i32
    %c0_i32_0 = arith.constant 0 : i32
    %c0_i32_1 = arith.constant 0 : i32
    return %c0_i32, %c0_i32_0 : i32, i32
  }
  func.func @transform_19(%arg0: i32) -> (i32, i32) {
    %c0_i32 = arith.constant 0 : i32
    %c0_i32_0 = arith.constant 0 : i32
    return %c0_i32, %arg0 : i32, i32
  }
  func.func @transform_20(%arg0: i32) -> (i32, i32) {
    %c0_i32 = arith.constant 0 : i32
    %c0_i32_0 = arith.constant 0 : i32
    return %c0_i32, %arg0 : i32, i32
  }
  func.func @transform_21(%arg0: i32) -> (i32, i32) {
    %c0_i32 = arith.constant 0 : i32
    %c0_i32_0 = arith.constant 0 : i32
    return %c0_i32, %arg0 : i32, i32
  }
}

</mosaic_0001>

<llo_original>
// kernel: vision_tower_forward.1
$region0: #{vision_tower_forward.1}
  #allocation0 [shape = 'u32[]', space=smem, size = 0x4, offset = 0x4, fixed_abs, tag = 'smem constant byte address 0x4 - core index']
  #allocation1 [shape = 'u32[144,128]{1,0:T(1,128)}', space=vmem, size = 0x12000, scoped, tag = 'internal scratch']
  #allocation2 [shape = 'bf16[2,128]{1,0:T(2,128)(2,1)}', space=vmem, size = 0x200, scoped, tag = 'scratch operand']
  %s0 = inlined_call_operand.vmem [shape: f32[30,192], index: 0, kind: input, shape index: {}]
  %s1 = inlined_call_operand.vmem [shape: bf16[192,128], index: 1, kind: input, shape index: {}]
  %s2 = inlined_call_operand.vmem [shape: f32[1,128], index: 2, kind: input, shape index: {}]
  %s3 = inlined_call_operand.vmem [shape: f32[1,128], index: 3, kind: input, shape index: {}]
  %s4 = inlined_call_operand.vmem [shape: f32[16,128], index: 4, kind: input, shape index: {}]
  %s5 = inlined_call_operand.vmem [shape: f32[2,1,128], index: 5, kind: input, shape index: {}]
  %s6 = inlined_call_operand.vmem [shape: f32[2,1,128], index: 6, kind: input, shape index: {}]
  %s7 = inlined_call_operand.vmem [shape: bf16[12,128,64], index: 7, kind: input, shape index: {}]
  %s8 = inlined_call_operand.vmem [shape: f32[12,1,64], index: 8, kind: input, shape index: {}]
  %s9 = inlined_call_operand.vmem [shape: bf16[4,64,128], index: 9, kind: input, shape index: {}]
  %s10 = inlined_call_operand.vmem [shape: f32[2,1,128], index: 10, kind: input, shape index: {}]
  %s11 = inlined_call_operand.vmem [shape: f32[2,1,128], index: 11, kind: input, shape index: {}]
  %s12 = inlined_call_operand.vmem [shape: f32[2,1,128], index: 12, kind: input, shape index: {}]
  %s13 = inlined_call_operand.vmem [shape: bf16[2,128,512], index: 13, kind: input, shape index: {}]
  %s14 = inlined_call_operand.vmem [shape: f32[2,1,512], index: 14, kind: input, shape index: {}]
  %s15 = inlined_call_operand.vmem [shape: bf16[2,512,128], index: 15, kind: input, shape index: {}]
  %s16 = inlined_call_operand.vmem [shape: f32[2,1,128], index: 16, kind: input, shape index: {}]
  %s17 = inlined_call_operand.vmem [shape: f32[1,128], index: 17, kind: input, shape index: {}]
  %s18 = inlined_call_operand.vmem [shape: f32[1,128], index: 18, kind: input, shape index: {}]
  %s19 = inlined_call_operand.vmem [shape: bf16[128,4096], index: 19, kind: input, shape index: {}]
  %s20 = inlined_call_operand.vmem [shape: f32[1,4096], index: 20, kind: input, shape index: {}]
  %s21 = inlined_call_operand.hbm [shape: f32[2,4096], index: 21, kind: output, shape index: {}]
  %s22 = sld [smem:[#allocation0]]
  $region144: #{vision_tower_forward.1} parent=0
    _
  %s24 = ssub.s32 1, %s22
  %s25 = scalar_select 0, %s24, %s22
  $region1: #{vision_tower_forward.1} parent=0
    #allocation3 [shape = 'u8[262144]{0}', space=vmem, size = 0x40000, scoped, tag = 'input window, operand 19']
    #allocation4 [shape = 'u8[8192]{0}', space=vmem, size = 0x2000, scoped, tag = 'output window, operand 0']
    #allocation5 [shape = 's32[2]{0}', space=sflag, size = 0x8, scoped, tag = 'scoped memory for vision_tower_forward.1']
    %26 = vsyncpa [#allocation5], 0
    %s27 = scalar_lea.sflag [#allocation5], 1
    %28 = vsyncpa %s27, 0
    loop: start=0, step=1, limit=10
    $region2: #{vision_tower_forward.1} parent=1 // loop_pre_header
      _
    $region3: #{vision_tower_forward.1} parent=1 // loop_header
      %s30 = sphi 0, %s34
      %p31 = scmp.ge.s32.totalorder %s30, 10
      %s38 = sphi 0, %s38
      %s40 = sphi 0, %s38
      %s41 = sphi 0, %s40
      %s55 = sphi 0, %s41
      %s59 = sphi 0, %s59
      %s61 = sphi 0, %s59
      %s62 = sphi 0, %s61
      %s76 = sphi 0, %s62
      %s80 = sphi 0, %s80
      %s82 = sphi 0, %s80
      %s83 = sphi 0, %s82
      %s97 = sphi 0, %s83
      %s101 = sphi 0, %s101
      %s103 = sphi 0, %s101
      %s104 = sphi 0, %s103
      %s118 = sphi 0, %s104
      %s122 = sphi 0, %s122
      %s124 = sphi 0, %s122
      %s125 = sphi 0, %s124
      %s139 = sphi 0, %s125
      %s143 = sphi 0, %s143
      %s145 = sphi 0, %s143
      %s146 = sphi 0, %s145
      %s160 = sphi 0, %s146
      %s164 = sphi 0, %s164
      %s166 = sphi 0, %s164
      %s167 = sphi 0, %s166
      %s181 = sphi 0, %s167
      %s185 = sphi 0, %s185
      %s187 = sphi 0, %s185
      %s188 = sphi 0, %s187
      %s202 = sphi 0, %s188
      %s206 = sphi 0, %s206
      %s208 = sphi 0, %s206
      %s209 = sphi 0, %s208
      %s223 = sphi 0, %s209
      %s227 = sphi 0, %s227
      %s229 = sphi 0, %s227
      %s230 = sphi 0, %s229
      %s244 = sphi 0, %s230
      %s248 = sphi 0, %s248
      %s250 = sphi 0, %s248
      %s251 = sphi 0, %s250
      %s265 = sphi 0, %s251
      %s269 = sphi 0, %s269
      %s271 = sphi 0, %s269
      %s272 = sphi 0, %s271
      %s286 = sphi 0, %s272
      %s290 = sphi 0, %s290
      %s292 = sphi 0, %s290
      %s293 = sphi 0, %s292
      %s307 = sphi 0, %s293
      %s311 = sphi 0, %s311
      %s313 = sphi 0, %s311
      %s314 = sphi 0, %s313
      %s328 = sphi 0, %s314
      %s332 = sphi 0, %s332
      %s334 = sphi 0, %s332
      %s335 = sphi 0, %s334
      %s349 = sphi 0, %s335
      %s353 = sphi 0, %s353
      %s355 = sphi 0, %s353
      %s356 = sphi 0, %s355
      %s370 = sphi 0, %s356
      %s374 = sphi 0, %s374
      %s376 = sphi 0, %s374
      %s377 = sphi 0, %s376
      %s391 = sphi 0, %s377
      %s395 = sphi 0, %s395
      %s397 = sphi 0, %s395
      %s398 = sphi 0, %s397
      %s412 = sphi 0, %s398
      %s416 = sphi 0, %s416
      %s418 = sphi 0, %s416
      %s419 = sphi 0, %s418
      %s433 = sphi 0, %s419
      %s439 = sphi 0, %s441
      %s442 = sphi 0, %s439
      %s443 = sphi 0, %s442
      %s459 = sphi 0, %s443
      %s465 = sphi 0, %s467
      %s468 = sphi 0, %s465
      %s469 = sphi 0, %s468
      %s485 = sphi 0, %s469
      %s491 = sphi 0, %s493
      %s494 = sphi 0, %s491
      %s495 = sphi 0, %s494
      %s511 = sphi 0, %s495
    $region4: #{vision_tower_forward.1} parent=1 // loop_header_branch
      %33 = sbr.rel (%p31) target = $region8
    $region5: #{vision_tower_forward.1} parent=1 // loop_body
      %s35 = ssub.s32 %s30, 1
      %s36 = ssub.s32 %s30, 2
      %s37 = sadd.s32 %s30, 1
      %s39 = sadd.s32 %s38, 1
      %p42 = scmp.eq.s32.totalorder %s30, 7
      %p43 = scmp.ne.s32.totalorder %s38, %s40
      %p44 = scmp.eq.s32.totalorder %s30, 0
      %p45 = por %p43, %p44
      %p46 = scmp.ne.s32.totalorder %s38, %s40
      %p47 = scmp.eq.s32.totalorder %s35, 7
      %p48 = por %p46, %p47
      %p49 = scmp.ne.s32.totalorder %s40, %s41
      %p50 = scmp.eq.s32.totalorder %s35, 0
      %p51 = por %p49, %p50
      %p52 = scmp.ne.s32.totalorder %s40, %s41
      %p53 = scmp.eq.s32.totalorder %s36, 7
      %p54 = por %p52, %p53
      %p56 = scmp.ne.s32.totalorder %s41, %s55
      %p57 = scmp.eq.s32.totalorder %s36, 0
      %p58 = por %p56, %p57
      %s60 = sadd.s32 %s59, 1
      %p63 = scmp.eq.s32.totalorder %s30, 7
      %p64 = scmp.ne.s32.totalorder %s59, %s61
      %p65 = scmp.eq.s32.totalorder %s30, 0
      %p66 = por %p64, %p65
      %p67 = scmp.ne.s32.totalorder %s59, %s61
      %p68 = scmp.eq.s32.totalorder %s35, 7
      %p69 = por %p67, %p68
      %p70 = scmp.ne.s32.totalorder %s61, %s62
      %p71 = scmp.eq.s32.totalorder %s35, 0
      %p72 = por %p70, %p71
      %p73 = scmp.ne.s32.totalorder %s61, %s62
      %p74 = scmp.eq.s32.totalorder %s36, 7
      %p75 = por %p73, %p74
      %p77 = scmp.ne.s32.totalorder %s62, %s76
      %p78 = scmp.eq.s32.totalorder %s36, 0
      %p79 = por %p77, %p78
      %s81 = sadd.s32 %s80, 1
      %p84 = scmp.eq.s32.totalorder %s30, 7
      %p85 = scmp.ne.s32.totalorder %s80, %s82
      %p86 = scmp.eq.s32.totalorder %s30, 0
      %p87 = por %p85, %p86
      %p88 = scmp.ne.s32.totalorder %s80, %s82
      %p89 = scmp.eq.s32.totalorder %s35, 7
      %p90 = por %p88, %p89
      %p91 = scmp.ne.s32.totalorder %s82, %s83
      %p92 = scmp.eq.s32.totalorder %s35, 0
      %p93 = por %p91, %p92
      %p94 = scmp.ne.s32.totalorder %s82, %s83
      %p95 = scmp.eq.s32.totalorder %s36, 7
      %p96 = por %p94, %p95
      %p98 = scmp.ne.s32.totalorder %s83, %s97
      %p99 = scmp.eq.s32.totalorder %s36, 0
      %p100 = por %p98, %p99
      %s102 = sadd.s32 %s101, 1
      %p105 = scmp.eq.s32.totalorder %s30, 7
      %p106 = scmp.ne.s32.totalorder %s101, %s103
      %p107 = scmp.eq.s32.totalorder %s30, 0
      %p108 = por %p106, %p107
      %p109 = scmp.ne.s32.totalorder %s101, %s103
      %p110 = scmp.eq.s32.totalorder %s35, 7
      %p111 = por %p109, %p110
      %p112 = scmp.ne.s32.totalorder %s103, %s104
      %p113 = scmp.eq.s32.totalorder %s35, 0
      %p114 = por %p112, %p113
      %p115 = scmp.ne.s32.totalorder %s103, %s104
      %p116 = scmp.eq.s32.totalorder %s36, 7
      %p117 = por %p115, %p116
      %p119 = scmp.ne.s32.totalorder %s104, %s118
      %p120 = scmp.eq.s32.totalorder %s36, 0
      %p121 = por %p119, %p120
      %s123 = sadd.s32 %s122, 1
      %p126 = scmp.eq.s32.totalorder %s30, 7
      %p127 = scmp.ne.s32.totalorder %s122, %s124
      %p128 = scmp.eq.s32.totalorder %s30, 0
      %p129 = por %p127, %p128
      %p130 = scmp.ne.s32.totalorder %s122, %s124
      %p131 = scmp.eq.s32.totalorder %s35, 7
      %p132 = por %p130, %p131
      %p133 = scmp.ne.s32.totalorder %s124, %s125
      %p134 = scmp.eq.s32.totalorder %s35, 0
      %p135 = por %p133, %p134
      %p136 = scmp.ne.s32.totalorder %s124, %s125
      %p137 = scmp.eq.s32.totalorder %s36, 7
      %p138 = por %p136, %p137
      %p140 = scmp.ne.s32.totalorder %s125, %s139
      %p141 = scmp.eq.s32.totalorder %s36, 0
      %p142 = por %p140, %p141
      %s144 = sadd.s32 %s143, 1
      %p147 = scmp.eq.s32.totalorder %s30, 7
      %p148 = scmp.ne.s32.totalorder %s143, %s145
      %p149 = scmp.eq.s32.totalorder %s30, 0
      %p150 = por %p148, %p149
      %p151 = scmp.ne.s32.totalorder %s143, %s145
      %p152 = scmp.eq.s32.totalorder %s35, 7
      %p153 = por %p151, %p152
      %p154 = scmp.ne.s32.totalorder %s145, %s146
      %p155 = scmp.eq.s32.totalorder %s35, 0
      %p156 = por %p154, %p155
      %p157 = scmp.ne.s32.totalorder %s145, %s146
      %p158 = scmp.eq.s32.totalorder %s36, 7
      %p159 = por %p157, %p158
      %p161 = scmp.ne.s32.totalorder %s146, %s160
      %p162 = scmp.eq.s32.totalorder %s36, 0
      %p163 = por %p161, %p162
      %s165 = sadd.s32 %s164, 1
      %p168 = scmp.eq.s32.totalorder %s30, 7
      %p169 = scmp.ne.s32.totalorder %s164, %s166
      %p170 = scmp.eq.s32.totalorder %s30, 0
      %p171 = por %p169, %p170
      %p172 = scmp.ne.s32.totalorder %s164, %s166
      %p173 = scmp.eq.s32.totalorder %s35, 7
      %p174 = por %p172, %p173
      %p175 = scmp.ne.s32.totalorder %s166, %s167
      %p176 = scmp.eq.s32.totalorder %s35, 0
      %p177 = por %p175, %p176
      %p178 = scmp.ne.s32.totalorder %s166, %s167
      %p179 = scmp.eq.s32.totalorder %s36, 7
      %p180 = por %p178, %p179
      %p182 = scmp.ne.s32.totalorder %s167, %s181
      %p183 = scmp.eq.s32.totalorder %s36, 0
      %p184 = por %p182, %p183
      %s186 = sadd.s32 %s185, 1
      %p189 = scmp.eq.s32.totalorder %s30, 7
      %p190 = scmp.ne.s32.totalorder %s185, %s187
      %p191 = scmp.eq.s32.totalorder %s30, 0
      %p192 = por %p190, %p191
      %p193 = scmp.ne.s32.totalorder %s185, %s187
      %p194 = scmp.eq.s32.totalorder %s35, 7
      %p195 = por %p193, %p194
      %p196 = scmp.ne.s32.totalorder %s187, %s188
      %p197 = scmp.eq.s32.totalorder %s35, 0
      %p198 = por %p196, %p197
      %p199 = scmp.ne.s32.totalorder %s187, %s188
      %p200 = scmp.eq.s32.totalorder %s36, 7
      %p201 = por %p199, %p200
      %p203 = scmp.ne.s32.totalorder %s188, %s202
      %p204 = scmp.eq.s32.totalorder %s36, 0
      %p205 = por %p203, %p204
      %s207 = sadd.s32 %s206, 1
      %p210 = scmp.eq.s32.totalorder %s30, 7
      %p211 = scmp.ne.s32.totalorder %s206, %s208
      %p212 = scmp.eq.s32.totalorder %s30, 0
      %p213 = por %p211, %p212
      %p214 = scmp.ne.s32.totalorder %s206, %s208
      %p215 = scmp.eq.s32.totalorder %s35, 7
      %p216 = por %p214, %p215
      %p217 = scmp.ne.s32.totalorder %s208, %s209
      %p218 = scmp.eq.s32.totalorder %s35, 0
      %p219 = por %p217, %p218
      %p220 = scmp.ne.s32.totalorder %s208, %s209
      %p221 = scmp.eq.s32.totalorder %s36, 7
      %p222 = por %p220, %p221
      %p224 = scmp.ne.s32.totalorder %s209, %s223
      %p225 = scmp.eq.s32.totalorder %s36, 0
      %p226 = por %p224, %p225
      %s228 = sadd.s32 %s227, 1
      %p231 = scmp.eq.s32.totalorder %s30, 7
      %p232 = scmp.ne.s32.totalorder %s227, %s229
      %p233 = scmp.eq.s32.totalorder %s30, 0
      %p234 = por %p232, %p233
      %p235 = scmp.ne.s32.totalorder %s227, %s229
      %p236 = scmp.eq.s32.totalorder %s35, 7
      %p237 = por %p235, %p236
      %p238 = scmp.ne.s32.totalorder %s229, %s230
      %p239 = scmp.eq.s32.totalorder %s35, 0
      %p240 = por %p238, %p239
      %p241 = scmp.ne.s32.totalorder %s229, %s230
      %p242 = scmp.eq.s32.totalorder %s36, 7
      %p243 = por %p241, %p242
      %p245 = scmp.ne.s32.totalorder %s230, %s244
      %p246 = scmp.eq.s32.totalorder %s36, 0
      %p247 = por %p245, %p246
      %s249 = sadd.s32 %s248, 1
      %p252 = scmp.eq.s32.totalorder %s30, 7
      %p253 = scmp.ne.s32.totalorder %s248, %s250
      %p254 = scmp.eq.s32.totalorder %s30, 0
      %p255 = por %p253, %p254
      %p256 = scmp.ne.s32.totalorder %s248, %s250
      %p257 = scmp.eq.s32.totalorder %s35, 7
      %p258 = por %p256, %p257
      %p259 = scmp.ne.s32.totalorder %s250, %s251
      %p260 = scmp.eq.s32.totalorder %s35, 0
      %p261 = por %p259, %p260
      %p262 = scmp.ne.s32.totalorder %s250, %s251
      %p263 = scmp.eq.s32.totalorder %s36, 7
      %p264 = por %p262, %p263
      %p266 = scmp.ne.s32.totalorder %s251, %s265
      %p267 = scmp.eq.s32.totalorder %s36, 0
      %p268 = por %p266, %p267
      %s270 = sadd.s32 %s269, 1
      %p273 = scmp.eq.s32.totalorder %s30, 7
      %p274 = scmp.ne.s32.totalorder %s269, %s271
      %p275 = scmp.eq.s32.totalorder %s30, 0
      %p276 = por %p274, %p275
      %p277 = scmp.ne.s32.totalorder %s269, %s271
      %p278 = scmp.eq.s32.totalorder %s35, 7
      %p279 = por %p277, %p278
      %p280 = scmp.ne.s32.totalorder %s271, %s272
      %p281 = scmp.eq.s32.totalorder %s35, 0
      %p282 = por %p280, %p281
      %p283 = scmp.ne.s32.totalorder %s271, %s272
      %p284 = scmp.eq.s32.totalorder %s36, 7
      %p285 = por %p283, %p284
      %p287 = scmp.ne.s32.totalorder %s272, %s286
      %p288 = scmp.eq.s32.totalorder %s36, 0
      %p289 = por %p287, %p288
      %s291 = sadd.s32 %s290, 1
      %p294 = scmp.eq.s32.totalorder %s30, 7
      %p295 = scmp.ne.s32.totalorder %s290, %s292
      %p296 = scmp.eq.s32.totalorder %s30, 0
      %p297 = por %p295, %p296
      %p298 = scmp.ne.s32.totalorder %s290, %s292
      %p299 = scmp.eq.s32.totalorder %s35, 7
      %p300 = por %p298, %p299
      %p301 = scmp.ne.s32.totalorder %s292, %s293
      %p302 = scmp.eq.s32.totalorder %s35, 0
      %p303 = por %p301, %p302
      %p304 = scmp.ne.s32.totalorder %s292, %s293
      %p305 = scmp.eq.s32.totalorder %s36, 7
      %p306 = por %p304, %p305
      %p308 = scmp.ne.s32.totalorder %s293, %s307
      %p309 = scmp.eq.s32.totalorder %s36, 0
      %p310 = por %p308, %p309
      %s312 = sadd.s32 %s311, 1
      %p315 = scmp.eq.s32.totalorder %s30, 7
      %p316 = scmp.ne.s32.totalorder %s311, %s313
      %p317 = scmp.eq.s32.totalorder %s30, 0
      %p318 = por %p316, %p317
      %p319 = scmp.ne.s32.totalorder %s311, %s313
      %p320 = scmp.eq.s32.totalorder %s35, 7
      %p321 = por %p319, %p320
      %p322 = scmp.ne.s32.totalorder %s313, %s314
      %p323 = scmp.eq.s32.totalorder %s35, 0
      %p324 = por %p322, %p323
      %p325 = scmp.ne.s32.totalorder %s313, %s314
      %p326 = scmp.eq.s32.totalorder %s36, 7
      %p327 = por %p325, %p326
      %p329 = scmp.ne.s32.totalorder %s314, %s328
      %p330 = scmp.eq.s32.totalorder %s36, 0
      %p331 = por %p329, %p330
      %s333 = sadd.s32 %s332, 1
      %p336 = scmp.eq.s32.totalorder %s30, 7
      %p337 = scmp.ne.s32.totalorder %s332, %s334
      %p338 = scmp.eq.s32.totalorder %s30, 0
      %p339 = por %p337, %p338
      %p340 = scmp.ne.s32.totalorder %s332, %s334
      %p341 = scmp.eq.s32.totalorder %s35, 7
      %p342 = por %p340, %p341
      %p343 = scmp.ne.s32.totalorder %s334, %s335
      %p344 = scmp.eq.s32.totalorder %s35, 0
      %p345 = por %p343, %p344
      %p346 = scmp.ne.s32.totalorder %s334, %s335
      %p347 = scmp.eq.s32.totalorder %s36, 7
      %p348 = por %p346, %p347
      %p350 = scmp.ne.s32.totalorder %s335, %s349
      %p351 = scmp.eq.s32.totalorder %s36, 0
      %p352 = por %p350, %p351
      %s354 = sadd.s32 %s353, 1
      %p357 = scmp.eq.s32.totalorder %s30, 7
      %p358 = scmp.ne.s32.totalorder %s353, %s355
      %p359 = scmp.eq.s32.totalorder %s30, 0
      %p360 = por %p358, %p359
      %p361 = scmp.ne.s32.totalorder %s353, %s355
      %p362 = scmp.eq.s32.totalorder %s35, 7
      %p363 = por %p361, %p362
      %p364 = scmp.ne.s32.totalorder %s355, %s356
      %p365 = scmp.eq.s32.totalorder %s35, 0
      %p366 = por %p364, %p365
      %p367 = scmp.ne.s32.totalorder %s355, %s356
      %p368 = scmp.eq.s32.totalorder %s36, 7
      %p369 = por %p367, %p368
      %p371 = scmp.ne.s32.totalorder %s356, %s370
      %p372 = scmp.eq.s32.totalorder %s36, 0
      %p373 = por %p371, %p372
      %s375 = sadd.s32 %s374, 1
      %p378 = scmp.eq.s32.totalorder %s30, 7
      %p379 = scmp.ne.s32.totalorder %s374, %s376
      %p380 = scmp.eq.s32.totalorder %s30, 0
      %p381 = por %p379, %p380
      %p382 = scmp.ne.s32.totalorder %s374, %s376
      %p383 = scmp.eq.s32.totalorder %s35, 7
      %p384 = por %p382, %p383
      %p385 = scmp.ne.s32.totalorder %s376, %s377
      %p386 = scmp.eq.s32.totalorder %s35, 0
      %p387 = por %p385, %p386
      %p388 = scmp.ne.s32.totalorder %s376, %s377
      %p389 = scmp.eq.s32.totalorder %s36, 7
      %p390 = por %p388, %p389
      %p392 = scmp.ne.s32.totalorder %s377, %s391
      %p393 = scmp.eq.s32.totalorder %s36, 0
      %p394 = por %p392, %p393
      %s396 = sadd.s32 %s395, 1
      %p399 = scmp.eq.s32.totalorder %s30, 7
      %p400 = scmp.ne.s32.totalorder %s395, %s397
      %p401 = scmp.eq.s32.totalorder %s30, 0
      %p402 = por %p400, %p401
      %p403 = scmp.ne.s32.totalorder %s395, %s397
      %p404 = scmp.eq.s32.totalorder %s35, 7
      %p405 = por %p403, %p404
      %p406 = scmp.ne.s32.totalorder %s397, %s398
      %p407 = scmp.eq.s32.totalorder %s35, 0
      %p408 = por %p406, %p407
      %p409 = scmp.ne.s32.totalorder %s397, %s398
      %p410 = scmp.eq.s32.totalorder %s36, 7
      %p411 = por %p409, %p410
      %p413 = scmp.ne.s32.totalorder %s398, %s412
      %p414 = scmp.eq.s32.totalorder %s36, 0
      %p415 = por %p413, %p414
      %s417 = sadd.s32 %s416, 1
      %p420 = scmp.eq.s32.totalorder %s30, 7
      %p421 = scmp.ne.s32.totalorder %s416, %s418
      %p422 = scmp.eq.s32.totalorder %s30, 0
      %p423 = por %p421, %p422
      %p424 = scmp.ne.s32.totalorder %s416, %s418
      %p425 = scmp.eq.s32.totalorder %s35, 7
      %p426 = por %p424, %p425
      %p427 = scmp.ne.s32.totalorder %s418, %s419
      %p428 = scmp.eq.s32.totalorder %s35, 0
      %p429 = por %p427, %p428
      %p430 = scmp.ne.s32.totalorder %s418, %s419
      %p431 = scmp.eq.s32.totalorder %s36, 7
      %p432 = por %p430, %p431
      %p434 = scmp.ne.s32.totalorder %s419, %s433
      %p435 = scmp.eq.s32.totalorder %s36, 0
      %p436 = por %p434, %p435
      %s437 = ssub.s32 %s30, %s37
      %p438 = scmp.eq.s32.totalorder %s437, 0
      %s440 = sadd.s32 %s439, 1
      %s441 = scalar_select %p438, %s439, %s440
      %p444 = pneg %p438
      %p445 = scmp.eq.s32.totalorder %s30, 7
      %p446 = por %p444, %p445
      %p447 = scmp.ne.s32.totalorder %s439, %s442
      %p448 = scmp.eq.s32.totalorder %s30, 0
      %p449 = por %p447, %p448
      %p450 = scmp.ne.s32.totalorder %s439, %s442
      %p451 = scmp.eq.s32.totalorder %s35, 7
      %p452 = por %p450, %p451
      %p453 = scmp.ne.s32.totalorder %s442, %s443
      %p454 = scmp.eq.s32.totalorder %s35, 0
      %p455 = por %p453, %p454
      %p456 = scmp.ne.s32.totalorder %s442, %s443
      %p457 = scmp.eq.s32.totalorder %s36, 7
      %p458 = por %p456, %p457
      %p460 = scmp.ne.s32.totalorder %s443, %s459
      %p461 = scmp.eq.s32.totalorder %s36, 0
      %p462 = por %p460, %p461
      %s463 = ssub.s32 %s30, %s37
      %p464 = scmp.eq.s32.totalorder %s463, 0
      %s466 = sadd.s32 %s465, 1
      %s467 = scalar_select %p464, %s465, %s466
      %p470 = pneg %p464
      %p471 = scmp.eq.s32.totalorder %s30, 7
      %p472 = por %p470, %p471
      %p473 = scmp.ne.s32.totalorder %s465, %s468
      %p474 = scmp.eq.s32.totalorder %s30, 0
      %p475 = por %p473, %p474
      %p476 = scmp.ne.s32.totalorder %s465, %s468
      %p477 = scmp.eq.s32.totalorder %s35, 7
      %p478 = por %p476, %p477
      %p479 = scmp.ne.s32.totalorder %s468, %s469
      %p480 = scmp.eq.s32.totalorder %s35, 0
      %p481 = por %p479, %p480
      %p482 = scmp.ne.s32.totalorder %s468, %s469
      %p483 = scmp.eq.s32.totalorder %s36, 7
      %p484 = por %p482, %p483
      %p486 = scmp.ne.s32.totalorder %s469, %s485
      %p487 = scmp.eq.s32.totalorder %s36, 0
      %p488 = por %p486, %p487
      %s489 = ssub.s32 %s30, %s37
      %p490 = scmp.eq.s32.totalorder %s489, 0
      %s492 = sadd.s32 %s491, 1
      %s493 = scalar_select %p490, %s491, %s492
      %p496 = pneg %p490
      %p497 = scmp.eq.s32.totalorder %s30, 7
      %p498 = por %p496, %p497
      %p499 = scmp.ne.s32.totalorder %s491, %s494
      %p500 = scmp.eq.s32.totalorder %s30, 0
      %p501 = por %p499, %p500
      %p502 = scmp.ne.s32.totalorder %s491, %s494
      %p503 = scmp.eq.s32.totalorder %s35, 7
      %p504 = por %p502, %p503
      %p505 = scmp.ne.s32.totalorder %s494, %s495
      %p506 = scmp.eq.s32.totalorder %s35, 0
      %p507 = por %p505, %p506
      %p508 = scmp.ne.s32.totalorder %s494, %s495
      %p509 = scmp.eq.s32.totalorder %s36, 7
      %p510 = por %p508, %p509
      %p512 = scmp.ne.s32.totalorder %s495, %s511
      %p513 = scmp.eq.s32.totalorder %s36, 0
      %p514 = por %p512, %p513
      %p515 = scmp.le.s32.totalorder 1, %s30
      %p516 = scmp.lt.s32.totalorder %s30, 9
      %p517 = pnand %p515, %p516
      %p518 = pneg %p517
      // Predicated region
      $region9: #{vision_tower_forward.1} parent=5 // pred_check
        _
      $region10: #{vision_tower_forward.1} parent=5 // pred_check_branch
        %520 = sbr.rel (%p517) target = $region12
      $region11: #{vision_tower_forward.1} parent=5 // pred_region
        %s521 = ssub.s32 %s30, 1
        // Predicated region
        $region13: #{vision_tower_forward.1} parent=11 // pred_check
          %p522 = pneg %p51
        $region14: #{vision_tower_forward.1} parent=11 // pred_check_branch
          %524 = sbr.rel (%p522) target = $region16
        $region15: #{vision_tower_forward.1} parent=11 // pred_region
          _
        $region16: #{vision_tower_forward.1} parent=11 // pred_fallthru
          _
        // Predicated region
        $region17: #{vision_tower_forward.1} parent=11 // pred_check
          %p525 = pneg %p72
        $region18: #{vision_tower_forward.1} parent=11 // pred_check_branch
          %527 = sbr.rel (%p525) target = $region20
        $region19: #{vision_tower_forward.1} parent=11 // pred_region
          _
        $region20: #{vision_tower_forward.1} parent=11 // pred_fallthru
          _
        // Predicated region
        $region21: #{vision_tower_forward.1} parent=11 // pred_check
          %p528 = pneg %p93
        $region22: #{vision_tower_forward.1} parent=11 // pred_check_branch
          %530 = sbr.rel (%p528) target = $region24
        $region23: #{vision_tower_forward.1} parent=11 // pred_region
          _
        $region24: #{vision_tower_forward.1} parent=11 // pred_fallthru
          _
        // Predicated region
        $region25: #{vision_tower_forward.1} parent=11 // pred_check
          %p531 = pneg %p114
        $region26: #{vision_tower_forward.1} parent=11 // pred_check_branch
          %533 = sbr.rel (%p531) target = $region28
        $region27: #{vision_tower_forward.1} parent=11 // pred_region
          _
        $region28: #{vision_tower_forward.1} parent=11 // pred_fallthru
          _
        // Predicated region
        $region29: #{vision_tower_forward.1} parent=11 // pred_check
          %p534 = pneg %p135
        $region30: #{vision_tower_forward.1} parent=11 // pred_check_branch
          %536 = sbr.rel (%p534) target = $region32
        $region31: #{vision_tower_forward.1} parent=11 // pred_region
          _
        $region32: #{vision_tower_forward.1} parent=11 // pred_fallthru
          _
        // Predicated region
        $region33: #{vision_tower_forward.1} parent=11 // pred_check
          %p537 = pneg %p156
        $region34: #{vision_tower_forward.1} parent=11 // pred_check_branch
          %539 = sbr.rel (%p537) target = $region36
        $region35: #{vision_tower_forward.1} parent=11 // pred_region
          _
        $region36: #{vision_tower_forward.1} parent=11 // pred_fallthru
          _
        // Predicated region
        $region37: #{vision_tower_forward.1} parent=11 // pred_check
          %p540 = pneg %p177
        $region38: #{vision_tower_forward.1} parent=11 // pred_check_branch
          %542 = sbr.rel (%p540) target = $region40
        $region39: #{vision_tower_forward.1} parent=11 // pred_region
          _
        $region40: #{vision_tower_forward.1} parent=11 // pred_fallthru
          _
        // Predicated region
        $region41: #{vision_tower_forward.1} parent=11 // pred_check
          %p543 = pneg %p198
        $region42: #{vision_tower_forward.1} parent=11 // pred_check_branch
          %545 = sbr.rel (%p543) target = $region44
        $region43: #{vision_tower_forward.1} parent=11 // pred_region
          _
        $region44: #{vision_tower_forward.1} parent=11 // pred_fallthru
          _
        // Predicated region
        $region45: #{vision_tower_forward.1} parent=11 // pred_check
          %p546 = pneg %p219
        $region46: #{vision_tower_forward.1} parent=11 // pred_check_branch
          %548 = sbr.rel (%p546) target = $region48
        $region47: #{vision_tower_forward.1} parent=11 // pred_region
          _
        $region48: #{vision_tower_forward.1} parent=11 // pred_fallthru
          _
        // Predicated region
        $region49: #{vision_tower_forward.1} parent=11 // pred_check
          %p549 = pneg %p240
        $region50: #{vision_tower_forward.1} parent=11 // pred_check_branch
          %551 = sbr.rel (%p549) target = $region52
        $region51: #{vision_tower_forward.1} parent=11 // pred_region
          _
        $region52: #{vision_tower_forward.1} parent=11 // pred_fallthru
          _
        // Predicated region
        $region53: #{vision_tower_forward.1} parent=11 // pred_check
          %p552 = pneg %p261
        $region54: #{vision_tower_forward.1} parent=11 // pred_check_branch
          %554 = sbr.rel (%p552) target = $region56
        $region55: #{vision_tower_forward.1} parent=11 // pred_region
          _
        $region56: #{vision_tower_forward.1} parent=11 // pred_fallthru
          _
        // Predicated region
        $region57: #{vision_tower_forward.1} parent=11 // pred_check
          %p555 = pneg %p282
        $region58: #{vision_tower_forward.1} parent=11 // pred_check_branch
          %557 = sbr.rel (%p555) target = $region60
        $region59: #{vision_tower_forward.1} parent=11 // pred_region
          _
        $region60: #{vision_tower_forward.1} parent=11 // pred_fallthru
          _
        // Predicated region
        $region61: #{vision_tower_forward.1} parent=11 // pred_check
          %p558 = pneg %p303
        $region62: #{vision_tower_forward.1} parent=11 // pred_check_branch
          %560 = sbr.rel (%p558) target = $region64
        $region63: #{vision_tower_forward.1} parent=11 // pred_region
          _
        $region64: #{vision_tower_forward.1} parent=11 // pred_fallthru
          _
        // Predicated region
        $region65: #{vision_tower_forward.1} parent=11 // pred_check
          %p561 = pneg %p324
        $region66: #{vision_tower_forward.1} parent=11 // pred_check_branch
          %563 = sbr.rel (%p561) target = $region68
        $region67: #{vision_tower_forward.1} parent=11 // pred_region
          _
        $region68: #{vision_tower_forward.1} parent=11 // pred_fallthru
          _
        // Predicated region
        $region69: #{vision_tower_forward.1} parent=11 // pred_check
          %p564 = pneg %p345
        $region70: #{vision_tower_forward.1} parent=11 // pred_check_branch
          %566 = sbr.rel (%p564) target = $region72
        $region71: #{vision_tower_forward.1} parent=11 // pred_region
          _
        $region72: #{vision_tower_forward.1} parent=11 // pred_fallthru
          _
        // Predicated region
        $region73: #{vision_tower_forward.1} parent=11 // pred_check
          %p567 = pneg %p366
        $region74: #{vision_tower_forward.1} parent=11 // pred_check_branch
          %569 = sbr.rel (%p567) target = $region76
        $region75: #{vision_tower_forward.1} parent=11 // pred_region
          _
        $region76: #{vision_tower_forward.1} parent=11 // pred_fallthru
          _
        // Predicated region
        $region77: #{vision_tower_forward.1} parent=11 // pred_check
          %p570 = pneg %p387
        $region78: #{vision_tower_forward.1} parent=11 // pred_check_branch
          %572 = sbr.rel (%p570) target = $region80
        $region79: #{vision_tower_forward.1} parent=11 // pred_region
          _
        $region80: #{vision_tower_forward.1} parent=11 // pred_fallthru
          _
        // Predicated region
        $region81: #{vision_tower_forward.1} parent=11 // pred_check
          %p573 = pneg %p408
        $region82: #{vision_tower_forward.1} parent=11 // pred_check_branch
          %575 = sbr.rel (%p573) target = $region84
        $region83: #{vision_tower_forward.1} parent=11 // pred_region
          _
        $region84: #{vision_tower_forward.1} parent=11 // pred_fallthru
          _
        // Predicated region
        $region85: #{vision_tower_forward.1} parent=11 // pred_check
          %p576 = pneg %p429
        $region86: #{vision_tower_forward.1} parent=11 // pred_check_branch
          %578 = sbr.rel (%p576) target = $region88
        $region87: #{vision_tower_forward.1} parent=11 // pred_region
          _
        $region88: #{vision_tower_forward.1} parent=11 // pred_fallthru
          _
      $region12: #{vision_tower_forward.1} parent=5 // pred_fallthru
        _
      %p579 = scmp.lt.s32.totalorder %s30, 8
      // Predicated region
      $region89: #{vision_tower_forward.1} parent=5 // pred_check
        %p580 = pneg %p579
      $region90: #{vision_tower_forward.1} parent=5 // pred_check_branch
        %582 = sbr.rel (%p580) target = $region92
      $region91: #{vision_tower_forward.1} parent=5 // pred_region
        // Predicated region
        $region93: #{vision_tower_forward.1} parent=91 // pred_check
          %p583 = pneg %p449
        $region94: #{vision_tower_forward.1} parent=91 // pred_check_branch
          %585 = sbr.rel (%p583) target = $region96
        $region95: #{vision_tower_forward.1} parent=91 // pred_region
          %s586 = sand.u32 %s439, 1
          %s587 = sand.u32 %s439, 1
          %s588 = smul.addr %s587, 256
          %s589 = scalar_lea.vmem [#allocation3], %s588
          %s590 = smul.u32 4, %s30
          %s591 = smul.addr %s590, 4
          %s592 = scalar_lea.vmem %s19, %s591
          // Predicated region
          $region97: #{vision_tower_forward.1} parent=95 // pred_check
            _
          $region98: #{vision_tower_forward.1} parent=95 // pred_check_branch
            %594 = sbr.rel (0) target = $region100
          $region99: #{vision_tower_forward.1} parent=95 // pred_region
            // Predicated region
            $region101: #{vision_tower_forward.1} parent=99 // pred_check
              _
            $region102: #{vision_tower_forward.1} parent=99 // pred_check_branch
              %596 = sbr.rel (0) target = $region104
            $region103: #{vision_tower_forward.1} parent=99 // pred_region
              loop: start=0, step=1, limit=1
              $region105: #{vision_tower_forward.1} parent=103 // loop_pre_header
                _
              $region106: #{vision_tower_forward.1} parent=103 // loop_header
                %s598 = sphi 0, %s602
                %p599 = scmp.ge.s32.totalorder %s598, 1
                %s603 = sphi %s592, %s592
                %s604 = sphi %s589, %s589
              $region107: #{vision_tower_forward.1} parent=103 // loop_header_branch
                %601 = sbr.rel (%p599) target = $region111
              $region108: #{vision_tower_forward.1} parent=103 // loop_body
                %v605 = vld [vmem:[%s603] sm:$0xff]
                %606 = vst [vmem:[%s604] sm:$0xff] %v605
                %v607 = vld [vmem:[%s603 + $0x8] sm:$0xff]
                %608 = vst [vmem:[%s604 + $0x8] sm:$0xff] %v607
                %v609 = vld [vmem:[%s603 + $0x80] sm:$0xff]
                %610 = vst [vmem:[%s604 + $0x10] sm:$0xff] %v609
                %v611 = vld [vmem:[%s603 + $0x88] sm:$0xff]
                %612 = vst [vmem:[%s604 + $0x18] sm:$0xff] %v611
                %v613 = vld [vmem:[%s603 + $0x100] sm:$0xff]
                %614 = vst [vmem:[%s604 + $0x20] sm:$0xff] %v613
                %v615 = vld [vmem:[%s603 + $0x108] sm:$0xff]
                %616 = vst [vmem:[%s604 + $0x28] sm:$0xff] %v615
                %v617 = vld [vmem:[%s603 + $0x180] sm:$0xff]
                %618 = vst [vmem:[%s604 + $0x30] sm:$0xff] %v617
                %v619 = vld [vmem:[%s603 + $0x188] sm:$0xff]
                %620 = vst [vmem:[%s604 + $0x38] sm:$0xff] %v619
                %v621 = vld [vmem:[%s603 + $0x200] sm:$0xff]
                %622 = vst [vmem:[%s604 + $0x40] sm:$0xff] %v621
                %v623 = vld [vmem:[%s603 + $0x208] sm:$0xff]
                %624 = vst [vmem:[%s604 + $0x48] sm:$0xff] %v623
                %v625 = vld [vmem:[%s603 + $0x280] sm:$0xff]
                %626 = vst [vmem:[%s604 + $0x50] sm:$0xff] %v625
                %v627 = vld [vmem:[%s603 + $0x288] sm:$0xff]
                %628 = vst [vmem:[%s604 + $0x58] sm:$0xff] %v627
                %v629 = vld [vmem:[%s603 + $0x300] sm:$0xff]
                %630 = vst [vmem:[%s604 + $0x60] sm:$0xff] %v629
                %v631 = vld [vmem:[%s603 + $0x308] sm:$0xff]
                %632 = vst [vmem:[%s604 + $0x68] sm:$0xff] %v631
                %v633 = vld [vmem:[%s603 + $0x380] sm:$0xff]
                %634 = vst [vmem:[%s604 + $0x70] sm:$0xff] %v633
                %v635 = vld [vmem:[%s603 + $0x388] sm:$0xff]
                %636 = vst [vmem:[%s604 + $0x78] sm:$0xff] %v635
                %v637 = vld [vmem:[%s603 + $0x400] sm:$0xff]
                %638 = vst [vmem:[%s604 + $0x80] sm:$0xff] %v637
                %v639 = vld [vmem:[%s603 + $0x408] sm:$0xff]
                %640 = vst [vmem:[%s604 + $0x88] sm:$0xff] %v639
                %v641 = vld [vmem:[%s603 + $0x480] sm:$0xff]
                %642 = vst [vmem:[%s604 + $0x90] sm:$0xff] %v641
                %v643 = vld [vmem:[%s603 + $0x488] sm:$0xff]
                %644 = vst [vmem:[%s604 + $0x98] sm:$0xff] %v643
                %v645 = vld [vmem:[%s603 + $0x500] sm:$0xff]
                %646 = vst [vmem:[%s604 + $0xa0] sm:$0xff] %v645
                %v647 = vld [vmem:[%s603 + $0x508] sm:$0xff]
                %648 = vst [vmem:[%s604 + $0xa8] sm:$0xff] %v647
                %v649 = vld [vmem:[%s603 + $0x580] sm:$0xff]
                %650 = vst [vmem:[%s604 + $0xb0] sm:$0xff] %v649
                %v651 = vld [vmem:[%s603 + $0x588] sm:$0xff]
                %652 = vst [vmem:[%s604 + $0xb8] sm:$0xff] %v651
                %v653 = vld [vmem:[%s603 + $0x600] sm:$0xff]
                %654 = vst [vmem:[%s604 + $0xc0] sm:$0xff] %v653
                %v655 = vld [vmem:[%s603 + $0x608] sm:$0xff]
                %656 = vst [vmem:[%s604 + $0xc8] sm:$0xff] %v655
                %v657 = vld [vmem:[%s603 + $0x680] sm:$0xff]
                %658 = vst [vmem:[%s604 + $0xd0] sm:$0xff] %v657
                %v659 = vld [vmem:[%s603 + $0x688] sm:$0xff]
                %660 = vst [vmem:[%s604 + $0xd8] sm:$0xff] %v659
                %v661 = vld [vmem:[%s603 + $0x700] sm:$0xff]
                %662 = vst [vmem:[%s604 + $0xe0] sm:$0xff] %v661
                %v663 = vld [vmem:[%s603 + $0x708] sm:$0xff]
                %664 = vst [vmem:[%s604 + $0xe8] sm:$0xff] %v663
                %v665 = vld [vmem:[%s603 + $0x780] sm:$0xff]
                %666 = vst [vmem:[%s604 + $0xf0] sm:$0xff] %v665
                %v667 = vld [vmem:[%s603 + $0x788] sm:$0xff]
                %668 = vst [vmem:[%s604 + $0xf8] sm:$0xff] %v667
              $region109: #{vision_tower_forward.1} parent=103 // loop_footer
                %s602 = sadd.s32 1, %s598
              $region110: #{vision_tower_forward.1} parent=103 // loop_footer_branch
                %597 = sbr.rel target = $region106
              $region111: #{vision_tower_forward.1} parent=103 // loop_exit
                _
            $region104: #{vision_tower_forward.1} parent=99 // pred_fallthru
              _
            // Predicated region
            $region112: #{vision_tower_forward.1} parent=99 // pred_check
              _
            $region113: #{vision_tower_forward.1} parent=99 // pred_check_branch
              %670 = sbr.rel target = $region115
            $region114: #{vision_tower_forward.1} parent=99 // pred_region
              _
            $region115: #{vision_tower_forward.1} parent=99 // pred_fallthru
              _
          $region100: #{vision_tower_forward.1} parent=95 // pred_fallthru
            _
          %671 = vnop
        $region96: #{vision_tower_forward.1} parent=91 // pred_fallthru
          _
        // Predicated region
        $region116: #{vision_tower_forward.1} parent=91 // pred_check
          %p672 = pneg %p475
        $region117: #{vision_tower_forward.1} parent=91 // pred_check_branch
          %674 = sbr.rel (%p672) target = $region119
        $region118: #{vision_tower_forward.1} parent=91 // pred_region
          %s675 = smul.u32 4, %s30
          %p676 = scmp.lt.s32.totalorder %s675, 31
          %s677 = scalar_select %p676, %s675, 31
          %s678 = scalar_lea.vmem %s20, %s677
          %s679 = smul.u32 4, %s30
        $region119: #{vision_tower_forward.1} parent=91 // pred_fallthru
          _
      $region92: #{vision_tower_forward.1} parent=5 // pred_fallthru
        _
      %p680 = scmp.le.s32.totalorder 1, %s30
      %p681 = scmp.lt.s32.totalorder %s30, 9
      %p682 = pnand %p680, %p681
      %p683 = pneg %p682
      // Predicated region
      $region120: #{vision_tower_forward.1} parent=5 // pred_check
        _
      $region121: #{vision_tower_forward.1} parent=5 // pred_check_branch
        %685 = sbr.rel (%p682) target = $region123
      $region122: #{vision_tower_forward.1} parent=5 // pred_region
        %s686 = ssub.s32 %s30, 1
        %s687 = sand.u32 %s442, 1
        %s688 = sand.u32 %s442, 1
        %s689 = smul.addr %s688, 256
        %s690 = scalar_lea.vmem [#allocation3], %s689
        // Predicated region
        $region124: #{vision_tower_forward.1} parent=122 // pred_check
          %p691 = pneg %p455
        $region125: #{vision_tower_forward.1} parent=122 // pred_check_branch
          %693 = sbr.rel (%p691) target = $region127
        $region126: #{vision_tower_forward.1} parent=122 // pred_region
          _
        $region127: #{vision_tower_forward.1} parent=122 // pred_fallthru
          _
        %p694 = pneg %p51
        %p695 = pneg %p48
        %p696 = pneg %p72
        %p697 = pneg %p69
        %p698 = pneg %p93
        %p699 = pneg %p90
        %p700 = pneg %p114
        %p701 = pneg %p111
        %p702 = pneg %p135
        %p703 = pneg %p132
        %p704 = pneg %p156
        %p705 = pneg %p153
        %p706 = pneg %p177
        %p707 = pneg %p174
        %p708 = pneg %p198
        %p709 = pneg %p195
        %p710 = pneg %p219
        %p711 = pneg %p216
        %p712 = pneg %p240
        %p713 = pneg %p237
        %p714 = pneg %p261
        %p715 = pneg %p258
        %p716 = pneg %p282
        %p717 = pneg %p279
        %p718 = pneg %p303
        %p719 = pneg %p300
        %p720 = pneg %p324
        %p721 = pneg %p321
        %p722 = pneg %p345
        %p723 = pneg %p342
        %p724 = pneg %p366
        %p725 = pneg %p363
        %p726 = pneg %p387
        %p727 = pneg %p384
        %p728 = pneg %p408
        %p729 = pneg %p405
        %p730 = pneg %p429
        %p731 = pneg %p426
        %s732 = sand.u32 %s442, 1
        %s733 = sand.u32 %s442, 1
        %s734 = smul.addr %s733, 256
        %s735 = scalar_lea.vmem [#allocation3], %s734
        %p736 = pneg %p455
        %p737 = pneg %p452
        %s738 = smul.u32 4, %s35
        %p739 = scmp.lt.s32.totalorder %s738, 31
        %s740 = scalar_select %p739, %s738, 31
        %s741 = scalar_lea.vmem %s20, %s740
        %p742 = pneg %p481
        %p743 = pneg %p478
        %p744 = pneg %p507
        %p745 = pneg %p504
        %s746 = sand.u32 %s494, 1
        %s747 = scalar_lea.sflag [#allocation5], %s746
        %s748 = sand.u32 %s494, 1
        %s749 = smul.addr %s748, 8
        %s750 = scalar_lea.vmem [#allocation4], %s749
        %s751 = smul.u32 4, %s35
        %s752 = smul.u32 4, %s35
        %p753 = scmp.lt.s32.totalorder %s752, 31
        %s754 = scalar_select %p753, %s752, 31
        %s755 = scalar_lea.vmem %s20, %s754
        %s756 = smul.u32 4, %s35
        %s757 = smul.u32 4, %s35
        %p759 = scmp.eq.s32.totalorder %s35, 0
        // Predicated region
        $region128: #{vision_tower_forward.1} parent=122 // pred_check
          %p760 = pneg %p759
        $region129: #{vision_tower_forward.1} parent=122 // pred_check_branch
          %762 = sbr.rel (%p760) target = $region131
        $region130: #{vision_tower_forward.1} parent=122 // pred_region
          %v763 = vld [vmem:[%s0] sm:$0xff]
          %v764 = vld [vmem:[%s0 + $0x8] sm:$0xff]
          %v765 = vld [vmem:[%s0 + $0x10] sm:$0xff]
          %v766 = vld [vmem:[%s0 + $0x18] sm:$0xff]
          %v767 = vld [vmem:[%s0 + $0x20] sm:$0xff]
          %v768 = vld [vmem:[%s0 + $0x28] sm:$0xff]
          %v769 = vld [vmem:[%s0 + $0x30] sm:$0x3f]
          %v770 = vld [vmem:[%s0 + $0x38] sm:$0x3f]
          %v771 = vpack.c.bf16 %v765, %v763
          %v772 = vpack.c.bf16 %v766, %v764
          %v773 = vpack.c.bf16 %v769, %v767
          %v774 = vpack.c.bf16 %v770, %v768
          %v775 = vld [vmem:[%s1] sm:$0xf]
          %v776 = vld [vmem:[%s1 + $0x4] sm:$0xf]
          %v777 = vld [vmem:[%s1 + $0x8] sm:$0xf]
          %v778 = vld [vmem:[%s1 + $0xc] sm:$0xf]
          %v779 = vld [vmem:[%s1 + $0x10] sm:$0xf]
          %v780 = vld [vmem:[%s1 + $0x14] sm:$0xf]
          %v781 = vld [vmem:[%s1 + $0x18] sm:$0xf]
          %v782 = vld [vmem:[%s1 + $0x1c] sm:$0xf]
          %v783 = vld [vmem:[%s1 + $0x20] sm:$0xf]
          %v784 = vld [vmem:[%s1 + $0x24] sm:$0xf]
          %v785 = vld [vmem:[%s1 + $0x28] sm:$0xf]
          %v786 = vld [vmem:[%s1 + $0x2c] sm:$0xf]
          %v787 = vld [vmem:[%s1 + $0x30] sm:$0xf]
          %v788 = vld [vmem:[%s1 + $0x34] sm:$0xf]
          %v789 = vld [vmem:[%s1 + $0x38] sm:$0xf]
          %v790 = vld [vmem:[%s1 + $0x3c] sm:$0xf]
          %v791 = vld [vmem:[%s1 + $0x40] sm:$0xf]
          %v792 = vld [vmem:[%s1 + $0x44] sm:$0xf]
          %v793 = vld [vmem:[%s1 + $0x48] sm:$0xf]
          %v794 = vld [vmem:[%s1 + $0x4c] sm:$0xf]
          %v795 = vld [vmem:[%s1 + $0x50] sm:$0xf]
          %v796 = vld [vmem:[%s1 + $0x54] sm:$0xf]
          %v797 = vld [vmem:[%s1 + $0x58] sm:$0xf]
          %v798 = vld [vmem:[%s1 + $0x5c] sm:$0xf]
          %v799 = vld [vmem:[%s2] sm:$0x1]
          %v801 = vlaneseq
          %v802 = vshrl.u32 %v801, 7
          %v803 = vsub.s32 0, %v802
          %v804 = vrot.slane %v799, %v803
          %v830 = vunpack.c.l.b16 %v775
          %v831 = vunpack.c.l.b16 %v776
          %v832 = vunpack.c.l.b16 %v777
          %v833 = vunpack.c.l.b16 %v778
          %v834 = vunpack.c.l.b16 %v779
          %v835 = vunpack.c.l.b16 %v780
          %v836 = vunpack.c.l.b16 %v781
          %v837 = vunpack.c.l.b16 %v782
          %v838 = vunpack.c.l.b16 %v783
          %v839 = vunpack.c.l.b16 %v784
          %v840 = vunpack.c.l.b16 %v785
          %v841 = vunpack.c.l.b16 %v786
          %v842 = vunpack.c.l.b16 %v787
          %v843 = vunpack.c.l.b16 %v788
          %v844 = vunpack.c.l.b16 %v789
          %v845 = vunpack.c.l.b16 %v790
          %v846 = vunpack.c.l.b16 %v791
          %v847 = vunpack.c.l.b16 %v792
          %v848 = vunpack.c.l.b16 %v793
          %v849 = vunpack.c.l.b16 %v794
          %v850 = vunpack.c.l.b16 %v795
          %v851 = vunpack.c.l.b16 %v796
          %v852 = vunpack.c.l.b16 %v797
          %v853 = vunpack.c.l.b16 %v798
          %v854 = vpack.c.b16 %v831, %v830
          %v855 = vpack.c.b16 %v833, %v832
          %v856 = vpack.c.b16 %v835, %v834
          %v857 = vpack.c.b16 %v837, %v836
          %v858 = vpack.c.b16 %v839, %v838
          %v859 = vpack.c.b16 %v841, %v840
          %v860 = vpack.c.b16 %v843, %v842
          %v861 = vpack.c.b16 %v845, %v844
          %v862 = vpack.c.b16 %v847, %v846
          %v863 = vpack.c.b16 %v849, %v848
          %v864 = vpack.c.b16 %v851, %v850
          %v865 = vpack.c.b16 %v853, %v852
          %vm878 = vcmask 523264
          %v880 = vsel %vm878, %v772, 0
          %v883 = vsel %vm878, %v774, 0
          %885 = vmatprep.subr.bf16.mxu0 0
          %886 = vmatpush1.bf16.msra.mxu0 %v861
          %887 = vmatprep.subr.bf16.mxu0 0
          %888 = vmatpush1.bf16.msra.mxu0 %v860
          %889 = vmatprep.subr.bf16.mxu0 0
          %890 = vmatpush1.bf16.msra.mxu0 %v859
          %891 = vmatprep.subr.bf16.mxu0 0
          %892 = vmatpush1.bf16.msra.mxu0 %v858
          %893 = vmatprep.subr.bf16.mxu0 0
          %894 = vmatpush1.bf16.msra.mxu0 %v857
          %895 = vmatprep.subr.bf16.mxu0 0
          %896 = vmatpush1.bf16.msra.mxu0 %v856
          %897 = vmatprep.subr.bf16.mxu0 0
          %898 = vmatpush1.bf16.msra.mxu0 %v855
          %899 = vmatprep.subr.bf16.mxu0 0
          %900 = vmatpush1.bf16.msra.mxu0 %v854
          %901 = vmatprep.subr.bf16.mxu0 0
          %902 = vmatpush2.bf16.msra.mxu0 0
          %903 = vmatprep.subr.bf16.mxu0 0
          %904 = vmatpush2.bf16.msra.mxu0 0
          %905 = vmatprep.subr.bf16.mxu0 0
          %906 = vmatpush2.bf16.msra.mxu0 0
          %907 = vmatprep.subr.bf16.mxu0 0
          %908 = vmatpush2.bf16.msra.mxu0 0
          %909 = vmatprep.subr.bf16.mxu0 0
          %910 = vmatpush2.bf16.msra.mxu0 %v865
          %911 = vmatprep.subr.bf16.mxu0 0
          %912 = vmatpush2.bf16.msra.mxu0 %v864
          %913 = vmatprep.subr.bf16.mxu0 0
          %914 = vmatpush2.bf16.msra.mxu0 %v863
          %915 = vmatprep.subr.bf16.mxu0 0
          %916 = vmatpush2.bf16.msra.mxu0 %v862
          %917 = vmatprep.mubr.bf16.mxu0 %v880
          %918 = vmatmul.mubr.bf16.gmra.mxu0 %v771
          %v919 = vpop.f32.mrf.mxu0
          %v920 = vadd.f32 %v804, %v919
          %v921 = vpop.f32.mrf.mxu0
          %v922 = vpop.f32.mrf.mxu0
          %v923 = vadd.f32 %v804, %v922
          %v924 = vpop.f32.mrf.mxu0
          %925 = vmatprep.mubr.bf16.mxu0 %v883
          %926 = vmatmul.mubr.bf16.gmra.mxu0 %v773
          %v927 = vpop.f32.mrf.mxu0
          %v928 = vadd.f32 %v804, %v927
          %v929 = vpop.f32.mrf.mxu0
          %v930 = vpop.f32.mrf.mxu0
          %v931 = vadd.f32 %v804, %v930
          %v932 = vpop.f32.mrf.mxu0
          %933 = vdwg.mxu0
          %v938 = vcombine.high %v920, %v920
          %v940 = vunpack.c.l.s4 1966171168
          %v941 = vunpack.c.0.s8 %v940
          %v942 = vlaneseq
          %v943 = vshrl.u32 %v942, 7
          %v944 = vsub.s32 %v941, %v943
          %v945 = vrot.slane %v920, %v944
          %v947 = vunpack.c.l.s4 1966171168
          %v948 = vunpack.c.0.s8 %v947
          %v949 = vlaneseq
          %v950 = vshrl.u32 %v949, 7
          %v951 = vsub.s32 %v948, %v950
          %v952 = vrot.slane %v938, %v951
          %v953 = vcombine.high %v945, %v945
          %v954 = vcombine.high %v952, %v952
          %v956 = vunpack.c.l.s4 1966171168
          %v957 = vunpack.c.0.s8 %v956
          %v958 = vlaneseq
          %v959 = vshrl.u32 %v958, 7
          %v960 = vsub.s32 %v957, %v959
          %v961 = vrot.slane %v945, %v960
          %v963 = vunpack.c.l.s4 1966171168
          %v964 = vunpack.c.0.s8 %v963
          %v965 = vlaneseq
          %v966 = vshrl.u32 %v965, 7
          %v967 = vsub.s32 %v964, %v966
          %v968 = vrot.slane %v952, %v967
          %v970 = vunpack.c.l.s4 1966171168
          %v971 = vunpack.c.0.s8 %v970
          %v972 = vlaneseq
          %v973 = vshrl.u32 %v972, 7
          %v974 = vsub.s32 %v971, %v973
          %v975 = vrot.slane %v953, %v974
          %v977 = vunpack.c.l.s4 1966171168
          %v978 = vunpack.c.0.s8 %v977
          %v979 = vlaneseq
          %v980 = vshrl.u32 %v979, 7
          %v981 = vsub.s32 %v978, %v980
          %v982 = vrot.slane %v954, %v981
          %v983 = vcombine.high %v961, %v961
          %v984 = vcombine.high %v968, %v968
          %v985 = vcombine.high %v975, %v975
          %v986 = vcombine.high %v982, %v982
          %v987 = vcombine.high %v923, %v923
          %v989 = vunpack.c.l.s4 1966171168
          %v990 = vunpack.c.0.s8 %v989
          %v991 = vlaneseq
          %v992 = vshrl.u32 %v991, 7
          %v993 = vsub.s32 %v990, %v992
          %v994 = vrot.slane %v923, %v993
          %v996 = vunpack.c.l.s4 1966171168
          %v997 = vunpack.c.0.s8 %v996
          %v998 = vlaneseq
          %v999 = vshrl.u32 %v998, 7
          %v1000 = vsub.s32 %v997, %v999
          %v1001 = vrot.slane %v987, %v1000
          %v1002 = vcombine.high %v994, %v994
          %v1003 = vcombine.high %v1001, %v1001
          %v1005 = vunpack.c.l.s4 1966171168
          %v1006 = vunpack.c.0.s8 %v1005
          %v1007 = vlaneseq
          %v1008 = vshrl.u32 %v1007, 7
          %v1009 = vsub.s32 %v1006, %v1008
          %v1010 = vrot.slane %v994, %v1009
          %v1012 = vunpack.c.l.s4 1966171168
          %v1013 = vunpack.c.0.s8 %v1012
          %v1014 = vlaneseq
          %v1015 = vshrl.u32 %v1014, 7
          %v1016 = vsub.s32 %v1013, %v1015
          %v1017 = vrot.slane %v1001, %v1016
          %v1019 = vunpack.c.l.s4 1966171168
          %v1020 = vunpack.c.0.s8 %v1019
          %v1021 = vlaneseq
          %v1022 = vshrl.u32 %v1021, 7
          %v1023 = vsub.s32 %v1020, %v1022
          %v1024 = vrot.slane %v1002, %v1023
          %v1026 = vunpack.c.l.s4 1966171168
          %v1027 = vunpack.c.0.s8 %v1026
          %v1028 = vlaneseq
          %v1029 = vshrl.u32 %v1028, 7
          %v1030 = vsub.s32 %v1027, %v1029
          %v1031 = vrot.slane %v1003, %v1030
          %v1032 = vcombine.high %v1010, %v1010
          %v1033 = vcombine.high %v1017, %v1017
          %v1034 = vcombine.high %v1024, %v1024
          %v1035 = vcombine.high %v1031, %v1031
          %v1036 = vcombine.high %v928, %v928
          %v1038 = vunpack.c.l.s4 1966171168
          %v1039 = vunpack.c.0.s8 %v1038
          %v1040 = vlaneseq
          %v1041 = vshrl.u32 %v1040, 7
          %v1042 = vsub.s32 %v1039, %v1041
          %v1043 = vrot.slane %v928, %v1042
          %v1045 = vunpack.c.l.s4 1966171168
          %v1046 = vunpack.c.0.s8 %v1045
          %v1047 = vlaneseq
          %v1048 = vshrl.u32 %v1047, 7
          %v1049 = vsub.s32 %v1046, %v1048
          %v1050 = vrot.slane %v1036, %v1049
          %v1051 = vcombine.high %v1043, %v1043
          %v1052 = vcombine.high %v1050, %v1050
          %v1054 = vunpack.c.l.s4 1966171168
          %v1055 = vunpack.c.0.s8 %v1054
          %v1056 = vlaneseq
          %v1057 = vshrl.u32 %v1056, 7
          %v1058 = vsub.s32 %v1055, %v1057
          %v1059 = vrot.slane %v1043, %v1058
          %v1061 = vunpack.c.l.s4 1966171168
          %v1062 = vunpack.c.0.s8 %v1061
          %v1063 = vlaneseq
          %v1064 = vshrl.u32 %v1063, 7
          %v1065 = vsub.s32 %v1062, %v1064
          %v1066 = vrot.slane %v1050, %v1065
          %v1068 = vunpack.c.l.s4 1966171168
          %v1069 = vunpack.c.0.s8 %v1068
          %v1070 = vlaneseq
          %v1071 = vshrl.u32 %v1070, 7
          %v1072 = vsub.s32 %v1069, %v1071
          %v1073 = vrot.slane %v1051, %v1072
          %v1075 = vunpack.c.l.s4 1966171168
          %v1076 = vunpack.c.0.s8 %v1075
          %v1077 = vlaneseq
          %v1078 = vshrl.u32 %v1077, 7
          %v1079 = vsub.s32 %v1076, %v1078
          %v1080 = vrot.slane %v1052, %v1079
          %v1081 = vcombine.high %v1059, %v1059
          %v1082 = vcombine.high %v1066, %v1066
          %v1083 = vcombine.high %v1073, %v1073
          %v1084 = vcombine.high %v1080, %v1080
          %v1085 = vcombine.high %v931, %v931
          %v1087 = vunpack.c.l.s4 1966171168
          %v1088 = vunpack.c.0.s8 %v1087
          %v1089 = vlaneseq
          %v1090 = vshrl.u32 %v1089, 7
          %v1091 = vsub.s32 %v1088, %v1090
          %v1092 = vrot.slane %v931, %v1091
          %v1094 = vunpack.c.l.s4 1966171168
          %v1095 = vunpack.c.0.s8 %v1094
          %v1096 = vlaneseq
          %v1097 = vshrl.u32 %v1096, 7
          %v1098 = vsub.s32 %v1095, %v1097
          %v1099 = vrot.slane %v1085, %v1098
          %v1100 = vcombine.high %v1092, %v1092
          %v1101 = vcombine.high %v1099, %v1099
          %v1103 = vunpack.c.l.s4 1966171168
          %v1104 = vunpack.c.0.s8 %v1103
          %v1105 = vlaneseq
          %v1106 = vshrl.u32 %v1105, 7
          %v1107 = vsub.s32 %v1104, %v1106
          %v1108 = vrot.slane %v1092, %v1107
          %v1110 = vunpack.c.l.s4 1966171168
          %v1111 = vunpack.c.0.s8 %v1110
          %v1112 = vlaneseq
          %v1113 = vshrl.u32 %v1112, 7
          %v1114 = vsub.s32 %v1111, %v1113
          %v1115 = vrot.slane %v1099, %v1114
          %v1117 = vunpack.c.l.s4 1966171168
          %v1118 = vunpack.c.0.s8 %v1117
          %v1119 = vlaneseq
          %v1120 = vshrl.u32 %v1119, 7
          %v1121 = vsub.s32 %v1118, %v1120
          %v1122 = vrot.slane %v1100, %v1121
          %v1124 = vunpack.c.l.s4 1966171168
          %v1125 = vunpack.c.0.s8 %v1124
          %v1126 = vlaneseq
          %v1127 = vshrl.u32 %v1126, 7
          %v1128 = vsub.s32 %v1125, %v1127
          %v1129 = vrot.slane %v1101, %v1128
          %v1130 = vcombine.high %v1108, %v1108
          %v1131 = vcombine.high %v1122, %v1122
          %v1162 = vld [vmem:[%s3] sm:$0x1]
          %v1163 = vld [vmem:[%s4] sm:$0x1]
          %v1164 = vadd.f32 %v1162, %v1163
          %v1165 = vld [vmem:[%s4 + $0x1] sm:$0xff]
          %v1166 = vld [vmem:[%s4 + $0x9] sm:$0x7f]
          %v1169 = vcombine.high %v1165, %v1165
          %v1171 = vunpack.c.l.s4 1966171168
          %v1172 = vunpack.c.0.s8 %v1171
          %v1173 = vlaneseq
          %v1174 = vshrl.u32 %v1173, 7
          %v1175 = vsub.s32 %v1172, %v1174
          %v1176 = vrot.slane %v1165, %v1175
          %v1178 = vunpack.c.l.s4 1966171168
          %v1179 = vunpack.c.0.s8 %v1178
          %v1180 = vlaneseq
          %v1181 = vshrl.u32 %v1180, 7
          %v1182 = vsub.s32 %v1179, %v1181
          %v1183 = vrot.slane %v1169, %v1182
          %v1184 = vcombine.high %v1176, %v1176
          %v1185 = vcombine.high %v1183, %v1183
          %v1187 = vunpack.c.l.s4 1966171168
          %v1188 = vunpack.c.0.s8 %v1187
          %v1189 = vlaneseq
          %v1190 = vshrl.u32 %v1189, 7
          %v1191 = vsub.s32 %v1188, %v1190
          %v1192 = vrot.slane %v1176, %v1191
          %v1194 = vunpack.c.l.s4 1966171168
          %v1195 = vunpack.c.0.s8 %v1194
          %v1196 = vlaneseq
          %v1197 = vshrl.u32 %v1196, 7
          %v1198 = vsub.s32 %v1195, %v1197
          %v1199 = vrot.slane %v1183, %v1198
          %v1201 = vunpack.c.l.s4 1966171168
          %v1202 = vunpack.c.0.s8 %v1201
          %v1203 = vlaneseq
          %v1204 = vshrl.u32 %v1203, 7
          %v1205 = vsub.s32 %v1202, %v1204
          %v1206 = vrot.slane %v1184, %v1205
          %v1208 = vunpack.c.l.s4 1966171168
          %v1209 = vunpack.c.0.s8 %v1208
          %v1210 = vlaneseq
          %v1211 = vshrl.u32 %v1210, 7
          %v1212 = vsub.s32 %v1209, %v1211
          %v1213 = vrot.slane %v1185, %v1212
          %v1214 = vcombine.high %v1192, %v1192
          %v1215 = vcombine.high %v1199, %v1199
          %v1216 = vcombine.high %v1206, %v1206
          %v1217 = vcombine.high %v1213, %v1213
          %v1218 = vcombine.high %v1166, %v1166
          %v1220 = vunpack.c.l.s4 1966171168
          %v1221 = vunpack.c.0.s8 %v1220
          %v1222 = vlaneseq
          %v1223 = vshrl.u32 %v1222, 7
          %v1224 = vsub.s32 %v1221, %v1223
          %v1225 = vrot.slane %v1166, %v1224
          %v1227 = vunpack.c.l.s4 1966171168
          %v1228 = vunpack.c.0.s8 %v1227
          %v1229 = vlaneseq
          %v1230 = vshrl.u32 %v1229, 7
          %v1231 = vsub.s32 %v1228, %v1230
          %v1232 = vrot.slane %v1218, %v1231
          %v1233 = vcombine.high %v1225, %v1225
          %v1234 = vcombine.high %v1232, %v1232
          %v1236 = vunpack.c.l.s4 1966171168
          %v1237 = vunpack.c.0.s8 %v1236
          %v1238 = vlaneseq
          %v1239 = vshrl.u32 %v1238, 7
          %v1240 = vsub.s32 %v1237, %v1239
          %v1241 = vrot.slane %v1225, %v1240
          %v1243 = vunpack.c.l.s4 1966171168
          %v1244 = vunpack.c.0.s8 %v1243
          %v1245 = vlaneseq
          %v1246 = vshrl.u32 %v1245, 7
          %v1247 = vsub.s32 %v1244, %v1246
          %v1248 = vrot.slane %v1232, %v1247
          %v1250 = vunpack.c.l.s4 1966171168
          %v1251 = vunpack.c.0.s8 %v1250
          %v1252 = vlaneseq
          %v1253 = vshrl.u32 %v1252, 7
          %v1254 = vsub.s32 %v1251, %v1253
          %v1255 = vrot.slane %v1233, %v1254
          %v1257 = vunpack.c.l.s4 1966171168
          %v1258 = vunpack.c.0.s8 %v1257
          %v1259 = vlaneseq
          %v1260 = vshrl.u32 %v1259, 7
          %v1261 = vsub.s32 %v1258, %v1260
          %v1262 = vrot.slane %v1234, %v1261
          %v1263 = vcombine.high %v1241, %v1241
          %v1264 = vcombine.high %v1248, %v1248
          %v1265 = vcombine.high %v1255, %v1255
          %v1281 = vadd.f32 %v961, %v1192
          %v1282 = vadd.f32 %v975, %v1206
          %v1283 = vadd.f32 %v983, %v1214
          %v1284 = vadd.f32 %v985, %v1216
          %v1285 = vadd.f32 %v968, %v1199
          %v1286 = vadd.f32 %v982, %v1213
          %v1287 = vadd.f32 %v984, %v1215
          %v1288 = vadd.f32 %v986, %v1217
          %v1289 = vadd.f32 %v1010, %v1241
          %v1290 = vadd.f32 %v1024, %v1255
          %v1291 = vadd.f32 %v1032, %v1263
          %v1292 = vadd.f32 %v1034, %v1265
          %v1293 = vadd.f32 %v1017, %v1248
          %v1294 = vadd.f32 %v1031, %v1262
          %v1295 = vadd.f32 %v1033, %v1264
          %v1296 = vadd.f32 %v1035, %v1192
          %v1297 = vadd.f32 %v1059, %v1206
          %v1298 = vadd.f32 %v1073, %v1214
          %v1299 = vadd.f32 %v1081, %v1216
          %v1300 = vadd.f32 %v1083, %v1199
          %v1301 = vadd.f32 %v1066, %v1213
          %v1302 = vadd.f32 %v1080, %v1215
          %v1303 = vadd.f32 %v1082, %v1217
          %v1304 = vadd.f32 %v1084, %v1241
          %v1305 = vadd.f32 %v1108, %v1255
          %v1306 = vadd.f32 %v1122, %v1263
          %v1307 = vadd.f32 %v1130, %v1265
          %v1308 = vadd.f32 %v1131, %v1248
          %v1309 = vadd.f32 %v1115, %v1262
          %v1310 = vadd.f32 %v1129, %v1264
          %v1341 = vcombine.low %v1281, %v1281
          %v1342 = vcombine.low %v1282, %v1283
          %v1343 = vcombine.low %v1284, %v1285
          %v1344 = vcombine.low %v1286, %v1287
          %v1346 = vunpack.c.l.s4 1966171168
          %v1347 = vunpack.c.0.s8 %v1346
          %v1348 = vlaneseq
          %v1349 = vshrl.u32 %v1348, 7
          %v1350 = vsub.s32 %v1347, %v1349
          %v1351 = vrot.slane %v1341, %v1350
          %v1353 = vunpack.c.l.s4 1966171168
          %v1354 = vunpack.c.0.s8 %v1353
          %v1355 = vlaneseq
          %v1356 = vshrl.u32 %v1355, 7
          %v1357 = vsub.s32 %v1354, %v1356
          %v1358 = vrot.slane %v1342, %v1357
          %v1360 = vunpack.c.l.s4 1966171168
          %v1361 = vunpack.c.0.s8 %v1360
          %v1362 = vlaneseq
          %v1363 = vshrl.u32 %v1362, 7
          %v1364 = vsub.s32 %v1361, %v1363
          %v1365 = vrot.slane %v1343, %v1364
          %v1367 = vunpack.c.l.s4 1966171168
          %v1368 = vunpack.c.0.s8 %v1367
          %v1369 = vlaneseq
          %v1370 = vshrl.u32 %v1369, 7
          %v1371 = vsub.s32 %v1368, %v1370
          %v1372 = vrot.slane %v1344, %v1371
          %v1373 = vcombine.low %v1351, %v1358
          %v1374 = vcombine.low %v1365, %v1372
          %v1376 = vunpack.c.l.s4 1966171168
          %v1377 = vunpack.c.0.s8 %v1376
          %v1378 = vlaneseq
          %v1379 = vshrl.u32 %v1378, 7
          %v1380 = vsub.s32 %v1377, %v1379
          %v1381 = vrot.slane %v1373, %v1380
          %v1383 = vunpack.c.l.s4 1966171168
          %v1384 = vunpack.c.0.s8 %v1383
          %v1385 = vlaneseq
          %v1386 = vshrl.u32 %v1385, 7
          %v1387 = vsub.s32 %v1384, %v1386
          %v1388 = vrot.slane %v1374, %v1387
          %v1389 = vcombine.low %v1381, %v1388
          %v1390 = vcombine.low %v1288, %v1289
          %v1391 = vcombine.low %v1290, %v1291
          %v1392 = vcombine.low %v1292, %v1293
          %v1393 = vcombine.low %v1294, %v1295
          %v1395 = vunpack.c.l.s4 1966171168
          %v1396 = vunpack.c.0.s8 %v1395
          %v1397 = vlaneseq
          %v1398 = vshrl.u32 %v1397, 7
          %v1399 = vsub.s32 %v1396, %v1398
          %v1400 = vrot.slane %v1390, %v1399
          %v1402 = vunpack.c.l.s4 1966171168
          %v1403 = vunpack.c.0.s8 %v1402
          %v1404 = vlaneseq
          %v1405 = vshrl.u32 %v1404, 7
          %v1406 = vsub.s32 %v1403, %v1405
          %v1407 = vrot.slane %v1391, %v1406
          %v1409 = vunpack.c.l.s4 1966171168
          %v1410 = vunpack.c.0.s8 %v1409
          %v1411 = vlaneseq
          %v1412 = vshrl.u32 %v1411, 7
          %v1413 = vsub.s32 %v1410, %v1412
          %v1414 = vrot.slane %v1392, %v1413
          %v1416 = vunpack.c.l.s4 1966171168
          %v1417 = vunpack.c.0.s8 %v1416
          %v1418 = vlaneseq
          %v1419 = vshrl.u32 %v1418, 7
          %v1420 = vsub.s32 %v1417, %v1419
          %v1421 = vrot.slane %v1393, %v1420
          %v1422 = vcombine.low %v1400, %v1407
          %v1423 = vcombine.low %v1414, %v1421
          %v1425 = vunpack.c.l.s4 1966171168
          %v1426 = vunpack.c.0.s8 %v1425
          %v1427 = vlaneseq
          %v1428 = vshrl.u32 %v1427, 7
          %v1429 = vsub.s32 %v1426, %v1428
          %v1430 = vrot.slane %v1422, %v1429
          %v1432 = vunpack.c.l.s4 1966171168
          %v1433 = vunpack.c.0.s8 %v1432
          %v1434 = vlaneseq
          %v1435 = vshrl.u32 %v1434, 7
          %v1436 = vsub.s32 %v1433, %v1435
          %v1437 = vrot.slane %v1423, %v1436
          %v1438 = vcombine.low %v1430, %v1437
          %v1439 = vcombine.low %v1296, %v1296
          %v1440 = vcombine.low %v1297, %v1298
          %v1441 = vcombine.low %v1299, %v1300
          %v1442 = vcombine.low %v1301, %v1302
          %v1444 = vunpack.c.l.s4 1966171168
          %v1445 = vunpack.c.0.s8 %v1444
          %v1446 = vlaneseq
          %v1447 = vshrl.u32 %v1446, 7
          %v1448 = vsub.s32 %v1445, %v1447
          %v1449 = vrot.slane %v1439, %v1448
          %v1451 = vunpack.c.l.s4 1966171168
          %v1452 = vunpack.c.0.s8 %v1451
          %v1453 = vlaneseq
          %v1454 = vshrl.u32 %v1453, 7
          %v1455 = vsub.s32 %v1452, %v1454
          %v1456 = vrot.slane %v1440, %v1455
          %v1458 = vunpack.c.l.s4 1966171168
          %v1459 = vunpack.c.0.s8 %v1458
          %v1460 = vlaneseq
          %v1461 = vshrl.u32 %v1460, 7
          %v1462 = vsub.s32 %v1459, %v1461
          %v1463 = vrot.slane %v1441, %v1462
          %v1465 = vunpack.c.l.s4 1966171168
          %v1466 = vunpack.c.0.s8 %v1465
          %v1467 = vlaneseq
          %v1468 = vshrl.u32 %v1467, 7
          %v1469 = vsub.s32 %v1466, %v1468
          %v1470 = vrot.slane %v1442, %v1469
          %v1471 = vcombine.low %v1449, %v1456
          %v1472 = vcombine.low %v1463, %v1470
          %v1474 = vunpack.c.l.s4 1966171168
          %v1475 = vunpack.c.0.s8 %v1474
          %v1476 = vlaneseq
          %v1477 = vshrl.u32 %v1476, 7
          %v1478 = vsub.s32 %v1475, %v1477
          %v1479 = vrot.slane %v1471, %v1478
          %v1481 = vunpack.c.l.s4 1966171168
          %v1482 = vunpack.c.0.s8 %v1481
          %v1483 = vlaneseq
          %v1484 = vshrl.u32 %v1483, 7
          %v1485 = vsub.s32 %v1482, %v1484
          %v1486 = vrot.slane %v1472, %v1485
          %v1487 = vcombine.low %v1479, %v1486
          %v1488 = vcombine.low %v1303, %v1304
          %v1489 = vcombine.low %v1305, %v1306
          %v1490 = vcombine.low %v1307, %v1308
          %v1491 = vcombine.low %v1309, %v1310
          %v1493 = vunpack.c.l.s4 1966171168
          %v1494 = vunpack.c.0.s8 %v1493
          %v1495 = vlaneseq
          %v1496 = vshrl.u32 %v1495, 7
          %v1497 = vsub.s32 %v1494, %v1496
          %v1498 = vrot.slane %v1488, %v1497
          %v1500 = vunpack.c.l.s4 1966171168
          %v1501 = vunpack.c.0.s8 %v1500
          %v1502 = vlaneseq
          %v1503 = vshrl.u32 %v1502, 7
          %v1504 = vsub.s32 %v1501, %v1503
          %v1505 = vrot.slane %v1489, %v1504
          %v1507 = vunpack.c.l.s4 1966171168
          %v1508 = vunpack.c.0.s8 %v1507
          %v1509 = vlaneseq
          %v1510 = vshrl.u32 %v1509, 7
          %v1511 = vsub.s32 %v1508, %v1510
          %v1512 = vrot.slane %v1490, %v1511
          %v1514 = vunpack.c.l.s4 1966171168
          %v1515 = vunpack.c.0.s8 %v1514
          %v1516 = vlaneseq
          %v1517 = vshrl.u32 %v1516, 7
          %v1518 = vsub.s32 %v1515, %v1517
          %v1519 = vrot.slane %v1491, %v1518
          %v1520 = vcombine.low %v1498, %v1505
          %v1521 = vcombine.low %v1512, %v1519
          %v1523 = vunpack.c.l.s4 1966171168
          %v1524 = vunpack.c.0.s8 %v1523
          %v1525 = vlaneseq
          %v1526 = vshrl.u32 %v1525, 7
          %v1527 = vsub.s32 %v1524, %v1526
          %v1528 = vrot.slane %v1520, %v1527
          %v1530 = vunpack.c.l.s4 1966171168
          %v1531 = vunpack.c.0.s8 %v1530
          %v1532 = vlaneseq
          %v1533 = vshrl.u32 %v1532, 7
          %v1534 = vsub.s32 %v1531, %v1533
          %v1535 = vrot.slane %v1521, %v1534
          %v1536 = vcombine.low %v1528, %v1535
          %vm1541 = vcmask 1040384
          %v1542 = vsel %vm1541, %v1164, %v1389
          %v1543 = vsel %vm1541, %v1164, %v1487
          %v1544 = vld [vmem:[%s5] sm:$0x1]
          %v1545 = vld [vmem:[%s6] sm:$0x1]
          %1546 = vadd.xlane.f32.xlu0 %v1542
          %v1547 = vpop.xlane.xlu0 %1546
          %1548 = vadd.xlane.f32.xlu0 %v1438
          %v1549 = vpop.xlane.xlu0 %1548
          %1550 = vadd.xlane.f32.xlu0 %v1543
          %v1551 = vpop.xlane.xlu0 %1550
          %1552 = vadd.xlane.f32.xlu0 %v1536
          %v1553 = vpop.xlane.xlu0 %1552
          %v1554 = vrcp.pop 128.0
          %v1555 = vmul.f32 %v1547, %v1554
          %v1556 = vmul.f32 %v1549, %v1554
          %v1557 = vmul.f32 %v1551, %v1554
          %v1558 = vmul.f32 %v1553, %v1554
          %v1559 = vsub.f32 %v1542, %v1555
          %v1560 = vsub.f32 %v1438, %v1556
          %v1561 = vsub.f32 %v1543, %v1557
          %v1562 = vsub.f32 %v1536, %v1558
          %v1563 = vmul.f32 %v1559, %v1559
          %v1564 = vmul.f32 %v1560, %v1560
          %v1565 = vmul.f32 %v1561, %v1561
          %v1566 = vmul.f32 %v1562, %v1562
          %1567 = vadd.xlane.f32.xlu0 %v1563
          %v1568 = vpop.xlane.xlu0 %1567
          %1569 = vadd.xlane.f32.xlu0 %v1564
          %v1570 = vpop.xlane.xlu0 %1569
          %1571 = vadd.xlane.f32.xlu0 %v1565
          %v1572 = vpop.xlane.xlu0 %1571
          %1573 = vadd.xlane.f32.xlu0 %v1566
          %v1574 = vpop.xlane.xlu0 %1573
          %v1575 = vmul.f32 %v1568, %v1554
          %v1576 = vmul.f32 %v1570, %v1554
          %v1577 = vmul.f32 %v1572, %v1554
          %v1578 = vmul.f32 %v1574, %v1554
          %v1579 = vadd.f32 %v1575, 1e-05
          %v1580 = vadd.f32 %v1576, 1e-05
          %v1581 = vadd.f32 %v1577, 1e-05
          %v1582 = vadd.f32 %v1578, 1e-05
          %v1583 = vrsqrt.pop %v1579
          %v1584 = vrsqrt.pop %v1580
          %v1585 = vrsqrt.pop %v1581
          %v1586 = vrsqrt.pop %v1582
          %v1587 = vmul.f32 %v1559, %v1583
          %v1588 = vmul.f32 %v1560, %v1584
          %v1589 = vmul.f32 %v1561, %v1585
          %v1590 = vmul.f32 %v1562, %v1586
          %v1592 = vlaneseq
          %v1593 = vshrl.u32 %v1592, 7
          %v1594 = vsub.s32 0, %v1593
          %v1595 = vrot.slane %v1544, %v1594
          %v1597 = vmul.f32 %v1587, %v1595
          %v1598 = vmul.f32 %v1588, %v1595
          %v1599 = vmul.f32 %v1589, %v1595
          %v1600 = vmul.f32 %v1590, %v1595
          %v1602 = vlaneseq
          %v1603 = vshrl.u32 %v1602, 7
          %v1604 = vsub.s32 0, %v1603
          %v1605 = vrot.slane %v1545, %v1604
          %v1607 = vadd.f32 %v1597, %v1605
          %v1608 = vadd.f32 %v1598, %v1605
          %v1609 = vadd.f32 %v1599, %v1605
          %v1610 = vadd.f32 %v1600, %v1605
          %v1611 = vpack.c.bf16 %v1608, %v1607
          %v1612 = vpack.c.bf16 %v1610, %v1609
          %v1613 = vld [vmem:[%s7] sm:$0xf]
          %v1614 = vld [vmem:[%s7 + $0x4] sm:$0xf]
          %v1615 = vld [vmem:[%s7 + $0x8] sm:$0xf]
          %v1616 = vld [vmem:[%s7 + $0xc] sm:$0xf]
          %v1617 = vld [vmem:[%s7 + $0x10] sm:$0xf]
          %v1618 = vld [vmem:[%s7 + $0x14] sm:$0xf]
          %v1619 = vld [vmem:[%s7 + $0x18] sm:$0xf]
          %v1620 = vld [vmem:[%s7 + $0x1c] sm:$0xf]
          %v1621 = vld [vmem:[%s7 + $0x20] sm:$0xf]
          %v1622 = vld [vmem:[%s7 + $0x24] sm:$0xf]
          %v1623 = vld [vmem:[%s7 + $0x28] sm:$0xf]
          %v1624 = vld [vmem:[%s7 + $0x2c] sm:$0xf]
          %v1625 = vld [vmem:[%s7 + $0x30] sm:$0xf]
          %v1626 = vld [vmem:[%s7 + $0x34] sm:$0xf]
          %v1627 = vld [vmem:[%s7 + $0x38] sm:$0xf]
          %v1628 = vld [vmem:[%s7 + $0x3c] sm:$0xf]
          %v1629 = vld [vmem:[%s8] sm:$0x1]
          %v1631 = vlaneseq
          %v1632 = vshrl.u32 %v1631, 7
          %v1633 = vsub.s32 0, %v1632
          %v1634 = vrot.slane %v1629, %v1633
          %v1652 = vunpack.c.l.b16 %v1613
          %v1653 = vunpack.c.l.b16 %v1614
          %v1654 = vunpack.c.l.b16 %v1615
          %v1655 = vunpack.c.l.b16 %v1616
          %v1656 = vunpack.c.l.b16 %v1617
          %v1657 = vunpack.c.l.b16 %v1618
          %v1658 = vunpack.c.l.b16 %v1619
          %v1659 = vunpack.c.l.b16 %v1620
          %v1660 = vunpack.c.l.b16 %v1621
          %v1661 = vunpack.c.l.b16 %v1622
          %v1662 = vunpack.c.l.b16 %v1623
          %v1663 = vunpack.c.l.b16 %v1624
          %v1664 = vunpack.c.l.b16 %v1625
          %v1665 = vunpack.c.l.b16 %v1626
          %v1666 = vunpack.c.l.b16 %v1627
          %v1667 = vunpack.c.l.b16 %v1628
          %v1668 = vpack.c.b16 %v1653, %v1652
          %v1669 = vpack.c.b16 %v1655, %v1654
          %v1670 = vpack.c.b16 %v1657, %v1656
          %v1671 = vpack.c.b16 %v1659, %v1658
          %v1672 = vpack.c.b16 %v1661, %v1660
          %v1673 = vpack.c.b16 %v1663, %v1662
          %v1674 = vpack.c.b16 %v1665, %v1664
          %v1675 = vpack.c.b16 %v1667, %v1666
          %1684 = vmatprep.subr.bf16.mxu0 0
          %1685 = vmatpush1.bf16.msra.mxu0 %v1675
          %1686 = vmatprep.subr.bf16.mxu0 0
          %1687 = vmatpush1.bf16.msra.mxu0 %v1674
          %1688 = vmatprep.subr.bf16.mxu0 0
          %1689 = vmatpush1.bf16.msra.mxu0 %v1673
          %1690 = vmatprep.subr.bf16.mxu0 0
          %1691 = vmatpush1.bf16.msra.mxu0 %v1672
          %1692 = vmatprep.subr.bf16.mxu0 0
          %1693 = vmatpush1.bf16.msra.mxu0 %v1671
          %1694 = vmatprep.subr.bf16.mxu0 0
          %1695 = vmatpush1.bf16.msra.mxu0 %v1670
          %1696 = vmatprep.subr.bf16.mxu0 0
          %1697 = vmatpush1.bf16.msra.mxu0 %v1669
          %1698 = vmatprep.subr.bf16.mxu0 0
          %1699 = vmatpush1.bf16.msra.mxu0 %v1668
          %1700 = vmatprep.subr.bf16.mxu0 0
          %1701 = vmatpush2.bf16.msra.mxu0 0
          %1702 = vmatprep.subr.bf16.mxu0 0
          %1703 = vmatpush2.bf16.msra.mxu0 0
          %1704 = vmatprep.subr.bf16.mxu0 0
          %1705 = vmatpush2.bf16.msra.mxu0 0
          %1706 = vmatprep.subr.bf16.mxu0 0
          %1707 = vmatpush2.bf16.msra.mxu0 0
          %1708 = vmatprep.subr.bf16.mxu0 0
          %1709 = vmatpush2.bf16.msra.mxu0 0
          %1710 = vmatprep.subr.bf16.mxu0 0
          %1711 = vmatpush2.bf16.msra.mxu0 0
          %1712 = vmatprep.subr.bf16.mxu0 0
          %1713 = vmatpush2.bf16.msra.mxu0 0
          %1714 = vmatprep.subr.bf16.mxu0 0
          %1715 = vmatpush2.bf16.msra.mxu0 0
          %1716 = vmatprep.mubr.bf16.mxu0 0
          %1717 = vmatmul.mubr.bf16.gmra.mxu0 %v1611
          %v1718 = vpop.f32.mrf.mxu0
          %v1719 = vadd.f32 %v1634, %v1718
          %v1720 = vpop.f32.mrf.mxu0
          %v1721 = vpop.f32.mrf.mxu0
          %v1722 = vadd.f32 %v1634, %v1721
          %v1723 = vpop.f32.mrf.mxu0
          %1724 = vmatprep.mubr.bf16.mxu0 0
          %1725 = vmatmul.mubr.bf16.gmra.mxu0 %v1612
          %v1726 = vpop.f32.mrf.mxu0
          %v1727 = vadd.f32 %v1634, %v1726
          %v1728 = vpop.f32.mrf.mxu0
          %v1729 = vpop.f32.mrf.mxu0
          %v1730 = vadd.f32 %v1634, %v1729
          %v1731 = vpop.f32.mrf.mxu0
          %1732 = vdwg.mxu0
          %s1733 = scalar_lea.vmem %s7, 64
          %v1734 = vld [vmem:[%s1733] sm:$0xf]
          %v1735 = vld [vmem:[%s1733 + $0x4] sm:$0xf]
          %v1736 = vld [vmem:[%s1733 + $0x8] sm:$0xf]
          %v1737 = vld [vmem:[%s1733 + $0xc] sm:$0xf]
          %v1738 = vld [vmem:[%s1733 + $0x10] sm:$0xf]
          %v1739 = vld [vmem:[%s1733 + $0x14] sm:$0xf]
          %v1740 = vld [vmem:[%s1733 + $0x18] sm:$0xf]
          %v1741 = vld [vmem:[%s1733 + $0x1c] sm:$0xf]
          %v1742 = vld [vmem:[%s1733 + $0x20] sm:$0xf]
          %v1743 = vld [vmem:[%s1733 + $0x24] sm:$0xf]
          %v1744 = vld [vmem:[%s1733 + $0x28] sm:$0xf]
          %v1745 = vld [vmem:[%s1733 + $0x2c] sm:$0xf]
          %v1746 = vld [vmem:[%s1733 + $0x30] sm:$0xf]
          %v1747 = vld [vmem:[%s1733 + $0x34] sm:$0xf]
          %v1748 = vld [vmem:[%s1733 + $0x38] sm:$0xf]
          %v1749 = vld [vmem:[%s1733 + $0x3c] sm:$0xf]
          %s1750 = scalar_lea.vmem %s8, 1
          %v1751 = vld [vmem:[%s1750] sm:$0x1]
          %v1753 = vlaneseq
          %v1754 = vshrl.u32 %v1753, 7
          %v1755 = vsub.s32 0, %v1754
          %v1756 = vrot.slane %v1751, %v1755
          %v1774 = vunpack.c.l.b16 %v1734
          %v1775 = vunpack.c.l.b16 %v1735
          %v1776 = vunpack.c.l.b16 %v1736
          %v1777 = vunpack.c.l.b16 %v1737
          %v1778 = vunpack.c.l.b16 %v1738
          %v1779 = vunpack.c.l.b16 %v1739
          %v1780 = vunpack.c.l.b16 %v1740
          %v1781 = vunpack.c.l.b16 %v1741
          %v1782 = vunpack.c.l.b16 %v1742
          %v1783 = vunpack.c.l.b16 %v1743
          %v1784 = vunpack.c.l.b16 %v1744
          %v1785 = vunpack.c.l.b16 %v1745
          %v1786 = vunpack.c.l.b16 %v1746
          %v1787 = vunpack.c.l.b16 %v1747
          %v1788 = vunpack.c.l.b16 %v1748
          %v1789 = vunpack.c.l.b16 %v1749
          %v1790 = vpack.c.b16 %v1775, %v1774
          %v1791 = vpack.c.b16 %v1777, %v1776
          %v1792 = vpack.c.b16 %v1779, %v1778
          %v1793 = vpack.c.b16 %v1781, %v1780
          %v1794 = vpack.c.b16 %v1783, %v1782
          %v1795 = vpack.c.b16 %v1785, %v1784
          %v1796 = vpack.c.b16 %v1787, %v1786
          %v1797 = vpack.c.b16 %v1789, %v1788
          %1806 = vmatprep.subr.bf16.mxu0 0
          %1807 = vmatpush1.bf16.msra.mxu0 %v1797
          %1808 = vmatprep.subr.bf16.mxu0 0
          %1809 = vmatpush1.bf16.msra.mxu0 %v1796
          %1810 = vmatprep.subr.bf16.mxu0 0
          %1811 = vmatpush1.bf16.msra.mxu0 %v1795
          %1812 = vmatprep.subr.bf16.mxu0 0
          %1813 = vmatpush1.bf16.msra.mxu0 %v1794
          %1814 = vmatprep.subr.bf16.mxu0 0
          %1815 = vmatpush1.bf16.msra.mxu0 %v1793
          %1816 = vmatprep.subr.bf16.mxu0 0
          %1817 = vmatpush1.bf16.msra.mxu0 %v1792
          %1818 = vmatprep.subr.bf16.mxu0 0
          %1819 = vmatpush1.bf16.msra.mxu0 %v1791
          %1820 = vmatprep.subr.bf16.mxu0 0
          %1821 = vmatpush1.bf16.msra.mxu0 %v1790
          %1822 = vmatprep.subr.bf16.mxu0 0
          %1823 = vmatpush2.bf16.msra.mxu0 0
          %1824 = vmatprep.subr.bf16.mxu0 0
          %1825 = vmatpush2.bf16.msra.mxu0 0
          %1826 = vmatprep.subr.bf16.mxu0 0
          %1827 = vmatpush2.bf16.msra.mxu0 0
          %1828 = vmatprep.subr.bf16.mxu0 0
          %1829 = vmatpush2.bf16.msra.mxu0 0
          %1830 = vmatprep.subr.bf16.mxu0 0
          %1831 = vmatpush2.bf16.msra.mxu0 0
          %1832 = vmatprep.subr.bf16.mxu0 0
          %1833 = vmatpush2.bf16.msra.mxu0 0
          %1834 = vmatprep.subr.bf16.mxu0 0
          %1835 = vmatpush2.bf16.msra.mxu0 0
          %1836 = vmatprep.subr.bf16.mxu0 0
          %1837 = vmatpush2.bf16.msra.mxu0 0
          %1838 = vmatprep.mubr.bf16.mxu0 0
          %1839 = vmatmul.mubr.bf16.gmra.mxu0 %v1611
          %v1840 = vpop.f32.mrf.mxu0
          %v1841 = vadd.f32 %v1756, %v1840
          %v1842 = vpop.f32.mrf.mxu0
          %v1843 = vpop.f32.mrf.mxu0
          %v1844 = vadd.f32 %v1756, %v1843
          %v1845 = vpop.f32.mrf.mxu0
          %1846 = vmatprep.mubr.bf16.mxu0 0
          %1847 = vmatmul.mubr.bf16.gmra.mxu0 %v1612
          %v1848 = vpop.f32.mrf.mxu0
          %v1849 = vadd.f32 %v1756, %v1848
          %v1850 = vpop.f32.mrf.mxu0
          %v1851 = vpop.f32.mrf.mxu0
          %v1852 = vadd.f32 %v1756, %v1851
          %v1853 = vpop.f32.mrf.mxu0
          %1854 = vdwg.mxu0
          %s1855 = scalar_lea.vmem %s7, 128
          %v1856 = vld [vmem:[%s1855] sm:$0xf]
          %v1857 = vld [vmem:[%s1855 + $0x4] sm:$0xf]
          %v1858 = vld [vmem:[%s1855 + $0x8] sm:$0xf]
          %v1859 = vld [vmem:[%s1855 + $0xc] sm:$0xf]
          %v1860 = vld [vmem:[%s1855 + $0x10] sm:$0xf]
          %v1861 = vld [vmem:[%s1855 + $0x14] sm:$0xf]
          %v1862 = vld [vmem:[%s1855 + $0x18] sm:$0xf]
          %v1863 = vld [vmem:[%s1855 + $0x1c] sm:$0xf]
          %v1864 = vld [vmem:[%s1855 + $0x20] sm:$0xf]
          %v1865 = vld [vmem:[%s1855 + $0x24] sm:$0xf]
          %v1866 = vld [vmem:[%s1855 + $0x28] sm:$0xf]
          %v1867 = vld [vmem:[%s1855 + $0x2c] sm:$0xf]
          %v1868 = vld [vmem:[%s1855 + $0x30] sm:$0xf]
          %v1869 = vld [vmem:[%s1855 + $0x34] sm:$0xf]
          %v1870 = vld [vmem:[%s1855 + $0x38] sm:$0xf]
          %v1871 = vld [vmem:[%s1855 + $0x3c] sm:$0xf]
          %s1872 = scalar_lea.vmem %s8, 2
          %v1873 = vld [vmem:[%s1872] sm:$0x1]
          %v1875 = vlaneseq
          %v1876 = vshrl.u32 %v1875, 7
          %v1877 = vsub.s32 0, %v1876
          %v1878 = vrot.slane %v1873, %v1877
          %v1896 = vunpack.c.l.b16 %v1856
          %v1897 = vunpack.c.l.b16 %v1857
          %v1898 = vunpack.c.l.b16 %v1858
          %v1899 = vunpack.c.l.b16 %v1859
          %v1900 = vunpack.c.l.b16 %v1860
          %v1901 = vunpack.c.l.b16 %v1861
          %v1902 = vunpack.c.l.b16 %v1862
          %v1903 = vunpack.c.l.b16 %v1863
          %v1904 = vunpack.c.l.b16 %v1864
          %v1905 = vunpack.c.l.b16 %v1865
          %v1906 = vunpack.c.l.b16 %v1866
          %v1907 = vunpack.c.l.b16 %v1867
          %v1908 = vunpack.c.l.b16 %v1868
          %v1909 = vunpack.c.l.b16 %v1869
          %v1910 = vunpack.c.l.b16 %v1870
          %v1911 = vunpack.c.l.b16 %v1871
          %v1912 = vpack.c.b16 %v1897, %v1896
          %v1913 = vpack.c.b16 %v1899, %v1898
          %v1914 = vpack.c.b16 %v1901, %v1900
          %v1915 = vpack.c.b16 %v1903, %v1902
          %v1916 = vpack.c.b16 %v1905, %v1904
          %v1917 = vpack.c.b16 %v1907, %v1906
          %v1918 = vpack.c.b16 %v1909, %v1908
          %v1919 = vpack.c.b16 %v1911, %v1910
          %1928 = vmatprep.subr.bf16.mxu0 0
          %1929 = vmatpush1.bf16.msra.mxu0 %v1919
          %1930 = vmatprep.subr.bf16.mxu0 0
          %1931 = vmatpush1.bf16.msra.mxu0 %v1918
          %1932 = vmatprep.subr.bf16.mxu0 0
          %1933 = vmatpush1.bf16.msra.mxu0 %v1917
          %1934 = vmatprep.subr.bf16.mxu0 0
          %1935 = vmatpush1.bf16.msra.mxu0 %v1916
          %1936 = vmatprep.subr.bf16.mxu0 0
          %1937 = vmatpush1.bf16.msra.mxu0 %v1915
          %1938 = vmatprep.subr.bf16.mxu0 0
          %1939 = vmatpush1.bf16.msra.mxu0 %v1914
          %1940 = vmatprep.subr.bf16.mxu0 0
          %1941 = vmatpush1.bf16.msra.mxu0 %v1913
          %1942 = vmatprep.subr.bf16.mxu0 0
          %1943 = vmatpush1.bf16.msra.mxu0 %v1912
          %1944 = vmatprep.subr.bf16.mxu0 0
          %1945 = vmatpush2.bf16.msra.mxu0 0
          %1946 = vmatprep.subr.bf16.mxu0 0
          %1947 = vmatpush2.bf16.msra.mxu0 0
          %1948 = vmatprep.subr.bf16.mxu0 0
          %1949 = vmatpush2.bf16.msra.mxu0 0
          %1950 = vmatprep.subr.bf16.mxu0 0
          %1951 = vmatpush2.bf16.msra.mxu0 0
          %1952 = vmatprep.subr.bf16.mxu0 0
          %1953 = vmatpush2.bf16.msra.mxu0 0
          %1954 = vmatprep.subr.bf16.mxu0 0
          %1955 = vmatpush2.bf16.msra.mxu0 0
          %1956 = vmatprep.subr.bf16.mxu0 0
          %1957 = vmatpush2.bf16.msra.mxu0 0
          %1958 = vmatprep.subr.bf16.mxu0 0
          %1959 = vmatpush2.bf16.msra.mxu0 0
          %1960 = vmatprep.mubr.bf16.mxu0 0
          %1961 = vmatmul.mubr.bf16.gmra.mxu0 %v1611
          %v1962 = vpop.f32.mrf.mxu0
          %v1963 = vadd.f32 %v1878, %v1962
          %v1964 = vpop.f32.mrf.mxu0
          %v1965 = vpop.f32.mrf.mxu0
          %v1966 = vadd.f32 %v1878, %v1965
          %v1967 = vpop.f32.mrf.mxu0
          %1968 = vmatprep.mubr.bf16.mxu0 0
          %1969 = vmatmul.mubr.bf16.gmra.mxu0 %v1612
          %v1970 = vpop.f32.mrf.mxu0
          %v1971 = vadd.f32 %v1878, %v1970
          %v1972 = vpop.f32.mrf.mxu0
          %v1973 = vpop.f32.mrf.mxu0
          %v1974 = vadd.f32 %v1878, %v1973
          %v1975 = vpop.f32.mrf.mxu0
          %1976 = vdwg.mxu0
          %v1977 = vmul.f32 %v1719, 0.125
          %v1978 = vmul.f32 %v1722, 0.125
          %v1979 = vmul.f32 %v1727, 0.125
          %v1980 = vmul.f32 %v1730, 0.125
          %v1981 = vpack.c.bf16 %v1978, %v1977
          %v1982 = vpack.c.bf16 %v1980, %v1979
          %v1983 = vpack.c.bf16 %v1844, %v1841
          %v1984 = vpack.c.bf16 %v1852, %v1849
          %v1985 = vpack.c.bf16 %v1966, %v1963
          %v1986 = vpack.c.bf16 %v1974, %v1971
          %v1988 = vsel %vm878, %v1981, 0
          %v1991 = vsel %vm878, %v1983, 0
          %1993 = vmatprep.subr.bf16.mxu0 0
          %1994 = vmatpush1.bf16.xpose.msra.mxu0 0
          %1995 = vmatprep.subr.bf16.mxu0 0
          %1996 = vmatpush1.bf16.xpose.msra.mxu0 0
          %1997 = vmatprep.subr.bf16.mxu0 0
          %1998 = vmatpush1.bf16.xpose.msra.mxu0 0
          %1999 = vmatprep.subr.bf16.mxu0 0
          %2000 = vmatpush1.bf16.xpose.msra.mxu0 0
          %2001 = vmatprep.subr.bf16.mxu0 0
          %2002 = vmatpush1.bf16.xpose.msra.mxu0 0
          %2003 = vmatprep.subr.bf16.mxu0 0
          %2004 = vmatpush1.bf16.xpose.msra.mxu0 0
          %2005 = vmatprep.subr.bf16.mxu0 0
          %2006 = vmatpush1.bf16.xpose.msra.mxu0 0
          %2007 = vmatprep.subr.bf16.mxu0 0
          %2008 = vmatpush1.bf16.xpose.msra.mxu0 %v1991
          %2009 = vmatprep.subr.bf16.mxu0 0
          %2010 = vmatpush2.bf16.xpose.msra.mxu0 0
          %2011 = vmatprep.subr.bf16.mxu0 0
          %2012 = vmatpush2.bf16.xpose.msra.mxu0 0
          %2013 = vmatprep.subr.bf16.mxu0 0
          %2014 = vmatpush2.bf16.xpose.msra.mxu0 0
          %2015 = vmatprep.subr.bf16.mxu0 0
          %2016 = vmatpush2.bf16.xpose.msra.mxu0 0
          %2017 = vmatprep.subr.bf16.mxu0 0
          %2018 = vmatpush2.bf16.xpose.msra.mxu0 0
          %2019 = vmatprep.subr.bf16.mxu0 0
          %2020 = vmatpush2.bf16.xpose.msra.mxu0 0
          %2021 = vmatprep.subr.bf16.mxu0 0
          %2022 = vmatpush2.bf16.xpose.msra.mxu0 0
          %2023 = vmatprep.subr.bf16.mxu0 0
          %2024 = vmatpush2.bf16.xpose.msra.mxu0 0
          %2025 = vmatprep.mubr.bf16.mxu0 0
          %2026 = vmatmul.mubr.bf16.gmra.mxu0 %v1988
          %v2027 = vpop.f32.mrf.mxu0
          %v2028 = vadd.f32 0.0, %v2027
          %v2029 = vpop.f32.mrf.mxu0
          %v2030 = vpop.f32.mrf.mxu0
          %v2031 = vadd.f32 0.0, %v2030
          %v2032 = vpop.f32.mrf.mxu0
          %2033 = vdwg.mxu0
          %v2035 = vsel %vm878, %v1982, 0
          %v2038 = vsel %vm878, %v1984, 0
          %2040 = vmatprep.subr.bf16.mxu0 0
          %2041 = vmatpush1.bf16.xpose.msra.mxu0 0
          %2042 = vmatprep.subr.bf16.mxu0 0
          %2043 = vmatpush1.bf16.xpose.msra.mxu0 0
          %2044 = vmatprep.subr.bf16.mxu0 0
          %2045 = vmatpush1.bf16.xpose.msra.mxu0 0
          %2046 = vmatprep.subr.bf16.mxu0 0
          %2047 = vmatpush1.bf16.xpose.msra.mxu0 0
          %2048 = vmatprep.subr.bf16.mxu0 0
          %2049 = vmatpush1.bf16.xpose.msra.mxu0 0
          %2050 = vmatprep.subr.bf16.mxu0 0
          %2051 = vmatpush1.bf16.xpose.msra.mxu0 0
          %2052 = vmatprep.subr.bf16.mxu0 0
          %2053 = vmatpush1.bf16.xpose.msra.mxu0 0
          %2054 = vmatprep.subr.bf16.mxu0 0
          %2055 = vmatpush1.bf16.xpose.msra.mxu0 %v2038
          %2056 = vmatprep.subr.bf16.mxu0 0
          %2057 = vmatpush2.bf16.xpose.msra.mxu0 0
          %2058 = vmatprep.subr.bf16.mxu0 0
          %2059 = vmatpush2.bf16.xpose.msra.mxu0 0
          %2060 = vmatprep.subr.bf16.mxu0 0
          %2061 = vmatpush2.bf16.xpose.msra.mxu0 0
          %2062 = vmatprep.subr.bf16.mxu0 0
          %2063 = vmatpush2.bf16.xpose.msra.mxu0 0
          %2064 = vmatprep.subr.bf16.mxu0 0
          %2065 = vmatpush2.bf16.xpose.msra.mxu0 0
          %2066 = vmatprep.subr.bf16.mxu0 0
          %2067 = vmatpush2.bf16.xpose.msra.mxu0 0
          %2068 = vmatprep.subr.bf16.mxu0 0
          %2069 = vmatpush2.bf16.xpose.msra.mxu0 0
          %2070 = vmatprep.subr.bf16.mxu0 0
          %2071 = vmatpush2.bf16.xpose.msra.mxu0 0
          %2072 = vmatprep.mubr.bf16.mxu0 0
          %2073 = vmatmul.mubr.bf16.gmra.mxu0 %v2035
          %v2074 = vpop.f32.mrf.mxu0
          %v2075 = vadd.f32 0.0, %v2074
          %v2076 = vpop.f32.mrf.mxu0
          %v2077 = vpop.f32.mrf.mxu0
          %v2078 = vadd.f32 0.0, %v2077
          %v2079 = vpop.f32.mrf.mxu0
          %2080 = vdwg.mxu0
          %vm2081 = vcmask 130048
          %v2082 = vsel %vm2081, %v2028, -inf
          %2083 = vmax.xlane.f32.xlu0 %v2082
          %v2084 = vpop.xlane.xlu0 %2083
          %v2085 = vsel %vm2081, %v2031, -inf
          %2086 = vmax.xlane.f32.xlu0 %v2085
          %v2087 = vpop.xlane.xlu0 %2086
          %v2088 = vsel %vm2081, %v2075, -inf
          %2089 = vmax.xlane.f32.xlu0 %v2088
          %v2090 = vpop.xlane.xlu0 %2089
          %v2091 = vsel %vm2081, %v2078, -inf
          %2092 = vmax.xlane.f32.xlu0 %v2091
          %v2093 = vpop.xlane.xlu0 %2092
          %v2094 = vsub.f32 %v2028, %v2084
          %v2095 = vsub.f32 %v2031, %v2087
          %v2096 = vsub.f32 %v2075, %v2090
          %v2097 = vsub.f32 %v2078, %v2093
          %v2098 = vmul.f32 %v2094, 1.442695
          %v2099 = vpow.pop %v2098
          %v2100 = vmul.f32 %v2095, 1.442695
          %v2101 = vpow.pop %v2100
          %v2102 = vmul.f32 %v2096, 1.442695
          %v2103 = vpow.pop %v2102
          %v2104 = vmul.f32 %v2097, 1.442695
          %v2105 = vpow.pop %v2104
          %v2106 = vsel %vm2081, %v2099, 0.0
          %2107 = vadd.xlane.f32.xlu0 %v2106
          %v2108 = vpop.xlane.xlu0 %2107
          %v2109 = vsel %vm2081, %v2101, 0.0
          %2110 = vadd.xlane.f32.xlu0 %v2109
          %v2111 = vpop.xlane.xlu0 %2110
          %v2112 = vsel %vm2081, %v2103, 0.0
          %2113 = vadd.xlane.f32.xlu0 %v2112
          %v2114 = vpop.xlane.xlu0 %2113
          %v2115 = vsel %vm2081, %v2105, 0.0
          %2116 = vadd.xlane.f32.xlu0 %v2115
          %v2117 = vpop.xlane.xlu0 %2116
          %v2118 = vrcp.pop %v2108
          %v2119 = vrcp.pop %v2111
          %v2120 = vrcp.pop %v2114
          %v2121 = vrcp.pop %v2117
          %v2122 = vmul.f32 %v2099, %v2118
          %v2123 = vmul.f32 %v2101, %v2119
          %v2124 = vmul.f32 %v2103, %v2120
          %v2125 = vmul.f32 %v2105, %v2121
          %v2126 = vpack.c.bf16 %v2123, %v2122
          %v2127 = vpack.c.bf16 %v2125, %v2124
          %v2129 = vsel %vm2081, %v2126, 0
          %2131 = vmatprep.subr.bf16.mxu0 0
          %2132 = vmatpush1.bf16.msra.mxu0 0
          %2133 = vmatprep.subr.bf16.mxu0 0
          %2134 = vmatpush1.bf16.msra.mxu0 0
          %2135 = vmatprep.subr.bf16.mxu0 0
          %2136 = vmatpush1.bf16.msra.mxu0 0
          %2137 = vmatprep.subr.bf16.mxu0 0
          %2138 = vmatpush1.bf16.msra.mxu0 0
          %2139 = vmatprep.subr.bf16.mxu0 0
          %2140 = vmatpush1.bf16.msra.mxu0 0
          %2141 = vmatprep.subr.bf16.mxu0 0
          %2142 = vmatpush1.bf16.msra.mxu0 0
          %2143 = vmatprep.subr.bf16.mxu0 0
          %2144 = vmatpush1.bf16.msra.mxu0 0
          %2145 = vmatprep.subr.bf16.mxu0 0
          %2146 = vmatpush1.bf16.msra.mxu0 %v1985
          %2147 = vmatprep.subr.bf16.mxu0 0
          %2148 = vmatpush2.bf16.msra.mxu0 0
          %2149 = vmatprep.subr.bf16.mxu0 0
          %2150 = vmatpush2.bf16.msra.mxu0 0
          %2151 = vmatprep.subr.bf16.mxu0 0
          %2152 = vmatpush2.bf16.msra.mxu0 0
          %2153 = vmatprep.subr.bf16.mxu0 0
          %2154 = vmatpush2.bf16.msra.mxu0 0
          %2155 = vmatprep.subr.bf16.mxu0 0
          %2156 = vmatpush2.bf16.msra.mxu0 0
          %2157 = vmatprep.subr.bf16.mxu0 0
          %2158 = vmatpush2.bf16.msra.mxu0 0
          %2159 = vmatprep.subr.bf16.mxu0 0
          %2160 = vmatpush2.bf16.msra.mxu0 0
          %2161 = vmatprep.subr.bf16.mxu0 0
          %2162 = vmatpush2.bf16.msra.mxu0 0
          %2163 = vmatprep.mubr.bf16.mxu0 0
          %2164 = vmatmul.mubr.bf16.gmra.mxu0 %v2129
          %v2165 = vpop.f32.mrf.mxu0
          %v2166 = vadd.f32 0.0, %v2165
          %v2167 = vpop.f32.mrf.mxu0
          %v2168 = vpop.f32.mrf.mxu0
          %v2169 = vadd.f32 0.0, %v2168
          %v2170 = vpop.f32.mrf.mxu0
          %2171 = vdwg.mxu0
          %v2173 = vsel %vm2081, %v2127, 0
          %2175 = vmatprep.subr.bf16.mxu0 0
          %2176 = vmatpush1.bf16.msra.mxu0 0
          %2177 = vmatprep.subr.bf16.mxu0 0
          %2178 = vmatpush1.bf16.msra.mxu0 0
          %2179 = vmatprep.subr.bf16.mxu0 0
          %2180 = vmatpush1.bf16.msra.mxu0 0
          %2181 = vmatprep.subr.bf16.mxu0 0
          %2182 = vmatpush1.bf16.msra.mxu0 0
          %2183 = vmatprep.subr.bf16.mxu0 0
          %2184 = vmatpush1.bf16.msra.mxu0 0
          %2185 = vmatprep.subr.bf16.mxu0 0
          %2186 = vmatpush1.bf16.msra.mxu0 0
          %2187 = vmatprep.subr.bf16.mxu0 0
          %2188 = vmatpush1.bf16.msra.mxu0 0
          %2189 = vmatprep.subr.bf16.mxu0 0
          %2190 = vmatpush1.bf16.msra.mxu0 %v1986
          %2191 = vmatprep.subr.bf16.mxu0 0
          %2192 = vmatpush2.bf16.msra.mxu0 0
          %2193 = vmatprep.subr.bf16.mxu0 0
          %2194 = vmatpush2.bf16.msra.mxu0 0
          %2195 = vmatprep.subr.bf16.mxu0 0
          %2196 = vmatpush2.bf16.msra.mxu0 0
          %2197 = vmatprep.subr.bf16.mxu0 0
          %2198 = vmatpush2.bf16.msra.mxu0 0
          %2199 = vmatprep.subr.bf16.mxu0 0
          %2200 = vmatpush2.bf16.msra.mxu0 0
          %2201 = vmatprep.subr.bf16.mxu0 0
          %2202 = vmatpush2.bf16.msra.mxu0 0
          %2203 = vmatprep.subr.bf16.mxu0 0
          %2204 = vmatpush2.bf16.msra.mxu0 0
          %2205 = vmatprep.subr.bf16.mxu0 0
          %2206 = vmatpush2.bf16.msra.mxu0 0
          %2207 = vmatprep.mubr.bf16.mxu0 0
          %2208 = vmatmul.mubr.bf16.gmra.mxu0 %v2173
          %v2209 = vpop.f32.mrf.mxu0
          %v2210 = vadd.f32 0.0, %v2209
          %v2211 = vpop.f32.mrf.mxu0
          %v2212 = vpop.f32.mrf.mxu0
          %v2213 = vadd.f32 0.0, %v2212
          %v2214 = vpop.f32.mrf.mxu0
          %2215 = vdwg.mxu0
          %v2216 = vpack.c.bf16 %v2169, %v2166
          %v2217 = vpack.c.bf16 %v2213, %v2210
          %v2218 = vld [vmem:[%s9] sm:$0xf]
          %v2219 = vld [vmem:[%s9 + $0x4] sm:$0xf]
          %v2220 = vld [vmem:[%s9 + $0x8] sm:$0xf]
          %v2221 = vld [vmem:[%s9 + $0xc] sm:$0xf]
          %v2222 = vld [vmem:[%s9 + $0x10] sm:$0xf]
          %v2223 = vld [vmem:[%s9 + $0x14] sm:$0xf]
          %v2224 = vld [vmem:[%s9 + $0x18] sm:$0xf]
          %v2225 = vld [vmem:[%s9 + $0x1c] sm:$0xf]
          %s2226 = scalar_lea.vmem %s7, 192
          %v2227 = vld [vmem:[%s2226] sm:$0xf]
          %v2228 = vld [vmem:[%s2226 + $0x4] sm:$0xf]
          %v2229 = vld [vmem:[%s2226 + $0x8] sm:$0xf]
          %v2230 = vld [vmem:[%s2226 + $0xc] sm:$0xf]
          %v2231 = vld [vmem:[%s2226 + $0x10] sm:$0xf]
          %v2232 = vld [vmem:[%s2226 + $0x14] sm:$0xf]
          %v2233 = vld [vmem:[%s2226 + $0x18] sm:$0xf]
          %v2234 = vld [vmem:[%s2226 + $0x1c] sm:$0xf]
          %v2235 = vld [vmem:[%s2226 + $0x20] sm:$0xf]
          %v2236 = vld [vmem:[%s2226 + $0x24] sm:$0xf]
          %v2237 = vld [vmem:[%s2226 + $0x28] sm:$0xf]
          %v2238 = vld [vmem:[%s2226 + $0x2c] sm:$0xf]
          %v2239 = vld [vmem:[%s2226 + $0x30] sm:$0xf]
          %v2240 = vld [vmem:[%s2226 + $0x34] sm:$0xf]
          %v2241 = vld [vmem:[%s2226 + $0x38] sm:$0xf]
          %v2242 = vld [vmem:[%s2226 + $0x3c] sm:$0xf]
          %s2243 = scalar_lea.vmem %s8, 3
          %v2244 = vld [vmem:[%s2243] sm:$0x1]
          %v2246 = vlaneseq
          %v2247 = vshrl.u32 %v2246, 7
          %v2248 = vsub.s32 0, %v2247
          %v2249 = vrot.slane %v2244, %v2248
          %v2267 = vunpack.c.l.b16 %v2227
          %v2268 = vunpack.c.l.b16 %v2228
          %v2269 = vunpack.c.l.b16 %v2229
          %v2270 = vunpack.c.l.b16 %v2230
          %v2271 = vunpack.c.l.b16 %v2231
          %v2272 = vunpack.c.l.b16 %v2232
          %v2273 = vunpack.c.l.b16 %v2233
          %v2274 = vunpack.c.l.b16 %v2234
          %v2275 = vunpack.c.l.b16 %v2235
          %v2276 = vunpack.c.l.b16 %v2236
          %v2277 = vunpack.c.l.b16 %v2237
          %v2278 = vunpack.c.l.b16 %v2238
          %v2279 = vunpack.c.l.b16 %v2239
          %v2280 = vunpack.c.l.b16 %v2240
          %v2281 = vunpack.c.l.b16 %v2241
          %v2282 = vunpack.c.l.b16 %v2242
          %v2283 = vpack.c.b16 %v2268, %v2267
          %v2284 = vpack.c.b16 %v2270, %v2269
          %v2285 = vpack.c.b16 %v2272, %v2271
          %v2286 = vpack.c.b16 %v2274, %v2273
          %v2287 = vpack.c.b16 %v2276, %v2275
          %v2288 = vpack.c.b16 %v2278, %v2277
          %v2289 = vpack.c.b16 %v2280, %v2279
          %v2290 = vpack.c.b16 %v2282, %v2281
          %2299 = vmatprep.subr.bf16.mxu0 0
          %2300 = vmatpush1.bf16.msra.mxu0 %v2290
          %2301 = vmatprep.subr.bf16.mxu0 0
          %2302 = vmatpush1.bf16.msra.mxu0 %v2289
          %2303 = vmatprep.subr.bf16.mxu0 0
          %2304 = vmatpush1.bf16.msra.mxu0 %v2288
          %2305 = vmatprep.subr.bf16.mxu0 0
          %2306 = vmatpush1.bf16.msra.mxu0 %v2287
          %2307 = vmatprep.subr.bf16.mxu0 0
          %2308 = vmatpush1.bf16.msra.mxu0 %v2286
          %2309 = vmatprep.subr.bf16.mxu0 0
          %2310 = vmatpush1.bf16.msra.mxu0 %v2285
          %2311 = vmatprep.subr.bf16.mxu0 0
          %2312 = vmatpush1.bf16.msra.mxu0 %v2284
          %2313 = vmatprep.subr.bf16.mxu0 0
          %2314 = vmatpush1.bf16.msra.mxu0 %v2283
          %2315 = vmatprep.subr.bf16.mxu0 0
          %2316 = vmatpush2.bf16.msra.mxu0 0
          %2317 = vmatprep.subr.bf16.mxu0 0
          %2318 = vmatpush2.bf16.msra.mxu0 0
          %2319 = vmatprep.subr.bf16.mxu0 0
          %2320 = vmatpush2.bf16.msra.mxu0 0
          %2321 = vmatprep.subr.bf16.mxu0 0
          %2322 = vmatpush2.bf16.msra.mxu0 0
          %2323 = vmatprep.subr.bf16.mxu0 0
          %2324 = vmatpush2.bf16.msra.mxu0 0
          %2325 = vmatprep.subr.bf16.mxu0 0
          %2326 = vmatpush2.bf16.msra.mxu0 0
          %2327 = vmatprep.subr.bf16.mxu0 0
          %2328 = vmatpush2.bf16.msra.mxu0 0
          %2329 = vmatprep.subr.bf16.mxu0 0
          %2330 = vmatpush2.bf16.msra.mxu0 0
          %2331 = vmatprep.mubr.bf16.mxu0 0
          %2332 = vmatmul.mubr.bf16.gmra.mxu0 %v1611
          %v2333 = vpop.f32.mrf.mxu0
          %v2334 = vadd.f32 %v2249, %v2333
          %v2335 = vpop.f32.mrf.mxu0
          %v2336 = vpop.f32.mrf.mxu0
          %v2337 = vadd.f32 %v2249, %v2336
          %v2338 = vpop.f32.mrf.mxu0
          %2339 = vmatprep.mubr.bf16.mxu0 0
          %2340 = vmatmul.mubr.bf16.gmra.mxu0 %v1612
          %v2341 = vpop.f32.mrf.mxu0
          %v2342 = vadd.f32 %v2249, %v2341
          %v2343 = vpop.f32.mrf.mxu0
          %v2344 = vpop.f32.mrf.mxu0
          %v2345 = vadd.f32 %v2249, %v2344
          %v2346 = vpop.f32.mrf.mxu0
          %2347 = vdwg.mxu0
          %s2348 = scalar_lea.vmem %s7, 256
          %v2349 = vld [vmem:[%s2348] sm:$0xf]
          %v2350 = vld [vmem:[%s2348 + $0x4] sm:$0xf]
          %v2351 = vld [vmem:[%s2348 + $0x8] sm:$0xf]
          %v2352 = vld [vmem:[%s2348 + $0xc] sm:$0xf]
          %v2353 = vld [vmem:[%s2348 + $0x10] sm:$0xf]
          %v2354 = vld [vmem:[%s2348 + $0x14] sm:$0xf]
          %v2355 = vld [vmem:[%s2348 + $0x18] sm:$0xf]
          %v2356 = vld [vmem:[%s2348 + $0x1c] sm:$0xf]
          %v2357 = vld [vmem:[%s2348 + $0x20] sm:$0xf]
          %v2358 = vld [vmem:[%s2348 + $0x24] sm:$0xf]
          %v2359 = vld [vmem:[%s2348 + $0x28] sm:$0xf]
          %v2360 = vld [vmem:[%s2348 + $0x2c] sm:$0xf]
          %v2361 = vld [vmem:[%s2348 + $0x30] sm:$0xf]
          %v2362 = vld [vmem:[%s2348 + $0x34] sm:$0xf]
          %v2363 = vld [vmem:[%s2348 + $0x38] sm:$0xf]
          %v2364 = vld [vmem:[%s2348 + $0x3c] sm:$0xf]
          %s2365 = scalar_lea.vmem %s8, 4
          %v2366 = vld [vmem:[%s2365] sm:$0x1]
          %v2368 = vlaneseq
          %v2369 = vshrl.u32 %v2368, 7
          %v2370 = vsub.s32 0, %v2369
          %v2371 = vrot.slane %v2366, %v2370
          %v2389 = vunpack.c.l.b16 %v2349
          %v2390 = vunpack.c.l.b16 %v2350
          %v2391 = vunpack.c.l.b16 %v2351
          %v2392 = vunpack.c.l.b16 %v2352
          %v2393 = vunpack.c.l.b16 %v2353
          %v2394 = vunpack.c.l.b16 %v2354
          %v2395 = vunpack.c.l.b16 %v2355
          %v2396 = vunpack.c.l.b16 %v2356
          %v2397 = vunpack.c.l.b16 %v2357
          %v2398 = vunpack.c.l.b16 %v2358
          %v2399 = vunpack.c.l.b16 %v2359
          %v2400 = vunpack.c.l.b16 %v2360
          %v2401 = vunpack.c.l.b16 %v2361
          %v2402 = vunpack.c.l.b16 %v2362
          %v2403 = vunpack.c.l.b16 %v2363
          %v2404 = vunpack.c.l.b16 %v2364
          %v2405 = vpack.c.b16 %v2390, %v2389
          %v2406 = vpack.c.b16 %v2392, %v2391
          %v2407 = vpack.c.b16 %v2394, %v2393
          %v2408 = vpack.c.b16 %v2396, %v2395
          %v2409 = vpack.c.b16 %v2398, %v2397
          %v2410 = vpack.c.b16 %v2400, %v2399
          %v2411 = vpack.c.b16 %v2402, %v2401
          %v2412 = vpack.c.b16 %v2404, %v2403
          %2421 = vmatprep.subr.bf16.mxu0 0
          %2422 = vmatpush1.bf16.msra.mxu0 %v2412
          %2423 = vmatprep.subr.bf16.mxu0 0
          %2424 = vmatpush1.bf16.msra.mxu0 %v2411
          %2425 = vmatprep.subr.bf16.mxu0 0
          %2426 = vmatpush1.bf16.msra.mxu0 %v2410
          %2427 = vmatprep.subr.bf16.mxu0 0
          %2428 = vmatpush1.bf16.msra.mxu0 %v2409
          %2429 = vmatprep.subr.bf16.mxu0 0
          %2430 = vmatpush1.bf16.msra.mxu0 %v2408
          %2431 = vmatprep.subr.bf16.mxu0 0
          %2432 = vmatpush1.bf16.msra.mxu0 %v2407
          %2433 = vmatprep.subr.bf16.mxu0 0
          %2434 = vmatpush1.bf16.msra.mxu0 %v2406
          %2435 = vmatprep.subr.bf16.mxu0 0
          %2436 = vmatpush1.bf16.msra.mxu0 %v2405
          %2437 = vmatprep.subr.bf16.mxu0 0
          %2438 = vmatpush2.bf16.msra.mxu0 0
          %2439 = vmatprep.subr.bf16.mxu0 0
          %2440 = vmatpush2.bf16.msra.mxu0 0
          %2441 = vmatprep.subr.bf16.mxu0 0
          %2442 = vmatpush2.bf16.msra.mxu0 0
          %2443 = vmatprep.subr.bf16.mxu0 0
          %2444 = vmatpush2.bf16.msra.mxu0 0
          %2445 = vmatprep.subr.bf16.mxu0 0
          %2446 = vmatpush2.bf16.msra.mxu0 0
          %2447 = vmatprep.subr.bf16.mxu0 0
          %2448 = vmatpush2.bf16.msra.mxu0 0
          %2449 = vmatprep.subr.bf16.mxu0 0
          %2450 = vmatpush2.bf16.msra.mxu0 0
          %2451 = vmatprep.subr.bf16.mxu0 0
          %2452 = vmatpush2.bf16.msra.mxu0 0
          %2453 = vmatprep.mubr.bf16.mxu0 0
          %2454 = vmatmul.mubr.bf16.gmra.mxu0 %v1611
          %v2455 = vpop.f32.mrf.mxu0
          %v2456 = vadd.f32 %v2371, %v2455
          %v2457 = vpop.f32.mrf.mxu0
          %v2458 = vpop.f32.mrf.mxu0
          %v2459 = vadd.f32 %v2371, %v2458
          %v2460 = vpop.f32.mrf.mxu0
          %2461 = vmatprep.mubr.bf16.mxu0 0
          %2462 = vmatmul.mubr.bf16.gmra.mxu0 %v1612
          %v2463 = vpop.f32.mrf.mxu0
          %v2464 = vadd.f32 %v2371, %v2463
          %v2465 = vpop.f32.mrf.mxu0
          %v2466 = vpop.f32.mrf.mxu0
          %v2467 = vadd.f32 %v2371, %v2466
          %v2468 = vpop.f32.mrf.mxu0
          %2469 = vdwg.mxu0
          %s2470 = scalar_lea.vmem %s7, 320
          %v2471 = vld [vmem:[%s2470] sm:$0xf]
          %v2472 = vld [vmem:[%s2470 + $0x4] sm:$0xf]
          %v2473 = vld [vmem:[%s2470 + $0x8] sm:$0xf]
          %v2474 = vld [vmem:[%s2470 + $0xc] sm:$0xf]
          %v2475 = vld [vmem:[%s2470 + $0x10] sm:$0xf]
          %v2476 = vld [vmem:[%s2470 + $0x14] sm:$0xf]
          %v2477 = vld [vmem:[%s2470 + $0x18] sm:$0xf]
          %v2478 = vld [vmem:[%s2470 + $0x1c] sm:$0xf]
          %v2479 = vld [vmem:[%s2470 + $0x20] sm:$0xf]
          %v2480 = vld [vmem:[%s2470 + $0x24] sm:$0xf]
          %v2481 = vld [vmem:[%s2470 + $0x28] sm:$0xf]
          %v2482 = vld [vmem:[%s2470 + $0x2c] sm:$0xf]
          %v2483 = vld [vmem:[%s2470 + $0x30] sm:$0xf]
          %v2484 = vld [vmem:[%s2470 + $0x34] sm:$0xf]
          %v2485 = vld [vmem:[%s2470 + $0x38] sm:$0xf]
          %v2486 = vld [vmem:[%s2470 + $0x3c] sm:$0xf]
          %s2487 = scalar_lea.vmem %s8, 5
          %v2488 = vld [vmem:[%s2487] sm:$0x1]
          %v2490 = vlaneseq
          %v2491 = vshrl.u32 %v2490, 7
          %v2492 = vsub.s32 0, %v2491
          %v2493 = vrot.slane %v2488, %v2492
          %v2511 = vunpack.c.l.b16 %v2471
          %v2512 = vunpack.c.l.b16 %v2472
          %v2513 = vunpack.c.l.b16 %v2473
          %v2514 = vunpack.c.l.b16 %v2474
          %v2515 = vunpack.c.l.b16 %v2475
          %v2516 = vunpack.c.l.b16 %v2476
          %v2517 = vunpack.c.l.b16 %v2477
          %v2518 = vunpack.c.l.b16 %v2478
          %v2519 = vunpack.c.l.b16 %v2479
          %v2520 = vunpack.c.l.b16 %v2480
          %v2521 = vunpack.c.l.b16 %v2481
          %v2522 = vunpack.c.l.b16 %v2482
          %v2523 = vunpack.c.l.b16 %v2483
          %v2524 = vunpack.c.l.b16 %v2484
          %v2525 = vunpack.c.l.b16 %v2485
          %v2526 = vunpack.c.l.b16 %v2486
          %v2527 = vpack.c.b16 %v2512, %v2511
          %v2528 = vpack.c.b16 %v2514, %v2513
          %v2529 = vpack.c.b16 %v2516, %v2515
          %v2530 = vpack.c.b16 %v2518, %v2517
          %v2531 = vpack.c.b16 %v2520, %v2519
          %v2532 = vpack.c.b16 %v2522, %v2521
          %v2533 = vpack.c.b16 %v2524, %v2523
          %v2534 = vpack.c.b16 %v2526, %v2525
          %2543 = vmatprep.subr.bf16.mxu0 0
          %2544 = vmatpush1.bf16.msra.mxu0 %v2534
          %2545 = vmatprep.subr.bf16.mxu0 0
          %2546 = vmatpush1.bf16.msra.mxu0 %v2533
          %2547 = vmatprep.subr.bf16.mxu0 0
          %2548 = vmatpush1.bf16.msra.mxu0 %v2532
          %2549 = vmatprep.subr.bf16.mxu0 0
          %2550 = vmatpush1.bf16.msra.mxu0 %v2531
          %2551 = vmatprep.subr.bf16.mxu0 0
          %2552 = vmatpush1.bf16.msra.mxu0 %v2530
          %2553 = vmatprep.subr.bf16.mxu0 0
          %2554 = vmatpush1.bf16.msra.mxu0 %v2529
          %2555 = vmatprep.subr.bf16.mxu0 0
          %2556 = vmatpush1.bf16.msra.mxu0 %v2528
          %2557 = vmatprep.subr.bf16.mxu0 0
          %2558 = vmatpush1.bf16.msra.mxu0 %v2527
          %2559 = vmatprep.subr.bf16.mxu0 0
          %2560 = vmatpush2.bf16.msra.mxu0 0
          %2561 = vmatprep.subr.bf16.mxu0 0
          %2562 = vmatpush2.bf16.msra.mxu0 0
          %2563 = vmatprep.subr.bf16.mxu0 0
          %2564 = vmatpush2.bf16.msra.mxu0 0
          %2565 = vmatprep.subr.bf16.mxu0 0
          %2566 = vmatpush2.bf16.msra.mxu0 0
          %2567 = vmatprep.subr.bf16.mxu0 0
          %2568 = vmatpush2.bf16.msra.mxu0 0
          %2569 = vmatprep.subr.bf16.mxu0 0
          %2570 = vmatpush2.bf16.msra.mxu0 0
          %2571 = vmatprep.subr.bf16.mxu0 0
          %2572 = vmatpush2.bf16.msra.mxu0 0
          %2573 = vmatprep.subr.bf16.mxu0 0
          %2574 = vmatpush2.bf16.msra.mxu0 0
          %2575 = vmatprep.mubr.bf16.mxu0 0
          %2576 = vmatmul.mubr.bf16.gmra.mxu0 %v1611
          %v2577 = vpop.f32.mrf.mxu0
          %v2578 = vadd.f32 %v2493, %v2577
          %v2579 = vpop.f32.mrf.mxu0
          %v2580 = vpop.f32.mrf.mxu0
          %v2581 = vadd.f32 %v2493, %v2580
          %v2582 = vpop.f32.mrf.mxu0
          %2583 = vmatprep.mubr.bf16.mxu0 0
          %2584 = vmatmul.mubr.bf16.gmra.mxu0 %v1612
          %v2585 = vpop.f32.mrf.mxu0
          %v2586 = vadd.f32 %v2493, %v2585
          %v2587 = vpop.f32.mrf.mxu0
          %v2588 = vpop.f32.mrf.mxu0
          %v2589 = vadd.f32 %v2493, %v2588
          %v2590 = vpop.f32.mrf.mxu0
          %2591 = vdwg.mxu0
          %v2592 = vmul.f32 %v2334, 0.125
          %v2593 = vmul.f32 %v2337, 0.125
          %v2594 = vmul.f32 %v2342, 0.125
          %v2595 = vmul.f32 %v2345, 0.125
          %v2596 = vpack.c.bf16 %v2593, %v2592
          %v2597 = vpack.c.bf16 %v2595, %v2594
          %v2598 = vpack.c.bf16 %v2459, %v2456
          %v2599 = vpack.c.bf16 %v2467, %v2464
          %v2600 = vpack.c.bf16 %v2581, %v2578
          %v2601 = vpack.c.bf16 %v2589, %v2586
          %v2603 = vsel %vm878, %v2596, 0
          %v2606 = vsel %vm878, %v2598, 0
          %2608 = vmatprep.subr.bf16.mxu0 0
          %2609 = vmatpush1.bf16.xpose.msra.mxu0 0
          %2610 = vmatprep.subr.bf16.mxu0 0
          %2611 = vmatpush1.bf16.xpose.msra.mxu0 0
          %2612 = vmatprep.subr.bf16.mxu0 0
          %2613 = vmatpush1.bf16.xpose.msra.mxu0 0
          %2614 = vmatprep.subr.bf16.mxu0 0
          %2615 = vmatpush1.bf16.xpose.msra.mxu0 0
          %2616 = vmatprep.subr.bf16.mxu0 0
          %2617 = vmatpush1.bf16.xpose.msra.mxu0 0
          %2618 = vmatprep.subr.bf16.mxu0 0
          %2619 = vmatpush1.bf16.xpose.msra.mxu0 0
          %2620 = vmatprep.subr.bf16.mxu0 0
          %2621 = vmatpush1.bf16.xpose.msra.mxu0 0
          %2622 = vmatprep.subr.bf16.mxu0 0
          %2623 = vmatpush1.bf16.xpose.msra.mxu0 %v2606
          %2624 = vmatprep.subr.bf16.mxu0 0
          %2625 = vmatpush2.bf16.xpose.msra.mxu0 0
          %2626 = vmatprep.subr.bf16.mxu0 0
          %2627 = vmatpush2.bf16.xpose.msra.mxu0 0
          %2628 = vmatprep.subr.bf16.mxu0 0
          %2629 = vmatpush2.bf16.xpose.msra.mxu0 0
          %2630 = vmatprep.subr.bf16.mxu0 0
          %2631 = vmatpush2.bf16.xpose.msra.mxu0 0
          %2632 = vmatprep.subr.bf16.mxu0 0
          %2633 = vmatpush2.bf16.xpose.msra.mxu0 0
          %2634 = vmatprep.subr.bf16.mxu0 0
          %2635 = vmatpush2.bf16.xpose.msra.mxu0 0
          %2636 = vmatprep.subr.bf16.mxu0 0
          %2637 = vmatpush2.bf16.xpose.msra.mxu0 0
          %2638 = vmatprep.subr.bf16.mxu0 0
          %2639 = vmatpush2.bf16.xpose.msra.mxu0 0
          %2640 = vmatprep.mubr.bf16.mxu0 0
          %2641 = vmatmul.mubr.bf16.gmra.mxu0 %v2603
          %v2642 = vpop.f32.mrf.mxu0
          %v2643 = vadd.f32 0.0, %v2642
          %v2644 = vpop.f32.mrf.mxu0
          %v2645 = vpop.f32.mrf.mxu0
          %v2646 = vadd.f32 0.0, %v2645
          %v2647 = vpop.f32.mrf.mxu0
          %2648 = vdwg.mxu0
          %v2650 = vsel %vm878, %v2597, 0
          %v2653 = vsel %vm878, %v2599, 0
          %2655 = vmatprep.subr.bf16.mxu0 0
          %2656 = vmatpush1.bf16.xpose.msra.mxu0 0
          %2657 = vmatprep.subr.bf16.mxu0 0
          %2658 = vmatpush1.bf16.xpose.msra.mxu0 0
          %2659 = vmatprep.subr.bf16.mxu0 0
          %2660 = vmatpush1.bf16.xpose.msra.mxu0 0
          %2661 = vmatprep.subr.bf16.mxu0 0
          %2662 = vmatpush1.bf16.xpose.msra.mxu0 0
          %2663 = vmatprep.subr.bf16.mxu0 0
          %2664 = vmatpush1.bf16.xpose.msra.mxu0 0
          %2665 = vmatprep.subr.bf16.mxu0 0
          %2666 = vmatpush1.bf16.xpose.msra.mxu0 0
          %2667 = vmatprep.subr.bf16.mxu0 0
          %2668 = vmatpush1.bf16.xpose.msra.mxu0 0
          %2669 = vmatprep.subr.bf16.mxu0 0
          %2670 = vmatpush1.bf16.xpose.msra.mxu0 %v2653
          %2671 = vmatprep.subr.bf16.mxu0 0
          %2672 = vmatpush2.bf16.xpose.msra.mxu0 0
          %2673 = vmatprep.subr.bf16.mxu0 0
          %2674 = vmatpush2.bf16.xpose.msra.mxu0 0
          %2675 = vmatprep.subr.bf16.mxu0 0
          %2676 = vmatpush2.bf16.xpose.msra.mxu0 0
          %2677 = vmatprep.subr.bf16.mxu0 0
          %2678 = vmatpush2.bf16.xpose.msra.mxu0 0
          %2679 = vmatprep.subr.bf16.mxu0 0
          %2680 = vmatpush2.bf16.xpose.msra.mxu0 0
          %2681 = vmatprep.subr.bf16.mxu0 0
          %2682 = vmatpush2.bf16.xpose.msra.mxu0 0
          %2683 = vmatprep.subr.bf16.mxu0 0
          %2684 = vmatpush2.bf16.xpose.msra.mxu0 0
          %2685 = vmatprep.subr.bf16.mxu0 0
          %2686 = vmatpush2.bf16.xpose.msra.mxu0 0
          %2687 = vmatprep.mubr.bf16.mxu0 0
          %2688 = vmatmul.mubr.bf16.gmra.mxu0 %v2650
          %v2689 = vpop.f32.mrf.mxu0
          %v2690 = vadd.f32 0.0, %v2689
          %v2691 = vpop.f32.mrf.mxu0
          %v2692 = vpop.f32.mrf.mxu0
          %v2693 = vadd.f32 0.0, %v2692
          %v2694 = vpop.f32.mrf.mxu0
          %2695 = vdwg.mxu0
          %v2696 = vsel %vm2081, %v2643, -inf
          %2697 = vmax.xlane.f32.xlu0 %v2696
          %v2698 = vpop.xlane.xlu0 %2697
          %v2699 = vsel %vm2081, %v2646, -inf
          %2700 = vmax.xlane.f32.xlu0 %v2699
          %v2701 = vpop.xlane.xlu0 %2700
          %v2702 = vsel %vm2081, %v2690, -inf
          %2703 = vmax.xlane.f32.xlu0 %v2702
          %v2704 = vpop.xlane.xlu0 %2703
          %v2705 = vsel %vm2081, %v2693, -inf
          %2706 = vmax.xlane.f32.xlu0 %v2705
          %v2707 = vpop.xlane.xlu0 %2706
          %v2708 = vsub.f32 %v2643, %v2698
          %v2709 = vsub.f32 %v2646, %v2701
          %v2710 = vsub.f32 %v2690, %v2704
          %v2711 = vsub.f32 %v2693, %v2707
          %v2712 = vmul.f32 %v2708, 1.442695
          %v2713 = vpow.pop %v2712
          %v2714 = vmul.f32 %v2709, 1.442695
          %v2715 = vpow.pop %v2714
          %v2716 = vmul.f32 %v2710, 1.442695
          %v2717 = vpow.pop %v2716
          %v2718 = vmul.f32 %v2711, 1.442695
          %v2719 = vpow.pop %v2718
          %v2720 = vsel %vm2081, %v2713, 0.0
          %2721 = vadd.xlane.f32.xlu0 %v2720
          %v2722 = vpop.xlane.xlu0 %2721
          %v2723 = vsel %vm2081, %v2715, 0.0
          %2724 = vadd.xlane.f32.xlu0 %v2723
          %v2725 = vpop.xlane.xlu0 %2724
          %v2726 = vsel %vm2081, %v2717, 0.0
          %2727 = vadd.xlane.f32.xlu0 %v2726
          %v2728 = vpop.xlane.xlu0 %2727
          %v2729 = vsel %vm2081, %v2719, 0.0
          %2730 = vadd.xlane.f32.xlu0 %v2729
          %v2731 = vpop.xlane.xlu0 %2730
          %v2732 = vrcp.pop %v2722
          %v2733 = vrcp.pop %v2725
          %v2734 = vrcp.pop %v2728
          %v2735 = vrcp.pop %v2731
          %v2736 = vmul.f32 %v2713, %v2732
          %v2737 = vmul.f32 %v2715, %v2733
          %v2738 = vmul.f32 %v2717, %v2734
          %v2739 = vmul.f32 %v2719, %v2735
          %v2740 = vpack.c.bf16 %v2737, %v2736
          %v2741 = vpack.c.bf16 %v2739, %v2738
          %v2743 = vsel %vm2081, %v2740, 0
          %2745 = vmatprep.subr.bf16.mxu0 0
          %2746 = vmatpush1.bf16.msra.mxu0 0
          %2747 = vmatprep.subr.bf16.mxu0 0
          %2748 = vmatpush1.bf16.msra.mxu0 0
          %2749 = vmatprep.subr.bf16.mxu0 0
          %2750 = vmatpush1.bf16.msra.mxu0 0
          %2751 = vmatprep.subr.bf16.mxu0 0
          %2752 = vmatpush1.bf16.msra.mxu0 0
          %2753 = vmatprep.subr.bf16.mxu0 0
          %2754 = vmatpush1.bf16.msra.mxu0 0
          %2755 = vmatprep.subr.bf16.mxu0 0
          %2756 = vmatpush1.bf16.msra.mxu0 0
          %2757 = vmatprep.subr.bf16.mxu0 0
          %2758 = vmatpush1.bf16.msra.mxu0 0
          %2759 = vmatprep.subr.bf16.mxu0 0
          %2760 = vmatpush1.bf16.msra.mxu0 %v2600
          %2761 = vmatprep.subr.bf16.mxu0 0
          %2762 = vmatpush2.bf16.msra.mxu0 0
          %2763 = vmatprep.subr.bf16.mxu0 0
          %2764 = vmatpush2.bf16.msra.mxu0 0
          %2765 = vmatprep.subr.bf16.mxu0 0
          %2766 = vmatpush2.bf16.msra.mxu0 0
          %2767 = vmatprep.subr.bf16.mxu0 0
          %2768 = vmatpush2.bf16.msra.mxu0 0
          %2769 = vmatprep.subr.bf16.mxu0 0
          %2770 = vmatpush2.bf16.msra.mxu0 0
          %2771 = vmatprep.subr.bf16.mxu0 0
          %2772 = vmatpush2.bf16.msra.mxu0 0
          %2773 = vmatprep.subr.bf16.mxu0 0
          %2774 = vmatpush2.bf16.msra.mxu0 0
          %2775 = vmatprep.subr.bf16.mxu0 0
          %2776 = vmatpush2.bf16.msra.mxu0 0
          %2777 = vmatprep.mubr.bf16.mxu0 0
          %2778 = vmatmul.mubr.bf16.gmra.mxu0 %v2743
          %v2779 = vpop.f32.mrf.mxu0
          %v2780 = vadd.f32 0.0, %v2779
          %v2781 = vpop.f32.mrf.mxu0
          %v2782 = vpop.f32.mrf.mxu0
          %v2783 = vadd.f32 0.0, %v2782
          %v2784 = vpop.f32.mrf.mxu0
          %2785 = vdwg.mxu0
          %v2787 = vsel %vm2081, %v2741, 0
          %2789 = vmatprep.subr.bf16.mxu0 0
          %2790 = vmatpush1.bf16.msra.mxu0 0
          %2791 = vmatprep.subr.bf16.mxu0 0
          %2792 = vmatpush1.bf16.msra.mxu0 0
          %2793 = vmatprep.subr.bf16.mxu0 0
          %2794 = vmatpush1.bf16.msra.mxu0 0
          %2795 = vmatprep.subr.bf16.mxu0 0
          %2796 = vmatpush1.bf16.msra.mxu0 0
          %2797 = vmatprep.subr.bf16.mxu0 0
          %2798 = vmatpush1.bf16.msra.mxu0 0
          %2799 = vmatprep.subr.bf16.mxu0 0
          %2800 = vmatpush1.bf16.msra.mxu0 0
          %2801 = vmatprep.subr.bf16.mxu0 0
          %2802 = vmatpush1.bf16.msra.mxu0 0
          %2803 = vmatprep.subr.bf16.mxu0 0
          %2804 = vmatpush1.bf16.msra.mxu0 %v2601
          %2805 = vmatprep.subr.bf16.mxu0 0
          %2806 = vmatpush2.bf16.msra.mxu0 0
          %2807 = vmatprep.subr.bf16.mxu0 0
          %2808 = vmatpush2.bf16.msra.mxu0 0
          %2809 = vmatprep.subr.bf16.mxu0 0
          %2810 = vmatpush2.bf16.msra.mxu0 0
          %2811 = vmatprep.subr.bf16.mxu0 0
          %2812 = vmatpush2.bf16.msra.mxu0 0
          %2813 = vmatprep.subr.bf16.mxu0 0
          %2814 = vmatpush2.bf16.msra.mxu0 0
          %2815 = vmatprep.subr.bf16.mxu0 0
          %2816 = vmatpush2.bf16.msra.mxu0 0
          %2817 = vmatprep.subr.bf16.mxu0 0
          %2818 = vmatpush2.bf16.msra.mxu0 0
          %2819 = vmatprep.subr.bf16.mxu0 0
          %2820 = vmatpush2.bf16.msra.mxu0 0
          %2821 = vmatprep.mubr.bf16.mxu0 0
          %2822 = vmatmul.mubr.bf16.gmra.mxu0 %v2787
          %v2823 = vpop.f32.mrf.mxu0
          %v2824 = vadd.f32 0.0, %v2823
          %v2825 = vpop.f32.mrf.mxu0
          %v2826 = vpop.f32.mrf.mxu0
          %v2827 = vadd.f32 0.0, %v2826
          %v2828 = vpop.f32.mrf.mxu0
          %2829 = vdwg.mxu0
          %v2830 = vpack.c.bf16 %v2783, %v2780
          %v2831 = vpack.c.bf16 %v2827, %v2824
          %s2832 = scalar_lea.vmem %s9, 32
          %v2833 = vld [vmem:[%s2832] sm:$0xf]
          %v2834 = vld [vmem:[%s2832 + $0x4] sm:$0xf]
          %v2835 = vld [vmem:[%s2832 + $0x8] sm:$0xf]
          %v2836 = vld [vmem:[%s2832 + $0xc] sm:$0xf]
          %v2837 = vld [vmem:[%s2832 + $0x10] sm:$0xf]
          %v2838 = vld [vmem:[%s2832 + $0x14] sm:$0xf]
          %v2839 = vld [vmem:[%s2832 + $0x18] sm:$0xf]
          %v2840 = vld [vmem:[%s2832 + $0x1c] sm:$0xf]
          %v2849 = vunpack.c.l.b16 %v2833
          %v2850 = vunpack.c.l.b16 %v2834
          %v2851 = vunpack.c.l.b16 %v2835
          %v2852 = vunpack.c.l.b16 %v2836
          %v2853 = vunpack.c.l.b16 %v2837
          %v2854 = vunpack.c.l.b16 %v2838
          %v2855 = vunpack.c.l.b16 %v2839
          %v2856 = vunpack.c.l.b16 %v2840
          %v2857 = vpack.c.b16 %v2850, %v2849
          %v2858 = vpack.c.b16 %v2852, %v2851
          %v2859 = vpack.c.b16 %v2854, %v2853
          %v2860 = vpack.c.b16 %v2856, %v2855
          %v2866 = vsel %vm878, %v2830, 0
          %v2869 = vsel %vm878, %v2831, 0
          %2871 = vmatprep.subr.bf16.mxu0 0
          %2872 = vmatpush1.bf16.msra.mxu0 0
          %2873 = vmatprep.subr.bf16.mxu0 0
          %2874 = vmatpush1.bf16.msra.mxu0 0
          %2875 = vmatprep.subr.bf16.mxu0 0
          %2876 = vmatpush1.bf16.msra.mxu0 0
          %2877 = vmatprep.subr.bf16.mxu0 0
          %2878 = vmatpush1.bf16.msra.mxu0 0
          %2879 = vmatprep.subr.bf16.mxu0 0
          %2880 = vmatpush1.bf16.msra.mxu0 %v2860
          %2881 = vmatprep.subr.bf16.mxu0 0
          %2882 = vmatpush1.bf16.msra.mxu0 %v2859
          %2883 = vmatprep.subr.bf16.mxu0 0
          %2884 = vmatpush1.bf16.msra.mxu0 %v2858
          %2885 = vmatprep.subr.bf16.mxu0 0
          %2886 = vmatpush1.bf16.msra.mxu0 %v2857
          %2887 = vmatprep.subr.bf16.mxu0 0
          %2888 = vmatpush2.bf16.msra.mxu0 0
          %2889 = vmatprep.subr.bf16.mxu0 0
          %2890 = vmatpush2.bf16.msra.mxu0 0
          %2891 = vmatprep.subr.bf16.mxu0 0
          %2892 = vmatpush2.bf16.msra.mxu0 0
          %2893 = vmatprep.subr.bf16.mxu0 0
          %2894 = vmatpush2.bf16.msra.mxu0 0
          %2895 = vmatprep.subr.bf16.mxu0 0
          %2896 = vmatpush2.bf16.msra.mxu0 0
          %2897 = vmatprep.subr.bf16.mxu0 0
          %2898 = vmatpush2.bf16.msra.mxu0 0
          %2899 = vmatprep.subr.bf16.mxu0 0
          %2900 = vmatpush2.bf16.msra.mxu0 0
          %2901 = vmatprep.subr.bf16.mxu0 0
          %2902 = vmatpush2.bf16.msra.mxu0 0
          %2903 = vmatprep.mubr.bf16.mxu0 0
          %2904 = vmatmul.mubr.bf16.gmra.mxu0 %v2866
          %v2905 = vpop.f32.mrf.mxu0
          %v2906 = vadd.f32 0.0, %v2905
          %v2907 = vpop.f32.mrf.mxu0
          %v2908 = vpop.f32.mrf.mxu0
          %v2909 = vadd.f32 0.0, %v2908
          %v2910 = vpop.f32.mrf.mxu0
          %2911 = vmatprep.mubr.bf16.mxu0 0
          %2912 = vmatmul.mubr.bf16.gmra.mxu0 %v2869
          %v2913 = vpop.f32.mrf.mxu0
          %v2914 = vadd.f32 0.0, %v2913
          %v2915 = vpop.f32.mrf.mxu0
          %v2916 = vpop.f32.mrf.mxu0
          %v2917 = vadd.f32 0.0, %v2916
          %v2918 = vpop.f32.mrf.mxu0
          %2919 = vdwg.mxu0
          %v2928 = vunpack.c.l.b16 %v2218
          %v2929 = vunpack.c.l.b16 %v2219
          %v2930 = vunpack.c.l.b16 %v2220
          %v2931 = vunpack.c.l.b16 %v2221
          %v2932 = vunpack.c.l.b16 %v2222
          %v2933 = vunpack.c.l.b16 %v2223
          %v2934 = vunpack.c.l.b16 %v2224
          %v2935 = vunpack.c.l.b16 %v2225
          %v2936 = vpack.c.b16 %v2929, %v2928
          %v2937 = vpack.c.b16 %v2931, %v2930
          %v2938 = vpack.c.b16 %v2933, %v2932
          %v2939 = vpack.c.b16 %v2935, %v2934
          %v2945 = vsel %vm878, %v2216, 0
          %v2948 = vsel %vm878, %v2217, 0
          %2950 = vmatprep.subr.bf16.mxu0 0
          %2951 = vmatpush1.bf16.msra.mxu0 0
          %2952 = vmatprep.subr.bf16.mxu0 0
          %2953 = vmatpush1.bf16.msra.mxu0 0
          %2954 = vmatprep.subr.bf16.mxu0 0
          %2955 = vmatpush1.bf16.msra.mxu0 0
          %2956 = vmatprep.subr.bf16.mxu0 0
          %2957 = vmatpush1.bf16.msra.mxu0 0
          %2958 = vmatprep.subr.bf16.mxu0 0
          %2959 = vmatpush1.bf16.msra.mxu0 %v2939
          %2960 = vmatprep.subr.bf16.mxu0 0
          %2961 = vmatpush1.bf16.msra.mxu0 %v2938
          %2962 = vmatprep.subr.bf16.mxu0 0
          %2963 = vmatpush1.bf16.msra.mxu0 %v2937
          %2964 = vmatprep.subr.bf16.mxu0 0
          %2965 = vmatpush1.bf16.msra.mxu0 %v2936
          %2966 = vmatprep.subr.bf16.mxu0 0
          %2967 = vmatpush2.bf16.msra.mxu0 0
          %2968 = vmatprep.subr.bf16.mxu0 0
          %2969 = vmatpush2.bf16.msra.mxu0 0
          %2970 = vmatprep.subr.bf16.mxu0 0
          %2971 = vmatpush2.bf16.msra.mxu0 0
          %2972 = vmatprep.subr.bf16.mxu0 0
          %2973 = vmatpush2.bf16.msra.mxu0 0
          %2974 = vmatprep.subr.bf16.mxu0 0
          %2975 = vmatpush2.bf16.msra.mxu0 0
          %2976 = vmatprep.subr.bf16.mxu0 0
          %2977 = vmatpush2.bf16.msra.mxu0 0
          %2978 = vmatprep.subr.bf16.mxu0 0
          %2979 = vmatpush2.bf16.msra.mxu0 0
          %2980 = vmatprep.subr.bf16.mxu0 0
          %2981 = vmatpush2.bf16.msra.mxu0 0
          %2982 = vmatprep.mubr.bf16.mxu0 0
          %2983 = vmatmul.mubr.bf16.gmra.mxu0 %v2945
          %v2984 = vpop.f32.mrf.mxu0
          %v2985 = vadd.f32 %v2906, %v2984
          %v2986 = vpop.f32.mrf.mxu0
          %v2987 = vpop.f32.mrf.mxu0
          %v2988 = vadd.f32 %v2909, %v2987
          %v2989 = vpop.f32.mrf.mxu0
          %2990 = vmatprep.mubr.bf16.mxu0 0
          %2991 = vmatmul.mubr.bf16.gmra.mxu0 %v2948
          %v2992 = vpop.f32.mrf.mxu0
          %v2993 = vadd.f32 %v2914, %v2992
          %v2994 = vpop.f32.mrf.mxu0
          %v2995 = vpop.f32.mrf.mxu0
          %v2996 = vadd.f32 %v2917, %v2995
          %v2997 = vpop.f32.mrf.mxu0
          %2998 = vdwg.mxu0
          %v2999 = vadd.f32 %v1542, %v2985
          %v3000 = vadd.f32 %v1438, %v2988
          %v3001 = vadd.f32 %v1543, %v2993
          %v3002 = vadd.f32 %v1536, %v2996
          %v3003 = vld [vmem:[%s10] sm:$0x1]
          %v3005 = vlaneseq
          %v3006 = vshrl.u32 %v3005, 7
          %v3007 = vsub.s32 0, %v3006
          %v3008 = vrot.slane %v3003, %v3007
          %v3010 = vadd.f32 %v2999, %v3008
          %v3011 = vadd.f32 %v3000, %v3008
          %v3012 = vadd.f32 %v3001, %v3008
          %v3013 = vadd.f32 %v3002, %v3008
          %v3014 = vld [vmem:[%s11] sm:$0x1]
          %v3015 = vld [vmem:[%s12] sm:$0x1]
          %3016 = vadd.xlane.f32.xlu0 %v3010
          %v3017 = vpop.xlane.xlu0 %3016
          %3018 = vadd.xlane.f32.xlu0 %v3011
          %v3019 = vpop.xlane.xlu0 %3018
          %3020 = vadd.xlane.f32.xlu0 %v3012
          %v3021 = vpop.xlane.xlu0 %3020
          %3022 = vadd.xlane.f32.xlu0 %v3013
          %v3023 = vpop.xlane.xlu0 %3022
          %v3024 = vmul.f32 %v3017, %v1554
          %v3025 = vmul.f32 %v3019, %v1554
          %v3026 = vmul.f32 %v3021, %v1554
          %v3027 = vmul.f32 %v3023, %v1554
          %v3028 = vsub.f32 %v3010, %v3024
          %v3029 = vsub.f32 %v3011, %v3025
          %v3030 = vsub.f32 %v3012, %v3026
          %v3031 = vsub.f32 %v3013, %v3027
          %v3032 = vmul.f32 %v3028, %v3028
          %v3033 = vmul.f32 %v3029, %v3029
          %v3034 = vmul.f32 %v3030, %v3030
          %v3035 = vmul.f32 %v3031, %v3031
          %3036 = vadd.xlane.f32.xlu0 %v3032
          %v3037 = vpop.xlane.xlu0 %3036
          %3038 = vadd.xlane.f32.xlu0 %v3033
          %v3039 = vpop.xlane.xlu0 %3038
          %3040 = vadd.xlane.f32.xlu0 %v3034
          %v3041 = vpop.xlane.xlu0 %3040
          %3042 = vadd.xlane.f32.xlu0 %v3035
          %v3043 = vpop.xlane.xlu0 %3042
          %v3044 = vmul.f32 %v3037, %v1554
          %v3045 = vmul.f32 %v3039, %v1554
          %v3046 = vmul.f32 %v3041, %v1554
          %v3047 = vmul.f32 %v3043, %v1554
          %v3048 = vadd.f32 %v3044, 1e-05
          %v3049 = vadd.f32 %v3045, 1e-05
          %v3050 = vadd.f32 %v3046, 1e-05
          %v3051 = vadd.f32 %v3047, 1e-05
          %v3052 = vrsqrt.pop %v3048
          %v3053 = vrsqrt.pop %v3049
          %v3054 = vrsqrt.pop %v3050
          %v3055 = vrsqrt.pop %v3051
          %v3056 = vmul.f32 %v3028, %v3052
          %v3057 = vmul.f32 %v3029, %v3053
          %v3058 = vmul.f32 %v3030, %v3054
          %v3059 = vmul.f32 %v3031, %v3055
          %v3061 = vlaneseq
          %v3062 = vshrl.u32 %v3061, 7
          %v3063 = vsub.s32 0, %v3062
          %v3064 = vrot.slane %v3014, %v3063
          %v3066 = vmul.f32 %v3056, %v3064
          %v3067 = vmul.f32 %v3057, %v3064
          %v3068 = vmul.f32 %v3058, %v3064
          %v3069 = vmul.f32 %v3059, %v3064
          %v3071 = vlaneseq
          %v3072 = vshrl.u32 %v3071, 7
          %v3073 = vsub.s32 0, %v3072
          %v3074 = vrot.slane %v3015, %v3073
          %v3076 = vadd.f32 %v3066, %v3074
          %v3077 = vadd.f32 %v3067, %v3074
          %v3078 = vadd.f32 %v3068, %v3074
          %v3079 = vadd.f32 %v3069, %v3074
          %v3080 = vpack.c.bf16 %v3077, %v3076
          %v3081 = vpack.c.bf16 %v3079, %v3078
          %v3082 = vld [vmem:[%s13] sm:$0xff]
          %v3083 = vld [vmem:[%s13 + $0x8] sm:$0xff]
          %v3084 = vld [vmem:[%s13 + $0x10] sm:$0xff]
          %v3085 = vld [vmem:[%s13 + $0x18] sm:$0xff]
          %v3086 = vld [vmem:[%s13 + $0x20] sm:$0xff]
          %v3087 = vld [vmem:[%s13 + $0x28] sm:$0xff]
          %v3088 = vld [vmem:[%s13 + $0x30] sm:$0xff]
          %v3089 = vld [vmem:[%s13 + $0x38] sm:$0xff]
          %v3090 = vld [vmem:[%s13 + $0x40] sm:$0xff]
          %v3091 = vld [vmem:[%s13 + $0x48] sm:$0xff]
          %v3092 = vld [vmem:[%s13 + $0x50] sm:$0xff]
          %v3093 = vld [vmem:[%s13 + $0x58] sm:$0xff]
          %v3094 = vld [vmem:[%s13 + $0x60] sm:$0xff]
          %v3095 = vld [vmem:[%s13 + $0x68] sm:$0xff]
          %v3096 = vld [vmem:[%s13 + $0x70] sm:$0xff]
          %v3097 = vld [vmem:[%s13 + $0x78] sm:$0xff]
          %v3098 = vld [vmem:[%s13 + $0x80] sm:$0xff]
          %v3099 = vld [vmem:[%s13 + $0x88] sm:$0xff]
          %v3100 = vld [vmem:[%s13 + $0x90] sm:$0xff]
          %v3101 = vld [vmem:[%s13 + $0x98] sm:$0xff]
          %v3102 = vld [vmem:[%s13 + $0xa0] sm:$0xff]
          %v3103 = vld [vmem:[%s13 + $0xa8] sm:$0xff]
          %v3104 = vld [vmem:[%s13 + $0xb0] sm:$0xff]
          %v3105 = vld [vmem:[%s13 + $0xb8] sm:$0xff]
          %v3106 = vld [vmem:[%s13 + $0xc0] sm:$0xff]
          %v3107 = vld [vmem:[%s13 + $0xc8] sm:$0xff]
          %v3108 = vld [vmem:[%s13 + $0xd0] sm:$0xff]
          %v3109 = vld [vmem:[%s13 + $0xd8] sm:$0xff]
          %v3110 = vld [vmem:[%s13 + $0xe0] sm:$0xff]
          %v3111 = vld [vmem:[%s13 + $0xe8] sm:$0xff]
          %v3112 = vld [vmem:[%s13 + $0xf0] sm:$0xff]
          %v3113 = vld [vmem:[%s13 + $0xf8] sm:$0xff]
          %v3114 = vld [vmem:[%s14] sm:$0xf]
          %v3116 = vlaneseq
          %v3117 = vshrl.u32 %v3116, 7
          %v3118 = vsub.s32 0, %v3117
          %v3119 = vrot.slane %v3114, %v3118
          %v3120 = vlaneseq
          %v3121 = vshrl.u32 %v3120, 7
          %v3122 = vsub.s32 1, %v3121
          %v3123 = vrot.slane %v3114, %v3122
          %v3124 = vlaneseq
          %v3125 = vshrl.u32 %v3124, 7
          %v3126 = vsub.s32 2, %v3125
          %v3127 = vrot.slane %v3114, %v3126
          %v3128 = vlaneseq
          %v3129 = vshrl.u32 %v3128, 7
          %v3130 = vsub.s32 3, %v3129
          %v3131 = vrot.slane %v3114, %v3130
          %v3168 = vunpack.c.l.b16 %v3082
          %v3169 = vunpack.c.h.b16 %v3082
          %v3170 = vunpack.c.l.b16 %v3083
          %v3171 = vunpack.c.h.b16 %v3083
          %v3172 = vunpack.c.l.b16 %v3084
          %v3173 = vunpack.c.h.b16 %v3084
          %v3174 = vunpack.c.l.b16 %v3085
          %v3175 = vunpack.c.h.b16 %v3085
          %v3176 = vunpack.c.l.b16 %v3086
          %v3177 = vunpack.c.h.b16 %v3086
          %v3178 = vunpack.c.l.b16 %v3087
          %v3179 = vunpack.c.h.b16 %v3087
          %v3180 = vunpack.c.l.b16 %v3088
          %v3181 = vunpack.c.h.b16 %v3088
          %v3182 = vunpack.c.l.b16 %v3089
          %v3183 = vunpack.c.h.b16 %v3089
          %v3184 = vunpack.c.l.b16 %v3090
          %v3185 = vunpack.c.h.b16 %v3090
          %v3186 = vunpack.c.l.b16 %v3091
          %v3187 = vunpack.c.h.b16 %v3091
          %v3188 = vunpack.c.l.b16 %v3092
          %v3189 = vunpack.c.h.b16 %v3092
          %v3190 = vunpack.c.l.b16 %v3093
          %v3191 = vunpack.c.h.b16 %v3093
          %v3192 = vunpack.c.l.b16 %v3094
          %v3193 = vunpack.c.h.b16 %v3094
          %v3194 = vunpack.c.l.b16 %v3095
          %v3195 = vunpack.c.h.b16 %v3095
          %v3196 = vunpack.c.l.b16 %v3096
          %v3197 = vunpack.c.h.b16 %v3096
          %v3198 = vunpack.c.l.b16 %v3097
          %v3199 = vunpack.c.h.b16 %v3097
          %v3200 = vunpack.c.l.b16 %v3098
          %v3201 = vunpack.c.h.b16 %v3098
          %v3202 = vunpack.c.l.b16 %v3099
          %v3203 = vunpack.c.h.b16 %v3099
          %v3204 = vunpack.c.l.b16 %v3100
          %v3205 = vunpack.c.h.b16 %v3100
          %v3206 = vunpack.c.l.b16 %v3101
          %v3207 = vunpack.c.h.b16 %v3101
          %v3208 = vunpack.c.l.b16 %v3102
          %v3209 = vunpack.c.h.b16 %v3102
          %v3210 = vunpack.c.l.b16 %v3103
          %v3211 = vunpack.c.h.b16 %v3103
          %v3212 = vunpack.c.l.b16 %v3104
          %v3213 = vunpack.c.h.b16 %v3104
          %v3214 = vunpack.c.l.b16 %v3105
          %v3215 = vunpack.c.h.b16 %v3105
          %v3216 = vunpack.c.l.b16 %v3106
          %v3217 = vunpack.c.h.b16 %v3106
          %v3218 = vunpack.c.l.b16 %v3107
          %v3219 = vunpack.c.h.b16 %v3107
          %v3220 = vunpack.c.l.b16 %v3108
          %v3221 = vunpack.c.h.b16 %v3108
          %v3222 = vunpack.c.l.b16 %v3109
          %v3223 = vunpack.c.h.b16 %v3109
          %v3224 = vunpack.c.l.b16 %v3110
          %v3225 = vunpack.c.h.b16 %v3110
          %v3226 = vunpack.c.l.b16 %v3111
          %v3227 = vunpack.c.h.b16 %v3111
          %v3228 = vunpack.c.l.b16 %v3112
          %v3229 = vunpack.c.h.b16 %v3112
          %v3230 = vunpack.c.l.b16 %v3113
          %v3231 = vunpack.c.h.b16 %v3113
          %v3232 = vpack.c.b16 %v3172, %v3168
          %v3233 = vpack.c.b16 %v3173, %v3169
          %v3234 = vpack.c.b16 %v3174, %v3170
          %v3235 = vpack.c.b16 %v3175, %v3171
          %v3236 = vpack.c.b16 %v3180, %v3176
          %v3237 = vpack.c.b16 %v3181, %v3177
          %v3238 = vpack.c.b16 %v3182, %v3178
          %v3239 = vpack.c.b16 %v3183, %v3179
          %v3240 = vpack.c.b16 %v3188, %v3184
          %v3241 = vpack.c.b16 %v3189, %v3185
          %v3242 = vpack.c.b16 %v3190, %v3186
          %v3243 = vpack.c.b16 %v3191, %v3187
          %v3244 = vpack.c.b16 %v3196, %v3192
          %v3245 = vpack.c.b16 %v3197, %v3193
          %v3246 = vpack.c.b16 %v3198, %v3194
          %v3247 = vpack.c.b16 %v3199, %v3195
          %v3248 = vpack.c.b16 %v3204, %v3200
          %v3249 = vpack.c.b16 %v3205, %v3201
          %v3250 = vpack.c.b16 %v3206, %v3202
          %v3251 = vpack.c.b16 %v3207, %v3203
          %v3252 = vpack.c.b16 %v3212, %v3208
          %v3253 = vpack.c.b16 %v3213, %v3209
          %v3254 = vpack.c.b16 %v3214, %v3210
          %v3255 = vpack.c.b16 %v3215, %v3211
          %v3256 = vpack.c.b16 %v3220, %v3216
          %v3257 = vpack.c.b16 %v3221, %v3217
          %v3258 = vpack.c.b16 %v3222, %v3218
          %v3259 = vpack.c.b16 %v3223, %v3219
          %v3260 = vpack.c.b16 %v3228, %v3224
          %v3261 = vpack.c.b16 %v3229, %v3225
          %v3262 = vpack.c.b16 %v3230, %v3226
          %v3263 = vpack.c.b16 %v3231, %v3227
          %3296 = vmatprep.subr.bf16.mxu0 %v3261
          %3297 = vmatpush1.bf16.msra.mxu0 %v3260
          %3298 = vmatprep.subr.bf16.mxu0 %v3257
          %3299 = vmatpush1.bf16.msra.mxu0 %v3256
          %3300 = vmatprep.subr.bf16.mxu0 %v3253
          %3301 = vmatpush1.bf16.msra.mxu0 %v3252
          %3302 = vmatprep.subr.bf16.mxu0 %v3249
          %3303 = vmatpush1.bf16.msra.mxu0 %v3248
          %3304 = vmatprep.subr.bf16.mxu0 %v3245
          %3305 = vmatpush1.bf16.msra.mxu0 %v3244
          %3306 = vmatprep.subr.bf16.mxu0 %v3241
          %3307 = vmatpush1.bf16.msra.mxu0 %v3240
          %3308 = vmatprep.subr.bf16.mxu0 %v3237
          %3309 = vmatpush1.bf16.msra.mxu0 %v3236
          %3310 = vmatprep.subr.bf16.mxu0 %v3233
          %3311 = vmatpush1.bf16.msra.mxu0 %v3232
          %3312 = vmatprep.subr.bf16.mxu0 0
          %3313 = vmatpush2.bf16.msra.mxu0 0
          %3314 = vmatprep.subr.bf16.mxu0 0
          %3315 = vmatpush2.bf16.msra.mxu0 0
          %3316 = vmatprep.subr.bf16.mxu0 0
          %3317 = vmatpush2.bf16.msra.mxu0 0
          %3318 = vmatprep.subr.bf16.mxu0 0
          %3319 = vmatpush2.bf16.msra.mxu0 0
          %3320 = vmatprep.subr.bf16.mxu0 0
          %3321 = vmatpush2.bf16.msra.mxu0 0
          %3322 = vmatprep.subr.bf16.mxu0 0
          %3323 = vmatpush2.bf16.msra.mxu0 0
          %3324 = vmatprep.subr.bf16.mxu0 0
          %3325 = vmatpush2.bf16.msra.mxu0 0
          %3326 = vmatprep.subr.bf16.mxu0 0
          %3327 = vmatpush2.bf16.msra.mxu0 0
          %3328 = vmatprep.mubr.bf16.mxu0 0
          %3329 = vmatmul.mubr.bf16.gmra.mxu0 %v3080
          %v3330 = vpop.f32.mrf.mxu0
          %v3331 = vadd.f32 %v3119, %v3330
          %v3332 = vpop.f32.mrf.mxu0
          %v3333 = vadd.f32 %v3123, %v3332
          %v3334 = vpop.f32.mrf.mxu0
          %v3335 = vadd.f32 %v3119, %v3334
          %v3336 = vpop.f32.mrf.mxu0
          %v3337 = vadd.f32 %v3123, %v3336
          %3338 = vmatprep.mubr.bf16.mxu0 0
          %3339 = vmatmul.mubr.bf16.gmra.mxu0 %v3081
          %v3340 = vpop.f32.mrf.mxu0
          %v3341 = vadd.f32 %v3119, %v3340
          %v3342 = vpop.f32.mrf.mxu0
          %v3343 = vadd.f32 %v3123, %v3342
          %v3344 = vpop.f32.mrf.mxu0
          %v3345 = vadd.f32 %v3119, %v3344
          %v3346 = vpop.f32.mrf.mxu0
          %v3347 = vadd.f32 %v3123, %v3346
          %3348 = vdwg.mxu0
          %3349 = vmatprep.subr.bf16.mxu0 %v3263
          %3350 = vmatpush1.bf16.msra.mxu0 %v3262
          %3351 = vmatprep.subr.bf16.mxu0 %v3259
          %3352 = vmatpush1.bf16.msra.mxu0 %v3258
          %3353 = vmatprep.subr.bf16.mxu0 %v3255
          %3354 = vmatpush1.bf16.msra.mxu0 %v3254
          %3355 = vmatprep.subr.bf16.mxu0 %v3251
          %3356 = vmatpush1.bf16.msra.mxu0 %v3250
          %3357 = vmatprep.subr.bf16.mxu0 %v3247
          %3358 = vmatpush1.bf16.msra.mxu0 %v3246
          %3359 = vmatprep.subr.bf16.mxu0 %v3243
          %3360 = vmatpush1.bf16.msra.mxu0 %v3242
          %3361 = vmatprep.subr.bf16.mxu0 %v3239
          %3362 = vmatpush1.bf16.msra.mxu0 %v3238
          %3363 = vmatprep.subr.bf16.mxu0 %v3235
          %3364 = vmatpush1.bf16.msra.mxu0 %v3234
          %3365 = vmatprep.subr.bf16.mxu0 0
          %3366 = vmatpush2.bf16.msra.mxu0 0
          %3367 = vmatprep.subr.bf16.mxu0 0
          %3368 = vmatpush2.bf16.msra.mxu0 0
          %3369 = vmatprep.subr.bf16.mxu0 0
          %3370 = vmatpush2.bf16.msra.mxu0 0
          %3371 = vmatprep.subr.bf16.mxu0 0
          %3372 = vmatpush2.bf16.msra.mxu0 0
          %3373 = vmatprep.subr.bf16.mxu0 0
          %3374 = vmatpush2.bf16.msra.mxu0 0
          %3375 = vmatprep.subr.bf16.mxu0 0
          %3376 = vmatpush2.bf16.msra.mxu0 0
          %3377 = vmatprep.subr.bf16.mxu0 0
          %3378 = vmatpush2.bf16.msra.mxu0 0
          %3379 = vmatprep.subr.bf16.mxu0 0
          %3380 = vmatpush2.bf16.msra.mxu0 0
          %3381 = vmatprep.mubr.bf16.mxu0 0
          %3382 = vmatmul.mubr.bf16.gmra.mxu0 %v3080
          %v3383 = vpop.f32.mrf.mxu0
          %v3384 = vadd.f32 %v3127, %v3383
          %v3385 = vpop.f32.mrf.mxu0
          %v3386 = vadd.f32 %v3131, %v3385
          %v3387 = vpop.f32.mrf.mxu0
          %v3388 = vadd.f32 %v3127, %v3387
          %v3389 = vpop.f32.mrf.mxu0
          %v3390 = vadd.f32 %v3131, %v3389
          %3391 = vmatprep.mubr.bf16.mxu0 0
          %3392 = vmatmul.mubr.bf16.gmra.mxu0 %v3081
          %v3393 = vpop.f32.mrf.mxu0
          %v3394 = vadd.f32 %v3127, %v3393
          %v3395 = vpop.f32.mrf.mxu0
          %v3396 = vadd.f32 %v3131, %v3395
          %v3397 = vpop.f32.mrf.mxu0
          %v3398 = vadd.f32 %v3127, %v3397
          %v3399 = vpop.f32.mrf.mxu0
          %v3400 = vadd.f32 %v3131, %v3399
          %3401 = vdwg.mxu0
          %v3402 = vmul.f32 %v3331, %v3331
          %v3403 = vmul.f32 %v3333, %v3333
          %v3404 = vmul.f32 %v3384, %v3384
          %v3405 = vmul.f32 %v3386, %v3386
          %v3406 = vmul.f32 %v3335, %v3335
          %v3407 = vmul.f32 %v3337, %v3337
          %v3408 = vmul.f32 %v3388, %v3388
          %v3409 = vmul.f32 %v3390, %v3390
          %v3410 = vmul.f32 %v3341, %v3341
          %v3411 = vmul.f32 %v3343, %v3343
          %v3412 = vmul.f32 %v3394, %v3394
          %v3413 = vmul.f32 %v3396, %v3396
          %v3414 = vmul.f32 %v3345, %v3345
          %v3415 = vmul.f32 %v3347, %v3347
          %v3416 = vmul.f32 %v3398, %v3398
          %v3417 = vmul.f32 %v3400, %v3400
          %v3418 = vmul.f32 %v3331, %v3402
          %v3419 = vmul.f32 %v3333, %v3403
          %v3420 = vmul.f32 %v3384, %v3404
          %v3421 = vmul.f32 %v3386, %v3405
          %v3422 = vmul.f32 %v3335, %v3406
          %v3423 = vmul.f32 %v3337, %v3407
          %v3424 = vmul.f32 %v3388, %v3408
          %v3425 = vmul.f32 %v3390, %v3409
          %v3426 = vmul.f32 %v3341, %v3410
          %v3427 = vmul.f32 %v3343, %v3411
          %v3428 = vmul.f32 %v3394, %v3412
          %v3429 = vmul.f32 %v3396, %v3413
          %v3430 = vmul.f32 %v3345, %v3414
          %v3431 = vmul.f32 %v3347, %v3415
          %v3432 = vmul.f32 %v3398, %v3416
          %v3433 = vmul.f32 %v3400, %v3417
          %v3434 = vmul.f32 %v3418, 0.044715
          %v3435 = vmul.f32 %v3419, 0.044715
          %v3436 = vmul.f32 %v3420, 0.044715
          %v3437 = vmul.f32 %v3421, 0.044715
          %v3438 = vmul.f32 %v3422, 0.044715
          %v3439 = vmul.f32 %v3423, 0.044715
          %v3440 = vmul.f32 %v3424, 0.044715
          %v3441 = vmul.f32 %v3425, 0.044715
          %v3442 = vmul.f32 %v3426, 0.044715
          %v3443 = vmul.f32 %v3427, 0.044715
          %v3444 = vmul.f32 %v3428, 0.044715
          %v3445 = vmul.f32 %v3429, 0.044715
          %v3446 = vmul.f32 %v3430, 0.044715
          %v3447 = vmul.f32 %v3431, 0.044715
          %v3448 = vmul.f32 %v3432, 0.044715
          %v3449 = vmul.f32 %v3433, 0.044715
          %v3450 = vadd.f32 %v3331, %v3434
          %v3451 = vadd.f32 %v3333, %v3435
          %v3452 = vadd.f32 %v3384, %v3436
          %v3453 = vadd.f32 %v3386, %v3437
          %v3454 = vadd.f32 %v3335, %v3438
          %v3455 = vadd.f32 %v3337, %v3439
          %v3456 = vadd.f32 %v3388, %v3440
          %v3457 = vadd.f32 %v3390, %v3441
          %v3458 = vadd.f32 %v3341, %v3442
          %v3459 = vadd.f32 %v3343, %v3443
          %v3460 = vadd.f32 %v3394, %v3444
          %v3461 = vadd.f32 %v3396, %v3445
          %v3462 = vadd.f32 %v3345, %v3446
          %v3463 = vadd.f32 %v3347, %v3447
          %v3464 = vadd.f32 %v3398, %v3448
          %v3465 = vadd.f32 %v3400, %v3449
          %v3466 = vmul.f32 %v3450, 0.7978846
          %v3467 = vmul.f32 %v3451, 0.7978846
          %v3468 = vmul.f32 %v3452, 0.7978846
          %v3469 = vmul.f32 %v3453, 0.7978846
          %v3470 = vmul.f32 %v3454, 0.7978846
          %v3471 = vmul.f32 %v3455, 0.7978846
          %v3472 = vmul.f32 %v3456, 0.7978846
          %v3473 = vmul.f32 %v3457, 0.7978846
          %v3474 = vmul.f32 %v3458, 0.7978846
          %v3475 = vmul.f32 %v3459, 0.7978846
          %v3476 = vmul.f32 %v3460, 0.7978846
          %v3477 = vmul.f32 %v3461, 0.7978846
          %v3478 = vmul.f32 %v3462, 0.7978846
          %v3479 = vmul.f32 %v3463, 0.7978846
          %v3480 = vmul.f32 %v3464, 0.7978846
          %v3481 = vmul.f32 %v3465, 0.7978846
          %v3482 = vtanh.pop %v3466
          %v3483 = vtanh.pop %v3467
          %v3484 = vtanh.pop %v3468
          %v3485 = vtanh.pop %v3469
          %v3486 = vtanh.pop %v3470
          %v3487 = vtanh.pop %v3471
          %v3488 = vtanh.pop %v3472
          %v3489 = vtanh.pop %v3473
          %v3490 = vtanh.pop %v3474
          %v3491 = vtanh.pop %v3475
          %v3492 = vtanh.pop %v3476
          %v3493 = vtanh.pop %v3477
          %v3494 = vtanh.pop %v3478
          %v3495 = vtanh.pop %v3479
          %v3496 = vtanh.pop %v3480
          %v3497 = vtanh.pop %v3481
          %v3498 = vadd.f32 %v3482, 1.0
          %v3499 = vadd.f32 %v3483, 1.0
          %v3500 = vadd.f32 %v3484, 1.0
          %v3501 = vadd.f32 %v3485, 1.0
          %v3502 = vadd.f32 %v3486, 1.0
          %v3503 = vadd.f32 %v3487, 1.0
          %v3504 = vadd.f32 %v3488, 1.0
          %v3505 = vadd.f32 %v3489, 1.0
          %v3506 = vadd.f32 %v3490, 1.0
          %v3507 = vadd.f32 %v3491, 1.0
          %v3508 = vadd.f32 %v3492, 1.0
          %v3509 = vadd.f32 %v3493, 1.0
          %v3510 = vadd.f32 %v3494, 1.0
          %v3511 = vadd.f32 %v3495, 1.0
          %v3512 = vadd.f32 %v3496, 1.0
          %v3513 = vadd.f32 %v3497, 1.0
          %v3514 = vmul.f32 %v3498, 0.5
          %v3515 = vmul.f32 %v3499, 0.5
          %v3516 = vmul.f32 %v3500, 0.5
          %v3517 = vmul.f32 %v3501, 0.5
          %v3518 = vmul.f32 %v3502, 0.5
          %v3519 = vmul.f32 %v3503, 0.5
          %v3520 = vmul.f32 %v3504, 0.5
          %v3521 = vmul.f32 %v3505, 0.5
          %v3522 = vmul.f32 %v3506, 0.5
          %v3523 = vmul.f32 %v3507, 0.5
          %v3524 = vmul.f32 %v3508, 0.5
          %v3525 = vmul.f32 %v3509, 0.5
          %v3526 = vmul.f32 %v3510, 0.5
          %v3527 = vmul.f32 %v3511, 0.5
          %v3528 = vmul.f32 %v3512, 0.5
          %v3529 = vmul.f32 %v3513, 0.5
          %v3530 = vmul.f32 %v3331, %v3514
          %v3531 = vmul.f32 %v3333, %v3515
          %v3532 = vmul.f32 %v3384, %v3516
          %v3533 = vmul.f32 %v3386, %v3517
          %v3534 = vmul.f32 %v3335, %v3518
          %v3535 = vmul.f32 %v3337, %v3519
          %v3536 = vmul.f32 %v3388, %v3520
          %v3537 = vmul.f32 %v3390, %v3521
          %v3538 = vmul.f32 %v3341, %v3522
          %v3539 = vmul.f32 %v3343, %v3523
          %v3540 = vmul.f32 %v3394, %v3524
          %v3541 = vmul.f32 %v3396, %v3525
          %v3542 = vmul.f32 %v3345, %v3526
          %v3543 = vmul.f32 %v3347, %v3527
          %v3544 = vmul.f32 %v3398, %v3528
          %v3545 = vmul.f32 %v3400, %v3529
          %v3546 = vpack.c.bf16 %v3534, %v3530
          %v3547 = vpack.c.bf16 %v3535, %v3531
          %v3548 = vpack.c.bf16 %v3536, %v3532
          %v3549 = vpack.c.bf16 %v3537, %v3533
          %v3550 = vpack.c.bf16 %v3542, %v3538
          %v3551 = vpack.c.bf16 %v3543, %v3539
          %v3552 = vpack.c.bf16 %v3544, %v3540
          %v3553 = vpack.c.bf16 %v3545, %v3541
          %v3554 = vld [vmem:[%s15] sm:$0xf]
          %v3555 = vld [vmem:[%s15 + $0x4] sm:$0xf]
          %v3556 = vld [vmem:[%s15 + $0x8] sm:$0xf]
          %v3557 = vld [vmem:[%s15 + $0xc] sm:$0xf]
          %v3558 = vld [vmem:[%s15 + $0x10] sm:$0xf]
          %v3559 = vld [vmem:[%s15 + $0x14] sm:$0xf]
          %v3560 = vld [vmem:[%s15 + $0x18] sm:$0xf]
          %v3561 = vld [vmem:[%s15 + $0x1c] sm:$0xf]
          %v3562 = vld [vmem:[%s15 + $0x20] sm:$0xf]
          %v3563 = vld [vmem:[%s15 + $0x24] sm:$0xf]
          %v3564 = vld [vmem:[%s15 + $0x28] sm:$0xf]
          %v3565 = vld [vmem:[%s15 + $0x2c] sm:$0xf]
          %v3566 = vld [vmem:[%s15 + $0x30] sm:$0xf]
          %v3567 = vld [vmem:[%s15 + $0x34] sm:$0xf]
          %v3568 = vld [vmem:[%s15 + $0x38] sm:$0xf]
          %v3569 = vld [vmem:[%s15 + $0x3c] sm:$0xf]
          %v3570 = vld [vmem:[%s15 + $0x40] sm:$0xf]
          %v3571 = vld [vmem:[%s15 + $0x44] sm:$0xf]
          %v3572 = vld [vmem:[%s15 + $0x48] sm:$0xf]
          %v3573 = vld [vmem:[%s15 + $0x4c] sm:$0xf]
          %v3574 = vld [vmem:[%s15 + $0x50] sm:$0xf]
          %v3575 = vld [vmem:[%s15 + $0x54] sm:$0xf]
          %v3576 = vld [vmem:[%s15 + $0x58] sm:$0xf]
          %v3577 = vld [vmem:[%s15 + $0x5c] sm:$0xf]
          %v3578 = vld [vmem:[%s15 + $0x60] sm:$0xf]
          %v3579 = vld [vmem:[%s15 + $0x64] sm:$0xf]
          %v3580 = vld [vmem:[%s15 + $0x68] sm:$0xf]
          %v3581 = vld [vmem:[%s15 + $0x6c] sm:$0xf]
          %v3582 = vld [vmem:[%s15 + $0x70] sm:$0xf]
          %v3583 = vld [vmem:[%s15 + $0x74] sm:$0xf]
          %v3584 = vld [vmem:[%s15 + $0x78] sm:$0xf]
          %v3585 = vld [vmem:[%s15 + $0x7c] sm:$0xf]
          %v3586 = vld [vmem:[%s15 + $0x80] sm:$0xf]
          %v3587 = vld [vmem:[%s15 + $0x84] sm:$0xf]
          %v3588 = vld [vmem:[%s15 + $0x88] sm:$0xf]
          %v3589 = vld [vmem:[%s15 + $0x8c] sm:$0xf]
          %v3590 = vld [vmem:[%s15 + $0x90] sm:$0xf]
          %v3591 = vld [vmem:[%s15 + $0x94] sm:$0xf]
          %v3592 = vld [vmem:[%s15 + $0x98] sm:$0xf]
          %v3593 = vld [vmem:[%s15 + $0x9c] sm:$0xf]
          %v3594 = vld [vmem:[%s15 + $0xa0] sm:$0xf]
          %v3595 = vld [vmem:[%s15 + $0xa4] sm:$0xf]
          %v3596 = vld [vmem:[%s15 + $0xa8] sm:$0xf]
          %v3597 = vld [vmem:[%s15 + $0xac] sm:$0xf]
          %v3598 = vld [vmem:[%s15 + $0xb0] sm:$0xf]
          %v3599 = vld [vmem:[%s15 + $0xb4] sm:$0xf]
          %v3600 = vld [vmem:[%s15 + $0xb8] sm:$0xf]
          %v3601 = vld [vmem:[%s15 + $0xbc] sm:$0xf]
          %v3602 = vld [vmem:[%s15 + $0xc0] sm:$0xf]
          %v3603 = vld [vmem:[%s15 + $0xc4] sm:$0xf]
          %v3604 = vld [vmem:[%s15 + $0xc8] sm:$0xf]
          %v3605 = vld [vmem:[%s15 + $0xcc] sm:$0xf]
          %v3606 = vld [vmem:[%s15 + $0xd0] sm:$0xf]
          %v3607 = vld [vmem:[%s15 + $0xd4] sm:$0xf]
          %v3608 = vld [vmem:[%s15 + $0xd8] sm:$0xf]
          %v3609 = vld [vmem:[%s15 + $0xdc] sm:$0xf]
          %v3610 = vld [vmem:[%s15 + $0xe0] sm:$0xf]
          %v3611 = vld [vmem:[%s15 + $0xe4] sm:$0xf]
          %v3612 = vld [vmem:[%s15 + $0xe8] sm:$0xf]
          %v3613 = vld [vmem:[%s15 + $0xec] sm:$0xf]
          %v3614 = vld [vmem:[%s15 + $0xf0] sm:$0xf]
          %v3615 = vld [vmem:[%s15 + $0xf4] sm:$0xf]
          %v3616 = vld [vmem:[%s15 + $0xf8] sm:$0xf]
          %v3617 = vld [vmem:[%s15 + $0xfc] sm:$0xf]
          %v3618 = vld [vmem:[%s16] sm:$0x1]
          %v3620 = vlaneseq
          %v3621 = vshrl.u32 %v3620, 7
          %v3622 = vsub.s32 0, %v3621
          %v3623 = vrot.slane %v3618, %v3622
          %v3689 = vunpack.c.l.b16 %v3554
          %v3690 = vunpack.c.l.b16 %v3555
          %v3691 = vunpack.c.l.b16 %v3556
          %v3692 = vunpack.c.l.b16 %v3557
          %v3693 = vunpack.c.l.b16 %v3558
          %v3694 = vunpack.c.l.b16 %v3559
          %v3695 = vunpack.c.l.b16 %v3560
          %v3696 = vunpack.c.l.b16 %v3561
          %v3697 = vunpack.c.l.b16 %v3562
          %v3698 = vunpack.c.l.b16 %v3563
          %v3699 = vunpack.c.l.b16 %v3564
          %v3700 = vunpack.c.l.b16 %v3565
          %v3701 = vunpack.c.l.b16 %v3566
          %v3702 = vunpack.c.l.b16 %v3567
          %v3703 = vunpack.c.l.b16 %v3568
          %v3704 = vunpack.c.l.b16 %v3569
          %v3705 = vunpack.c.l.b16 %v3570
          %v3706 = vunpack.c.l.b16 %v3571
          %v3707 = vunpack.c.l.b16 %v3572
          %v3708 = vunpack.c.l.b16 %v3573
          %v3709 = vunpack.c.l.b16 %v3574
          %v3710 = vunpack.c.l.b16 %v3575
          %v3711 = vunpack.c.l.b16 %v3576
          %v3712 = vunpack.c.l.b16 %v3577
          %v3713 = vunpack.c.l.b16 %v3578
          %v3714 = vunpack.c.l.b16 %v3579
          %v3715 = vunpack.c.l.b16 %v3580
          %v3716 = vunpack.c.l.b16 %v3581
          %v3717 = vunpack.c.l.b16 %v3582
          %v3718 = vunpack.c.l.b16 %v3583
          %v3719 = vunpack.c.l.b16 %v3584
          %v3720 = vunpack.c.l.b16 %v3585
          %v3721 = vunpack.c.l.b16 %v3586
          %v3722 = vunpack.c.l.b16 %v3587
          %v3723 = vunpack.c.l.b16 %v3588
          %v3724 = vunpack.c.l.b16 %v3589
          %v3725 = vunpack.c.l.b16 %v3590
          %v3726 = vunpack.c.l.b16 %v3591
          %v3727 = vunpack.c.l.b16 %v3592
          %v3728 = vunpack.c.l.b16 %v3593
          %v3729 = vunpack.c.l.b16 %v3594
          %v3730 = vunpack.c.l.b16 %v3595
          %v3731 = vunpack.c.l.b16 %v3596
          %v3732 = vunpack.c.l.b16 %v3597
          %v3733 = vunpack.c.l.b16 %v3598
          %v3734 = vunpack.c.l.b16 %v3599
          %v3735 = vunpack.c.l.b16 %v3600
          %v3736 = vunpack.c.l.b16 %v3601
          %v3737 = vunpack.c.l.b16 %v3602
          %v3738 = vunpack.c.l.b16 %v3603
          %v3739 = vunpack.c.l.b16 %v3604
          %v3740 = vunpack.c.l.b16 %v3605
          %v3741 = vunpack.c.l.b16 %v3606
          %v3742 = vunpack.c.l.b16 %v3607
          %v3743 = vunpack.c.l.b16 %v3608
          %v3744 = vunpack.c.l.b16 %v3609
          %v3745 = vunpack.c.l.b16 %v3610
          %v3746 = vunpack.c.l.b16 %v3611
          %v3747 = vunpack.c.l.b16 %v3612
          %v3748 = vunpack.c.l.b16 %v3613
          %v3749 = vunpack.c.l.b16 %v3614
          %v3750 = vunpack.c.l.b16 %v3615
          %v3751 = vunpack.c.l.b16 %v3616
          %v3752 = vunpack.c.l.b16 %v3617
          %v3753 = vpack.c.b16 %v3690, %v3689
          %v3754 = vpack.c.b16 %v3692, %v3691
          %v3755 = vpack.c.b16 %v3694, %v3693
          %v3756 = vpack.c.b16 %v3696, %v3695
          %v3757 = vpack.c.b16 %v3698, %v3697
          %v3758 = vpack.c.b16 %v3700, %v3699
          %v3759 = vpack.c.b16 %v3702, %v3701
          %v3760 = vpack.c.b16 %v3704, %v3703
          %v3761 = vpack.c.b16 %v3706, %v3705
          %v3762 = vpack.c.b16 %v3708, %v3707
          %v3763 = vpack.c.b16 %v3710, %v3709
          %v3764 = vpack.c.b16 %v3712, %v3711
          %v3765 = vpack.c.b16 %v3714, %v3713
          %v3766 = vpack.c.b16 %v3716, %v3715
          %v3767 = vpack.c.b16 %v3718, %v3717
          %v3768 = vpack.c.b16 %v3720, %v3719
          %v3769 = vpack.c.b16 %v3722, %v3721
          %v3770 = vpack.c.b16 %v3724, %v3723
          %v3771 = vpack.c.b16 %v3726, %v3725
          %v3772 = vpack.c.b16 %v3728, %v3727
          %v3773 = vpack.c.b16 %v3730, %v3729
          %v3774 = vpack.c.b16 %v3732, %v3731
          %v3775 = vpack.c.b16 %v3734, %v3733
          %v3776 = vpack.c.b16 %v3736, %v3735
          %v3777 = vpack.c.b16 %v3738, %v3737
          %v3778 = vpack.c.b16 %v3740, %v3739
          %v3779 = vpack.c.b16 %v3742, %v3741
          %v3780 = vpack.c.b16 %v3744, %v3743
          %v3781 = vpack.c.b16 %v3746, %v3745
          %v3782 = vpack.c.b16 %v3748, %v3747
          %v3783 = vpack.c.b16 %v3750, %v3749
          %v3784 = vpack.c.b16 %v3752, %v3751
          %3817 = vmatprep.subr.bf16.mxu0 0
          %3818 = vmatpush1.bf16.msra.mxu0 %v3760
          %3819 = vmatprep.subr.bf16.mxu0 0
          %3820 = vmatpush1.bf16.msra.mxu0 %v3759
          %3821 = vmatprep.subr.bf16.mxu0 0
          %3822 = vmatpush1.bf16.msra.mxu0 %v3758
          %3823 = vmatprep.subr.bf16.mxu0 0
          %3824 = vmatpush1.bf16.msra.mxu0 %v3757
          %3825 = vmatprep.subr.bf16.mxu0 0
          %3826 = vmatpush1.bf16.msra.mxu0 %v3756
          %3827 = vmatprep.subr.bf16.mxu0 0
          %3828 = vmatpush1.bf16.msra.mxu0 %v3755
          %3829 = vmatprep.subr.bf16.mxu0 0
          %3830 = vmatpush1.bf16.msra.mxu0 %v3754
          %3831 = vmatprep.subr.bf16.mxu0 0
          %3832 = vmatpush1.bf16.msra.mxu0 %v3753
          %3833 = vmatprep.subr.bf16.mxu0 0
          %3834 = vmatpush2.bf16.msra.mxu0 %v3768
          %3835 = vmatprep.subr.bf16.mxu0 0
          %3836 = vmatpush2.bf16.msra.mxu0 %v3767
          %3837 = vmatprep.subr.bf16.mxu0 0
          %3838 = vmatpush2.bf16.msra.mxu0 %v3766
          %3839 = vmatprep.subr.bf16.mxu0 0
          %3840 = vmatpush2.bf16.msra.mxu0 %v3765
          %3841 = vmatprep.subr.bf16.mxu0 0
          %3842 = vmatpush2.bf16.msra.mxu0 %v3764
          %3843 = vmatprep.subr.bf16.mxu0 0
          %3844 = vmatpush2.bf16.msra.mxu0 %v3763
          %3845 = vmatprep.subr.bf16.mxu0 0
          %3846 = vmatpush2.bf16.msra.mxu0 %v3762
          %3847 = vmatprep.subr.bf16.mxu0 0
          %3848 = vmatpush2.bf16.msra.mxu0 %v3761
          %3849 = vmatprep.mubr.bf16.mxu0 %v3547
          %3850 = vmatmul.mubr.bf16.gmra.mxu0 %v3546
          %v3851 = vpop.f32.mrf.mxu0
          %v3852 = vadd.f32 %v3623, %v3851
          %v3853 = vpop.f32.mrf.mxu0
          %v3854 = vpop.f32.mrf.mxu0
          %v3855 = vadd.f32 %v3623, %v3854
          %v3856 = vpop.f32.mrf.mxu0
          %3857 = vmatprep.mubr.bf16.mxu0 %v3551
          %3858 = vmatmul.mubr.bf16.gmra.mxu0 %v3550
          %v3859 = vpop.f32.mrf.mxu0
          %v3860 = vadd.f32 %v3623, %v3859
          %v3861 = vpop.f32.mrf.mxu0
          %v3862 = vpop.f32.mrf.mxu0
          %v3863 = vadd.f32 %v3623, %v3862
          %v3864 = vpop.f32.mrf.mxu0
          %3865 = vdwg.mxu0
          %3866 = vmatprep.subr.bf16.mxu0 0
          %3867 = vmatpush1.bf16.msra.mxu0 %v3776
          %3868 = vmatprep.subr.bf16.mxu0 0
          %3869 = vmatpush1.bf16.msra.mxu0 %v3775
          %3870 = vmatprep.subr.bf16.mxu0 0
          %3871 = vmatpush1.bf16.msra.mxu0 %v3774
          %3872 = vmatprep.subr.bf16.mxu0 0
          %3873 = vmatpush1.bf16.msra.mxu0 %v3773
          %3874 = vmatprep.subr.bf16.mxu0 0
          %3875 = vmatpush1.bf16.msra.mxu0 %v3772
          %3876 = vmatprep.subr.bf16.mxu0 0
          %3877 = vmatpush1.bf16.msra.mxu0 %v3771
          %3878 = vmatprep.subr.bf16.mxu0 0
          %3879 = vmatpush1.bf16.msra.mxu0 %v3770
          %3880 = vmatprep.subr.bf16.mxu0 0
          %3881 = vmatpush1.bf16.msra.mxu0 %v3769
          %3882 = vmatprep.subr.bf16.mxu0 0
          %3883 = vmatpush2.bf16.msra.mxu0 %v3784
          %3884 = vmatprep.subr.bf16.mxu0 0
          %3885 = vmatpush2.bf16.msra.mxu0 %v3783
          %3886 = vmatprep.subr.bf16.mxu0 0
          %3887 = vmatpush2.bf16.msra.mxu0 %v3782
          %3888 = vmatprep.subr.bf16.mxu0 0
          %3889 = vmatpush2.bf16.msra.mxu0 %v3781
          %3890 = vmatprep.subr.bf16.mxu0 0
          %3891 = vmatpush2.bf16.msra.mxu0 %v3780
          %3892 = vmatprep.subr.bf16.mxu0 0
          %3893 = vmatpush2.bf16.msra.mxu0 %v3779
          %3894 = vmatprep.subr.bf16.mxu0 0
          %3895 = vmatpush2.bf16.msra.mxu0 %v3778
          %3896 = vmatprep.subr.bf16.mxu0 0
          %3897 = vmatpush2.bf16.msra.mxu0 %v3777
          %3898 = vmatprep.mubr.bf16.mxu0 %v3549
          %3899 = vmatmul.mubr.bf16.gmra.mxu0 %v3548
          %v3900 = vpop.f32.mrf.mxu0
          %v3901 = vadd.f32 %v3852, %v3900
          %v3902 = vpop.f32.mrf.mxu0
          %v3903 = vpop.f32.mrf.mxu0
          %v3904 = vadd.f32 %v3855, %v3903
          %v3905 = vpop.f32.mrf.mxu0
          %3906 = vmatprep.mubr.bf16.mxu0 %v3553
          %3907 = vmatmul.mubr.bf16.gmra.mxu0 %v3552
          %v3908 = vpop.f32.mrf.mxu0
          %v3909 = vadd.f32 %v3860, %v3908
          %v3910 = vpop.f32.mrf.mxu0
          %v3911 = vpop.f32.mrf.mxu0
          %v3912 = vadd.f32 %v3863, %v3911
          %v3913 = vpop.f32.mrf.mxu0
          %3914 = vdwg.mxu0
          %v3915 = vadd.f32 %v3010, %v3901
          %v3916 = vadd.f32 %v3011, %v3904
          %v3917 = vadd.f32 %v3012, %v3909
          %v3918 = vadd.f32 %v3013, %v3912
          %s3919 = scalar_lea.vmem %s5, 1
          %v3920 = vld [vmem:[%s3919] sm:$0x1]
          %s3921 = scalar_lea.vmem %s6, 1
          %v3922 = vld [vmem:[%s3921] sm:$0x1]
          %3923 = vadd.xlane.f32.xlu0 %v3915
          %v3924 = vpop.xlane.xlu0 %3923
          %3925 = vadd.xlane.f32.xlu0 %v3916
          %v3926 = vpop.xlane.xlu0 %3925
          %3927 = vadd.xlane.f32.xlu0 %v3917
          %v3928 = vpop.xlane.xlu0 %3927
          %3929 = vadd.xlane.f32.xlu0 %v3918
          %v3930 = vpop.xlane.xlu0 %3929
          %v3931 = vmul.f32 %v3924, %v1554
          %v3932 = vmul.f32 %v3926, %v1554
          %v3933 = vmul.f32 %v3928, %v1554
          %v3934 = vmul.f32 %v3930, %v1554
          %v3935 = vsub.f32 %v3915, %v3931
          %v3936 = vsub.f32 %v3916, %v3932
          %v3937 = vsub.f32 %v3917, %v3933
          %v3938 = vsub.f32 %v3918, %v3934
          %v3939 = vmul.f32 %v3935, %v3935
          %v3940 = vmul.f32 %v3936, %v3936
          %v3941 = vmul.f32 %v3937, %v3937
          %v3942 = vmul.f32 %v3938, %v3938
          %3943 = vadd.xlane.f32.xlu0 %v3939
          %v3944 = vpop.xlane.xlu0 %3943
          %3945 = vadd.xlane.f32.xlu0 %v3940
          %v3946 = vpop.xlane.xlu0 %3945
          %3947 = vadd.xlane.f32.xlu0 %v3941
          %v3948 = vpop.xlane.xlu0 %3947
          %3949 = vadd.xlane.f32.xlu0 %v3942
          %v3950 = vpop.xlane.xlu0 %3949
          %v3951 = vmul.f32 %v3944, %v1554
          %v3952 = vmul.f32 %v3946, %v1554
          %v3953 = vmul.f32 %v3948, %v1554
          %v3954 = vmul.f32 %v3950, %v1554
          %v3955 = vadd.f32 %v3951, 1e-05
          %v3956 = vadd.f32 %v3952, 1e-05
          %v3957 = vadd.f32 %v3953, 1e-05
          %v3958 = vadd.f32 %v3954, 1e-05
          %v3959 = vrsqrt.pop %v3955
          %v3960 = vrsqrt.pop %v3956
          %v3961 = vrsqrt.pop %v3957
          %v3962 = vrsqrt.pop %v3958
          %v3963 = vmul.f32 %v3935, %v3959
          %v3964 = vmul.f32 %v3936, %v3960
          %v3965 = vmul.f32 %v3937, %v3961
          %v3966 = vmul.f32 %v3938, %v3962
          %v3968 = vlaneseq
          %v3969 = vshrl.u32 %v3968, 7
          %v3970 = vsub.s32 0, %v3969
          %v3971 = vrot.slane %v3920, %v3970
          %v3973 = vmul.f32 %v3963, %v3971
          %v3974 = vmul.f32 %v3964, %v3971
          %v3975 = vmul.f32 %v3965, %v3971
          %v3976 = vmul.f32 %v3966, %v3971
          %v3978 = vlaneseq
          %v3979 = vshrl.u32 %v3978, 7
          %v3980 = vsub.s32 0, %v3979
          %v3981 = vrot.slane %v3922, %v3980
          %v3983 = vadd.f32 %v3973, %v3981
          %v3984 = vadd.f32 %v3974, %v3981
          %v3985 = vadd.f32 %v3975, %v3981
          %v3986 = vadd.f32 %v3976, %v3981
          %v3987 = vpack.c.bf16 %v3984, %v3983
          %v3988 = vpack.c.bf16 %v3986, %v3985
          %s3989 = scalar_lea.vmem %s7, 384
          %v3990 = vld [vmem:[%s3989] sm:$0xf]
          %v3991 = vld [vmem:[%s3989 + $0x4] sm:$0xf]
          %v3992 = vld [vmem:[%s3989 + $0x8] sm:$0xf]
          %v3993 = vld [vmem:[%s3989 + $0xc] sm:$0xf]
          %v3994 = vld [vmem:[%s3989 + $0x10] sm:$0xf]
          %v3995 = vld [vmem:[%s3989 + $0x14] sm:$0xf]
          %v3996 = vld [vmem:[%s3989 + $0x18] sm:$0xf]
          %v3997 = vld [vmem:[%s3989 + $0x1c] sm:$0xf]
          %v3998 = vld [vmem:[%s3989 + $0x20] sm:$0xf]
          %v3999 = vld [vmem:[%s3989 + $0x24] sm:$0xf]
          %v4000 = vld [vmem:[%s3989 + $0x28] sm:$0xf]
          %v4001 = vld [vmem:[%s3989 + $0x2c] sm:$0xf]
          %v4002 = vld [vmem:[%s3989 + $0x30] sm:$0xf]
          %v4003 = vld [vmem:[%s3989 + $0x34] sm:$0xf]
          %v4004 = vld [vmem:[%s3989 + $0x38] sm:$0xf]
          %v4005 = vld [vmem:[%s3989 + $0x3c] sm:$0xf]
          %s4006 = scalar_lea.vmem %s8, 6
          %v4007 = vld [vmem:[%s4006] sm:$0x1]
          %v4009 = vlaneseq
          %v4010 = vshrl.u32 %v4009, 7
          %v4011 = vsub.s32 0, %v4010
          %v4012 = vrot.slane %v4007, %v4011
          %v4030 = vunpack.c.l.b16 %v3990
          %v4031 = vunpack.c.l.b16 %v3991
          %v4032 = vunpack.c.l.b16 %v3992
          %v4033 = vunpack.c.l.b16 %v3993
          %v4034 = vunpack.c.l.b16 %v3994
          %v4035 = vunpack.c.l.b16 %v3995
          %v4036 = vunpack.c.l.b16 %v3996
          %v4037 = vunpack.c.l.b16 %v3997
          %v4038 = vunpack.c.l.b16 %v3998
          %v4039 = vunpack.c.l.b16 %v3999
          %v4040 = vunpack.c.l.b16 %v4000
          %v4041 = vunpack.c.l.b16 %v4001
          %v4042 = vunpack.c.l.b16 %v4002
          %v4043 = vunpack.c.l.b16 %v4003
          %v4044 = vunpack.c.l.b16 %v4004
          %v4045 = vunpack.c.l.b16 %v4005
          %v4046 = vpack.c.b16 %v4031, %v4030
          %v4047 = vpack.c.b16 %v4033, %v4032
          %v4048 = vpack.c.b16 %v4035, %v4034
          %v4049 = vpack.c.b16 %v4037, %v4036
          %v4050 = vpack.c.b16 %v4039, %v4038
          %v4051 = vpack.c.b16 %v4041, %v4040
          %v4052 = vpack.c.b16 %v4043, %v4042
          %v4053 = vpack.c.b16 %v4045, %v4044
          %4062 = vmatprep.subr.bf16.mxu0 0
          %4063 = vmatpush1.bf16.msra.mxu0 %v4053
          %4064 = vmatprep.subr.bf16.mxu0 0
          %4065 = vmatpush1.bf16.msra.mxu0 %v4052
          %4066 = vmatprep.subr.bf16.mxu0 0
          %4067 = vmatpush1.bf16.msra.mxu0 %v4051
          %4068 = vmatprep.subr.bf16.mxu0 0
          %4069 = vmatpush1.bf16.msra.mxu0 %v4050
          %4070 = vmatprep.subr.bf16.mxu0 0
          %4071 = vmatpush1.bf16.msra.mxu0 %v4049
          %4072 = vmatprep.subr.bf16.mxu0 0
          %4073 = vmatpush1.bf16.msra.mxu0 %v4048
          %4074 = vmatprep.subr.bf16.mxu0 0
          %4075 = vmatpush1.bf16.msra.mxu0 %v4047
          %4076 = vmatprep.subr.bf16.mxu0 0
          %4077 = vmatpush1.bf16.msra.mxu0 %v4046
          %4078 = vmatprep.subr.bf16.mxu0 0
          %4079 = vmatpush2.bf16.msra.mxu0 0
          %4080 = vmatprep.subr.bf16.mxu0 0
          %4081 = vmatpush2.bf16.msra.mxu0 0
          %4082 = vmatprep.subr.bf16.mxu0 0
          %4083 = vmatpush2.bf16.msra.mxu0 0
          %4084 = vmatprep.subr.bf16.mxu0 0
          %4085 = vmatpush2.bf16.msra.mxu0 0
          %4086 = vmatprep.subr.bf16.mxu0 0
          %4087 = vmatpush2.bf16.msra.mxu0 0
          %4088 = vmatprep.subr.bf16.mxu0 0
          %4089 = vmatpush2.bf16.msra.mxu0 0
          %4090 = vmatprep.subr.bf16.mxu0 0
          %4091 = vmatpush2.bf16.msra.mxu0 0
          %4092 = vmatprep.subr.bf16.mxu0 0
          %4093 = vmatpush2.bf16.msra.mxu0 0
          %4094 = vmatprep.mubr.bf16.mxu0 0
          %4095 = vmatmul.mubr.bf16.gmra.mxu0 %v3987
          %v4096 = vpop.f32.mrf.mxu0
          %v4097 = vadd.f32 %v4012, %v4096
          %v4098 = vpop.f32.mrf.mxu0
          %v4099 = vpop.f32.mrf.mxu0
          %v4100 = vadd.f32 %v4012, %v4099
          %v4101 = vpop.f32.mrf.mxu0
          %4102 = vmatprep.mubr.bf16.mxu0 0
          %4103 = vmatmul.mubr.bf16.gmra.mxu0 %v3988
          %v4104 = vpop.f32.mrf.mxu0
          %v4105 = vadd.f32 %v4012, %v4104
          %v4106 = vpop.f32.mrf.mxu0
          %v4107 = vpop.f32.mrf.mxu0
          %v4108 = vadd.f32 %v4012, %v4107
          %v4109 = vpop.f32.mrf.mxu0
          %4110 = vdwg.mxu0
          %s4111 = scalar_lea.vmem %s7, 448
          %v4112 = vld [vmem:[%s4111] sm:$0xf]
          %v4113 = vld [vmem:[%s4111 + $0x4] sm:$0xf]
          %v4114 = vld [vmem:[%s4111 + $0x8] sm:$0xf]
          %v4115 = vld [vmem:[%s4111 + $0xc] sm:$0xf]
          %v4116 = vld [vmem:[%s4111 + $0x10] sm:$0xf]
          %v4117 = vld [vmem:[%s4111 + $0x14] sm:$0xf]
          %v4118 = vld [vmem:[%s4111 + $0x18] sm:$0xf]
          %v4119 = vld [vmem:[%s4111 + $0x1c] sm:$0xf]
          %v4120 = vld [vmem:[%s4111 + $0x20] sm:$0xf]
          %v4121 = vld [vmem:[%s4111 + $0x24] sm:$0xf]
          %v4122 = vld [vmem:[%s4111 + $0x28] sm:$0xf]
          %v4123 = vld [vmem:[%s4111 + $0x2c] sm:$0xf]
          %v4124 = vld [vmem:[%s4111 + $0x30] sm:$0xf]
          %v4125 = vld [vmem:[%s4111 + $0x34] sm:$0xf]
          %v4126 = vld [vmem:[%s4111 + $0x38] sm:$0xf]
          %v4127 = vld [vmem:[%s4111 + $0x3c] sm:$0xf]
          %s4128 = scalar_lea.vmem %s8, 7
          %v4129 = vld [vmem:[%s4128] sm:$0x1]
          %v4131 = vlaneseq
          %v4132 = vshrl.u32 %v4131, 7
          %v4133 = vsub.s32 0, %v4132
          %v4134 = vrot.slane %v4129, %v4133
          %v4152 = vunpack.c.l.b16 %v4112
          %v4153 = vunpack.c.l.b16 %v4113
          %v4154 = vunpack.c.l.b16 %v4114
          %v4155 = vunpack.c.l.b16 %v4115
          %v4156 = vunpack.c.l.b16 %v4116
          %v4157 = vunpack.c.l.b16 %v4117
          %v4158 = vunpack.c.l.b16 %v4118
          %v4159 = vunpack.c.l.b16 %v4119
          %v4160 = vunpack.c.l.b16 %v4120
          %v4161 = vunpack.c.l.b16 %v4121
          %v4162 = vunpack.c.l.b16 %v4122
          %v4163 = vunpack.c.l.b16 %v4123
          %v4164 = vunpack.c.l.b16 %v4124
          %v4165 = vunpack.c.l.b16 %v4125
          %v4166 = vunpack.c.l.b16 %v4126
          %v4167 = vunpack.c.l.b16 %v4127
          %v4168 = vpack.c.b16 %v4153, %v4152
          %v4169 = vpack.c.b16 %v4155, %v4154
          %v4170 = vpack.c.b16 %v4157, %v4156
          %v4171 = vpack.c.b16 %v4159, %v4158
          %v4172 = vpack.c.b16 %v4161, %v4160
          %v4173 = vpack.c.b16 %v4163, %v4162
          %v4174 = vpack.c.b16 %v4165, %v4164
          %v4175 = vpack.c.b16 %v4167, %v4166
          %4184 = vmatprep.subr.bf16.mxu0 0
          %4185 = vmatpush1.bf16.msra.mxu0 %v4175
          %4186 = vmatprep.subr.bf16.mxu0 0
          %4187 = vmatpush1.bf16.msra.mxu0 %v4174
          %4188 = vmatprep.subr.bf16.mxu0 0
          %4189 = vmatpush1.bf16.msra.mxu0 %v4173
          %4190 = vmatprep.subr.bf16.mxu0 0
          %4191 = vmatpush1.bf16.msra.mxu0 %v4172
          %4192 = vmatprep.subr.bf16.mxu0 0
          %4193 = vmatpush1.bf16.msra.mxu0 %v4171
          %4194 = vmatprep.subr.bf16.mxu0 0
          %4195 = vmatpush1.bf16.msra.mxu0 %v4170
          %4196 = vmatprep.subr.bf16.mxu0 0
          %4197 = vmatpush1.bf16.msra.mxu0 %v4169
          %4198 = vmatprep.subr.bf16.mxu0 0
          %4199 = vmatpush1.bf16.msra.mxu0 %v4168
          %4200 = vmatprep.subr.bf16.mxu0 0
          %4201 = vmatpush2.bf16.msra.mxu0 0
          %4202 = vmatprep.subr.bf16.mxu0 0
          %4203 = vmatpush2.bf16.msra.mxu0 0
          %4204 = vmatprep.subr.bf16.mxu0 0
          %4205 = vmatpush2.bf16.msra.mxu0 0
          %4206 = vmatprep.subr.bf16.mxu0 0
          %4207 = vmatpush2.bf16.msra.mxu0 0
          %4208 = vmatprep.subr.bf16.mxu0 0
          %4209 = vmatpush2.bf16.msra.mxu0 0
          %4210 = vmatprep.subr.bf16.mxu0 0
          %4211 = vmatpush2.bf16.msra.mxu0 0
          %4212 = vmatprep.subr.bf16.mxu0 0
          %4213 = vmatpush2.bf16.msra.mxu0 0
          %4214 = vmatprep.subr.bf16.mxu0 0
          %4215 = vmatpush2.bf16.msra.mxu0 0
          %4216 = vmatprep.mubr.bf16.mxu0 0
          %4217 = vmatmul.mubr.bf16.gmra.mxu0 %v3987
          %v4218 = vpop.f32.mrf.mxu0
          %v4219 = vadd.f32 %v4134, %v4218
          %v4220 = vpop.f32.mrf.mxu0
          %v4221 = vpop.f32.mrf.mxu0
          %v4222 = vadd.f32 %v4134, %v4221
          %v4223 = vpop.f32.mrf.mxu0
          %4224 = vmatprep.mubr.bf16.mxu0 0
          %4225 = vmatmul.mubr.bf16.gmra.mxu0 %v3988
          %v4226 = vpop.f32.mrf.mxu0
          %v4227 = vadd.f32 %v4134, %v4226
          %v4228 = vpop.f32.mrf.mxu0
          %v4229 = vpop.f32.mrf.mxu0
          %v4230 = vadd.f32 %v4134, %v4229
          %v4231 = vpop.f32.mrf.mxu0
          %4232 = vdwg.mxu0
          %s4233 = scalar_lea.vmem %s7, 512
          %v4234 = vld [vmem:[%s4233] sm:$0xf]
          %v4235 = vld [vmem:[%s4233 + $0x4] sm:$0xf]
          %v4236 = vld [vmem:[%s4233 + $0x8] sm:$0xf]
          %v4237 = vld [vmem:[%s4233 + $0xc] sm:$0xf]
          %v4238 = vld [vmem:[%s4233 + $0x10] sm:$0xf]
          %v4239 = vld [vmem:[%s4233 + $0x14] sm:$0xf]
          %v4240 = vld [vmem:[%s4233 + $0x18] sm:$0xf]
          %v4241 = vld [vmem:[%s4233 + $0x1c] sm:$0xf]
          %v4242 = vld [vmem:[%s4233 + $0x20] sm:$0xf]
          %v4243 = vld [vmem:[%s4233 + $0x24] sm:$0xf]
          %v4244 = vld [vmem:[%s4233 + $0x28] sm:$0xf]
          %v4245 = vld [vmem:[%s4233 + $0x2c] sm:$0xf]
          %v4246 = vld [vmem:[%s4233 + $0x30] sm:$0xf]
          %v4247 = vld [vmem:[%s4233 + $0x34] sm:$0xf]
          %v4248 = vld [vmem:[%s4233 + $0x38] sm:$0xf]
          %v4249 = vld [vmem:[%s4233 + $0x3c] sm:$0xf]
          %s4250 = scalar_lea.vmem %s8, 8
          %v4251 = vld [vmem:[%s4250] sm:$0x1]
          %v4253 = vlaneseq
          %v4254 = vshrl.u32 %v4253, 7
          %v4255 = vsub.s32 0, %v4254
          %v4256 = vrot.slane %v4251, %v4255
          %v4274 = vunpack.c.l.b16 %v4234
          %v4275 = vunpack.c.l.b16 %v4235
          %v4276 = vunpack.c.l.b16 %v4236
          %v4277 = vunpack.c.l.b16 %v4237
          %v4278 = vunpack.c.l.b16 %v4238
          %v4279 = vunpack.c.l.b16 %v4239
          %v4280 = vunpack.c.l.b16 %v4240
          %v4281 = vunpack.c.l.b16 %v4241
          %v4282 = vunpack.c.l.b16 %v4242
          %v4283 = vunpack.c.l.b16 %v4243
          %v4284 = vunpack.c.l.b16 %v4244
          %v4285 = vunpack.c.l.b16 %v4245
          %v4286 = vunpack.c.l.b16 %v4246
          %v4287 = vunpack.c.l.b16 %v4247
          %v4288 = vunpack.c.l.b16 %v4248
          %v4289 = vunpack.c.l.b16 %v4249
          %v4290 = vpack.c.b16 %v4275, %v4274
          %v4291 = vpack.c.b16 %v4277, %v4276
          %v4292 = vpack.c.b16 %v4279, %v4278
          %v4293 = vpack.c.b16 %v4281, %v4280
          %v4294 = vpack.c.b16 %v4283, %v4282
          %v4295 = vpack.c.b16 %v4285, %v4284
          %v4296 = vpack.c.b16 %v4287, %v4286
          %v4297 = vpack.c.b16 %v4289, %v4288
          %4306 = vmatprep.subr.bf16.mxu0 0
          %4307 = vmatpush1.bf16.msra.mxu0 %v4297
          %4308 = vmatprep.subr.bf16.mxu0 0
          %4309 = vmatpush1.bf16.msra.mxu0 %v4296
          %4310 = vmatprep.subr.bf16.mxu0 0
          %4311 = vmatpush1.bf16.msra.mxu0 %v4295
          %4312 = vmatprep.subr.bf16.mxu0 0
          %4313 = vmatpush1.bf16.msra.mxu0 %v4294
          %4314 = vmatprep.subr.bf16.mxu0 0
          %4315 = vmatpush1.bf16.msra.mxu0 %v4293
          %4316 = vmatprep.subr.bf16.mxu0 0
          %4317 = vmatpush1.bf16.msra.mxu0 %v4292
          %4318 = vmatprep.subr.bf16.mxu0 0
          %4319 = vmatpush1.bf16.msra.mxu0 %v4291
          %4320 = vmatprep.subr.bf16.mxu0 0
          %4321 = vmatpush1.bf16.msra.mxu0 %v4290
          %4322 = vmatprep.subr.bf16.mxu0 0
          %4323 = vmatpush2.bf16.msra.mxu0 0
          %4324 = vmatprep.subr.bf16.mxu0 0
          %4325 = vmatpush2.bf16.msra.mxu0 0
          %4326 = vmatprep.subr.bf16.mxu0 0
          %4327 = vmatpush2.bf16.msra.mxu0 0
          %4328 = vmatprep.subr.bf16.mxu0 0
          %4329 = vmatpush2.bf16.msra.mxu0 0
          %4330 = vmatprep.subr.bf16.mxu0 0
          %4331 = vmatpush2.bf16.msra.mxu0 0
          %4332 = vmatprep.subr.bf16.mxu0 0
          %4333 = vmatpush2.bf16.msra.mxu0 0
          %4334 = vmatprep.subr.bf16.mxu0 0
          %4335 = vmatpush2.bf16.msra.mxu0 0
          %4336 = vmatprep.subr.bf16.mxu0 0
          %4337 = vmatpush2.bf16.msra.mxu0 0
          %4338 = vmatprep.mubr.bf16.mxu0 0
          %4339 = vmatmul.mubr.bf16.gmra.mxu0 %v3987
          %v4340 = vpop.f32.mrf.mxu0
          %v4341 = vadd.f32 %v4256, %v4340
          %v4342 = vpop.f32.mrf.mxu0
          %v4343 = vpop.f32.mrf.mxu0
          %v4344 = vadd.f32 %v4256, %v4343
          %v4345 = vpop.f32.mrf.mxu0
          %4346 = vmatprep.mubr.bf16.mxu0 0
          %4347 = vmatmul.mubr.bf16.gmra.mxu0 %v3988
          %v4348 = vpop.f32.mrf.mxu0
          %v4349 = vadd.f32 %v4256, %v4348
          %v4350 = vpop.f32.mrf.mxu0
          %v4351 = vpop.f32.mrf.mxu0
          %v4352 = vadd.f32 %v4256, %v4351
          %v4353 = vpop.f32.mrf.mxu0
          %4354 = vdwg.mxu0
          %v4355 = vmul.f32 %v4097, 0.125
          %v4356 = vmul.f32 %v4100, 0.125
          %v4357 = vmul.f32 %v4105, 0.125
          %v4358 = vmul.f32 %v4108, 0.125
          %v4359 = vpack.c.bf16 %v4356, %v4355
          %v4360 = vpack.c.bf16 %v4358, %v4357
          %v4361 = vpack.c.bf16 %v4222, %v4219
          %v4362 = vpack.c.bf16 %v4230, %v4227
          %v4363 = vpack.c.bf16 %v4344, %v4341
          %v4364 = vpack.c.bf16 %v4352, %v4349
          %v4366 = vsel %vm878, %v4359, 0
          %v4369 = vsel %vm878, %v4361, 0
          %4371 = vmatprep.subr.bf16.mxu0 0
          %4372 = vmatpush1.bf16.xpose.msra.mxu0 0
          %4373 = vmatprep.subr.bf16.mxu0 0
          %4374 = vmatpush1.bf16.xpose.msra.mxu0 0
          %4375 = vmatprep.subr.bf16.mxu0 0
          %4376 = vmatpush1.bf16.xpose.msra.mxu0 0
          %4377 = vmatprep.subr.bf16.mxu0 0
          %4378 = vmatpush1.bf16.xpose.msra.mxu0 0
          %4379 = vmatprep.subr.bf16.mxu0 0
          %4380 = vmatpush1.bf16.xpose.msra.mxu0 0
          %4381 = vmatprep.subr.bf16.mxu0 0
          %4382 = vmatpush1.bf16.xpose.msra.mxu0 0
          %4383 = vmatprep.subr.bf16.mxu0 0
          %4384 = vmatpush1.bf16.xpose.msra.mxu0 0
          %4385 = vmatprep.subr.bf16.mxu0 0
          %4386 = vmatpush1.bf16.xpose.msra.mxu0 %v4369
          %4387 = vmatprep.subr.bf16.mxu0 0
          %4388 = vmatpush2.bf16.xpose.msra.mxu0 0
          %4389 = vmatprep.subr.bf16.mxu0 0
          %4390 = vmatpush2.bf16.xpose.msra.mxu0 0
          %4391 = vmatprep.subr.bf16.mxu0 0
          %4392 = vmatpush2.bf16.xpose.msra.mxu0 0
          %4393 = vmatprep.subr.bf16.mxu0 0
          %4394 = vmatpush2.bf16.xpose.msra.mxu0 0
          %4395 = vmatprep.subr.bf16.mxu0 0
          %4396 = vmatpush2.bf16.xpose.msra.mxu0 0
          %4397 = vmatprep.subr.bf16.mxu0 0
          %4398 = vmatpush2.bf16.xpose.msra.mxu0 0
          %4399 = vmatprep.subr.bf16.mxu0 0
          %4400 = vmatpush2.bf16.xpose.msra.mxu0 0
          %4401 = vmatprep.subr.bf16.mxu0 0
          %4402 = vmatpush2.bf16.xpose.msra.mxu0 0
          %4403 = vmatprep.mubr.bf16.mxu0 0
          %4404 = vmatmul.mubr.bf16.gmra.mxu0 %v4366
          %v4405 = vpop.f32.mrf.mxu0
          %v4406 = vadd.f32 0.0, %v4405
          %v4407 = vpop.f32.mrf.mxu0
          %v4408 = vpop.f32.mrf.mxu0
          %v4409 = vadd.f32 0.0, %v4408
          %v4410 = vpop.f32.mrf.mxu0
          %4411 = vdwg.mxu0
          %v4413 = vsel %vm878, %v4360, 0
          %v4416 = vsel %vm878, %v4362, 0
          %4418 = vmatprep.subr.bf16.mxu0 0
          %4419 = vmatpush1.bf16.xpose.msra.mxu0 0
          %4420 = vmatprep.subr.bf16.mxu0 0
          %4421 = vmatpush1.bf16.xpose.msra.mxu0 0
          %4422 = vmatprep.subr.bf16.mxu0 0
          %4423 = vmatpush1.bf16.xpose.msra.mxu0 0
          %4424 = vmatprep.subr.bf16.mxu0 0
          %4425 = vmatpush1.bf16.xpose.msra.mxu0 0
          %4426 = vmatprep.subr.bf16.mxu0 0
          %4427 = vmatpush1.bf16.xpose.msra.mxu0 0
          %4428 = vmatprep.subr.bf16.mxu0 0
          %4429 = vmatpush1.bf16.xpose.msra.mxu0 0
          %4430 = vmatprep.subr.bf16.mxu0 0
          %4431 = vmatpush1.bf16.xpose.msra.mxu0 0
          %4432 = vmatprep.subr.bf16.mxu0 0
          %4433 = vmatpush1.bf16.xpose.msra.mxu0 %v4416
          %4434 = vmatprep.subr.bf16.mxu0 0
          %4435 = vmatpush2.bf16.xpose.msra.mxu0 0
          %4436 = vmatprep.subr.bf16.mxu0 0
          %4437 = vmatpush2.bf16.xpose.msra.mxu0 0
          %4438 = vmatprep.subr.bf16.mxu0 0
          %4439 = vmatpush2.bf16.xpose.msra.mxu0 0
          %4440 = vmatprep.subr.bf16.mxu0 0
          %4441 = vmatpush2.bf16.xpose.msra.mxu0 0
          %4442 = vmatprep.subr.bf16.mxu0 0
          %4443 = vmatpush2.bf16.xpose.msra.mxu0 0
          %4444 = vmatprep.subr.bf16.mxu0 0
          %4445 = vmatpush2.bf16.xpose.msra.mxu0 0
          %4446 = vmatprep.subr.bf16.mxu0 0
          %4447 = vmatpush2.bf16.xpose.msra.mxu0 0
          %4448 = vmatprep.subr.bf16.mxu0 0
          %4449 = vmatpush2.bf16.xpose.msra.mxu0 0
          %4450 = vmatprep.mubr.bf16.mxu0 0
          %4451 = vmatmul.mubr.bf16.gmra.mxu0 %v4413
          %v4452 = vpop.f32.mrf.mxu0
          %v4453 = vadd.f32 0.0, %v4452
          %v4454 = vpop.f32.mrf.mxu0
          %v4455 = vpop.f32.mrf.mxu0
          %v4456 = vadd.f32 0.0, %v4455
          %v4457 = vpop.f32.mrf.mxu0
          %4458 = vdwg.mxu0
          %v4459 = vsel %vm2081, %v4406, -inf
          %4460 = vmax.xlane.f32.xlu0 %v4459
          %v4461 = vpop.xlane.xlu0 %4460
          %v4462 = vsel %vm2081, %v4409, -inf
          %4463 = vmax.xlane.f32.xlu0 %v4462
          %v4464 = vpop.xlane.xlu0 %4463
          %v4465 = vsel %vm2081, %v4453, -inf
          %4466 = vmax.xlane.f32.xlu0 %v4465
          %v4467 = vpop.xlane.xlu0 %4466
          %v4468 = vsel %vm2081, %v4456, -inf
          %4469 = vmax.xlane.f32.xlu0 %v4468
          %v4470 = vpop.xlane.xlu0 %4469
          %v4471 = vsub.f32 %v4406, %v4461
          %v4472 = vsub.f32 %v4409, %v4464
          %v4473 = vsub.f32 %v4453, %v4467
          %v4474 = vsub.f32 %v4456, %v4470
          %v4475 = vmul.f32 %v4471, 1.442695
          %v4476 = vpow.pop %v4475
          %v4477 = vmul.f32 %v4472, 1.442695
          %v4478 = vpow.pop %v4477
          %v4479 = vmul.f32 %v4473, 1.442695
          %v4480 = vpow.pop %v4479
          %v4481 = vmul.f32 %v4474, 1.442695
          %v4482 = vpow.pop %v4481
          %v4483 = vsel %vm2081, %v4476, 0.0
          %4484 = vadd.xlane.f32.xlu0 %v4483
          %v4485 = vpop.xlane.xlu0 %4484
          %v4486 = vsel %vm2081, %v4478, 0.0
          %4487 = vadd.xlane.f32.xlu0 %v4486
          %v4488 = vpop.xlane.xlu0 %4487
          %v4489 = vsel %vm2081, %v4480, 0.0
          %4490 = vadd.xlane.f32.xlu0 %v4489
          %v4491 = vpop.xlane.xlu0 %4490
          %v4492 = vsel %vm2081, %v4482, 0.0
          %4493 = vadd.xlane.f32.xlu0 %v4492
          %v4494 = vpop.xlane.xlu0 %4493
          %v4495 = vrcp.pop %v4485
          %v4496 = vrcp.pop %v4488
          %v4497 = vrcp.pop %v4491
          %v4498 = vrcp.pop %v4494
          %v4499 = vmul.f32 %v4476, %v4495
          %v4500 = vmul.f32 %v4478, %v4496
          %v4501 = vmul.f32 %v4480, %v4497
          %v4502 = vmul.f32 %v4482, %v4498
          %v4503 = vpack.c.bf16 %v4500, %v4499
          %v4504 = vpack.c.bf16 %v4502, %v4501
          %v4506 = vsel %vm2081, %v4503, 0
          %4508 = vmatprep.subr.bf16.mxu0 0
          %4509 = vmatpush1.bf16.msra.mxu0 0
          %4510 = vmatprep.subr.bf16.mxu0 0
          %4511 = vmatpush1.bf16.msra.mxu0 0
          %4512 = vmatprep.subr.bf16.mxu0 0
          %4513 = vmatpush1.bf16.msra.mxu0 0
          %4514 = vmatprep.subr.bf16.mxu0 0
          %4515 = vmatpush1.bf16.msra.mxu0 0
          %4516 = vmatprep.subr.bf16.mxu0 0
          %4517 = vmatpush1.bf16.msra.mxu0 0
          %4518 = vmatprep.subr.bf16.mxu0 0
          %4519 = vmatpush1.bf16.msra.mxu0 0
          %4520 = vmatprep.subr.bf16.mxu0 0
          %4521 = vmatpush1.bf16.msra.mxu0 0
          %4522 = vmatprep.subr.bf16.mxu0 0
          %4523 = vmatpush1.bf16.msra.mxu0 %v4363
          %4524 = vmatprep.subr.bf16.mxu0 0
          %4525 = vmatpush2.bf16.msra.mxu0 0
          %4526 = vmatprep.subr.bf16.mxu0 0
          %4527 = vmatpush2.bf16.msra.mxu0 0
          %4528 = vmatprep.subr.bf16.mxu0 0
          %4529 = vmatpush2.bf16.msra.mxu0 0
          %4530 = vmatprep.subr.bf16.mxu0 0
          %4531 = vmatpush2.bf16.msra.mxu0 0
          %4532 = vmatprep.subr.bf16.mxu0 0
          %4533 = vmatpush2.bf16.msra.mxu0 0
          %4534 = vmatprep.subr.bf16.mxu0 0
          %4535 = vmatpush2.bf16.msra.mxu0 0
          %4536 = vmatprep.subr.bf16.mxu0 0
          %4537 = vmatpush2.bf16.msra.mxu0 0
          %4538 = vmatprep.subr.bf16.mxu0 0
          %4539 = vmatpush2.bf16.msra.mxu0 0
          %4540 = vmatprep.mubr.bf16.mxu0 0
          %4541 = vmatmul.mubr.bf16.gmra.mxu0 %v4506
          %v4542 = vpop.f32.mrf.mxu0
          %v4543 = vadd.f32 0.0, %v4542
          %v4544 = vpop.f32.mrf.mxu0
          %v4545 = vpop.f32.mrf.mxu0
          %v4546 = vadd.f32 0.0, %v4545
          %v4547 = vpop.f32.mrf.mxu0
          %4548 = vdwg.mxu0
          %v4550 = vsel %vm2081, %v4504, 0
          %4552 = vmatprep.subr.bf16.mxu0 0
          %4553 = vmatpush1.bf16.msra.mxu0 0
          %4554 = vmatprep.subr.bf16.mxu0 0
          %4555 = vmatpush1.bf16.msra.mxu0 0
          %4556 = vmatprep.subr.bf16.mxu0 0
          %4557 = vmatpush1.bf16.msra.mxu0 0
          %4558 = vmatprep.subr.bf16.mxu0 0
          %4559 = vmatpush1.bf16.msra.mxu0 0
          %4560 = vmatprep.subr.bf16.mxu0 0
          %4561 = vmatpush1.bf16.msra.mxu0 0
          %4562 = vmatprep.subr.bf16.mxu0 0
          %4563 = vmatpush1.bf16.msra.mxu0 0
          %4564 = vmatprep.subr.bf16.mxu0 0
          %4565 = vmatpush1.bf16.msra.mxu0 0
          %4566 = vmatprep.subr.bf16.mxu0 0
          %4567 = vmatpush1.bf16.msra.mxu0 %v4364
          %4568 = vmatprep.subr.bf16.mxu0 0
          %4569 = vmatpush2.bf16.msra.mxu0 0
          %4570 = vmatprep.subr.bf16.mxu0 0
          %4571 = vmatpush2.bf16.msra.mxu0 0
          %4572 = vmatprep.subr.bf16.mxu0 0
          %4573 = vmatpush2.bf16.msra.mxu0 0
          %4574 = vmatprep.subr.bf16.mxu0 0
          %4575 = vmatpush2.bf16.msra.mxu0 0
          %4576 = vmatprep.subr.bf16.mxu0 0
          %4577 = vmatpush2.bf16.msra.mxu0 0
          %4578 = vmatprep.subr.bf16.mxu0 0
          %4579 = vmatpush2.bf16.msra.mxu0 0
          %4580 = vmatprep.subr.bf16.mxu0 0
          %4581 = vmatpush2.bf16.msra.mxu0 0
          %4582 = vmatprep.subr.bf16.mxu0 0
          %4583 = vmatpush2.bf16.msra.mxu0 0
          %4584 = vmatprep.mubr.bf16.mxu0 0
          %4585 = vmatmul.mubr.bf16.gmra.mxu0 %v4550
          %v4586 = vpop.f32.mrf.mxu0
          %v4587 = vadd.f32 0.0, %v4586
          %v4588 = vpop.f32.mrf.mxu0
          %v4589 = vpop.f32.mrf.mxu0
          %v4590 = vadd.f32 0.0, %v4589
          %v4591 = vpop.f32.mrf.mxu0
          %4592 = vdwg.mxu0
          %v4593 = vpack.c.bf16 %v4546, %v4543
          %v4594 = vpack.c.bf16 %v4590, %v4587
          %s4595 = scalar_lea.vmem %s9, 64
          %v4596 = vld [vmem:[%s4595] sm:$0xf]
          %v4597 = vld [vmem:[%s4595 + $0x4] sm:$0xf]
          %v4598 = vld [vmem:[%s4595 + $0x8] sm:$0xf]
          %v4599 = vld [vmem:[%s4595 + $0xc] sm:$0xf]
          %v4600 = vld [vmem:[%s4595 + $0x10] sm:$0xf]
          %v4601 = vld [vmem:[%s4595 + $0x14] sm:$0xf]
          %v4602 = vld [vmem:[%s4595 + $0x18] sm:$0xf]
          %v4603 = vld [vmem:[%s4595 + $0x1c] sm:$0xf]
          %s4604 = scalar_lea.vmem %s7, 576
          %v4605 = vld [vmem:[%s4604] sm:$0xf]
          %v4606 = vld [vmem:[%s4604 + $0x4] sm:$0xf]
          %v4607 = vld [vmem:[%s4604 + $0x8] sm:$0xf]
          %v4608 = vld [vmem:[%s4604 + $0xc] sm:$0xf]
          %v4609 = vld [vmem:[%s4604 + $0x10] sm:$0xf]
          %v4610 = vld [vmem:[%s4604 + $0x14] sm:$0xf]
          %v4611 = vld [vmem:[%s4604 + $0x18] sm:$0xf]
          %v4612 = vld [vmem:[%s4604 + $0x1c] sm:$0xf]
          %v4613 = vld [vmem:[%s4604 + $0x20] sm:$0xf]
          %v4614 = vld [vmem:[%s4604 + $0x24] sm:$0xf]
          %v4615 = vld [vmem:[%s4604 + $0x28] sm:$0xf]
          %v4616 = vld [vmem:[%s4604 + $0x2c] sm:$0xf]
          %v4617 = vld [vmem:[%s4604 + $0x30] sm:$0xf]
          %v4618 = vld [vmem:[%s4604 + $0x34] sm:$0xf]
          %v4619 = vld [vmem:[%s4604 + $0x38] sm:$0xf]
          %v4620 = vld [vmem:[%s4604 + $0x3c] sm:$0xf]
          %s4621 = scalar_lea.vmem %s8, 9
          %v4622 = vld [vmem:[%s4621] sm:$0x1]
          %v4624 = vlaneseq
          %v4625 = vshrl.u32 %v4624, 7
          %v4626 = vsub.s32 0, %v4625
          %v4627 = vrot.slane %v4622, %v4626
          %v4645 = vunpack.c.l.b16 %v4605
          %v4646 = vunpack.c.l.b16 %v4606
          %v4647 = vunpack.c.l.b16 %v4607
          %v4648 = vunpack.c.l.b16 %v4608
          %v4649 = vunpack.c.l.b16 %v4609
          %v4650 = vunpack.c.l.b16 %v4610
          %v4651 = vunpack.c.l.b16 %v4611
          %v4652 = vunpack.c.l.b16 %v4612
          %v4653 = vunpack.c.l.b16 %v4613
          %v4654 = vunpack.c.l.b16 %v4614
          %v4655 = vunpack.c.l.b16 %v4615
          %v4656 = vunpack.c.l.b16 %v4616
          %v4657 = vunpack.c.l.b16 %v4617
          %v4658 = vunpack.c.l.b16 %v4618
          %v4659 = vunpack.c.l.b16 %v4619
          %v4660 = vunpack.c.l.b16 %v4620
          %v4661 = vpack.c.b16 %v4646, %v4645
          %v4662 = vpack.c.b16 %v4648, %v4647
          %v4663 = vpack.c.b16 %v4650, %v4649
          %v4664 = vpack.c.b16 %v4652, %v4651
          %v4665 = vpack.c.b16 %v4654, %v4653
          %v4666 = vpack.c.b16 %v4656, %v4655
          %v4667 = vpack.c.b16 %v4658, %v4657
          %v4668 = vpack.c.b16 %v4660, %v4659
          %4677 = vmatprep.subr.bf16.mxu0 0
          %4678 = vmatpush1.bf16.msra.mxu0 %v4668
          %4679 = vmatprep.subr.bf16.mxu0 0
          %4680 = vmatpush1.bf16.msra.mxu0 %v4667
          %4681 = vmatprep.subr.bf16.mxu0 0
          %4682 = vmatpush1.bf16.msra.mxu0 %v4666
          %4683 = vmatprep.subr.bf16.mxu0 0
          %4684 = vmatpush1.bf16.msra.mxu0 %v4665
          %4685 = vmatprep.subr.bf16.mxu0 0
          %4686 = vmatpush1.bf16.msra.mxu0 %v4664
          %4687 = vmatprep.subr.bf16.mxu0 0
          %4688 = vmatpush1.bf16.msra.mxu0 %v4663
          %4689 = vmatprep.subr.bf16.mxu0 0
          %4690 = vmatpush1.bf16.msra.mxu0 %v4662
          %4691 = vmatprep.subr.bf16.mxu0 0
          %4692 = vmatpush1.bf16.msra.mxu0 %v4661
          %4693 = vmatprep.subr.bf16.mxu0 0
          %4694 = vmatpush2.bf16.msra.mxu0 0
          %4695 = vmatprep.subr.bf16.mxu0 0
          %4696 = vmatpush2.bf16.msra.mxu0 0
          %4697 = vmatprep.subr.bf16.mxu0 0
          %4698 = vmatpush2.bf16.msra.mxu0 0
          %4699 = vmatprep.subr.bf16.mxu0 0
          %4700 = vmatpush2.bf16.msra.mxu0 0
          %4701 = vmatprep.subr.bf16.mxu0 0
          %4702 = vmatpush2.bf16.msra.mxu0 0
          %4703 = vmatprep.subr.bf16.mxu0 0
          %4704 = vmatpush2.bf16.msra.mxu0 0
          %4705 = vmatprep.subr.bf16.mxu0 0
          %4706 = vmatpush2.bf16.msra.mxu0 0
          %4707 = vmatprep.subr.bf16.mxu0 0
          %4708 = vmatpush2.bf16.msra.mxu0 0
          %4709 = vmatprep.mubr.bf16.mxu0 0
          %4710 = vmatmul.mubr.bf16.gmra.mxu0 %v3987
          %v4711 = vpop.f32.mrf.mxu0
          %v4712 = vadd.f32 %v4627, %v4711
          %v4713 = vpop.f32.mrf.mxu0
          %v4714 = vpop.f32.mrf.mxu0
          %v4715 = vadd.f32 %v4627, %v4714
          %v4716 = vpop.f32.mrf.mxu0
          %4717 = vmatprep.mubr.bf16.mxu0 0
          %4718 = vmatmul.mubr.bf16.gmra.mxu0 %v3988
          %v4719 = vpop.f32.mrf.mxu0
          %v4720 = vadd.f32 %v4627, %v4719
          %v4721 = vpop.f32.mrf.mxu0
          %v4722 = vpop.f32.mrf.mxu0
          %v4723 = vadd.f32 %v4627, %v4722
          %v4724 = vpop.f32.mrf.mxu0
          %4725 = vdwg.mxu0
          %s4726 = scalar_lea.vmem %s7, 640
          %v4727 = vld [vmem:[%s4726] sm:$0xf]
          %v4728 = vld [vmem:[%s4726 + $0x4] sm:$0xf]
          %v4729 = vld [vmem:[%s4726 + $0x8] sm:$0xf]
          %v4730 = vld [vmem:[%s4726 + $0xc] sm:$0xf]
          %v4731 = vld [vmem:[%s4726 + $0x10] sm:$0xf]
          %v4732 = vld [vmem:[%s4726 + $0x14] sm:$0xf]
          %v4733 = vld [vmem:[%s4726 + $0x18] sm:$0xf]
          %v4734 = vld [vmem:[%s4726 + $0x1c] sm:$0xf]
          %v4735 = vld [vmem:[%s4726 + $0x20] sm:$0xf]
          %v4736 = vld [vmem:[%s4726 + $0x24] sm:$0xf]
          %v4737 = vld [vmem:[%s4726 + $0x28] sm:$0xf]
          %v4738 = vld [vmem:[%s4726 + $0x2c] sm:$0xf]
          %v4739 = vld [vmem:[%s4726 + $0x30] sm:$0xf]
          %v4740 = vld [vmem:[%s4726 + $0x34] sm:$0xf]
          %v4741 = vld [vmem:[%s4726 + $0x38] sm:$0xf]
          %v4742 = vld [vmem:[%s4726 + $0x3c] sm:$0xf]
          %s4743 = scalar_lea.vmem %s8, 10
          %v4744 = vld [vmem:[%s4743] sm:$0x1]
          %v4746 = vlaneseq
          %v4747 = vshrl.u32 %v4746, 7
          %v4748 = vsub.s32 0, %v4747
          %v4749 = vrot.slane %v4744, %v4748
          %v4767 = vunpack.c.l.b16 %v4727
          %v4768 = vunpack.c.l.b16 %v4728
          %v4769 = vunpack.c.l.b16 %v4729
          %v4770 = vunpack.c.l.b16 %v4730
          %v4771 = vunpack.c.l.b16 %v4731
          %v4772 = vunpack.c.l.b16 %v4732
          %v4773 = vunpack.c.l.b16 %v4733
          %v4774 = vunpack.c.l.b16 %v4734
          %v4775 = vunpack.c.l.b16 %v4735
          %v4776 = vunpack.c.l.b16 %v4736
          %v4777 = vunpack.c.l.b16 %v4737
          %v4778 = vunpack.c.l.b16 %v4738
          %v4779 = vunpack.c.l.b16 %v4739
          %v4780 = vunpack.c.l.b16 %v4740
          %v4781 = vunpack.c.l.b16 %v4741
          %v4782 = vunpack.c.l.b16 %v4742
          %v4783 = vpack.c.b16 %v4768, %v4767
          %v4784 = vpack.c.b16 %v4770, %v4769
          %v4785 = vpack.c.b16 %v4772, %v4771
          %v4786 = vpack.c.b16 %v4774, %v4773
          %v4787 = vpack.c.b16 %v4776, %v4775
          %v4788 = vpack.c.b16 %v4778, %v4777
          %v4789 = vpack.c.b16 %v4780, %v4779
          %v4790 = vpack.c.b16 %v4782, %v4781
          %4799 = vmatprep.subr.bf16.mxu0 0
          %4800 = vmatpush1.bf16.msra.mxu0 %v4790
          %4801 = vmatprep.subr.bf16.mxu0 0
          %4802 = vmatpush1.bf16.msra.mxu0 %v4789
          %4803 = vmatprep.subr.bf16.mxu0 0
          %4804 = vmatpush1.bf16.msra.mxu0 %v4788
          %4805 = vmatprep.subr.bf16.mxu0 0
          %4806 = vmatpush1.bf16.msra.mxu0 %v4787
          %4807 = vmatprep.subr.bf16.mxu0 0
          %4808 = vmatpush1.bf16.msra.mxu0 %v4786
          %4809 = vmatprep.subr.bf16.mxu0 0
          %4810 = vmatpush1.bf16.msra.mxu0 %v4785
          %4811 = vmatprep.subr.bf16.mxu0 0
          %4812 = vmatpush1.bf16.msra.mxu0 %v4784
          %4813 = vmatprep.subr.bf16.mxu0 0
          %4814 = vmatpush1.bf16.msra.mxu0 %v4783
          %4815 = vmatprep.subr.bf16.mxu0 0
          %4816 = vmatpush2.bf16.msra.mxu0 0
          %4817 = vmatprep.subr.bf16.mxu0 0
          %4818 = vmatpush2.bf16.msra.mxu0 0
          %4819 = vmatprep.subr.bf16.mxu0 0
          %4820 = vmatpush2.bf16.msra.mxu0 0
          %4821 = vmatprep.subr.bf16.mxu0 0
          %4822 = vmatpush2.bf16.msra.mxu0 0
          %4823 = vmatprep.subr.bf16.mxu0 0
          %4824 = vmatpush2.bf16.msra.mxu0 0
          %4825 = vmatprep.subr.bf16.mxu0 0
          %4826 = vmatpush2.bf16.msra.mxu0 0
          %4827 = vmatprep.subr.bf16.mxu0 0
          %4828 = vmatpush2.bf16.msra.mxu0 0
          %4829 = vmatprep.subr.bf16.mxu0 0
          %4830 = vmatpush2.bf16.msra.mxu0 0
          %4831 = vmatprep.mubr.bf16.mxu0 0
          %4832 = vmatmul.mubr.bf16.gmra.mxu0 %v3987
          %v4833 = vpop.f32.mrf.mxu0
          %v4834 = vadd.f32 %v4749, %v4833
          %v4835 = vpop.f32.mrf.mxu0
          %v4836 = vpop.f32.mrf.mxu0
          %v4837 = vadd.f32 %v4749, %v4836
          %v4838 = vpop.f32.mrf.mxu0
          %4839 = vmatprep.mubr.bf16.mxu0 0
          %4840 = vmatmul.mubr.bf16.gmra.mxu0 %v3988
          %v4841 = vpop.f32.mrf.mxu0
          %v4842 = vadd.f32 %v4749, %v4841
          %v4843 = vpop.f32.mrf.mxu0
          %v4844 = vpop.f32.mrf.mxu0
          %v4845 = vadd.f32 %v4749, %v4844
          %v4846 = vpop.f32.mrf.mxu0
          %4847 = vdwg.mxu0
          %s4848 = scalar_lea.vmem %s7, 704
          %v4849 = vld [vmem:[%s4848] sm:$0xf]
          %v4850 = vld [vmem:[%s4848 + $0x4] sm:$0xf]
          %v4851 = vld [vmem:[%s4848 + $0x8] sm:$0xf]
          %v4852 = vld [vmem:[%s4848 + $0xc] sm:$0xf]
          %v4853 = vld [vmem:[%s4848 + $0x10] sm:$0xf]
          %v4854 = vld [vmem:[%s4848 + $0x14] sm:$0xf]
          %v4855 = vld [vmem:[%s4848 + $0x18] sm:$0xf]
          %v4856 = vld [vmem:[%s4848 + $0x1c] sm:$0xf]
          %v4857 = vld [vmem:[%s4848 + $0x20] sm:$0xf]
          %v4858 = vld [vmem:[%s4848 + $0x24] sm:$0xf]
          %v4859 = vld [vmem:[%s4848 + $0x28] sm:$0xf]
          %v4860 = vld [vmem:[%s4848 + $0x2c] sm:$0xf]
          %v4861 = vld [vmem:[%s4848 + $0x30] sm:$0xf]
          %v4862 = vld [vmem:[%s4848 + $0x34] sm:$0xf]
          %v4863 = vld [vmem:[%s4848 + $0x38] sm:$0xf]
          %v4864 = vld [vmem:[%s4848 + $0x3c] sm:$0xf]
          %s4865 = scalar_lea.vmem %s8, 11
          %v4866 = vld [vmem:[%s4865] sm:$0x1]
          %v4868 = vlaneseq
          %v4869 = vshrl.u32 %v4868, 7
          %v4870 = vsub.s32 0, %v4869
          %v4871 = vrot.slane %v4866, %v4870
          %v4889 = vunpack.c.l.b16 %v4849
          %v4890 = vunpack.c.l.b16 %v4850
          %v4891 = vunpack.c.l.b16 %v4851
          %v4892 = vunpack.c.l.b16 %v4852
          %v4893 = vunpack.c.l.b16 %v4853
          %v4894 = vunpack.c.l.b16 %v4854
          %v4895 = vunpack.c.l.b16 %v4855
          %v4896 = vunpack.c.l.b16 %v4856
          %v4897 = vunpack.c.l.b16 %v4857
          %v4898 = vunpack.c.l.b16 %v4858
          %v4899 = vunpack.c.l.b16 %v4859
          %v4900 = vunpack.c.l.b16 %v4860
          %v4901 = vunpack.c.l.b16 %v4861
          %v4902 = vunpack.c.l.b16 %v4862
          %v4903 = vunpack.c.l.b16 %v4863
          %v4904 = vunpack.c.l.b16 %v4864
          %v4905 = vpack.c.b16 %v4890, %v4889
          %v4906 = vpack.c.b16 %v4892, %v4891
          %v4907 = vpack.c.b16 %v4894, %v4893
          %v4908 = vpack.c.b16 %v4896, %v4895
          %v4909 = vpack.c.b16 %v4898, %v4897
          %v4910 = vpack.c.b16 %v4900, %v4899
          %v4911 = vpack.c.b16 %v4902, %v4901
          %v4912 = vpack.c.b16 %v4904, %v4903
          %4921 = vmatprep.subr.bf16.mxu0 0
          %4922 = vmatpush1.bf16.msra.mxu0 %v4912
          %4923 = vmatprep.subr.bf16.mxu0 0
          %4924 = vmatpush1.bf16.msra.mxu0 %v4911
          %4925 = vmatprep.subr.bf16.mxu0 0
          %4926 = vmatpush1.bf16.msra.mxu0 %v4910
          %4927 = vmatprep.subr.bf16.mxu0 0
          %4928 = vmatpush1.bf16.msra.mxu0 %v4909
          %4929 = vmatprep.subr.bf16.mxu0 0
          %4930 = vmatpush1.bf16.msra.mxu0 %v4908
          %4931 = vmatprep.subr.bf16.mxu0 0
          %4932 = vmatpush1.bf16.msra.mxu0 %v4907
          %4933 = vmatprep.subr.bf16.mxu0 0
          %4934 = vmatpush1.bf16.msra.mxu0 %v4906
          %4935 = vmatprep.subr.bf16.mxu0 0
          %4936 = vmatpush1.bf16.msra.mxu0 %v4905
          %4937 = vmatprep.subr.bf16.mxu0 0
          %4938 = vmatpush2.bf16.msra.mxu0 0
          %4939 = vmatprep.subr.bf16.mxu0 0
          %4940 = vmatpush2.bf16.msra.mxu0 0
          %4941 = vmatprep.subr.bf16.mxu0 0
          %4942 = vmatpush2.bf16.msra.mxu0 0
          %4943 = vmatprep.subr.bf16.mxu0 0
          %4944 = vmatpush2.bf16.msra.mxu0 0
          %4945 = vmatprep.subr.bf16.mxu0 0
          %4946 = vmatpush2.bf16.msra.mxu0 0
          %4947 = vmatprep.subr.bf16.mxu0 0
          %4948 = vmatpush2.bf16.msra.mxu0 0
          %4949 = vmatprep.subr.bf16.mxu0 0
          %4950 = vmatpush2.bf16.msra.mxu0 0
          %4951 = vmatprep.subr.bf16.mxu0 0
          %4952 = vmatpush2.bf16.msra.mxu0 0
          %4953 = vmatprep.mubr.bf16.mxu0 0
          %4954 = vmatmul.mubr.bf16.gmra.mxu0 %v3987
          %v4955 = vpop.f32.mrf.mxu0
          %v4956 = vadd.f32 %v4871, %v4955
          %v4957 = vpop.f32.mrf.mxu0
          %v4958 = vpop.f32.mrf.mxu0
          %v4959 = vadd.f32 %v4871, %v4958
          %v4960 = vpop.f32.mrf.mxu0
          %4961 = vmatprep.mubr.bf16.mxu0 0
          %4962 = vmatmul.mubr.bf16.gmra.mxu0 %v3988
          %v4963 = vpop.f32.mrf.mxu0
          %v4964 = vadd.f32 %v4871, %v4963
          %v4965 = vpop.f32.mrf.mxu0
          %v4966 = vpop.f32.mrf.mxu0
          %v4967 = vadd.f32 %v4871, %v4966
          %v4968 = vpop.f32.mrf.mxu0
          %4969 = vdwg.mxu0
          %v4970 = vmul.f32 %v4712, 0.125
          %v4971 = vmul.f32 %v4715, 0.125
          %v4972 = vmul.f32 %v4720, 0.125
          %v4973 = vmul.f32 %v4723, 0.125
          %v4974 = vpack.c.bf16 %v4971, %v4970
          %v4975 = vpack.c.bf16 %v4973, %v4972
          %v4976 = vpack.c.bf16 %v4837, %v4834
          %v4977 = vpack.c.bf16 %v4845, %v4842
          %v4978 = vpack.c.bf16 %v4959, %v4956
          %v4979 = vpack.c.bf16 %v4967, %v4964
          %v4981 = vsel %vm878, %v4974, 0
          %v4984 = vsel %vm878, %v4976, 0
          %4986 = vmatprep.subr.bf16.mxu0 0
          %4987 = vmatpush1.bf16.xpose.msra.mxu0 0
          %4988 = vmatprep.subr.bf16.mxu0 0
          %4989 = vmatpush1.bf16.xpose.msra.mxu0 0
          %4990 = vmatprep.subr.bf16.mxu0 0
          %4991 = vmatpush1.bf16.xpose.msra.mxu0 0
          %4992 = vmatprep.subr.bf16.mxu0 0
          %4993 = vmatpush1.bf16.xpose.msra.mxu0 0
          %4994 = vmatprep.subr.bf16.mxu0 0
          %4995 = vmatpush1.bf16.xpose.msra.mxu0 0
          %4996 = vmatprep.subr.bf16.mxu0 0
          %4997 = vmatpush1.bf16.xpose.msra.mxu0 0
          %4998 = vmatprep.subr.bf16.mxu0 0
          %4999 = vmatpush1.bf16.xpose.msra.mxu0 0
          %5000 = vmatprep.subr.bf16.mxu0 0
          %5001 = vmatpush1.bf16.xpose.msra.mxu0 %v4984
          %5002 = vmatprep.subr.bf16.mxu0 0
          %5003 = vmatpush2.bf16.xpose.msra.mxu0 0
          %5004 = vmatprep.subr.bf16.mxu0 0
          %5005 = vmatpush2.bf16.xpose.msra.mxu0 0
          %5006 = vmatprep.subr.bf16.mxu0 0
          %5007 = vmatpush2.bf16.xpose.msra.mxu0 0
          %5008 = vmatprep.subr.bf16.mxu0 0
          %5009 = vmatpush2.bf16.xpose.msra.mxu0 0
          %5010 = vmatprep.subr.bf16.mxu0 0
          %5011 = vmatpush2.bf16.xpose.msra.mxu0 0
          %5012 = vmatprep.subr.bf16.mxu0 0
          %5013 = vmatpush2.bf16.xpose.msra.mxu0 0
          %5014 = vmatprep.subr.bf16.mxu0 0
          %5015 = vmatpush2.bf16.xpose.msra.mxu0 0
          %5016 = vmatprep.subr.bf16.mxu0 0
          %5017 = vmatpush2.bf16.xpose.msra.mxu0 0
          %5018 = vmatprep.mubr.bf16.mxu0 0
          %5019 = vmatmul.mubr.bf16.gmra.mxu0 %v4981
          %v5020 = vpop.f32.mrf.mxu0
          %v5021 = vadd.f32 0.0, %v5020
          %v5022 = vpop.f32.mrf.mxu0
          %v5023 = vpop.f32.mrf.mxu0
          %v5024 = vadd.f32 0.0, %v5023
          %v5025 = vpop.f32.mrf.mxu0
          %5026 = vdwg.mxu0
          %v5028 = vsel %vm878, %v4975, 0
          %v5031 = vsel %vm878, %v4977, 0
          %5033 = vmatprep.subr.bf16.mxu0 0
          %5034 = vmatpush1.bf16.xpose.msra.mxu0 0
          %5035 = vmatprep.subr.bf16.mxu0 0
          %5036 = vmatpush1.bf16.xpose.msra.mxu0 0
          %5037 = vmatprep.subr.bf16.mxu0 0
          %5038 = vmatpush1.bf16.xpose.msra.mxu0 0
          %5039 = vmatprep.subr.bf16.mxu0 0
          %5040 = vmatpush1.bf16.xpose.msra.mxu0 0
          %5041 = vmatprep.subr.bf16.mxu0 0
          %5042 = vmatpush1.bf16.xpose.msra.mxu0 0
          %5043 = vmatprep.subr.bf16.mxu0 0
          %5044 = vmatpush1.bf16.xpose.msra.mxu0 0
          %5045 = vmatprep.subr.bf16.mxu0 0
          %5046 = vmatpush1.bf16.xpose.msra.mxu0 0
          %5047 = vmatprep.subr.bf16.mxu0 0
          %5048 = vmatpush1.bf16.xpose.msra.mxu0 %v5031
          %5049 = vmatprep.subr.bf16.mxu0 0
          %5050 = vmatpush2.bf16.xpose.msra.mxu0 0
          %5051 = vmatprep.subr.bf16.mxu0 0
          %5052 = vmatpush2.bf16.xpose.msra.mxu0 0
          %5053 = vmatprep.subr.bf16.mxu0 0
          %5054 = vmatpush2.bf16.xpose.msra.mxu0 0
          %5055 = vmatprep.subr.bf16.mxu0 0
          %5056 = vmatpush2.bf16.xpose.msra.mxu0 0
          %5057 = vmatprep.subr.bf16.mxu0 0
          %5058 = vmatpush2.bf16.xpose.msra.mxu0 0
          %5059 = vmatprep.subr.bf16.mxu0 0
          %5060 = vmatpush2.bf16.xpose.msra.mxu0 0
          %5061 = vmatprep.subr.bf16.mxu0 0
          %5062 = vmatpush2.bf16.xpose.msra.mxu0 0
          %5063 = vmatprep.subr.bf16.mxu0 0
          %5064 = vmatpush2.bf16.xpose.msra.mxu0 0
          %5065 = vmatprep.mubr.bf16.mxu0 0
          %5066 = vmatmul.mubr.bf16.gmra.mxu0 %v5028
          %v5067 = vpop.f32.mrf.mxu0
          %v5068 = vadd.f32 0.0, %v5067
          %v5069 = vpop.f32.mrf.mxu0
          %v5070 = vpop.f32.mrf.mxu0
          %v5071 = vadd.f32 0.0, %v5070
          %v5072 = vpop.f32.mrf.mxu0
          %5073 = vdwg.mxu0
          %v5074 = vsel %vm2081, %v5021, -inf
          %5075 = vmax.xlane.f32.xlu0 %v5074
          %v5076 = vpop.xlane.xlu0 %5075
          %v5077 = vsel %vm2081, %v5024, -inf
          %5078 = vmax.xlane.f32.xlu0 %v5077
          %v5079 = vpop.xlane.xlu0 %5078
          %v5080 = vsel %vm2081, %v5068, -inf
          %5081 = vmax.xlane.f32.xlu0 %v5080
          %v5082 = vpop.xlane.xlu0 %5081
          %v5083 = vsel %vm2081, %v5071, -inf
          %5084 = vmax.xlane.f32.xlu0 %v5083
          %v5085 = vpop.xlane.xlu0 %5084
          %v5086 = vsub.f32 %v5021, %v5076
          %v5087 = vsub.f32 %v5024, %v5079
          %v5088 = vsub.f32 %v5068, %v5082
          %v5089 = vsub.f32 %v5071, %v5085
          %v5090 = vmul.f32 %v5086, 1.442695
          %v5091 = vpow.pop %v5090
          %v5092 = vmul.f32 %v5087, 1.442695
          %v5093 = vpow.pop %v5092
          %v5094 = vmul.f32 %v5088, 1.442695
          %v5095 = vpow.pop %v5094
          %v5096 = vmul.f32 %v5089, 1.442695
          %v5097 = vpow.pop %v5096
          %v5098 = vsel %vm2081, %v5091, 0.0
          %5099 = vadd.xlane.f32.xlu0 %v5098
          %v5100 = vpop.xlane.xlu0 %5099
          %v5101 = vsel %vm2081, %v5093, 0.0
          %5102 = vadd.xlane.f32.xlu0 %v5101
          %v5103 = vpop.xlane.xlu0 %5102
          %v5104 = vsel %vm2081, %v5095, 0.0
          %5105 = vadd.xlane.f32.xlu0 %v5104
          %v5106 = vpop.xlane.xlu0 %5105
          %v5107 = vsel %vm2081, %v5097, 0.0
          %5108 = vadd.xlane.f32.xlu0 %v5107
          %v5109 = vpop.xlane.xlu0 %5108
          %v5110 = vrcp.pop %v5100
          %v5111 = vrcp.pop %v5103
          %v5112 = vrcp.pop %v5106
          %v5113 = vrcp.pop %v5109
          %v5114 = vmul.f32 %v5091, %v5110
          %v5115 = vmul.f32 %v5093, %v5111
          %v5116 = vmul.f32 %v5095, %v5112
          %v5117 = vmul.f32 %v5097, %v5113
          %v5118 = vpack.c.bf16 %v5115, %v5114
          %v5119 = vpack.c.bf16 %v5117, %v5116
          %v5121 = vsel %vm2081, %v5118, 0
          %5123 = vmatprep.subr.bf16.mxu0 0
          %5124 = vmatpush1.bf16.msra.mxu0 0
          %5125 = vmatprep.subr.bf16.mxu0 0
          %5126 = vmatpush1.bf16.msra.mxu0 0
          %5127 = vmatprep.subr.bf16.mxu0 0
          %5128 = vmatpush1.bf16.msra.mxu0 0
          %5129 = vmatprep.subr.bf16.mxu0 0
          %5130 = vmatpush1.bf16.msra.mxu0 0
          %5131 = vmatprep.subr.bf16.mxu0 0
          %5132 = vmatpush1.bf16.msra.mxu0 0
          %5133 = vmatprep.subr.bf16.mxu0 0
          %5134 = vmatpush1.bf16.msra.mxu0 0
          %5135 = vmatprep.subr.bf16.mxu0 0
          %5136 = vmatpush1.bf16.msra.mxu0 0
          %5137 = vmatprep.subr.bf16.mxu0 0
          %5138 = vmatpush1.bf16.msra.mxu0 %v4978
          %5139 = vmatprep.subr.bf16.mxu0 0
          %5140 = vmatpush2.bf16.msra.mxu0 0
          %5141 = vmatprep.subr.bf16.mxu0 0
          %5142 = vmatpush2.bf16.msra.mxu0 0
          %5143 = vmatprep.subr.bf16.mxu0 0
          %5144 = vmatpush2.bf16.msra.mxu0 0
          %5145 = vmatprep.subr.bf16.mxu0 0
          %5146 = vmatpush2.bf16.msra.mxu0 0
          %5147 = vmatprep.subr.bf16.mxu0 0
          %5148 = vmatpush2.bf16.msra.mxu0 0
          %5149 = vmatprep.subr.bf16.mxu0 0
          %5150 = vmatpush2.bf16.msra.mxu0 0
          %5151 = vmatprep.subr.bf16.mxu0 0
          %5152 = vmatpush2.bf16.msra.mxu0 0
          %5153 = vmatprep.subr.bf16.mxu0 0
          %5154 = vmatpush2.bf16.msra.mxu0 0
          %5155 = vmatprep.mubr.bf16.mxu0 0
          %5156 = vmatmul.mubr.bf16.gmra.mxu0 %v5121
          %v5157 = vpop.f32.mrf.mxu0
          %v5158 = vadd.f32 0.0, %v5157
          %v5159 = vpop.f32.mrf.mxu0
          %v5160 = vpop.f32.mrf.mxu0
          %v5161 = vadd.f32 0.0, %v5160
          %v5162 = vpop.f32.mrf.mxu0
          %5163 = vdwg.mxu0
          %v5165 = vsel %vm2081, %v5119, 0
          %5167 = vmatprep.subr.bf16.mxu0 0
          %5168 = vmatpush1.bf16.msra.mxu0 0
          %5169 = vmatprep.subr.bf16.mxu0 0
          %5170 = vmatpush1.bf16.msra.mxu0 0
          %5171 = vmatprep.subr.bf16.mxu0 0
          %5172 = vmatpush1.bf16.msra.mxu0 0
          %5173 = vmatprep.subr.bf16.mxu0 0
          %5174 = vmatpush1.bf16.msra.mxu0 0
          %5175 = vmatprep.subr.bf16.mxu0 0
          %5176 = vmatpush1.bf16.msra.mxu0 0
          %5177 = vmatprep.subr.bf16.mxu0 0
          %5178 = vmatpush1.bf16.msra.mxu0 0
          %5179 = vmatprep.subr.bf16.mxu0 0
          %5180 = vmatpush1.bf16.msra.mxu0 0
          %5181 = vmatprep.subr.bf16.mxu0 0
          %5182 = vmatpush1.bf16.msra.mxu0 %v4979
          %5183 = vmatprep.subr.bf16.mxu0 0
          %5184 = vmatpush2.bf16.msra.mxu0 0
          %5185 = vmatprep.subr.bf16.mxu0 0
          %5186 = vmatpush2.bf16.msra.mxu0 0
          %5187 = vmatprep.subr.bf16.mxu0 0
          %5188 = vmatpush2.bf16.msra.mxu0 0
          %5189 = vmatprep.subr.bf16.mxu0 0
          %5190 = vmatpush2.bf16.msra.mxu0 0
          %5191 = vmatprep.subr.bf16.mxu0 0
          %5192 = vmatpush2.bf16.msra.mxu0 0
          %5193 = vmatprep.subr.bf16.mxu0 0
          %5194 = vmatpush2.bf16.msra.mxu0 0
          %5195 = vmatprep.subr.bf16.mxu0 0
          %5196 = vmatpush2.bf16.msra.mxu0 0
          %5197 = vmatprep.subr.bf16.mxu0 0
          %5198 = vmatpush2.bf16.msra.mxu0 0
          %5199 = vmatprep.mubr.bf16.mxu0 0
          %5200 = vmatmul.mubr.bf16.gmra.mxu0 %v5165
          %v5201 = vpop.f32.mrf.mxu0
          %v5202 = vadd.f32 0.0, %v5201
          %v5203 = vpop.f32.mrf.mxu0
          %v5204 = vpop.f32.mrf.mxu0
          %v5205 = vadd.f32 0.0, %v5204
          %v5206 = vpop.f32.mrf.mxu0
          %5207 = vdwg.mxu0
          %v5208 = vpack.c.bf16 %v5161, %v5158
          %v5209 = vpack.c.bf16 %v5205, %v5202
          %s5210 = scalar_lea.vmem %s9, 96
          %v5211 = vld [vmem:[%s5210] sm:$0xf]
          %v5212 = vld [vmem:[%s5210 + $0x4] sm:$0xf]
          %v5213 = vld [vmem:[%s5210 + $0x8] sm:$0xf]
          %v5214 = vld [vmem:[%s5210 + $0xc] sm:$0xf]
          %v5215 = vld [vmem:[%s5210 + $0x10] sm:$0xf]
          %v5216 = vld [vmem:[%s5210 + $0x14] sm:$0xf]
          %v5217 = vld [vmem:[%s5210 + $0x18] sm:$0xf]
          %v5218 = vld [vmem:[%s5210 + $0x1c] sm:$0xf]
          %v5227 = vunpack.c.l.b16 %v5211
          %v5228 = vunpack.c.l.b16 %v5212
          %v5229 = vunpack.c.l.b16 %v5213
          %v5230 = vunpack.c.l.b16 %v5214
          %v5231 = vunpack.c.l.b16 %v5215
          %v5232 = vunpack.c.l.b16 %v5216
          %v5233 = vunpack.c.l.b16 %v5217
          %v5234 = vunpack.c.l.b16 %v5218
          %v5235 = vpack.c.b16 %v5228, %v5227
          %v5236 = vpack.c.b16 %v5230, %v5229
          %v5237 = vpack.c.b16 %v5232, %v5231
          %v5238 = vpack.c.b16 %v5234, %v5233
          %v5244 = vsel %vm878, %v5208, 0
          %v5247 = vsel %vm878, %v5209, 0
          %5249 = vmatprep.subr.bf16.mxu0 0
          %5250 = vmatpush1.bf16.msra.mxu0 0
          %5251 = vmatprep.subr.bf16.mxu0 0
          %5252 = vmatpush1.bf16.msra.mxu0 0
          %5253 = vmatprep.subr.bf16.mxu0 0
          %5254 = vmatpush1.bf16.msra.mxu0 0
          %5255 = vmatprep.subr.bf16.mxu0 0
          %5256 = vmatpush1.bf16.msra.mxu0 0
          %5257 = vmatprep.subr.bf16.mxu0 0
          %5258 = vmatpush1.bf16.msra.mxu0 %v5238
          %5259 = vmatprep.subr.bf16.mxu0 0
          %5260 = vmatpush1.bf16.msra.mxu0 %v5237
          %5261 = vmatprep.subr.bf16.mxu0 0
          %5262 = vmatpush1.bf16.msra.mxu0 %v5236
          %5263 = vmatprep.subr.bf16.mxu0 0
          %5264 = vmatpush1.bf16.msra.mxu0 %v5235
          %5265 = vmatprep.subr.bf16.mxu0 0
          %5266 = vmatpush2.bf16.msra.mxu0 0
          %5267 = vmatprep.subr.bf16.mxu0 0
          %5268 = vmatpush2.bf16.msra.mxu0 0
          %5269 = vmatprep.subr.bf16.mxu0 0
          %5270 = vmatpush2.bf16.msra.mxu0 0
          %5271 = vmatprep.subr.bf16.mxu0 0
          %5272 = vmatpush2.bf16.msra.mxu0 0
          %5273 = vmatprep.subr.bf16.mxu0 0
          %5274 = vmatpush2.bf16.msra.mxu0 0
          %5275 = vmatprep.subr.bf16.mxu0 0
          %5276 = vmatpush2.bf16.msra.mxu0 0
          %5277 = vmatprep.subr.bf16.mxu0 0
          %5278 = vmatpush2.bf16.msra.mxu0 0
          %5279 = vmatprep.subr.bf16.mxu0 0
          %5280 = vmatpush2.bf16.msra.mxu0 0
          %5281 = vmatprep.mubr.bf16.mxu0 0
          %5282 = vmatmul.mubr.bf16.gmra.mxu0 %v5244
          %v5283 = vpop.f32.mrf.mxu0
          %v5284 = vadd.f32 0.0, %v5283
          %v5285 = vpop.f32.mrf.mxu0
          %v5286 = vpop.f32.mrf.mxu0
          %v5287 = vadd.f32 0.0, %v5286
          %v5288 = vpop.f32.mrf.mxu0
          %5289 = vmatprep.mubr.bf16.mxu0 0
          %5290 = vmatmul.mubr.bf16.gmra.mxu0 %v5247
          %v5291 = vpop.f32.mrf.mxu0
          %v5292 = vadd.f32 0.0, %v5291
          %v5293 = vpop.f32.mrf.mxu0
          %v5294 = vpop.f32.mrf.mxu0
          %v5295 = vadd.f32 0.0, %v5294
          %v5296 = vpop.f32.mrf.mxu0
          %5297 = vdwg.mxu0
          %v5306 = vunpack.c.l.b16 %v4596
          %v5307 = vunpack.c.l.b16 %v4597
          %v5308 = vunpack.c.l.b16 %v4598
          %v5309 = vunpack.c.l.b16 %v4599
          %v5310 = vunpack.c.l.b16 %v4600
          %v5311 = vunpack.c.l.b16 %v4601
          %v5312 = vunpack.c.l.b16 %v4602
          %v5313 = vunpack.c.l.b16 %v4603
          %v5314 = vpack.c.b16 %v5307, %v5306
          %v5315 = vpack.c.b16 %v5309, %v5308
          %v5316 = vpack.c.b16 %v5311, %v5310
          %v5317 = vpack.c.b16 %v5313, %v5312
          %v5323 = vsel %vm878, %v4593, 0
          %v5326 = vsel %vm878, %v4594, 0
          %5328 = vmatprep.subr.bf16.mxu0 0
          %5329 = vmatpush1.bf16.msra.mxu0 0
          %5330 = vmatprep.subr.bf16.mxu0 0
          %5331 = vmatpush1.bf16.msra.mxu0 0
          %5332 = vmatprep.subr.bf16.mxu0 0
          %5333 = vmatpush1.bf16.msra.mxu0 0
          %5334 = vmatprep.subr.bf16.mxu0 0
          %5335 = vmatpush1.bf16.msra.mxu0 0
          %5336 = vmatprep.subr.bf16.mxu0 0
          %5337 = vmatpush1.bf16.msra.mxu0 %v5317
          %5338 = vmatprep.subr.bf16.mxu0 0
          %5339 = vmatpush1.bf16.msra.mxu0 %v5316
          %5340 = vmatprep.subr.bf16.mxu0 0
          %5341 = vmatpush1.bf16.msra.mxu0 %v5315
          %5342 = vmatprep.subr.bf16.mxu0 0
          %5343 = vmatpush1.bf16.msra.mxu0 %v5314
          %5344 = vmatprep.subr.bf16.mxu0 0
          %5345 = vmatpush2.bf16.msra.mxu0 0
          %5346 = vmatprep.subr.bf16.mxu0 0
          %5347 = vmatpush2.bf16.msra.mxu0 0
          %5348 = vmatprep.subr.bf16.mxu0 0
          %5349 = vmatpush2.bf16.msra.mxu0 0
          %5350 = vmatprep.subr.bf16.mxu0 0
          %5351 = vmatpush2.bf16.msra.mxu0 0
          %5352 = vmatprep.subr.bf16.mxu0 0
          %5353 = vmatpush2.bf16.msra.mxu0 0
          %5354 = vmatprep.subr.bf16.mxu0 0
          %5355 = vmatpush2.bf16.msra.mxu0 0
          %5356 = vmatprep.subr.bf16.mxu0 0
          %5357 = vmatpush2.bf16.msra.mxu0 0
          %5358 = vmatprep.subr.bf16.mxu0 0
          %5359 = vmatpush2.bf16.msra.mxu0 0
          %5360 = vmatprep.mubr.bf16.mxu0 0
          %5361 = vmatmul.mubr.bf16.gmra.mxu0 %v5323
          %v5362 = vpop.f32.mrf.mxu0
          %v5363 = vadd.f32 %v5284, %v5362
          %v5364 = vpop.f32.mrf.mxu0
          %v5365 = vpop.f32.mrf.mxu0
          %v5366 = vadd.f32 %v5287, %v5365
          %v5367 = vpop.f32.mrf.mxu0
          %5368 = vmatprep.mubr.bf16.mxu0 0
          %5369 = vmatmul.mubr.bf16.gmra.mxu0 %v5326
          %v5370 = vpop.f32.mrf.mxu0
          %v5371 = vadd.f32 %v5292, %v5370
          %v5372 = vpop.f32.mrf.mxu0
          %v5373 = vpop.f32.mrf.mxu0
          %v5374 = vadd.f32 %v5295, %v5373
          %v5375 = vpop.f32.mrf.mxu0
          %5376 = vdwg.mxu0
          %v5377 = vadd.f32 %v3915, %v5363
          %v5378 = vadd.f32 %v3916, %v5366
          %v5379 = vadd.f32 %v3917, %v5371
          %v5380 = vadd.f32 %v3918, %v5374
          %s5381 = scalar_lea.vmem %s10, 1
          %v5382 = vld [vmem:[%s5381] sm:$0x1]
          %v5384 = vlaneseq
          %v5385 = vshrl.u32 %v5384, 7
          %v5386 = vsub.s32 0, %v5385
          %v5387 = vrot.slane %v5382, %v5386
          %v5389 = vadd.f32 %v5377, %v5387
          %v5390 = vadd.f32 %v5378, %v5387
          %v5391 = vadd.f32 %v5379, %v5387
          %v5392 = vadd.f32 %v5380, %v5387
          %s5393 = scalar_lea.vmem %s11, 1
          %v5394 = vld [vmem:[%s5393] sm:$0x1]
          %s5395 = scalar_lea.vmem %s12, 1
          %v5396 = vld [vmem:[%s5395] sm:$0x1]
          %5397 = vadd.xlane.f32.xlu0 %v5389
          %v5398 = vpop.xlane.xlu0 %5397
          %5399 = vadd.xlane.f32.xlu0 %v5390
          %v5400 = vpop.xlane.xlu0 %5399
          %5401 = vadd.xlane.f32.xlu0 %v5391
          %v5402 = vpop.xlane.xlu0 %5401
          %5403 = vadd.xlane.f32.xlu0 %v5392
          %v5404 = vpop.xlane.xlu0 %5403
          %v5405 = vmul.f32 %v5398, %v1554
          %v5406 = vmul.f32 %v5400, %v1554
          %v5407 = vmul.f32 %v5402, %v1554
          %v5408 = vmul.f32 %v5404, %v1554
          %v5409 = vsub.f32 %v5389, %v5405
          %v5410 = vsub.f32 %v5390, %v5406
          %v5411 = vsub.f32 %v5391, %v5407
          %v5412 = vsub.f32 %v5392, %v5408
          %v5413 = vmul.f32 %v5409, %v5409
          %v5414 = vmul.f32 %v5410, %v5410
          %v5415 = vmul.f32 %v5411, %v5411
          %v5416 = vmul.f32 %v5412, %v5412
          %5417 = vadd.xlane.f32.xlu0 %v5413
          %v5418 = vpop.xlane.xlu0 %5417
          %5419 = vadd.xlane.f32.xlu0 %v5414
          %v5420 = vpop.xlane.xlu0 %5419
          %5421 = vadd.xlane.f32.xlu0 %v5415
          %v5422 = vpop.xlane.xlu0 %5421
          %5423 = vadd.xlane.f32.xlu0 %v5416
          %v5424 = vpop.xlane.xlu0 %5423
          %v5425 = vmul.f32 %v5418, %v1554
          %v5426 = vmul.f32 %v5420, %v1554
          %v5427 = vmul.f32 %v5422, %v1554
          %v5428 = vmul.f32 %v5424, %v1554
          %v5429 = vadd.f32 %v5425, 1e-05
          %v5430 = vadd.f32 %v5426, 1e-05
          %v5431 = vadd.f32 %v5427, 1e-05
          %v5432 = vadd.f32 %v5428, 1e-05
          %v5433 = vrsqrt.pop %v5429
          %v5434 = vrsqrt.pop %v5430
          %v5435 = vrsqrt.pop %v5431
          %v5436 = vrsqrt.pop %v5432
          %v5437 = vmul.f32 %v5409, %v5433
          %v5438 = vmul.f32 %v5410, %v5434
          %v5439 = vmul.f32 %v5411, %v5435
          %v5440 = vmul.f32 %v5412, %v5436
          %v5442 = vlaneseq
          %v5443 = vshrl.u32 %v5442, 7
          %v5444 = vsub.s32 0, %v5443
          %v5445 = vrot.slane %v5394, %v5444
          %v5447 = vmul.f32 %v5437, %v5445
          %v5448 = vmul.f32 %v5438, %v5445
          %v5449 = vmul.f32 %v5439, %v5445
          %v5450 = vmul.f32 %v5440, %v5445
          %v5452 = vlaneseq
          %v5453 = vshrl.u32 %v5452, 7
          %v5454 = vsub.s32 0, %v5453
          %v5455 = vrot.slane %v5396, %v5454
          %v5457 = vadd.f32 %v5447, %v5455
          %v5458 = vadd.f32 %v5448, %v5455
          %v5459 = vadd.f32 %v5449, %v5455
          %v5460 = vadd.f32 %v5450, %v5455
          %v5461 = vpack.c.bf16 %v5458, %v5457
          %v5462 = vpack.c.bf16 %v5460, %v5459
          %s5463 = scalar_lea.vmem %s13, 256
          %v5464 = vld [vmem:[%s5463] sm:$0xff]
          %v5465 = vld [vmem:[%s5463 + $0x8] sm:$0xff]
          %v5466 = vld [vmem:[%s5463 + $0x10] sm:$0xff]
          %v5467 = vld [vmem:[%s5463 + $0x18] sm:$0xff]
          %v5468 = vld [vmem:[%s5463 + $0x20] sm:$0xff]
          %v5469 = vld [vmem:[%s5463 + $0x28] sm:$0xff]
          %v5470 = vld [vmem:[%s5463 + $0x30] sm:$0xff]
          %v5471 = vld [vmem:[%s5463 + $0x38] sm:$0xff]
          %v5472 = vld [vmem:[%s5463 + $0x40] sm:$0xff]
          %v5473 = vld [vmem:[%s5463 + $0x48] sm:$0xff]
          %v5474 = vld [vmem:[%s5463 + $0x50] sm:$0xff]
          %v5475 = vld [vmem:[%s5463 + $0x58] sm:$0xff]
          %v5476 = vld [vmem:[%s5463 + $0x60] sm:$0xff]
          %v5477 = vld [vmem:[%s5463 + $0x68] sm:$0xff]
          %v5478 = vld [vmem:[%s5463 + $0x70] sm:$0xff]
          %v5479 = vld [vmem:[%s5463 + $0x78] sm:$0xff]
          %v5480 = vld [vmem:[%s5463 + $0x80] sm:$0xff]
          %v5481 = vld [vmem:[%s5463 + $0x88] sm:$0xff]
          %v5482 = vld [vmem:[%s5463 + $0x90] sm:$0xff]
          %v5483 = vld [vmem:[%s5463 + $0x98] sm:$0xff]
          %v5484 = vld [vmem:[%s5463 + $0xa0] sm:$0xff]
          %v5485 = vld [vmem:[%s5463 + $0xa8] sm:$0xff]
          %v5486 = vld [vmem:[%s5463 + $0xb0] sm:$0xff]
          %v5487 = vld [vmem:[%s5463 + $0xb8] sm:$0xff]
          %v5488 = vld [vmem:[%s5463 + $0xc0] sm:$0xff]
          %v5489 = vld [vmem:[%s5463 + $0xc8] sm:$0xff]
          %v5490 = vld [vmem:[%s5463 + $0xd0] sm:$0xff]
          %v5491 = vld [vmem:[%s5463 + $0xd8] sm:$0xff]
          %v5492 = vld [vmem:[%s5463 + $0xe0] sm:$0xff]
          %v5493 = vld [vmem:[%s5463 + $0xe8] sm:$0xff]
          %v5494 = vld [vmem:[%s5463 + $0xf0] sm:$0xff]
          %v5495 = vld [vmem:[%s5463 + $0xf8] sm:$0xff]
          %s5496 = scalar_lea.vmem %s14, 4
          %v5497 = vld [vmem:[%s5496] sm:$0xf]
          %v5499 = vlaneseq
          %v5500 = vshrl.u32 %v5499, 7
          %v5501 = vsub.s32 0, %v5500
          %v5502 = vrot.slane %v5497, %v5501
          %v5503 = vlaneseq
          %v5504 = vshrl.u32 %v5503, 7
          %v5505 = vsub.s32 1, %v5504
          %v5506 = vrot.slane %v5497, %v5505
          %v5507 = vlaneseq
          %v5508 = vshrl.u32 %v5507, 7
          %v5509 = vsub.s32 2, %v5508
          %v5510 = vrot.slane %v5497, %v5509
          %v5511 = vlaneseq
          %v5512 = vshrl.u32 %v5511, 7
          %v5513 = vsub.s32 3, %v5512
          %v5514 = vrot.slane %v5497, %v5513
          %v5551 = vunpack.c.l.b16 %v5464
          %v5552 = vunpack.c.h.b16 %v5464
          %v5553 = vunpack.c.l.b16 %v5465
          %v5554 = vunpack.c.h.b16 %v5465
          %v5555 = vunpack.c.l.b16 %v5466
          %v5556 = vunpack.c.h.b16 %v5466
          %v5557 = vunpack.c.l.b16 %v5467
          %v5558 = vunpack.c.h.b16 %v5467
          %v5559 = vunpack.c.l.b16 %v5468
          %v5560 = vunpack.c.h.b16 %v5468
          %v5561 = vunpack.c.l.b16 %v5469
          %v5562 = vunpack.c.h.b16 %v5469
          %v5563 = vunpack.c.l.b16 %v5470
          %v5564 = vunpack.c.h.b16 %v5470
          %v5565 = vunpack.c.l.b16 %v5471
          %v5566 = vunpack.c.h.b16 %v5471
          %v5567 = vunpack.c.l.b16 %v5472
          %v5568 = vunpack.c.h.b16 %v5472
          %v5569 = vunpack.c.l.b16 %v5473
          %v5570 = vunpack.c.h.b16 %v5473
          %v5571 = vunpack.c.l.b16 %v5474
          %v5572 = vunpack.c.h.b16 %v5474
          %v5573 = vunpack.c.l.b16 %v5475
          %v5574 = vunpack.c.h.b16 %v5475
          %v5575 = vunpack.c.l.b16 %v5476
          %v5576 = vunpack.c.h.b16 %v5476
          %v5577 = vunpack.c.l.b16 %v5477
          %v5578 = vunpack.c.h.b16 %v5477
          %v5579 = vunpack.c.l.b16 %v5478
          %v5580 = vunpack.c.h.b16 %v5478
          %v5581 = vunpack.c.l.b16 %v5479
          %v5582 = vunpack.c.h.b16 %v5479
          %v5583 = vunpack.c.l.b16 %v5480
          %v5584 = vunpack.c.h.b16 %v5480
          %v5585 = vunpack.c.l.b16 %v5481
          %v5586 = vunpack.c.h.b16 %v5481
          %v5587 = vunpack.c.l.b16 %v5482
          %v5588 = vunpack.c.h.b16 %v5482
          %v5589 = vunpack.c.l.b16 %v5483
          %v5590 = vunpack.c.h.b16 %v5483
          %v5591 = vunpack.c.l.b16 %v5484
          %v5592 = vunpack.c.h.b16 %v5484
          %v5593 = vunpack.c.l.b16 %v5485
          %v5594 = vunpack.c.h.b16 %v5485
          %v5595 = vunpack.c.l.b16 %v5486
          %v5596 = vunpack.c.h.b16 %v5486
          %v5597 = vunpack.c.l.b16 %v5487
          %v5598 = vunpack.c.h.b16 %v5487
          %v5599 = vunpack.c.l.b16 %v5488
          %v5600 = vunpack.c.h.b16 %v5488
          %v5601 = vunpack.c.l.b16 %v5489
          %v5602 = vunpack.c.h.b16 %v5489
          %v5603 = vunpack.c.l.b16 %v5490
          %v5604 = vunpack.c.h.b16 %v5490
          %v5605 = vunpack.c.l.b16 %v5491
          %v5606 = vunpack.c.h.b16 %v5491
          %v5607 = vunpack.c.l.b16 %v5492
          %v5608 = vunpack.c.h.b16 %v5492
          %v5609 = vunpack.c.l.b16 %v5493
          %v5610 = vunpack.c.h.b16 %v5493
          %v5611 = vunpack.c.l.b16 %v5494
          %v5612 = vunpack.c.h.b16 %v5494
          %v5613 = vunpack.c.l.b16 %v5495
          %v5614 = vunpack.c.h.b16 %v5495
          %v5615 = vpack.c.b16 %v5555, %v5551
          %v5616 = vpack.c.b16 %v5556, %v5552
          %v5617 = vpack.c.b16 %v5557, %v5553
          %v5618 = vpack.c.b16 %v5558, %v5554
          %v5619 = vpack.c.b16 %v5563, %v5559
          %v5620 = vpack.c.b16 %v5564, %v5560
          %v5621 = vpack.c.b16 %v5565, %v5561
          %v5622 = vpack.c.b16 %v5566, %v5562
          %v5623 = vpack.c.b16 %v5571, %v5567
          %v5624 = vpack.c.b16 %v5572, %v5568
          %v5625 = vpack.c.b16 %v5573, %v5569
          %v5626 = vpack.c.b16 %v5574, %v5570
          %v5627 = vpack.c.b16 %v5579, %v5575
          %v5628 = vpack.c.b16 %v5580, %v5576
          %v5629 = vpack.c.b16 %v5581, %v5577
          %v5630 = vpack.c.b16 %v5582, %v5578
          %v5631 = vpack.c.b16 %v5587, %v5583
          %v5632 = vpack.c.b16 %v5588, %v5584
          %v5633 = vpack.c.b16 %v5589, %v5585
          %v5634 = vpack.c.b16 %v5590, %v5586
          %v5635 = vpack.c.b16 %v5595, %v5591
          %v5636 = vpack.c.b16 %v5596, %v5592
          %v5637 = vpack.c.b16 %v5597, %v5593
          %v5638 = vpack.c.b16 %v5598, %v5594
          %v5639 = vpack.c.b16 %v5603, %v5599
          %v5640 = vpack.c.b16 %v5604, %v5600
          %v5641 = vpack.c.b16 %v5605, %v5601
          %v5642 = vpack.c.b16 %v5606, %v5602
          %v5643 = vpack.c.b16 %v5611, %v5607
          %v5644 = vpack.c.b16 %v5612, %v5608
          %v5645 = vpack.c.b16 %v5613, %v5609
          %v5646 = vpack.c.b16 %v5614, %v5610
          %5679 = vmatprep.subr.bf16.mxu0 %v5644
          %5680 = vmatpush1.bf16.msra.mxu0 %v5643
          %5681 = vmatprep.subr.bf16.mxu0 %v5640
          %5682 = vmatpush1.bf16.msra.mxu0 %v5639
          %5683 = vmatprep.subr.bf16.mxu0 %v5636
          %5684 = vmatpush1.bf16.msra.mxu0 %v5635
          %5685 = vmatprep.subr.bf16.mxu0 %v5632
          %5686 = vmatpush1.bf16.msra.mxu0 %v5631
          %5687 = vmatprep.subr.bf16.mxu0 %v5628
          %5688 = vmatpush1.bf16.msra.mxu0 %v5627
          %5689 = vmatprep.subr.bf16.mxu0 %v5624
          %5690 = vmatpush1.bf16.msra.mxu0 %v5623
          %5691 = vmatprep.subr.bf16.mxu0 %v5620
          %5692 = vmatpush1.bf16.msra.mxu0 %v5619
          %5693 = vmatprep.subr.bf16.mxu0 %v5616
          %5694 = vmatpush1.bf16.msra.mxu0 %v5615
          %5695 = vmatprep.subr.bf16.mxu0 0
          %5696 = vmatpush2.bf16.msra.mxu0 0
          %5697 = vmatprep.subr.bf16.mxu0 0
          %5698 = vmatpush2.bf16.msra.mxu0 0
          %5699 = vmatprep.subr.bf16.mxu0 0
          %5700 = vmatpush2.bf16.msra.mxu0 0
          %5701 = vmatprep.subr.bf16.mxu0 0
          %5702 = vmatpush2.bf16.msra.mxu0 0
          %5703 = vmatprep.subr.bf16.mxu0 0
          %5704 = vmatpush2.bf16.msra.mxu0 0
          %5705 = vmatprep.subr.bf16.mxu0 0
          %5706 = vmatpush2.bf16.msra.mxu0 0
          %5707 = vmatprep.subr.bf16.mxu0 0
          %5708 = vmatpush2.bf16.msra.mxu0 0
          %5709 = vmatprep.subr.bf16.mxu0 0
          %5710 = vmatpush2.bf16.msra.mxu0 0
          %5711 = vmatprep.mubr.bf16.mxu0 0
          %5712 = vmatmul.mubr.bf16.gmra.mxu0 %v5461
          %v5713 = vpop.f32.mrf.mxu0
          %v5714 = vadd.f32 %v5502, %v5713
          %v5715 = vpop.f32.mrf.mxu0
          %v5716 = vadd.f32 %v5506, %v5715
          %v5717 = vpop.f32.mrf.mxu0
          %v5718 = vadd.f32 %v5502, %v5717
          %v5719 = vpop.f32.mrf.mxu0
          %v5720 = vadd.f32 %v5506, %v5719
          %5721 = vmatprep.mubr.bf16.mxu0 0
          %5722 = vmatmul.mubr.bf16.gmra.mxu0 %v5462
          %v5723 = vpop.f32.mrf.mxu0
          %v5724 = vadd.f32 %v5502, %v5723
          %v5725 = vpop.f32.mrf.mxu0
          %v5726 = vadd.f32 %v5506, %v5725
          %v5727 = vpop.f32.mrf.mxu0
          %v5728 = vadd.f32 %v5502, %v5727
          %v5729 = vpop.f32.mrf.mxu0
          %v5730 = vadd.f32 %v5506, %v5729
          %5731 = vdwg.mxu0
          %5732 = vmatprep.subr.bf16.mxu0 %v5646
          %5733 = vmatpush1.bf16.msra.mxu0 %v5645
          %5734 = vmatprep.subr.bf16.mxu0 %v5642
          %5735 = vmatpush1.bf16.msra.mxu0 %v5641
          %5736 = vmatprep.subr.bf16.mxu0 %v5638
          %5737 = vmatpush1.bf16.msra.mxu0 %v5637
          %5738 = vmatprep.subr.bf16.mxu0 %v5634
          %5739 = vmatpush1.bf16.msra.mxu0 %v5633
          %5740 = vmatprep.subr.bf16.mxu0 %v5630
          %5741 = vmatpush1.bf16.msra.mxu0 %v5629
          %5742 = vmatprep.subr.bf16.mxu0 %v5626
          %5743 = vmatpush1.bf16.msra.mxu0 %v5625
          %5744 = vmatprep.subr.bf16.mxu0 %v5622
          %5745 = vmatpush1.bf16.msra.mxu0 %v5621
          %5746 = vmatprep.subr.bf16.mxu0 %v5618
          %5747 = vmatpush1.bf16.msra.mxu0 %v5617
          %5748 = vmatprep.subr.bf16.mxu0 0
          %5749 = vmatpush2.bf16.msra.mxu0 0
          %5750 = vmatprep.subr.bf16.mxu0 0
          %5751 = vmatpush2.bf16.msra.mxu0 0
          %5752 = vmatprep.subr.bf16.mxu0 0
          %5753 = vmatpush2.bf16.msra.mxu0 0
          %5754 = vmatprep.subr.bf16.mxu0 0
          %5755 = vmatpush2.bf16.msra.mxu0 0
          %5756 = vmatprep.subr.bf16.mxu0 0
          %5757 = vmatpush2.bf16.msra.mxu0 0
          %5758 = vmatprep.subr.bf16.mxu0 0
          %5759 = vmatpush2.bf16.msra.mxu0 0
          %5760 = vmatprep.subr.bf16.mxu0 0
          %5761 = vmatpush2.bf16.msra.mxu0 0
          %5762 = vmatprep.subr.bf16.mxu0 0
          %5763 = vmatpush2.bf16.msra.mxu0 0
          %5764 = vmatprep.mubr.bf16.mxu0 0
          %5765 = vmatmul.mubr.bf16.gmra.mxu0 %v5461
          %v5766 = vpop.f32.mrf.mxu0
          %v5767 = vadd.f32 %v5510, %v5766
          %v5768 = vpop.f32.mrf.mxu0
          %v5769 = vadd.f32 %v5514, %v5768
          %v5770 = vpop.f32.mrf.mxu0
          %v5771 = vadd.f32 %v5510, %v5770
          %v5772 = vpop.f32.mrf.mxu0
          %v5773 = vadd.f32 %v5514, %v5772
          %5774 = vmatprep.mubr.bf16.mxu0 0
          %5775 = vmatmul.mubr.bf16.gmra.mxu0 %v5462
          %v5776 = vpop.f32.mrf.mxu0
          %v5777 = vadd.f32 %v5510, %v5776
          %v5778 = vpop.f32.mrf.mxu0
          %v5779 = vadd.f32 %v5514, %v5778
          %v5780 = vpop.f32.mrf.mxu0
          %v5781 = vadd.f32 %v5510, %v5780
          %v5782 = vpop.f32.mrf.mxu0
          %v5783 = vadd.f32 %v5514, %v5782
          %5784 = vdwg.mxu0
          %v5785 = vmul.f32 %v5714, %v5714
          %v5786 = vmul.f32 %v5716, %v5716
          %v5787 = vmul.f32 %v5767, %v5767
          %v5788 = vmul.f32 %v5769, %v5769
          %v5789 = vmul.f32 %v5718, %v5718
          %v5790 = vmul.f32 %v5720, %v5720
          %v5791 = vmul.f32 %v5771, %v5771
          %v5792 = vmul.f32 %v5773, %v5773
          %v5793 = vmul.f32 %v5724, %v5724
          %v5794 = vmul.f32 %v5726, %v5726
          %v5795 = vmul.f32 %v5777, %v5777
          %v5796 = vmul.f32 %v5779, %v5779
          %v5797 = vmul.f32 %v5728, %v5728
          %v5798 = vmul.f32 %v5730, %v5730
          %v5799 = vmul.f32 %v5781, %v5781
          %v5800 = vmul.f32 %v5783, %v5783
          %v5801 = vmul.f32 %v5714, %v5785
          %v5802 = vmul.f32 %v5716, %v5786
          %v5803 = vmul.f32 %v5767, %v5787
          %v5804 = vmul.f32 %v5769, %v5788
          %v5805 = vmul.f32 %v5718, %v5789
          %v5806 = vmul.f32 %v5720, %v5790
          %v5807 = vmul.f32 %v5771, %v5791
          %v5808 = vmul.f32 %v5773, %v5792
          %v5809 = vmul.f32 %v5724, %v5793
          %v5810 = vmul.f32 %v5726, %v5794
          %v5811 = vmul.f32 %v5777, %v5795
          %v5812 = vmul.f32 %v5779, %v5796
          %v5813 = vmul.f32 %v5728, %v5797
          %v5814 = vmul.f32 %v5730, %v5798
          %v5815 = vmul.f32 %v5781, %v5799
          %v5816 = vmul.f32 %v5783, %v5800
          %v5817 = vmul.f32 %v5801, 0.044715
          %v5818 = vmul.f32 %v5802, 0.044715
          %v5819 = vmul.f32 %v5803, 0.044715
          %v5820 = vmul.f32 %v5804, 0.044715
          %v5821 = vmul.f32 %v5805, 0.044715
          %v5822 = vmul.f32 %v5806, 0.044715
          %v5823 = vmul.f32 %v5807, 0.044715
          %v5824 = vmul.f32 %v5808, 0.044715
          %v5825 = vmul.f32 %v5809, 0.044715
          %v5826 = vmul.f32 %v5810, 0.044715
          %v5827 = vmul.f32 %v5811, 0.044715
          %v5828 = vmul.f32 %v5812, 0.044715
          %v5829 = vmul.f32 %v5813, 0.044715
          %v5830 = vmul.f32 %v5814, 0.044715
          %v5831 = vmul.f32 %v5815, 0.044715
          %v5832 = vmul.f32 %v5816, 0.044715
          %v5833 = vadd.f32 %v5714, %v5817
          %v5834 = vadd.f32 %v5716, %v5818
          %v5835 = vadd.f32 %v5767, %v5819
          %v5836 = vadd.f32 %v5769, %v5820
          %v5837 = vadd.f32 %v5718, %v5821
          %v5838 = vadd.f32 %v5720, %v5822
          %v5839 = vadd.f32 %v5771, %v5823
          %v5840 = vadd.f32 %v5773, %v5824
          %v5841 = vadd.f32 %v5724, %v5825
          %v5842 = vadd.f32 %v5726, %v5826
          %v5843 = vadd.f32 %v5777, %v5827
          %v5844 = vadd.f32 %v5779, %v5828
          %v5845 = vadd.f32 %v5728, %v5829
          %v5846 = vadd.f32 %v5730, %v5830
          %v5847 = vadd.f32 %v5781, %v5831
          %v5848 = vadd.f32 %v5783, %v5832
          %v5849 = vmul.f32 %v5833, 0.7978846
          %v5850 = vmul.f32 %v5834, 0.7978846
          %v5851 = vmul.f32 %v5835, 0.7978846
          %v5852 = vmul.f32 %v5836, 0.7978846
          %v5853 = vmul.f32 %v5837, 0.7978846
          %v5854 = vmul.f32 %v5838, 0.7978846
          %v5855 = vmul.f32 %v5839, 0.7978846
          %v5856 = vmul.f32 %v5840, 0.7978846
          %v5857 = vmul.f32 %v5841, 0.7978846
          %v5858 = vmul.f32 %v5842, 0.7978846
          %v5859 = vmul.f32 %v5843, 0.7978846
          %v5860 = vmul.f32 %v5844, 0.7978846
          %v5861 = vmul.f32 %v5845, 0.7978846
          %v5862 = vmul.f32 %v5846, 0.7978846
          %v5863 = vmul.f32 %v5847, 0.7978846
          %v5864 = vmul.f32 %v5848, 0.7978846
          %v5865 = vtanh.pop %v5849
          %v5866 = vtanh.pop %v5850
          %v5867 = vtanh.pop %v5851
          %v5868 = vtanh.pop %v5852
          %v5869 = vtanh.pop %v5853
          %v5870 = vtanh.pop %v5854
          %v5871 = vtanh.pop %v5855
          %v5872 = vtanh.pop %v5856
          %v5873 = vtanh.pop %v5857
          %v5874 = vtanh.pop %v5858
          %v5875 = vtanh.pop %v5859
          %v5876 = vtanh.pop %v5860
          %v5877 = vtanh.pop %v5861
          %v5878 = vtanh.pop %v5862
          %v5879 = vtanh.pop %v5863
          %v5880 = vtanh.pop %v5864
          %v5881 = vadd.f32 %v5865, 1.0
          %v5882 = vadd.f32 %v5866, 1.0
          %v5883 = vadd.f32 %v5867, 1.0
          %v5884 = vadd.f32 %v5868, 1.0
          %v5885 = vadd.f32 %v5869, 1.0
          %v5886 = vadd.f32 %v5870, 1.0
          %v5887 = vadd.f32 %v5871, 1.0
          %v5888 = vadd.f32 %v5872, 1.0
          %v5889 = vadd.f32 %v5873, 1.0
          %v5890 = vadd.f32 %v5874, 1.0
          %v5891 = vadd.f32 %v5875, 1.0
          %v5892 = vadd.f32 %v5876, 1.0
          %v5893 = vadd.f32 %v5877, 1.0
          %v5894 = vadd.f32 %v5878, 1.0
          %v5895 = vadd.f32 %v5879, 1.0
          %v5896 = vadd.f32 %v5880, 1.0
          %v5897 = vmul.f32 %v5881, 0.5
          %v5898 = vmul.f32 %v5882, 0.5
          %v5899 = vmul.f32 %v5883, 0.5
          %v5900 = vmul.f32 %v5884, 0.5
          %v5901 = vmul.f32 %v5885, 0.5
          %v5902 = vmul.f32 %v5886, 0.5
          %v5903 = vmul.f32 %v5887, 0.5
          %v5904 = vmul.f32 %v5888, 0.5
          %v5905 = vmul.f32 %v5889, 0.5
          %v5906 = vmul.f32 %v5890, 0.5
          %v5907 = vmul.f32 %v5891, 0.5
          %v5908 = vmul.f32 %v5892, 0.5
          %v5909 = vmul.f32 %v5893, 0.5
          %v5910 = vmul.f32 %v5894, 0.5
          %v5911 = vmul.f32 %v5895, 0.5
          %v5912 = vmul.f32 %v5896, 0.5
          %v5913 = vmul.f32 %v5714, %v5897
          %v5914 = vmul.f32 %v5716, %v5898
          %v5915 = vmul.f32 %v5767, %v5899
          %v5916 = vmul.f32 %v5769, %v5900
          %v5917 = vmul.f32 %v5718, %v5901
          %v5918 = vmul.f32 %v5720, %v5902
          %v5919 = vmul.f32 %v5771, %v5903
          %v5920 = vmul.f32 %v5773, %v5904
          %v5921 = vmul.f32 %v5724, %v5905
          %v5922 = vmul.f32 %v5726, %v5906
          %v5923 = vmul.f32 %v5777, %v5907
          %v5924 = vmul.f32 %v5779, %v5908
          %v5925 = vmul.f32 %v5728, %v5909
          %v5926 = vmul.f32 %v5730, %v5910
          %v5927 = vmul.f32 %v5781, %v5911
          %v5928 = vmul.f32 %v5783, %v5912
          %v5929 = vpack.c.bf16 %v5917, %v5913
          %v5930 = vpack.c.bf16 %v5918, %v5914
          %v5931 = vpack.c.bf16 %v5919, %v5915
          %v5932 = vpack.c.bf16 %v5920, %v5916
          %v5933 = vpack.c.bf16 %v5925, %v5921
          %v5934 = vpack.c.bf16 %v5926, %v5922
          %v5935 = vpack.c.bf16 %v5927, %v5923
          %v5936 = vpack.c.bf16 %v5928, %v5924
          %s5937 = scalar_lea.vmem %s15, 256
          %v5938 = vld [vmem:[%s5937] sm:$0xf]
          %v5939 = vld [vmem:[%s5937 + $0x4] sm:$0xf]
          %v5940 = vld [vmem:[%s5937 + $0x8] sm:$0xf]
          %v5941 = vld [vmem:[%s5937 + $0xc] sm:$0xf]
          %v5942 = vld [vmem:[%s5937 + $0x10] sm:$0xf]
          %v5943 = vld [vmem:[%s5937 + $0x14] sm:$0xf]
          %v5944 = vld [vmem:[%s5937 + $0x18] sm:$0xf]
          %v5945 = vld [vmem:[%s5937 + $0x1c] sm:$0xf]
          %v5946 = vld [vmem:[%s5937 + $0x20] sm:$0xf]
          %v5947 = vld [vmem:[%s5937 + $0x24] sm:$0xf]
          %v5948 = vld [vmem:[%s5937 + $0x28] sm:$0xf]
          %v5949 = vld [vmem:[%s5937 + $0x2c] sm:$0xf]
          %v5950 = vld [vmem:[%s5937 + $0x30] sm:$0xf]
          %v5951 = vld [vmem:[%s5937 + $0x34] sm:$0xf]
          %v5952 = vld [vmem:[%s5937 + $0x38] sm:$0xf]
          %v5953 = vld [vmem:[%s5937 + $0x3c] sm:$0xf]
          %v5954 = vld [vmem:[%s5937 + $0x40] sm:$0xf]
          %v5955 = vld [vmem:[%s5937 + $0x44] sm:$0xf]
          %v5956 = vld [vmem:[%s5937 + $0x48] sm:$0xf]
          %v5957 = vld [vmem:[%s5937 + $0x4c] sm:$0xf]
          %v5958 = vld [vmem:[%s5937 + $0x50] sm:$0xf]
          %v5959 = vld [vmem:[%s5937 + $0x54] sm:$0xf]
          %v5960 = vld [vmem:[%s5937 + $0x58] sm:$0xf]
          %v5961 = vld [vmem:[%s5937 + $0x5c] sm:$0xf]
          %v5962 = vld [vmem:[%s5937 + $0x60] sm:$0xf]
          %v5963 = vld [vmem:[%s5937 + $0x64] sm:$0xf]
          %v5964 = vld [vmem:[%s5937 + $0x68] sm:$0xf]
          %v5965 = vld [vmem:[%s5937 + $0x6c] sm:$0xf]
          %v5966 = vld [vmem:[%s5937 + $0x70] sm:$0xf]
          %v5967 = vld [vmem:[%s5937 + $0x74] sm:$0xf]
          %v5968 = vld [vmem:[%s5937 + $0x78] sm:$0xf]
          %v5969 = vld [vmem:[%s5937 + $0x7c] sm:$0xf]
          %v5970 = vld [vmem:[%s5937 + $0x80] sm:$0xf]
          %v5971 = vld [vmem:[%s5937 + $0x84] sm:$0xf]
          %v5972 = vld [vmem:[%s5937 + $0x88] sm:$0xf]
          %v5973 = vld [vmem:[%s5937 + $0x8c] sm:$0xf]
          %v5974 = vld [vmem:[%s5937 + $0x90] sm:$0xf]
          %v5975 = vld [vmem:[%s5937 + $0x94] sm:$0xf]
          %v5976 = vld [vmem:[%s5937 + $0x98] sm:$0xf]
          %v5977 = vld [vmem:[%s5937 + $0x9c] sm:$0xf]
          %v5978 = vld [vmem:[%s5937 + $0xa0] sm:$0xf]
          %v5979 = vld [vmem:[%s5937 + $0xa4] sm:$0xf]
          %v5980 = vld [vmem:[%s5937 + $0xa8] sm:$0xf]
          %v5981 = vld [vmem:[%s5937 + $0xac] sm:$0xf]
          %v5982 = vld [vmem:[%s5937 + $0xb0] sm:$0xf]
          %v5983 = vld [vmem:[%s5937 + $0xb4] sm:$0xf]
          %v5984 = vld [vmem:[%s5937 + $0xb8] sm:$0xf]
          %v5985 = vld [vmem:[%s5937 + $0xbc] sm:$0xf]
          %v5986 = vld [vmem:[%s5937 + $0xc0] sm:$0xf]
          %v5987 = vld [vmem:[%s5937 + $0xc4] sm:$0xf]
          %v5988 = vld [vmem:[%s5937 + $0xc8] sm:$0xf]
          %v5989 = vld [vmem:[%s5937 + $0xcc] sm:$0xf]
          %v5990 = vld [vmem:[%s5937 + $0xd0] sm:$0xf]
          %v5991 = vld [vmem:[%s5937 + $0xd4] sm:$0xf]
          %v5992 = vld [vmem:[%s5937 + $0xd8] sm:$0xf]
          %v5993 = vld [vmem:[%s5937 + $0xdc] sm:$0xf]
          %v5994 = vld [vmem:[%s5937 + $0xe0] sm:$0xf]
          %v5995 = vld [vmem:[%s5937 + $0xe4] sm:$0xf]
          %v5996 = vld [vmem:[%s5937 + $0xe8] sm:$0xf]
          %v5997 = vld [vmem:[%s5937 + $0xec] sm:$0xf]
          %v5998 = vld [vmem:[%s5937 + $0xf0] sm:$0xf]
          %v5999 = vld [vmem:[%s5937 + $0xf4] sm:$0xf]
          %v6000 = vld [vmem:[%s5937 + $0xf8] sm:$0xf]
          %v6001 = vld [vmem:[%s5937 + $0xfc] sm:$0xf]
          %s6002 = scalar_lea.vmem %s16, 1
          %v6003 = vld [vmem:[%s6002] sm:$0x1]
          %v6005 = vlaneseq
          %v6006 = vshrl.u32 %v6005, 7
          %v6007 = vsub.s32 0, %v6006
          %v6008 = vrot.slane %v6003, %v6007
          %v6074 = vunpack.c.l.b16 %v5938
          %v6075 = vunpack.c.l.b16 %v5939
          %v6076 = vunpack.c.l.b16 %v5940
          %v6077 = vunpack.c.l.b16 %v5941
          %v6078 = vunpack.c.l.b16 %v5942
          %v6079 = vunpack.c.l.b16 %v5943
          %v6080 = vunpack.c.l.b16 %v5944
          %v6081 = vunpack.c.l.b16 %v5945
          %v6082 = vunpack.c.l.b16 %v5946
          %v6083 = vunpack.c.l.b16 %v5947
          %v6084 = vunpack.c.l.b16 %v5948
          %v6085 = vunpack.c.l.b16 %v5949
          %v6086 = vunpack.c.l.b16 %v5950
          %v6087 = vunpack.c.l.b16 %v5951
          %v6088 = vunpack.c.l.b16 %v5952
          %v6089 = vunpack.c.l.b16 %v5953
          %v6090 = vunpack.c.l.b16 %v5954
          %v6091 = vunpack.c.l.b16 %v5955
          %v6092 = vunpack.c.l.b16 %v5956
          %v6093 = vunpack.c.l.b16 %v5957
          %v6094 = vunpack.c.l.b16 %v5958
          %v6095 = vunpack.c.l.b16 %v5959
          %v6096 = vunpack.c.l.b16 %v5960
          %v6097 = vunpack.c.l.b16 %v5961
          %v6098 = vunpack.c.l.b16 %v5962
          %v6099 = vunpack.c.l.b16 %v5963
          %v6100 = vunpack.c.l.b16 %v5964
          %v6101 = vunpack.c.l.b16 %v5965
          %v6102 = vunpack.c.l.b16 %v5966
          %v6103 = vunpack.c.l.b16 %v5967
          %v6104 = vunpack.c.l.b16 %v5968
          %v6105 = vunpack.c.l.b16 %v5969
          %v6106 = vunpack.c.l.b16 %v5970
          %v6107 = vunpack.c.l.b16 %v5971
          %v6108 = vunpack.c.l.b16 %v5972
          %v6109 = vunpack.c.l.b16 %v5973
          %v6110 = vunpack.c.l.b16 %v5974
          %v6111 = vunpack.c.l.b16 %v5975
          %v6112 = vunpack.c.l.b16 %v5976
          %v6113 = vunpack.c.l.b16 %v5977
          %v6114 = vunpack.c.l.b16 %v5978
          %v6115 = vunpack.c.l.b16 %v5979
          %v6116 = vunpack.c.l.b16 %v5980
          %v6117 = vunpack.c.l.b16 %v5981
          %v6118 = vunpack.c.l.b16 %v5982
          %v6119 = vunpack.c.l.b16 %v5983
          %v6120 = vunpack.c.l.b16 %v5984
          %v6121 = vunpack.c.l.b16 %v5985
          %v6122 = vunpack.c.l.b16 %v5986
          %v6123 = vunpack.c.l.b16 %v5987
          %v6124 = vunpack.c.l.b16 %v5988
          %v6125 = vunpack.c.l.b16 %v5989
          %v6126 = vunpack.c.l.b16 %v5990
          %v6127 = vunpack.c.l.b16 %v5991
          %v6128 = vunpack.c.l.b16 %v5992
          %v6129 = vunpack.c.l.b16 %v5993
          %v6130 = vunpack.c.l.b16 %v5994
          %v6131 = vunpack.c.l.b16 %v5995
          %v6132 = vunpack.c.l.b16 %v5996
          %v6133 = vunpack.c.l.b16 %v5997
          %v6134 = vunpack.c.l.b16 %v5998
          %v6135 = vunpack.c.l.b16 %v5999
          %v6136 = vunpack.c.l.b16 %v6000
          %v6137 = vunpack.c.l.b16 %v6001
          %v6138 = vpack.c.b16 %v6075, %v6074
          %v6139 = vpack.c.b16 %v6077, %v6076
          %v6140 = vpack.c.b16 %v6079, %v6078
          %v6141 = vpack.c.b16 %v6081, %v6080
          %v6142 = vpack.c.b16 %v6083, %v6082
          %v6143 = vpack.c.b16 %v6085, %v6084
          %v6144 = vpack.c.b16 %v6087, %v6086
          %v6145 = vpack.c.b16 %v6089, %v6088
          %v6146 = vpack.c.b16 %v6091, %v6090
          %v6147 = vpack.c.b16 %v6093, %v6092
          %v6148 = vpack.c.b16 %v6095, %v6094
          %v6149 = vpack.c.b16 %v6097, %v6096
          %v6150 = vpack.c.b16 %v6099, %v6098
          %v6151 = vpack.c.b16 %v6101, %v6100
          %v6152 = vpack.c.b16 %v6103, %v6102
          %v6153 = vpack.c.b16 %v6105, %v6104
          %v6154 = vpack.c.b16 %v6107, %v6106
          %v6155 = vpack.c.b16 %v6109, %v6108
          %v6156 = vpack.c.b16 %v6111, %v6110
          %v6157 = vpack.c.b16 %v6113, %v6112
          %v6158 = vpack.c.b16 %v6115, %v6114
          %v6159 = vpack.c.b16 %v6117, %v6116
          %v6160 = vpack.c.b16 %v6119, %v6118
          %v6161 = vpack.c.b16 %v6121, %v6120
          %v6162 = vpack.c.b16 %v6123, %v6122
          %v6163 = vpack.c.b16 %v6125, %v6124
          %v6164 = vpack.c.b16 %v6127, %v6126
          %v6165 = vpack.c.b16 %v6129, %v6128
          %v6166 = vpack.c.b16 %v6131, %v6130
          %v6167 = vpack.c.b16 %v6133, %v6132
          %v6168 = vpack.c.b16 %v6135, %v6134
          %v6169 = vpack.c.b16 %v6137, %v6136
          %6202 = vmatprep.subr.bf16.mxu0 0
          %6203 = vmatpush1.bf16.msra.mxu0 %v6145
          %6204 = vmatprep.subr.bf16.mxu0 0
          %6205 = vmatpush1.bf16.msra.mxu0 %v6144
          %6206 = vmatprep.subr.bf16.mxu0 0
          %6207 = vmatpush1.bf16.msra.mxu0 %v6143
          %6208 = vmatprep.subr.bf16.mxu0 0
          %6209 = vmatpush1.bf16.msra.mxu0 %v6142
          %6210 = vmatprep.subr.bf16.mxu0 0
          %6211 = vmatpush1.bf16.msra.mxu0 %v6141
          %6212 = vmatprep.subr.bf16.mxu0 0
          %6213 = vmatpush1.bf16.msra.mxu0 %v6140
          %6214 = vmatprep.subr.bf16.mxu0 0
          %6215 = vmatpush1.bf16.msra.mxu0 %v6139
          %6216 = vmatprep.subr.bf16.mxu0 0
          %6217 = vmatpush1.bf16.msra.mxu0 %v6138
          %6218 = vmatprep.subr.bf16.mxu0 0
          %6219 = vmatpush2.bf16.msra.mxu0 %v6153
          %6220 = vmatprep.subr.bf16.mxu0 0
          %6221 = vmatpush2.bf16.msra.mxu0 %v6152
          %6222 = vmatprep.subr.bf16.mxu0 0
          %6223 = vmatpush2.bf16.msra.mxu0 %v6151
          %6224 = vmatprep.subr.bf16.mxu0 0
          %6225 = vmatpush2.bf16.msra.mxu0 %v6150
          %6226 = vmatprep.subr.bf16.mxu0 0
          %6227 = vmatpush2.bf16.msra.mxu0 %v6149
          %6228 = vmatprep.subr.bf16.mxu0 0
          %6229 = vmatpush2.bf16.msra.mxu0 %v6148
          %6230 = vmatprep.subr.bf16.mxu0 0
          %6231 = vmatpush2.bf16.msra.mxu0 %v6147
          %6232 = vmatprep.subr.bf16.mxu0 0
          %6233 = vmatpush2.bf16.msra.mxu0 %v6146
          %6234 = vmatprep.mubr.bf16.mxu0 %v5930
          %6235 = vmatmul.mubr.bf16.gmra.mxu0 %v5929
          %v6236 = vpop.f32.mrf.mxu0
          %v6237 = vadd.f32 %v6008, %v6236
          %v6238 = vpop.f32.mrf.mxu0
          %v6239 = vpop.f32.mrf.mxu0
          %v6240 = vpop.f32.mrf.mxu0
          %6241 = vmatprep.mubr.bf16.mxu0 %v5934
          %6242 = vmatmul.mubr.bf16.gmra.mxu0 %v5933
          %v6243 = vpop.f32.mrf.mxu0
          %v6244 = vadd.f32 %v6008, %v6243
          %v6245 = vpop.f32.mrf.mxu0
          %v6246 = vpop.f32.mrf.mxu0
          %v6247 = vpop.f32.mrf.mxu0
          %6248 = vdwg.mxu0
          %6249 = vmatprep.subr.bf16.mxu0 0
          %6250 = vmatpush1.bf16.msra.mxu0 %v6161
          %6251 = vmatprep.subr.bf16.mxu0 0
          %6252 = vmatpush1.bf16.msra.mxu0 %v6160
          %6253 = vmatprep.subr.bf16.mxu0 0
          %6254 = vmatpush1.bf16.msra.mxu0 %v6159
          %6255 = vmatprep.subr.bf16.mxu0 0
          %6256 = vmatpush1.bf16.msra.mxu0 %v6158
          %6257 = vmatprep.subr.bf16.mxu0 0
          %6258 = vmatpush1.bf16.msra.mxu0 %v6157
          %6259 = vmatprep.subr.bf16.mxu0 0
          %6260 = vmatpush1.bf16.msra.mxu0 %v6156
          %6261 = vmatprep.subr.bf16.mxu0 0
          %6262 = vmatpush1.bf16.msra.mxu0 %v6155
          %6263 = vmatprep.subr.bf16.mxu0 0
          %6264 = vmatpush1.bf16.msra.mxu0 %v6154
          %6265 = vmatprep.subr.bf16.mxu0 0
          %6266 = vmatpush2.bf16.msra.mxu0 %v6169
          %6267 = vmatprep.subr.bf16.mxu0 0
          %6268 = vmatpush2.bf16.msra.mxu0 %v6168
          %6269 = vmatprep.subr.bf16.mxu0 0
          %6270 = vmatpush2.bf16.msra.mxu0 %v6167
          %6271 = vmatprep.subr.bf16.mxu0 0
          %6272 = vmatpush2.bf16.msra.mxu0 %v6166
          %6273 = vmatprep.subr.bf16.mxu0 0
          %6274 = vmatpush2.bf16.msra.mxu0 %v6165
          %6275 = vmatprep.subr.bf16.mxu0 0
          %6276 = vmatpush2.bf16.msra.mxu0 %v6164
          %6277 = vmatprep.subr.bf16.mxu0 0
          %6278 = vmatpush2.bf16.msra.mxu0 %v6163
          %6279 = vmatprep.subr.bf16.mxu0 0
          %6280 = vmatpush2.bf16.msra.mxu0 %v6162
          %6281 = vmatprep.mubr.bf16.mxu0 %v5932
          %6282 = vmatmul.mubr.bf16.gmra.mxu0 %v5931
          %v6283 = vpop.f32.mrf.mxu0
          %v6284 = vadd.f32 %v6237, %v6283
          %v6285 = vpop.f32.mrf.mxu0
          %v6286 = vpop.f32.mrf.mxu0
          %v6287 = vpop.f32.mrf.mxu0
          %6288 = vmatprep.mubr.bf16.mxu0 %v5936
          %6289 = vmatmul.mubr.bf16.gmra.mxu0 %v5935
          %v6290 = vpop.f32.mrf.mxu0
          %v6291 = vadd.f32 %v6244, %v6290
          %v6292 = vpop.f32.mrf.mxu0
          %v6293 = vpop.f32.mrf.mxu0
          %v6294 = vpop.f32.mrf.mxu0
          %6295 = vdwg.mxu0
          %v6296 = vadd.f32 %v5389, %v6284
          %v6297 = vadd.f32 %v5391, %v6291
          %v6298 = vld [vmem:[%s17] sm:$0x1]
          %v6299 = vld [vmem:[%s18] sm:$0x1]
          %v6302 = vrot.slane %v6297, 7
          %vm6303 = vcmask 1041409
          %v6304 = vsel %vm6303, %v6302, %v6296
          %vm6306 = vcmask 1041408
          %v6307 = vsel %vm6306, %v6304, 0.0
          %6308 = vadd.xlane.f32.xlu0 %v6307
          %v6309 = vpop.xlane.xlu0 %6308
          %v6310 = vmul.f32 %v6309, %v1554
          %v6312 = vrot.slane %v6310, 1
          %v6315 = vsub.f32 %v6296, %v6310
          %v6316 = vsub.f32 %v6297, %v6312
          %v6317 = vmul.f32 %v6315, %v6315
          %v6318 = vmul.f32 %v6316, %v6316
          %v6321 = vrot.slane %v6318, 7
          %v6322 = vsel %vm6303, %v6321, %v6317
          %v6324 = vsel %vm6306, %v6322, 0.0
          %6325 = vadd.xlane.f32.xlu0 %v6324
          %v6326 = vpop.xlane.xlu0 %6325
          %v6327 = vmul.f32 %v6326, %v1554
          %v6328 = vadd.f32 %v6327, 1e-05
          %v6329 = vrsqrt.pop %v6328
          %v6331 = vrot.slane %v6329, 1
          %v6334 = vmul.f32 %v6315, %v6329
          %v6335 = vmul.f32 %v6316, %v6331
          %v6337 = vlaneseq
          %v6338 = vshrl.u32 %v6337, 7
          %v6339 = vsub.s32 0, %v6338
          %v6340 = vrot.slane %v6298, %v6339
          %v6342 = vmul.f32 %v6334, %v6340
          %v6343 = vmul.f32 %v6335, %v6340
          %v6345 = vlaneseq
          %v6346 = vshrl.u32 %v6345, 7
          %v6347 = vsub.s32 0, %v6346
          %v6348 = vrot.slane %v6299, %v6347
          %v6350 = vadd.f32 %v6342, %v6348
          %v6351 = vadd.f32 %v6343, %v6348
          %v6352 = vpack.c.bf16 %v6350, %v6350
          %v6353 = vpack.c.bf16 %v6351, %v6351
          %v6357 = vunpack.c.l.s4 1966171168
          %v6358 = vunpack.c.0.s8 %v6357
          %v6359 = vlaneseq
          %v6360 = vshrl.u32 %v6359, 7
          %v6361 = vsub.s32 %v6358, %v6360
          %v6362 = vrot.slane %v6352, %v6361
          %v6364 = vunpack.c.l.s4 1966171168
          %v6365 = vunpack.c.0.s8 %v6364
          %v6366 = vlaneseq
          %v6367 = vshrl.u32 %v6366, 7
          %v6368 = vsub.s32 %v6365, %v6367
          %v6369 = vrot.slane %v6362, %v6368
          %v6371 = vunpack.c.l.s4 1966171168
          %v6372 = vunpack.c.0.s8 %v6371
          %v6373 = vlaneseq
          %v6374 = vshrl.u32 %v6373, 7
          %v6375 = vsub.s32 %v6372, %v6374
          %v6376 = vrot.slane %v6353, %v6375
          %v6378 = vunpack.c.l.s4 1966171168
          %v6379 = vunpack.c.0.s8 %v6378
          %v6380 = vlaneseq
          %v6381 = vshrl.u32 %v6380, 7
          %v6382 = vsub.s32 %v6379, %v6381
          %v6383 = vrot.slane %v6376, %v6382
          %v6385 = vunpack.c.l.s4 1935823168
          %v6386 = vunpack.c.0.s8 %v6385
          %v6387 = vlaneseq
          %v6388 = vshrl.u32 %v6387, 7
          %v6389 = vsub.s32 %v6386, %v6388
          %v6390 = vrot.slane %v6369, %v6389
          %v6392 = vunpack.c.l.s4 1935823168
          %v6393 = vunpack.c.0.s8 %v6392
          %v6394 = vlaneseq
          %v6395 = vshrl.u32 %v6394, 7
          %v6396 = vsub.s32 %v6393, %v6395
          %v6397 = vrot.slane %v6390, %v6396
          %v6399 = vunpack.c.l.s4 1935823168
          %v6400 = vunpack.c.0.s8 %v6399
          %v6401 = vlaneseq
          %v6402 = vshrl.u32 %v6401, 7
          %v6403 = vsub.s32 %v6400, %v6402
          %v6404 = vrot.slane %v6383, %v6403
          %v6406 = vunpack.c.l.s4 1935823168
          %v6407 = vunpack.c.0.s8 %v6406
          %v6408 = vlaneseq
          %v6409 = vshrl.u32 %v6408, 7
          %v6410 = vsub.s32 %v6407, %v6409
          %v6411 = vrot.slane %v6404, %v6410
          %v6412 = vunpack.c.l.b16 %v6397
          %v6413 = vunpack.c.l.b16 %v6411
          %v6414 = vrot.slane %v6413, 7
          %v6415 = vsel %vm6303, %v6414, %v6412
          %v6416 = vpack.c.b16 %v6415, %v6415
          %v6418 = vunpack.c.l.s4 1966171168
          %v6419 = vunpack.c.0.s8 %v6418
          %v6420 = vlaneseq
          %v6421 = vshrl.u32 %v6420, 7
          %v6422 = vsub.s32 %v6419, %v6421
          %v6423 = vrot.slane %v6416, %v6422
          %v6425 = vunpack.c.l.s4 1966171168
          %v6426 = vunpack.c.0.s8 %v6425
          %v6427 = vlaneseq
          %v6428 = vshrl.u32 %v6427, 7
          %v6429 = vsub.s32 %v6426, %v6428
          %v6430 = vrot.slane %v6423, %v6429
          %6432 = vst [vmem:[#allocation2] sm:$0x1] %v6430
        $region131: #{vision_tower_forward.1} parent=122 // pred_fallthru
          _
        %v6433 = vld [vmem:[#allocation2] sm:$0x1]
        %v6434 = vld [vmem:[%s690] sm:$0xff]
        %v6435 = vld [vmem:[%s690 + $0x8] sm:$0xff]
        %v6436 = vld [vmem:[%s690 + $0x10] sm:$0xff]
        %v6437 = vld [vmem:[%s690 + $0x18] sm:$0xff]
        %v6438 = vld [vmem:[%s690 + $0x20] sm:$0xff]
        %v6439 = vld [vmem:[%s690 + $0x28] sm:$0xff]
        %v6440 = vld [vmem:[%s690 + $0x30] sm:$0xff]
        %v6441 = vld [vmem:[%s690 + $0x38] sm:$0xff]
        %v6442 = vld [vmem:[%s690 + $0x40] sm:$0xff]
        %v6443 = vld [vmem:[%s690 + $0x48] sm:$0xff]
        %v6444 = vld [vmem:[%s690 + $0x50] sm:$0xff]
        %v6445 = vld [vmem:[%s690 + $0x58] sm:$0xff]
        %v6446 = vld [vmem:[%s690 + $0x60] sm:$0xff]
        %v6447 = vld [vmem:[%s690 + $0x68] sm:$0xff]
        %v6448 = vld [vmem:[%s690 + $0x70] sm:$0xff]
        %v6449 = vld [vmem:[%s690 + $0x78] sm:$0xff]
        %v6450 = vld [vmem:[%s690 + $0x80] sm:$0xff]
        %v6451 = vld [vmem:[%s690 + $0x88] sm:$0xff]
        %v6452 = vld [vmem:[%s690 + $0x90] sm:$0xff]
        %v6453 = vld [vmem:[%s690 + $0x98] sm:$0xff]
        %v6454 = vld [vmem:[%s690 + $0xa0] sm:$0xff]
        %v6455 = vld [vmem:[%s690 + $0xa8] sm:$0xff]
        %v6456 = vld [vmem:[%s690 + $0xb0] sm:$0xff]
        %v6457 = vld [vmem:[%s690 + $0xb8] sm:$0xff]
        %v6458 = vld [vmem:[%s690 + $0xc0] sm:$0xff]
        %v6459 = vld [vmem:[%s690 + $0xc8] sm:$0xff]
        %v6460 = vld [vmem:[%s690 + $0xd0] sm:$0xff]
        %v6461 = vld [vmem:[%s690 + $0xd8] sm:$0xff]
        %v6462 = vld [vmem:[%s690 + $0xe0] sm:$0xff]
        %v6463 = vld [vmem:[%s690 + $0xe8] sm:$0xff]
        %v6464 = vld [vmem:[%s690 + $0xf0] sm:$0xff]
        %v6465 = vld [vmem:[%s690 + $0xf8] sm:$0xff]
        %v6466 = vld [vmem:[%s755] sm:$0xf]
        %v6468 = vlaneseq
        %v6469 = vshrl.u32 %v6468, 7
        %v6470 = vsub.s32 0, %v6469
        %v6471 = vrot.slane %v6466, %v6470
        %v6472 = vlaneseq
        %v6473 = vshrl.u32 %v6472, 7
        %v6474 = vsub.s32 1, %v6473
        %v6475 = vrot.slane %v6466, %v6474
        %v6476 = vlaneseq
        %v6477 = vshrl.u32 %v6476, 7
        %v6478 = vsub.s32 2, %v6477
        %v6479 = vrot.slane %v6466, %v6478
        %v6480 = vlaneseq
        %v6481 = vshrl.u32 %v6480, 7
        %v6482 = vsub.s32 3, %v6481
        %v6483 = vrot.slane %v6466, %v6482
        %v6520 = vunpack.c.l.b16 %v6434
        %v6521 = vunpack.c.h.b16 %v6434
        %v6522 = vunpack.c.l.b16 %v6435
        %v6523 = vunpack.c.h.b16 %v6435
        %v6524 = vunpack.c.l.b16 %v6436
        %v6525 = vunpack.c.h.b16 %v6436
        %v6526 = vunpack.c.l.b16 %v6437
        %v6527 = vunpack.c.h.b16 %v6437
        %v6528 = vunpack.c.l.b16 %v6438
        %v6529 = vunpack.c.h.b16 %v6438
        %v6530 = vunpack.c.l.b16 %v6439
        %v6531 = vunpack.c.h.b16 %v6439
        %v6532 = vunpack.c.l.b16 %v6440
        %v6533 = vunpack.c.h.b16 %v6440
        %v6534 = vunpack.c.l.b16 %v6441
        %v6535 = vunpack.c.h.b16 %v6441
        %v6536 = vunpack.c.l.b16 %v6442
        %v6537 = vunpack.c.h.b16 %v6442
        %v6538 = vunpack.c.l.b16 %v6443
        %v6539 = vunpack.c.h.b16 %v6443
        %v6540 = vunpack.c.l.b16 %v6444
        %v6541 = vunpack.c.h.b16 %v6444
        %v6542 = vunpack.c.l.b16 %v6445
        %v6543 = vunpack.c.h.b16 %v6445
        %v6544 = vunpack.c.l.b16 %v6446
        %v6545 = vunpack.c.h.b16 %v6446
        %v6546 = vunpack.c.l.b16 %v6447
        %v6547 = vunpack.c.h.b16 %v6447
        %v6548 = vunpack.c.l.b16 %v6448
        %v6549 = vunpack.c.h.b16 %v6448
        %v6550 = vunpack.c.l.b16 %v6449
        %v6551 = vunpack.c.h.b16 %v6449
        %v6552 = vunpack.c.l.b16 %v6450
        %v6553 = vunpack.c.h.b16 %v6450
        %v6554 = vunpack.c.l.b16 %v6451
        %v6555 = vunpack.c.h.b16 %v6451
        %v6556 = vunpack.c.l.b16 %v6452
        %v6557 = vunpack.c.h.b16 %v6452
        %v6558 = vunpack.c.l.b16 %v6453
        %v6559 = vunpack.c.h.b16 %v6453
        %v6560 = vunpack.c.l.b16 %v6454
        %v6561 = vunpack.c.h.b16 %v6454
        %v6562 = vunpack.c.l.b16 %v6455
        %v6563 = vunpack.c.h.b16 %v6455
        %v6564 = vunpack.c.l.b16 %v6456
        %v6565 = vunpack.c.h.b16 %v6456
        %v6566 = vunpack.c.l.b16 %v6457
        %v6567 = vunpack.c.h.b16 %v6457
        %v6568 = vunpack.c.l.b16 %v6458
        %v6569 = vunpack.c.h.b16 %v6458
        %v6570 = vunpack.c.l.b16 %v6459
        %v6571 = vunpack.c.h.b16 %v6459
        %v6572 = vunpack.c.l.b16 %v6460
        %v6573 = vunpack.c.h.b16 %v6460
        %v6574 = vunpack.c.l.b16 %v6461
        %v6575 = vunpack.c.h.b16 %v6461
        %v6576 = vunpack.c.l.b16 %v6462
        %v6577 = vunpack.c.h.b16 %v6462
        %v6578 = vunpack.c.l.b16 %v6463
        %v6579 = vunpack.c.h.b16 %v6463
        %v6580 = vunpack.c.l.b16 %v6464
        %v6581 = vunpack.c.h.b16 %v6464
        %v6582 = vunpack.c.l.b16 %v6465
        %v6583 = vunpack.c.h.b16 %v6465
        %v6584 = vpack.c.b16 %v6524, %v6520
        %v6585 = vpack.c.b16 %v6525, %v6521
        %v6586 = vpack.c.b16 %v6526, %v6522
        %v6587 = vpack.c.b16 %v6527, %v6523
        %v6588 = vpack.c.b16 %v6532, %v6528
        %v6589 = vpack.c.b16 %v6533, %v6529
        %v6590 = vpack.c.b16 %v6534, %v6530
        %v6591 = vpack.c.b16 %v6535, %v6531
        %v6592 = vpack.c.b16 %v6540, %v6536
        %v6593 = vpack.c.b16 %v6541, %v6537
        %v6594 = vpack.c.b16 %v6542, %v6538
        %v6595 = vpack.c.b16 %v6543, %v6539
        %v6596 = vpack.c.b16 %v6548, %v6544
        %v6597 = vpack.c.b16 %v6549, %v6545
        %v6598 = vpack.c.b16 %v6550, %v6546
        %v6599 = vpack.c.b16 %v6551, %v6547
        %v6600 = vpack.c.b16 %v6556, %v6552
        %v6601 = vpack.c.b16 %v6557, %v6553
        %v6602 = vpack.c.b16 %v6558, %v6554
        %v6603 = vpack.c.b16 %v6559, %v6555
        %v6604 = vpack.c.b16 %v6564, %v6560
        %v6605 = vpack.c.b16 %v6565, %v6561
        %v6606 = vpack.c.b16 %v6566, %v6562
        %v6607 = vpack.c.b16 %v6567, %v6563
        %v6608 = vpack.c.b16 %v6572, %v6568
        %v6609 = vpack.c.b16 %v6573, %v6569
        %v6610 = vpack.c.b16 %v6574, %v6570
        %v6611 = vpack.c.b16 %v6575, %v6571
        %v6612 = vpack.c.b16 %v6580, %v6576
        %v6613 = vpack.c.b16 %v6581, %v6577
        %v6614 = vpack.c.b16 %v6582, %v6578
        %v6615 = vpack.c.b16 %v6583, %v6579
        %6648 = vmatprep.subr.bf16.mxu0 %v6613
        %6649 = vmatpush1.bf16.msra.mxu0 %v6612
        %6650 = vmatprep.subr.bf16.mxu0 %v6609
        %6651 = vmatpush1.bf16.msra.mxu0 %v6608
        %6652 = vmatprep.subr.bf16.mxu0 %v6605
        %6653 = vmatpush1.bf16.msra.mxu0 %v6604
        %6654 = vmatprep.subr.bf16.mxu0 %v6601
        %6655 = vmatpush1.bf16.msra.mxu0 %v6600
        %6656 = vmatprep.subr.bf16.mxu0 %v6597
        %6657 = vmatpush1.bf16.msra.mxu0 %v6596
        %6658 = vmatprep.subr.bf16.mxu0 %v6593
        %6659 = vmatpush1.bf16.msra.mxu0 %v6592
        %6660 = vmatprep.subr.bf16.mxu0 %v6589
        %6661 = vmatpush1.bf16.msra.mxu0 %v6588
        %6662 = vmatprep.subr.bf16.mxu0 %v6585
        %6663 = vmatpush1.bf16.msra.mxu0 %v6584
        %6664 = vmatprep.subr.bf16.mxu0 0
        %6665 = vmatpush2.bf16.msra.mxu0 0
        %6666 = vmatprep.subr.bf16.mxu0 0
        %6667 = vmatpush2.bf16.msra.mxu0 0
        %6668 = vmatprep.subr.bf16.mxu0 0
        %6669 = vmatpush2.bf16.msra.mxu0 0
        %6670 = vmatprep.subr.bf16.mxu0 0
        %6671 = vmatpush2.bf16.msra.mxu0 0
        %6672 = vmatprep.subr.bf16.mxu0 0
        %6673 = vmatpush2.bf16.msra.mxu0 0
        %6674 = vmatprep.subr.bf16.mxu0 0
        %6675 = vmatpush2.bf16.msra.mxu0 0
        %6676 = vmatprep.subr.bf16.mxu0 0
        %6677 = vmatpush2.bf16.msra.mxu0 0
        %6678 = vmatprep.subr.bf16.mxu0 0
        %6679 = vmatpush2.bf16.msra.mxu0 0
        %6680 = vmatprep.mubr.bf16.mxu0 0
        %6681 = vmatmul.mubr.bf16.gmra.mxu0 %v6433
        %v6682 = vpop.f32.mrf.mxu0
        %v6683 = vadd.f32 %v6471, %v6682
        %v6684 = vpop.f32.mrf.mxu0
        %v6685 = vadd.f32 %v6475, %v6684
        %v6686 = vpop.f32.mrf.mxu0
        %v6687 = vpop.f32.mrf.mxu0
        %6688 = vdwg.mxu0
        %6689 = vmatprep.subr.bf16.mxu0 %v6615
        %6690 = vmatpush1.bf16.msra.mxu0 %v6614
        %6691 = vmatprep.subr.bf16.mxu0 %v6611
        %6692 = vmatpush1.bf16.msra.mxu0 %v6610
        %6693 = vmatprep.subr.bf16.mxu0 %v6607
        %6694 = vmatpush1.bf16.msra.mxu0 %v6606
        %6695 = vmatprep.subr.bf16.mxu0 %v6603
        %6696 = vmatpush1.bf16.msra.mxu0 %v6602
        %6697 = vmatprep.subr.bf16.mxu0 %v6599
        %6698 = vmatpush1.bf16.msra.mxu0 %v6598
        %6699 = vmatprep.subr.bf16.mxu0 %v6595
        %6700 = vmatpush1.bf16.msra.mxu0 %v6594
        %6701 = vmatprep.subr.bf16.mxu0 %v6591
        %6702 = vmatpush1.bf16.msra.mxu0 %v6590
        %6703 = vmatprep.subr.bf16.mxu0 %v6587
        %6704 = vmatpush1.bf16.msra.mxu0 %v6586
        %6705 = vmatprep.subr.bf16.mxu0 0
        %6706 = vmatpush2.bf16.msra.mxu0 0
        %6707 = vmatprep.subr.bf16.mxu0 0
        %6708 = vmatpush2.bf16.msra.mxu0 0
        %6709 = vmatprep.subr.bf16.mxu0 0
        %6710 = vmatpush2.bf16.msra.mxu0 0
        %6711 = vmatprep.subr.bf16.mxu0 0
        %6712 = vmatpush2.bf16.msra.mxu0 0
        %6713 = vmatprep.subr.bf16.mxu0 0
        %6714 = vmatpush2.bf16.msra.mxu0 0
        %6715 = vmatprep.subr.bf16.mxu0 0
        %6716 = vmatpush2.bf16.msra.mxu0 0
        %6717 = vmatprep.subr.bf16.mxu0 0
        %6718 = vmatpush2.bf16.msra.mxu0 0
        %6719 = vmatprep.subr.bf16.mxu0 0
        %6720 = vmatpush2.bf16.msra.mxu0 0
        %6721 = vmatprep.mubr.bf16.mxu0 0
        %6722 = vmatmul.mubr.bf16.gmra.mxu0 %v6433
        %v6723 = vpop.f32.mrf.mxu0
        %v6724 = vadd.f32 %v6479, %v6723
        %v6725 = vpop.f32.mrf.mxu0
        %v6726 = vadd.f32 %v6483, %v6725
        %v6727 = vpop.f32.mrf.mxu0
        %v6728 = vpop.f32.mrf.mxu0
        %6729 = vdwg.mxu0
        %v6734 = vcombine.low %v6683, %v6685
        %v6735 = vcombine.low %v6724, %v6726
        %v6737 = vunpack.c.l.s4 1983009808
        %v6738 = vunpack.c.0.s8 %v6737
        %v6739 = vlaneseq
        %v6740 = vshrl.u32 %v6739, 7
        %v6741 = vsub.s32 %v6738, %v6740
        %v6742 = vrot.slane %v6734, %v6741
        %v6744 = vunpack.c.l.s4 1983009808
        %v6745 = vunpack.c.0.s8 %v6744
        %v6746 = vlaneseq
        %v6747 = vshrl.u32 %v6746, 7
        %v6748 = vsub.s32 %v6745, %v6747
        %v6749 = vrot.slane %v6735, %v6748
        %v6750 = vcombine.low %v6742, %v6749
        %6752 = vst [vmem:[%s750] sm:$0xff] %v6750
        %s6753 = sand.u32 %s494, 1
        %s6754 = scalar_lea.sflag [#allocation5], %s6753
        %s6755 = sand.u32 %s494, 1
        %s6756 = smul.addr %s6755, 8
        %s6757 = scalar_lea.vmem [#allocation4], %s6756
        // Predicated region
        $region132: #{vision_tower_forward.1} parent=122 // pred_check
          %p6758 = pneg %p504
        $region133: #{vision_tower_forward.1} parent=122 // pred_check_branch
          %6760 = sbr.rel (%p6758) target = $region135
        $region134: #{vision_tower_forward.1} parent=122 // pred_region
          %s6761 = smul.u32 4, %s35
          %s6763 = ssub.s32 128, 128
          %6764 = vsyncadd %s6754, %s6763
          %s6765 = smul.addr %s6761, 32
          %s6766 = scalar_lea.hbm %s21, %s6765
          %s6768 = sshll.u32 %s6757, 4
          %s6769 = int_to_ptr.vmem [resolvable:$true] %s6768
          %6771 = dma.vmem_to_hbm [thread:$0]  %s6769, 128, %s6766, %s6754
        $region135: #{vision_tower_forward.1} parent=122 // pred_fallthru
          _
      $region123: #{vision_tower_forward.1} parent=5 // pred_fallthru
        _
      %p6772 = scmp.le.s32.totalorder 2, %s30
      // Predicated region
      $region136: #{vision_tower_forward.1} parent=5 // pred_check
        %p6773 = pneg %p6772
      $region137: #{vision_tower_forward.1} parent=5 // pred_check_branch
        %6775 = sbr.rel (%p6773) target = $region139
      $region138: #{vision_tower_forward.1} parent=5 // pred_region
        %s6776 = ssub.s32 %s30, 2
        // Predicated region
        $region140: #{vision_tower_forward.1} parent=138 // pred_check
          %p6777 = pneg %p510
        $region141: #{vision_tower_forward.1} parent=138 // pred_check_branch
          %6779 = sbr.rel (%p6777) target = $region143
        $region142: #{vision_tower_forward.1} parent=138 // pred_region
          %s6780 = sand.u32 %s495, 1
          %s6781 = scalar_lea.sflag [#allocation5], %s6780
          %s6782 = sand.u32 %s495, 1
          %s6783 = smul.addr %s6782, 8
          %s6784 = scalar_lea.vmem [#allocation4], %s6783
          %6785 = dma.done %s6781, 128
        $region143: #{vision_tower_forward.1} parent=138 // pred_fallthru
          _
      $region139: #{vision_tower_forward.1} parent=5 // pred_fallthru
        _
    $region6: #{vision_tower_forward.1} parent=1 // loop_footer
      %s34 = sadd.s32 1, %s30
    $region7: #{vision_tower_forward.1} parent=1 // loop_footer_branch
      %29 = sbr.rel target = $region3
    $region8: #{vision_tower_forward.1} parent=1 // loop_exit
      _
    %6786 = vsyncpa [#allocation5], 1
    %s6787 = scalar_lea.sflag [#allocation5], 1
    %6788 = vsyncpa %s6787, 1

</llo_original>
